<compile_context>
chip_gen: v5e
topology: v5e:2x2
jax: 0.10.0
libtpu: 0.0.40
codegen_flags: <defaults>
</compile_context>

<pallas_src>
import functools

import jax
import jax.numpy as jnp
import numpy as np
from jax.experimental import pallas as pl
from jax.experimental.pallas import tpu as pltpu


# ------------------------------ fused kernel --------------------------------

def _net72_kernel(x_ref,
                  w1_ref, b1_ref,
                  w2_ref, b2_ref,
                  w3_ref, b3_ref,
                  w4_ref, b4_ref,
                  wfc_ref, bfc_ref,
                  out_ref):
    f32, bf16 = jnp.float32, jnp.bfloat16
    tb = x_ref.shape[0]

    def conv3x3_s2(xact, wt_ref, b_ref, ho_n):
        # xact: (2*ho_n, TB, WC) bf16 activation, H-leading.
        # wt_ref: (3, WC, WOC) bf16 Toeplitz-in-W weights (tap = kh index).
        # b_ref: (1, WOC) f32.
        # k=3, stride=2, pad=1: output row ho reads input rows
        # {2ho-1, 2ho, 2ho+1}; only ho=0 touches the (zero) top pad row, the
        # bottom pad row is never read -> no padded-input copy needed.
        h_n, tbn, wc = xact.shape
        xr = xact.reshape(ho_n, 2, tbn, wc)
        even = xr[:, 0]                                   # rows 2*ho   -> tap 1
        odd = xr[:, 1]                                    # rows 2*ho+1 -> tap 2
        zrow = jnp.zeros((1, tbn, wc), xact.dtype)
        shifted = jnp.concatenate([zrow, odd[:ho_n - 1]], axis=0)  # 2*ho-1 -> tap 0
        acc = jnp.dot(shifted.reshape(ho_n * tbn, wc), wt_ref[0],
                      preferred_element_type=f32)
        acc = acc + jnp.dot(even.reshape(ho_n * tbn, wc), wt_ref[1],
                            preferred_element_type=f32)
        acc = acc + jnp.dot(odd.reshape(ho_n * tbn, wc), wt_ref[2],
                            preferred_element_type=f32)
        out = jnp.maximum(acc + b_ref[...], 0.0)          # bias + ReLU in f32
        return out.astype(bf16).reshape(ho_n, tbn, -1)    # bf16 between layers

    # ---- input relayout (TB,32,32) -> H-leading (32,TB,32), on the VMEM block
    x = x_ref[...]
    try:
        x = pltpu.einshape("bhw->hbw", x)
    except Exception:
        x = jnp.transpose(x, (1, 0, 2))

    # ---- conv1: 1->64, 3x3 s2 p1 — all 3 H taps fused into ONE K=96 GEMM ----
    xr = x.reshape(16, 2, tb, 32)
    xe, xo = xr[:, 0], xr[:, 1]                           # rows 2ho / 2ho+1
    zrow = jnp.zeros((1, tb, 32), x.dtype)
    x0 = jnp.concatenate([zrow, xo[:15]], axis=0)         # rows 2ho-1 (zero at ho=0)
    rows = jnp.concatenate([x0, xe, xo], axis=-1)         # (16, TB, 96)
    acc = jnp.dot(rows.reshape(16 * tb, 96).astype(bf16), w1_ref[...],
                  preferred_element_type=f32)
    h = jnp.maximum(acc + b1_ref[...], 0.0).astype(bf16).reshape(16, tb, 1024)

    h = conv3x3_s2(h, w2_ref, b2_ref, 8)                  # (8, TB, 512)
    h = conv3x3_s2(h, w3_ref, b3_ref, 4)                  # (4, TB, 256)

    # ---- conv4 (4x4 valid conv == dense 1024->256) + ReLU -------------------
    acc = jnp.dot(h[0], w4_ref[0], preferred_element_type=f32)
    for i in range(1, 4):
        acc = acc + jnp.dot(h[i], w4_ref[i], preferred_element_type=f32)
    feat = jnp.maximum(acc + b4_ref[...], 0.0).astype(bf16)          # (TB, 256)

    # ---- FC (lane-dense: classes padded to 128) + log_softmax ---------------
    logits = jnp.dot(feat, wfc_ref[...], preferred_element_type=f32) + bfc_ref[...]
    m = jnp.max(logits, axis=-1, keepdims=True)
    z = logits - m
    lse = jnp.log(jnp.sum(jnp.exp(z), axis=-1, keepdims=True))
    out_ref[...] = (z - lse).astype(out_ref.dtype)


# --------------------------- one-time weight prep ----------------------------

def prepare_params(params, *, lane_pad=128):
    """Hoisted layout prep: PyTorch OIHW weights -> GEMM/Toeplitz bf16 layout."""

    def toeplitz(w, w_in, stride, pad):
        w = np.asarray(w, np.float32)
        c_out, c_in, kh, kw = w.shape
        wo_n = (w_in + 2 * pad - kw) // stride + 1
        t = np.zeros((kh, w_in * c_in, wo_n * c_out), np.float32)
        for i in range(kh):
            for wi in range(w_in):
                for wo in range(wo_n):
                    j = wi + pad - stride * wo
                    if 0 <= j < kw:
                        t[i, wi * c_in:(wi + 1) * c_in,
                          wo * c_out:(wo + 1) * c_out] = w[:, :, i, j].T
        return t

    def dense_rows(w):                       # 4x4 valid conv -> 4 row-GEMMs
        w = np.asarray(w, np.float32)
        c_out, c_in, kh, kw = w.shape
        t = np.zeros((kh, kw * c_in, c_out), np.float32)
        for i in range(kh):
            for wi in range(kw):
                t[i, wi * c_in:(wi + 1) * c_in, :] = w[:, :, i, wi].T
        return t

    def brow(b, wo_n):
        return np.tile(np.asarray(b, np.float32), wo_n)[None, :]

    bf16, f32 = jnp.bfloat16, jnp.float32
    nr_class = int(np.asarray(params["fc_w"]).shape[0])
    n_cls_pad = max(lane_pad, ((nr_class + lane_pad - 1) // lane_pad) * lane_pad)
    wfc = np.zeros((256, n_cls_pad), np.float32)
    wfc[:, :nr_class] = np.asarray(params["fc_w"], np.float32).T
    bfc = np.full((1, n_cls_pad), -1e30, np.float32)      # pad classes -> exp()=0
    bfc[0, :nr_class] = np.asarray(params["fc_b"], np.float32)

    return {
        "nr_class": nr_class,
        # conv1: (3, 32, 1024) Toeplitz taps stacked into one (96, 1024) weight.
        "w1": jnp.asarray(toeplitz(params["conv1_w"], 32, 2, 1).reshape(96, 1024), bf16),
        "b1": jnp.asarray(brow(params["conv1_b"], 16), f32),
        "w2": jnp.asarray(toeplitz(params["conv2_w"], 16, 2, 1), bf16),
        "b2": jnp.asarray(brow(params["conv2_b"], 8), f32),
        "w3": jnp.asarray(toeplitz(params["conv3_w"], 8, 2, 1), bf16),
        "b3": jnp.asarray(brow(params["conv3_b"], 4), f32),
        "w4": jnp.asarray(dense_rows(params["conv_w"]), bf16),
        "b4": jnp.asarray(np.asarray(params["conv_b"], np.float32)[None, :], f32),
        "wfc": jnp.asarray(wfc, bf16),
        "bfc": jnp.asarray(bfc, f32),
    }


# ------------------------------ forward wrapper ------------------------------

def _round_up(v, m):
    return ((v + m - 1) // m) * m


def _pick_tile_and_vmem(n, batch_tile, vmem_limit_bytes):
    """Generation-aware batch-tile / VMEM-limit choice (v5e/v6e vs v7x)."""
    vmem_cap = 64 * 1024 * 1024
    try:
        info = pltpu.get_tpu_info()
        vmem_cap = int(getattr(info, "vmem_capacity_bytes", vmem_cap))
    except Exception:
        pass
    if vmem_cap >= 100 * 1024 * 1024:          # v5e / v6e: 128 MiB physical VMEM
        tb_max, vmem_default = 256, 96 * 1024 * 1024
    else:                                       # v7x: 64 MiB physical, 2 TCs
        tb_max, vmem_default = 128, 52 * 1024 * 1024
    if batch_tile is None:
        # Keep >=2 grid tiles when the batch allows it so the "parallel" axis
        # can shard across TensorCores; tiles stay a multiple of 8 sublanes.
        half = _round_up(max((n + 1) // 2, 1), 8)
        batch_tile = max(8, min(tb_max, half))
    if vmem_limit_bytes is None:
        vmem_limit_bytes = vmem_default
    return batch_tile, vmem_limit_bytes


def net72_forward(prep, x, *, batch_tile=None, vmem_limit_bytes=None):
    """Fused Net72 forward: one pallas_call with a parallel grid over batch tiles."""
    n = x.shape[0]
    assert x.shape[1:] == (1, 32, 32), x.shape
    tb, vmem_limit = _pick_tile_and_vmem(n, batch_tile, vmem_limit_bytes)
    assert tb % 8 == 0, "batch tile must be a multiple of the sublane count (8)"
    n_tiles = (n + tb - 1) // tb
    n_pad = n_tiles * tb
    nr_class = prep["nr_class"]
    n_cls_pad = prep["wfc"].shape[1]

    # No wrapper-side transpose: batch-tiled (N, 32, 32) blocks go straight to
    # VMEM; the tiny H-leading relayout happens on-chip inside the kernel.
    xin = x.reshape(n, 32, 32)
    if n_pad != n:
        xin = jnp.pad(xin, ((0, n_pad - n), (0, 0), (0, 0)))

    weight_names = ["w1", "b1", "w2", "b2", "w3", "b3", "w4", "b4", "wfc", "bfc"]
    weights = [prep[k] for k in weight_names]

    def const_spec(a):                       # whole-array, VMEM-resident block
        idx = lambda b, nd=a.ndim: (0,) * nd
        try:                                 # single-buffer the constants
            return pl.BlockSpec(a.shape, idx, pipeline_mode=pl.Buffered(1))
        except TypeError:
            return pl.BlockSpec(a.shape, idx)

    macs = (16 * 16 * 64 * 9                 # conv1
            + 8 * 8 * 64 * 9 * 64            # conv2
            + 4 * 4 * 64 * 9 * 64            # conv3
            + 256 * 4 * 4 * 64               # conv4
            + 256 * n_cls_pad)               # fc
    weight_bytes = sum(int(np.prod(w.shape)) * w.dtype.itemsize for w in weights)
    cost = pl.CostEstimate(
        flops=2 * macs * n_pad,
        transcendentals=(n_cls_pad + 1) * n_pad,
        bytes_accessed=int(xin.size) * 4 + weight_bytes + n_pad * n_cls_pad * 4)

    out = pl.pallas_call(
        _net72_kernel,
        out_shape=jax.ShapeDtypeStruct((n_pad, n_cls_pad), jnp.float32),
        grid=(n_tiles,),
        in_specs=[pl.BlockSpec((tb, 32, 32), lambda b: (b, 0, 0))]
                 + [const_spec(w) for w in weights],
        out_specs=pl.BlockSpec((tb, n_cls_pad), lambda b: (b, 0)),
        compiler_params=pltpu.CompilerParams(
            dimension_semantics=("parallel",),
            vmem_limit_bytes=vmem_limit),
        cost_estimate=cost,
    )(xin, *weights)
    return out[:n, :nr_class]


# ------------------------------- init & reference ----------------------------

def init_params(key, nr_class):
    ks = jax.random.split(key, 10)

    def w(k, shape, fan_in):
        return (jax.random.normal(k, shape, jnp.float32)
                / jnp.sqrt(jnp.float32(fan_in)))

    return {
        "conv1_w": w(ks[0], (64, 1, 3, 3), 1 * 9),
        "conv1_b": w(ks[1], (64,), 1 * 9),
        "conv2_w": w(ks[2], (64, 64, 3, 3), 64 * 9),
        "conv2_b": w(ks[3], (64,), 64 * 9),
        "conv3_w": w(ks[4], (64, 64, 3, 3), 64 * 9),
        "conv3_b": w(ks[5], (64,), 64 * 9),
        "conv_w":  w(ks[6], (256, 64, 4, 4), 64 * 16),
        "conv_b":  w(ks[7], (256,), 64 * 16),
        "fc_w":    w(ks[8], (nr_class, 256), 256),
        "fc_b":    w(ks[9], (nr_class,), 256),
    }


def net72_reference(params, x, *, bf16_matmul=False):
    """Pure-JAX reference. bf16_matmul=True mimics the kernel's bf16 MXU operands."""
    mm = jnp.bfloat16 if bf16_matmul else jnp.float32

    def conv(x, w, b, stride, pad):
        y = jax.lax.conv_general_dilated(
            x.astype(mm), w.astype(mm),
            window_strides=(stride, stride),
            padding=((pad, pad), (pad, pad)),
            dimension_numbers=("NCHW", "OIHW", "NCHW"),
            preferred_element_type=jnp.float32)
        return jax.nn.relu(y + b.reshape(1, -1, 1, 1))

    x = conv(x, params["conv1_w"], params["conv1_b"], 2, 1)
    x = conv(x, params["conv2_w"], params["conv2_b"], 2, 1)
    x = conv(x, params["conv3_w"], params["conv3_b"], 2, 1)
    x = conv(x, params["conv_w"],  params["conv_b"],  1, 0)
    x = x.reshape(x.shape[0], -1)
    logits = jnp.dot(x.astype(mm), params["fc_w"].T.astype(mm),
                     preferred_element_type=jnp.float32) + params["fc_b"]
    return jax.nn.log_softmax(logits, axis=1)


if __name__ == "__main__":
    key = jax.random.PRNGKey(0)
    pkey, xkey, xkey2 = jax.random.split(key, 3)
    nr_class = 4
    params = init_params(pkey, nr_class)
    prep = prepare_params(params)             # one-time layout prep (not in fwd)

    fwd = jax.jit(functools.partial(net72_forward, prep))

    # Small batch (single tile, padded).
    x = jax.random.normal(xkey, (2, 1, 32, 32), jnp.float32)
    out = jax.block_until_ready(fwd(x))
    assert out.shape == (2, nr_class), out.shape
    ref_b = np.asarray(net72_reference(params, x, bf16_matmul=True))
    ref_f = np.asarray(net72_reference(params, x, bf16_matmul=False))
    if not np.allclose(np.asarray(out), ref_b, atol=5e-3, rtol=5e-3):
        raise AssertionError("mismatch vs bf16-matched reference (batch=2)")
    if not np.allclose(np.asarray(out), ref_f, atol=1e-1, rtol=1e-1):
        raise AssertionError("mismatch vs f32 reference (batch=2)")

    # Larger, non-multiple-of-tile batch: exercises the parallel multi-tile grid.
    x2 = jax.random.normal(xkey2, (30, 1, 32, 32), jnp.float32)
    out2 = jax.block_until_ready(fwd(x2))
    assert out2.shape == (30, nr_class), out2.shape
    ref2 = np.asarray(net72_reference(params, x2, bf16_matmul=True))
    if not np.allclose(np.asarray(out2), ref2, atol=5e-3, rtol=5e-3):
        raise AssertionError("mismatch vs bf16-matched reference (batch=30)")

    print("KERNEL_OK")
</pallas_src>

<mosaic_0001>
module attributes {stable_mosaic.version = 11 : i64} {
  func.func @_net72_kernel(%arg0: i32, %arg1: memref<8x32x32xf32, #tpu.memory_space<vmem>>, %arg2: memref<96x1024xbf16, #tpu.memory_space<vmem>>, %arg3: memref<1x1024xf32, #tpu.memory_space<vmem>>, %arg4: memref<3x1024x512xbf16, #tpu.memory_space<vmem>>, %arg5: memref<1x512xf32, #tpu.memory_space<vmem>>, %arg6: memref<3x512x256xbf16, #tpu.memory_space<vmem>>, %arg7: memref<1x256xf32, #tpu.memory_space<vmem>>, %arg8: memref<4x256x256xbf16, #tpu.memory_space<vmem>>, %arg9: memref<1x256xf32, #tpu.memory_space<vmem>>, %arg10: memref<256x128xbf16, #tpu.memory_space<vmem>>, %arg11: memref<1x128xf32, #tpu.memory_space<vmem>>, %arg12: memref<8x128xf32, #tpu.memory_space<vmem>>) attributes {dimension_semantics = [#tpu.dimension_semantics<parallel>], iteration_bounds = array<i64: 1>, scalar_prefetch = 0 : i64, scratch_operands = 0 : i64, tpu.core_type = #tpu.core_type<tc>, window_params = [{transform_indices = @transform_0, window_bounds = array<i64: 8, 32, 32>}, {pipeline_mode = #tpu.pipeline_mode<synchronous>, transform_indices = @transform_1, window_bounds = array<i64: 96, 1024>}, {pipeline_mode = #tpu.pipeline_mode<synchronous>, transform_indices = @transform_2, window_bounds = array<i64: 1, 1024>}, {pipeline_mode = #tpu.pipeline_mode<synchronous>, transform_indices = @transform_3, window_bounds = array<i64: 3, 1024, 512>}, {pipeline_mode = #tpu.pipeline_mode<synchronous>, transform_indices = @transform_4, window_bounds = array<i64: 1, 512>}, {pipeline_mode = #tpu.pipeline_mode<synchronous>, transform_indices = @transform_5, window_bounds = array<i64: 3, 512, 256>}, {pipeline_mode = #tpu.pipeline_mode<synchronous>, transform_indices = @transform_6, window_bounds = array<i64: 1, 256>}, {pipeline_mode = #tpu.pipeline_mode<synchronous>, transform_indices = @transform_7, window_bounds = array<i64: 4, 256, 256>}, {pipeline_mode = #tpu.pipeline_mode<synchronous>, transform_indices = @transform_8, window_bounds = array<i64: 1, 256>}, {pipeline_mode = #tpu.pipeline_mode<synchronous>, transform_indices = @transform_9, window_bounds = array<i64: 256, 128>}, {pipeline_mode = #tpu.pipeline_mode<synchronous>, transform_indices = @transform_10, window_bounds = array<i64: 1, 128>}, {transform_indices = @transform_11, window_bounds = array<i64: 8, 128>}]} {
    %c0 = arith.constant 0 : index
    %c0_0 = arith.constant 0 : index
    %c0_1 = arith.constant 0 : index
    %0 = vector.load %arg1[%c0, %c0_0, %c0_1] : memref<8x32x32xf32, #tpu.memory_space<vmem>>, vector<8x32x32xf32>
    %1 = tpu.transpose %0, [1, 0, 2] : vector<8x32x32xf32> -> vector<32x8x32xf32>
    %2 = vector.shape_cast %1 : vector<32x8x32xf32> to vector<16x2x8x32xf32>
    %3 = vector.extract_strided_slice %2 {offsets = [0, 0, 0, 0], sizes = [16, 1, 8, 32], strides = [1, 1, 1, 1]} : vector<16x2x8x32xf32> to vector<16x1x8x32xf32>
    %4 = vector.shape_cast %3 : vector<16x1x8x32xf32> to vector<16x8x32xf32>
    %5 = vector.extract_strided_slice %2 {offsets = [0, 1, 0, 0], sizes = [16, 1, 8, 32], strides = [1, 1, 1, 1]} : vector<16x2x8x32xf32> to vector<16x1x8x32xf32>
    %6 = vector.shape_cast %5 : vector<16x1x8x32xf32> to vector<16x8x32xf32>
    %cst = arith.constant 0.000000e+00 : f32
    %7 = vector.broadcast %cst : f32 to vector<1x8x32xf32>
    %8 = vector.extract_strided_slice %6 {offsets = [0, 0, 0], sizes = [15, 8, 32], strides = [1, 1, 1]} : vector<16x8x32xf32> to vector<15x8x32xf32>
    %9 = tpu.concatenate %7, %8 in 0 : vector<1x8x32xf32>, vector<15x8x32xf32> -> vector<16x8x32xf32>
    %10 = tpu.concatenate %9, %4, %6 in 2 : vector<16x8x32xf32>, vector<16x8x32xf32>, vector<16x8x32xf32> -> vector<16x8x96xf32>
    %11 = vector.shape_cast %10 : vector<16x8x96xf32> to vector<128x96xf32>
    %12 = arith.truncf %11 : vector<128x96xf32> to vector<128x96xbf16>
    %c0_2 = arith.constant 0 : index
    %c0_3 = arith.constant 0 : index
    %13 = vector.load %arg2[%c0_2, %c0_3] : memref<96x1024xbf16, #tpu.memory_space<vmem>>, vector<96x1024xbf16>
    %cst_4 = arith.constant dense<0.000000e+00> : vector<128x1024xf32>
    %14 = tpu.matmul %12, %13, %cst_4 {dimension_numbers = #tpu.dot_dimension_numbers<[1], [0], [0], [1], [0, 0, 1, 1], [], []>} : vector<128x96xbf16>, vector<96x1024xbf16>, vector<128x1024xf32> -> vector<128x1024xf32>
    %c0_5 = arith.constant 0 : index
    %c0_6 = arith.constant 0 : index
    %15 = vector.load %arg3[%c0_5, %c0_6] : memref<1x1024xf32, #tpu.memory_space<vmem>>, vector<1x1024xf32>
    %16 = vector.broadcast %15 : vector<1x1024xf32> to vector<128x1024xf32>
    %17 = arith.addf %14, %16 : vector<128x1024xf32>
    %cst_7 = arith.constant 0.000000e+00 : f32
    %18 = vector.broadcast %cst_7 : f32 to vector<128x1024xf32>
    %19 = arith.maximumf %17, %18 : vector<128x1024xf32>
    %20 = arith.truncf %19 : vector<128x1024xf32> to vector<128x1024xbf16>
    %21 = vector.shape_cast %20 : vector<128x1024xbf16> to vector<16x8x1024xbf16>
    %22 = vector.shape_cast %21 : vector<16x8x1024xbf16> to vector<8x2x8x1024xbf16>
    %23 = vector.extract_strided_slice %22 {offsets = [0, 0, 0, 0], sizes = [8, 1, 8, 1024], strides = [1, 1, 1, 1]} : vector<8x2x8x1024xbf16> to vector<8x1x8x1024xbf16>
    %24 = vector.shape_cast %23 : vector<8x1x8x1024xbf16> to vector<8x8x1024xbf16>
    %25 = vector.extract_strided_slice %22 {offsets = [0, 1, 0, 0], sizes = [8, 1, 8, 1024], strides = [1, 1, 1, 1]} : vector<8x2x8x1024xbf16> to vector<8x1x8x1024xbf16>
    %26 = vector.shape_cast %25 : vector<8x1x8x1024xbf16> to vector<8x8x1024xbf16>
    %cst_8 = arith.constant 0.000000e+00 : bf16
    %27 = vector.broadcast %cst_8 : bf16 to vector<1x8x1024xbf16>
    %28 = vector.extract_strided_slice %26 {offsets = [0, 0, 0], sizes = [7, 8, 1024], strides = [1, 1, 1]} : vector<8x8x1024xbf16> to vector<7x8x1024xbf16>
    %29 = tpu.concatenate %27, %28 in 0 : vector<1x8x1024xbf16>, vector<7x8x1024xbf16> -> vector<8x8x1024xbf16>
    %30 = vector.shape_cast %29 : vector<8x8x1024xbf16> to vector<64x1024xbf16>
    %c0_9 = arith.constant 0 : index
    %c0_10 = arith.constant 0 : index
    %c0_11 = arith.constant 0 : index
    %31 = vector.load %arg4[%c0_9, %c0_10, %c0_11] : memref<3x1024x512xbf16, #tpu.memory_space<vmem>>, vector<1x1024x512xbf16>
    %32 = vector.shape_cast %31 : vector<1x1024x512xbf16> to vector<1024x512xbf16>
    %cst_12 = arith.constant dense<0.000000e+00> : vector<64x512xf32>
    %33 = tpu.matmul %30, %32, %cst_12 {dimension_numbers = #tpu.dot_dimension_numbers<[1], [0], [0], [1], [0, 0, 1, 1], [], []>} : vector<64x1024xbf16>, vector<1024x512xbf16>, vector<64x512xf32> -> vector<64x512xf32>
    %34 = vector.shape_cast %24 : vector<8x8x1024xbf16> to vector<64x1024xbf16>
    %c1 = arith.constant 1 : index
    %c0_13 = arith.constant 0 : index
    %c0_14 = arith.constant 0 : index
    %35 = vector.load %arg4[%c1, %c0_13, %c0_14] : memref<3x1024x512xbf16, #tpu.memory_space<vmem>>, vector<1x1024x512xbf16>
    %36 = vector.shape_cast %35 : vector<1x1024x512xbf16> to vector<1024x512xbf16>
    %cst_15 = arith.constant dense<0.000000e+00> : vector<64x512xf32>
    %37 = tpu.matmul %34, %36, %cst_15 {dimension_numbers = #tpu.dot_dimension_numbers<[1], [0], [0], [1], [0, 0, 1, 1], [], []>} : vector<64x1024xbf16>, vector<1024x512xbf16>, vector<64x512xf32> -> vector<64x512xf32>
    %38 = arith.addf %33, %37 : vector<64x512xf32>
    %39 = vector.shape_cast %26 : vector<8x8x1024xbf16> to vector<64x1024xbf16>
    %c2 = arith.constant 2 : index
    %c0_16 = arith.constant 0 : index
    %c0_17 = arith.constant 0 : index
    %40 = vector.load %arg4[%c2, %c0_16, %c0_17] : memref<3x1024x512xbf16, #tpu.memory_space<vmem>>, vector<1x1024x512xbf16>
    %41 = vector.shape_cast %40 : vector<1x1024x512xbf16> to vector<1024x512xbf16>
    %cst_18 = arith.constant dense<0.000000e+00> : vector<64x512xf32>
    %42 = tpu.matmul %39, %41, %cst_18 {dimension_numbers = #tpu.dot_dimension_numbers<[1], [0], [0], [1], [0, 0, 1, 1], [], []>} : vector<64x1024xbf16>, vector<1024x512xbf16>, vector<64x512xf32> -> vector<64x512xf32>
    %43 = arith.addf %38, %42 : vector<64x512xf32>
    %c0_19 = arith.constant 0 : index
    %c0_20 = arith.constant 0 : index
    %44 = vector.load %arg5[%c0_19, %c0_20] : memref<1x512xf32, #tpu.memory_space<vmem>>, vector<1x512xf32>
    %45 = vector.broadcast %44 : vector<1x512xf32> to vector<64x512xf32>
    %46 = arith.addf %43, %45 : vector<64x512xf32>
    %cst_21 = arith.constant 0.000000e+00 : f32
    %47 = vector.broadcast %cst_21 : f32 to vector<64x512xf32>
    %48 = arith.maximumf %46, %47 : vector<64x512xf32>
    %49 = arith.truncf %48 : vector<64x512xf32> to vector<64x512xbf16>
    %50 = vector.shape_cast %49 : vector<64x512xbf16> to vector<8x8x512xbf16>
    %51 = vector.shape_cast %50 : vector<8x8x512xbf16> to vector<4x2x8x512xbf16>
    %52 = vector.extract_strided_slice %51 {offsets = [0, 0, 0, 0], sizes = [4, 1, 8, 512], strides = [1, 1, 1, 1]} : vector<4x2x8x512xbf16> to vector<4x1x8x512xbf16>
    %53 = vector.shape_cast %52 : vector<4x1x8x512xbf16> to vector<4x8x512xbf16>
    %54 = vector.extract_strided_slice %51 {offsets = [0, 1, 0, 0], sizes = [4, 1, 8, 512], strides = [1, 1, 1, 1]} : vector<4x2x8x512xbf16> to vector<4x1x8x512xbf16>
    %55 = vector.shape_cast %54 : vector<4x1x8x512xbf16> to vector<4x8x512xbf16>
    %cst_22 = arith.constant 0.000000e+00 : bf16
    %56 = vector.broadcast %cst_22 : bf16 to vector<1x8x512xbf16>
    %57 = vector.extract_strided_slice %55 {offsets = [0, 0, 0], sizes = [3, 8, 512], strides = [1, 1, 1]} : vector<4x8x512xbf16> to vector<3x8x512xbf16>
    %58 = tpu.concatenate %56, %57 in 0 : vector<1x8x512xbf16>, vector<3x8x512xbf16> -> vector<4x8x512xbf16>
    %59 = vector.shape_cast %58 : vector<4x8x512xbf16> to vector<32x512xbf16>
    %c0_23 = arith.constant 0 : index
    %c0_24 = arith.constant 0 : index
    %c0_25 = arith.constant 0 : index
    %60 = vector.load %arg6[%c0_23, %c0_24, %c0_25] : memref<3x512x256xbf16, #tpu.memory_space<vmem>>, vector<1x512x256xbf16>
    %61 = vector.shape_cast %60 : vector<1x512x256xbf16> to vector<512x256xbf16>
    %cst_26 = arith.constant dense<0.000000e+00> : vector<32x256xf32>
    %62 = tpu.matmul %59, %61, %cst_26 {dimension_numbers = #tpu.dot_dimension_numbers<[1], [0], [0], [1], [0, 0, 1, 1], [], []>} : vector<32x512xbf16>, vector<512x256xbf16>, vector<32x256xf32> -> vector<32x256xf32>
    %63 = vector.shape_cast %53 : vector<4x8x512xbf16> to vector<32x512xbf16>
    %c1_27 = arith.constant 1 : index
    %c0_28 = arith.constant 0 : index
    %c0_29 = arith.constant 0 : index
    %64 = vector.load %arg6[%c1_27, %c0_28, %c0_29] : memref<3x512x256xbf16, #tpu.memory_space<vmem>>, vector<1x512x256xbf16>
    %65 = vector.shape_cast %64 : vector<1x512x256xbf16> to vector<512x256xbf16>
    %cst_30 = arith.constant dense<0.000000e+00> : vector<32x256xf32>
    %66 = tpu.matmul %63, %65, %cst_30 {dimension_numbers = #tpu.dot_dimension_numbers<[1], [0], [0], [1], [0, 0, 1, 1], [], []>} : vector<32x512xbf16>, vector<512x256xbf16>, vector<32x256xf32> -> vector<32x256xf32>
    %67 = arith.addf %62, %66 : vector<32x256xf32>
    %68 = vector.shape_cast %55 : vector<4x8x512xbf16> to vector<32x512xbf16>
    %c2_31 = arith.constant 2 : index
    %c0_32 = arith.constant 0 : index
    %c0_33 = arith.constant 0 : index
    %69 = vector.load %arg6[%c2_31, %c0_32, %c0_33] : memref<3x512x256xbf16, #tpu.memory_space<vmem>>, vector<1x512x256xbf16>
    %70 = vector.shape_cast %69 : vector<1x512x256xbf16> to vector<512x256xbf16>
    %cst_34 = arith.constant dense<0.000000e+00> : vector<32x256xf32>
    %71 = tpu.matmul %68, %70, %cst_34 {dimension_numbers = #tpu.dot_dimension_numbers<[1], [0], [0], [1], [0, 0, 1, 1], [], []>} : vector<32x512xbf16>, vector<512x256xbf16>, vector<32x256xf32> -> vector<32x256xf32>
    %72 = arith.addf %67, %71 : vector<32x256xf32>
    %c0_35 = arith.constant 0 : index
    %c0_36 = arith.constant 0 : index
    %73 = vector.load %arg7[%c0_35, %c0_36] : memref<1x256xf32, #tpu.memory_space<vmem>>, vector<1x256xf32>
    %74 = vector.broadcast %73 : vector<1x256xf32> to vector<32x256xf32>
    %75 = arith.addf %72, %74 : vector<32x256xf32>
    %cst_37 = arith.constant 0.000000e+00 : f32
    %76 = vector.broadcast %cst_37 : f32 to vector<32x256xf32>
    %77 = arith.maximumf %75, %76 : vector<32x256xf32>
    %78 = arith.truncf %77 : vector<32x256xf32> to vector<32x256xbf16>
    %79 = vector.shape_cast %78 : vector<32x256xbf16> to vector<4x8x256xbf16>
    %80 = vector.extract_strided_slice %79 {offsets = [0, 0, 0], sizes = [1, 8, 256], strides = [1, 1, 1]} : vector<4x8x256xbf16> to vector<1x8x256xbf16>
    %81 = vector.shape_cast %80 : vector<1x8x256xbf16> to vector<8x256xbf16>
    %c0_38 = arith.constant 0 : index
    %c0_39 = arith.constant 0 : index
    %c0_40 = arith.constant 0 : index
    %82 = vector.load %arg8[%c0_38, %c0_39, %c0_40] : memref<4x256x256xbf16, #tpu.memory_space<vmem>>, vector<1x256x256xbf16>
    %83 = vector.shape_cast %82 : vector<1x256x256xbf16> to vector<256x256xbf16>
    %cst_41 = arith.constant dense<0.000000e+00> : vector<8x256xf32>
    %84 = tpu.matmul %81, %83, %cst_41 {dimension_numbers = #tpu.dot_dimension_numbers<[1], [0], [0], [1], [0, 0, 1, 1], [], []>} : vector<8x256xbf16>, vector<256x256xbf16>, vector<8x256xf32> -> vector<8x256xf32>
    %85 = vector.extract_strided_slice %79 {offsets = [1, 0, 0], sizes = [1, 8, 256], strides = [1, 1, 1]} : vector<4x8x256xbf16> to vector<1x8x256xbf16>
    %86 = vector.shape_cast %85 : vector<1x8x256xbf16> to vector<8x256xbf16>
    %c1_42 = arith.constant 1 : index
    %c0_43 = arith.constant 0 : index
    %c0_44 = arith.constant 0 : index
    %87 = vector.load %arg8[%c1_42, %c0_43, %c0_44] : memref<4x256x256xbf16, #tpu.memory_space<vmem>>, vector<1x256x256xbf16>
    %88 = vector.shape_cast %87 : vector<1x256x256xbf16> to vector<256x256xbf16>
    %cst_45 = arith.constant dense<0.000000e+00> : vector<8x256xf32>
    %89 = tpu.matmul %86, %88, %cst_45 {dimension_numbers = #tpu.dot_dimension_numbers<[1], [0], [0], [1], [0, 0, 1, 1], [], []>} : vector<8x256xbf16>, vector<256x256xbf16>, vector<8x256xf32> -> vector<8x256xf32>
    %90 = arith.addf %84, %89 : vector<8x256xf32>
    %91 = vector.extract_strided_slice %79 {offsets = [2, 0, 0], sizes = [1, 8, 256], strides = [1, 1, 1]} : vector<4x8x256xbf16> to vector<1x8x256xbf16>
    %92 = vector.shape_cast %91 : vector<1x8x256xbf16> to vector<8x256xbf16>
    %c2_46 = arith.constant 2 : index
    %c0_47 = arith.constant 0 : index
    %c0_48 = arith.constant 0 : index
    %93 = vector.load %arg8[%c2_46, %c0_47, %c0_48] : memref<4x256x256xbf16, #tpu.memory_space<vmem>>, vector<1x256x256xbf16>
    %94 = vector.shape_cast %93 : vector<1x256x256xbf16> to vector<256x256xbf16>
    %cst_49 = arith.constant dense<0.000000e+00> : vector<8x256xf32>
    %95 = tpu.matmul %92, %94, %cst_49 {dimension_numbers = #tpu.dot_dimension_numbers<[1], [0], [0], [1], [0, 0, 1, 1], [], []>} : vector<8x256xbf16>, vector<256x256xbf16>, vector<8x256xf32> -> vector<8x256xf32>
    %96 = arith.addf %90, %95 : vector<8x256xf32>
    %97 = vector.extract_strided_slice %79 {offsets = [3, 0, 0], sizes = [1, 8, 256], strides = [1, 1, 1]} : vector<4x8x256xbf16> to vector<1x8x256xbf16>
    %98 = vector.shape_cast %97 : vector<1x8x256xbf16> to vector<8x256xbf16>
    %c3 = arith.constant 3 : index
    %c0_50 = arith.constant 0 : index
    %c0_51 = arith.constant 0 : index
    %99 = vector.load %arg8[%c3, %c0_50, %c0_51] : memref<4x256x256xbf16, #tpu.memory_space<vmem>>, vector<1x256x256xbf16>
    %100 = vector.shape_cast %99 : vector<1x256x256xbf16> to vector<256x256xbf16>
    %cst_52 = arith.constant dense<0.000000e+00> : vector<8x256xf32>
    %101 = tpu.matmul %98, %100, %cst_52 {dimension_numbers = #tpu.dot_dimension_numbers<[1], [0], [0], [1], [0, 0, 1, 1], [], []>} : vector<8x256xbf16>, vector<256x256xbf16>, vector<8x256xf32> -> vector<8x256xf32>
    %102 = arith.addf %96, %101 : vector<8x256xf32>
    %c0_53 = arith.constant 0 : index
    %c0_54 = arith.constant 0 : index
    %103 = vector.load %arg9[%c0_53, %c0_54] : memref<1x256xf32, #tpu.memory_space<vmem>>, vector<1x256xf32>
    %104 = vector.broadcast %103 : vector<1x256xf32> to vector<8x256xf32>
    %105 = arith.addf %102, %104 : vector<8x256xf32>
    %cst_55 = arith.constant 0.000000e+00 : f32
    %106 = vector.broadcast %cst_55 : f32 to vector<8x256xf32>
    %107 = arith.maximumf %105, %106 : vector<8x256xf32>
    %108 = arith.truncf %107 : vector<8x256xf32> to vector<8x256xbf16>
    %c0_56 = arith.constant 0 : index
    %c0_57 = arith.constant 0 : index
    %109 = vector.load %arg10[%c0_56, %c0_57] : memref<256x128xbf16, #tpu.memory_space<vmem>>, vector<256x128xbf16>
    %cst_58 = arith.constant dense<0.000000e+00> : vector<8x128xf32>
    %110 = tpu.matmul %108, %109, %cst_58 {dimension_numbers = #tpu.dot_dimension_numbers<[1], [0], [0], [1], [0, 0, 1, 1], [], []>} : vector<8x256xbf16>, vector<256x128xbf16>, vector<8x128xf32> -> vector<8x128xf32>
    %c0_59 = arith.constant 0 : index
    %c0_60 = arith.constant 0 : index
    %111 = vector.load %arg11[%c0_59, %c0_60] : memref<1x128xf32, #tpu.memory_space<vmem>>, vector<1x128xf32>
    %112 = vector.broadcast %111 : vector<1x128xf32> to vector<8x128xf32>
    %113 = arith.addf %110, %112 : vector<8x128xf32>
    %cst_61 = arith.constant dense<0xFF800000> : vector<8xf32>
    %114 = vector.multi_reduction <maximumf>, %113, %cst_61 [1] : vector<8x128xf32> to vector<8xf32>
    %115 = vector.shape_cast %114 : vector<8xf32> to vector<8x1xf32>
    %116 = vector.broadcast %115 : vector<8x1xf32> to vector<8x128xf32>
    %117 = arith.subf %113, %116 : vector<8x128xf32>
    %118 = math.exp %117 : vector<8x128xf32>
    %cst_62 = arith.constant dense<0.000000e+00> : vector<8xf32>
    %119 = vector.multi_reduction <add>, %118, %cst_62 [1] : vector<8x128xf32> to vector<8xf32>
    %120 = vector.shape_cast %119 : vector<8xf32> to vector<8x1xf32>
    %121 = math.log %120 : vector<8x1xf32>
    %122 = vector.broadcast %121 : vector<8x1xf32> to vector<8x128xf32>
    %123 = arith.subf %117, %122 : vector<8x128xf32>
    %c0_63 = arith.constant 0 : index
    %c0_64 = arith.constant 0 : index
    %124 = vector.load %arg12[%c0_63, %c0_64] : memref<8x128xf32, #tpu.memory_space<vmem>>, vector<8x128xf32>
    tpu.vector_store %arg12[%c0_63, %c0_64], %123 {strides = array<i32>} : memref<8x128xf32, #tpu.memory_space<vmem>>, vector<8x128xf32>,
    return
  }
  func.func @transform_0(%arg0: i32) -> (i32, i32, i32) {
    %c0_i32 = arith.constant 0 : i32
    %c0_i32_0 = arith.constant 0 : i32
    %c0_i32_1 = arith.constant 0 : i32
    return %arg0, %c0_i32, %c0_i32_0 : i32, i32, i32
  }
  func.func @transform_1(%arg0: i32) -> (i32, i32) {
    %c0_i32 = arith.constant 0 : i32
    %c0_i32_0 = arith.constant 0 : i32
    %c0_i32_1 = arith.constant 0 : i32
    return %c0_i32, %c0_i32_0 : i32, i32
  }
  func.func @transform_2(%arg0: i32) -> (i32, i32) {
    %c0_i32 = arith.constant 0 : i32
    %c0_i32_0 = arith.constant 0 : i32
    %c0_i32_1 = arith.constant 0 : i32
    return %c0_i32, %c0_i32_0 : i32, i32
  }
  func.func @transform_3(%arg0: i32) -> (i32, i32, i32) {
    %c0_i32 = arith.constant 0 : i32
    %c0_i32_0 = arith.constant 0 : i32
    %c0_i32_1 = arith.constant 0 : i32
    %c0_i32_2 = arith.constant 0 : i32
    return %c0_i32, %c0_i32_0, %c0_i32_1 : i32, i32, i32
  }
  func.func @transform_4(%arg0: i32) -> (i32, i32) {
    %c0_i32 = arith.constant 0 : i32
    %c0_i32_0 = arith.constant 0 : i32
    %c0_i32_1 = arith.constant 0 : i32
    return %c0_i32, %c0_i32_0 : i32, i32
  }
  func.func @transform_5(%arg0: i32) -> (i32, i32, i32) {
    %c0_i32 = arith.constant 0 : i32
    %c0_i32_0 = arith.constant 0 : i32
    %c0_i32_1 = arith.constant 0 : i32
    %c0_i32_2 = arith.constant 0 : i32
    return %c0_i32, %c0_i32_0, %c0_i32_1 : i32, i32, i32
  }
  func.func @transform_6(%arg0: i32) -> (i32, i32) {
    %c0_i32 = arith.constant 0 : i32
    %c0_i32_0 = arith.constant 0 : i32
    %c0_i32_1 = arith.constant 0 : i32
    return %c0_i32, %c0_i32_0 : i32, i32
  }
  func.func @transform_7(%arg0: i32) -> (i32, i32, i32) {
    %c0_i32 = arith.constant 0 : i32
    %c0_i32_0 = arith.constant 0 : i32
    %c0_i32_1 = arith.constant 0 : i32
    %c0_i32_2 = arith.constant 0 : i32
    return %c0_i32, %c0_i32_0, %c0_i32_1 : i32, i32, i32
  }
  func.func @transform_8(%arg0: i32) -> (i32, i32) {
    %c0_i32 = arith.constant 0 : i32
    %c0_i32_0 = arith.constant 0 : i32
    %c0_i32_1 = arith.constant 0 : i32
    return %c0_i32, %c0_i32_0 : i32, i32
  }
  func.func @transform_9(%arg0: i32) -> (i32, i32) {
    %c0_i32 = arith.constant 0 : i32
    %c0_i32_0 = arith.constant 0 : i32
    %c0_i32_1 = arith.constant 0 : i32
    return %c0_i32, %c0_i32_0 : i32, i32
  }
  func.func @transform_10(%arg0: i32) -> (i32, i32) {
    %c0_i32 = arith.constant 0 : i32
    %c0_i32_0 = arith.constant 0 : i32
    %c0_i32_1 = arith.constant 0 : i32
    return %c0_i32, %c0_i32_0 : i32, i32
  }
  func.func @transform_11(%arg0: i32) -> (i32, i32) {
    %c0_i32 = arith.constant 0 : i32
    %c0_i32_0 = arith.constant 0 : i32
    return %arg0, %c0_i32 : i32, i32
  }
}

</mosaic_0001>

<llo_original>
// kernel: net72_forward.1
$region0: #{net72_forward.1}
  #allocation0 [shape = 'u32[]', space=smem, size = 0x4, offset = 0x4, fixed_abs, tag = 'smem constant byte address 0x4 - core index']
  #allocation1 [shape = 'u32[72,128]{1,0:T(1,128)}', space=vmem, size = 0x9000, scoped, tag = 'internal scratch']
  %s0 = inlined_call_operand.vmem [shape: f32[8,32,32], index: 0, kind: input, shape index: {}]
  %s1 = inlined_call_operand.hbm [shape: bf16[96,1024], index: 1, kind: input, shape index: {}]
  %s2 = inlined_call_operand.hbm [shape: f32[1,1024], index: 2, kind: input, shape index: {}]
  %s3 = inlined_call_operand.hbm [shape: bf16[3,1024,512], index: 3, kind: input, shape index: {}]
  %s4 = inlined_call_operand.hbm [shape: f32[1,512], index: 4, kind: input, shape index: {}]
  %s5 = inlined_call_operand.hbm [shape: bf16[3,512,256], index: 5, kind: input, shape index: {}]
  %s6 = inlined_call_operand.hbm [shape: f32[1,256], index: 6, kind: input, shape index: {}]
  %s7 = inlined_call_operand.hbm [shape: bf16[4,256,256], index: 7, kind: input, shape index: {}]
  %s8 = inlined_call_operand.hbm [shape: f32[1,256], index: 8, kind: input, shape index: {}]
  %s9 = inlined_call_operand.hbm [shape: bf16[256,128], index: 9, kind: input, shape index: {}]
  %s10 = inlined_call_operand.hbm [shape: f32[1,128], index: 10, kind: input, shape index: {}]
  %s11 = inlined_call_operand.vmem [shape: f32[8,128], index: 11, kind: output, shape index: {}]
  %s12 = sld [smem:[#allocation0]]
  $region94: #{net72_forward.1} parent=0
    _
  %s14 = ssub.s32 1, %s12
  %s15 = scalar_select 0, %s14, %s12
  $region1: #{net72_forward.1} parent=0
    #allocation2 [shape = 'u8[196608]{0}', space=vmem, size = 0x30000, scoped, tag = 'input window, operand 1, single buffered']
    #allocation3 [shape = 's32[1]{0}', space=sflag, size = 0x4, scoped, tag = 'scoped memory for net72_forward.1']
    #allocation4 [shape = 'u8[4096]{0}', space=vmem, size = 0x1000, scoped, tag = 'input window, operand 2, single buffered']
    #allocation5 [shape = 's32[1]{0}', space=sflag, size = 0x4, scoped, tag = 'scoped memory for net72_forward.1']
    #allocation6 [shape = 'u8[3145728]{0}', space=vmem, size = 0x300000, scoped, tag = 'input window, operand 3, single buffered']
    #allocation7 [shape = 'u8[2048]{0}', space=vmem, size = 0x800, scoped, tag = 'input window, operand 4, single buffered']
    #allocation8 [shape = 's32[1]{0}', space=sflag, size = 0x4, scoped, tag = 'scoped memory for net72_forward.1']
    #allocation9 [shape = 'u8[786432]{0}', space=vmem, size = 0xc0000, scoped, tag = 'input window, operand 5, single buffered']
    #allocation10 [shape = 'u8[1024]{0}', space=vmem, size = 0x400, scoped, tag = 'input window, operand 6, single buffered']
    #allocation11 [shape = 's32[1]{0}', space=sflag, size = 0x4, scoped, tag = 'scoped memory for net72_forward.1']
    #allocation12 [shape = 'u8[524288]{0}', space=vmem, size = 0x80000, scoped, tag = 'input window, operand 7, single buffered']
    #allocation13 [shape = 'u8[1024]{0}', space=vmem, size = 0x400, scoped, tag = 'input window, operand 8, single buffered']
    #allocation14 [shape = 's32[1]{0}', space=sflag, size = 0x4, scoped, tag = 'scoped memory for net72_forward.1']
    #allocation15 [shape = 'u8[65536]{0}', space=vmem, size = 0x10000, scoped, tag = 'input window, operand 9, single buffered']
    #allocation16 [shape = 'u8[512]{0}', space=vmem, size = 0x400, scoped, tag = 'input window, operand 10, single buffered']
    #allocation17 [shape = 's32[1]{0}', space=sflag, size = 0x4, scoped, tag = 'scoped memory for net72_forward.1']
    %16 = vsyncpa [#allocation3], 0
    %17 = vsyncpa [#allocation5], 0
    %18 = vsyncpa [#allocation8], 0
    %19 = vsyncpa [#allocation11], 0
    %20 = vsyncpa [#allocation14], 0
    %21 = vsyncpa [#allocation17], 0
    // Predicated region
    $region2: #{net72_forward.1} parent=1 // pred_check
      _
    $region3: #{net72_forward.1} parent=1 // pred_check_branch
      %23 = sbr.rel (0) target = $region5
    $region4: #{net72_forward.1} parent=1 // pred_region
      _
    $region5: #{net72_forward.1} parent=1 // pred_fallthru
      _
    // Predicated region
    $region6: #{net72_forward.1} parent=1 // pred_check
      _
    $region7: #{net72_forward.1} parent=1 // pred_check_branch
      %25 = sbr.rel (0) target = $region9
    $region8: #{net72_forward.1} parent=1 // pred_region
      %27 = vsyncadd [#allocation3], 0
      %s28 = sshll.u32 %s1, 4
      %s29 = int_to_ptr.hbm [resolvable:$true] %s28
      %s30 = sshll.u32 [#allocation2], 4
      %s31 = int_to_ptr.vmem [resolvable:$true] %s30
      %36 = dma.hbm_to_vmem [thread:$0]  %s29, 6144, %s31, [#allocation3], 512, 512, 32
    $region9: #{net72_forward.1} parent=1 // pred_fallthru
      _
    // Predicated region
    $region10: #{net72_forward.1} parent=1 // pred_check
      _
    $region11: #{net72_forward.1} parent=1 // pred_check_branch
      %38 = sbr.rel (0) target = $region13
    $region12: #{net72_forward.1} parent=1 // pred_region
      %40 = vsyncadd [#allocation5], 0
      %s42 = sshll.u32 %s2, 4
      %s43 = int_to_ptr.hbm [resolvable:$true] %s42
      %s44 = sshll.u32 [#allocation4], 4
      %s45 = int_to_ptr.vmem [resolvable:$true] %s44
      %47 = dma.hbm_to_vmem [thread:$0]  %s43, 128, %s45, [#allocation5]
    $region13: #{net72_forward.1} parent=1 // pred_fallthru
      _
    // Predicated region
    $region14: #{net72_forward.1} parent=1 // pred_check
      _
    $region15: #{net72_forward.1} parent=1 // pred_check_branch
      %49 = sbr.rel (0) target = $region17
    $region16: #{net72_forward.1} parent=1 // pred_region
      %51 = vsyncadd [#allocation5], 0
      %s52 = sshll.u32 %s3, 4
      %s53 = int_to_ptr.hbm [resolvable:$true] %s52
      %s54 = sshll.u32 [#allocation6], 4
      %s55 = int_to_ptr.vmem [resolvable:$true] %s54
      %60 = dma.hbm_to_vmem [thread:$0]  %s53, 98304, %s55, [#allocation5], 256, 256, 16
    $region17: #{net72_forward.1} parent=1 // pred_fallthru
      _
    // Predicated region
    $region18: #{net72_forward.1} parent=1 // pred_check
      _
    $region19: #{net72_forward.1} parent=1 // pred_check_branch
      %62 = sbr.rel (0) target = $region21
    $region20: #{net72_forward.1} parent=1 // pred_region
      %64 = vsyncadd [#allocation8], 0
      %s66 = sshll.u32 %s4, 4
      %s67 = int_to_ptr.hbm [resolvable:$true] %s66
      %s68 = sshll.u32 [#allocation7], 4
      %s69 = int_to_ptr.vmem [resolvable:$true] %s68
      %71 = dma.hbm_to_vmem [thread:$0]  %s67, 64, %s69, [#allocation8]
    $region21: #{net72_forward.1} parent=1 // pred_fallthru
      _
    // Predicated region
    $region22: #{net72_forward.1} parent=1 // pred_check
      _
    $region23: #{net72_forward.1} parent=1 // pred_check_branch
      %73 = sbr.rel (0) target = $region25
    $region24: #{net72_forward.1} parent=1 // pred_region
      %75 = vsyncadd [#allocation8], 0
      %s76 = sshll.u32 %s5, 4
      %s77 = int_to_ptr.hbm [resolvable:$true] %s76
      %s78 = sshll.u32 [#allocation9], 4
      %s79 = int_to_ptr.vmem [resolvable:$true] %s78
      %84 = dma.hbm_to_vmem [thread:$0]  %s77, 24576, %s79, [#allocation8], 128, 128, 8
    $region25: #{net72_forward.1} parent=1 // pred_fallthru
      _
    // Predicated region
    $region26: #{net72_forward.1} parent=1 // pred_check
      _
    $region27: #{net72_forward.1} parent=1 // pred_check_branch
      %86 = sbr.rel (0) target = $region29
    $region28: #{net72_forward.1} parent=1 // pred_region
      %88 = vsyncadd [#allocation11], 0
      %s90 = sshll.u32 %s6, 4
      %s91 = int_to_ptr.hbm [resolvable:$true] %s90
      %s92 = sshll.u32 [#allocation10], 4
      %s93 = int_to_ptr.vmem [resolvable:$true] %s92
      %95 = dma.hbm_to_vmem [thread:$0]  %s91, 32, %s93, [#allocation11]
    $region29: #{net72_forward.1} parent=1 // pred_fallthru
      _
    // Predicated region
    $region30: #{net72_forward.1} parent=1 // pred_check
      _
    $region31: #{net72_forward.1} parent=1 // pred_check_branch
      %97 = sbr.rel (0) target = $region33
    $region32: #{net72_forward.1} parent=1 // pred_region
      %99 = vsyncadd [#allocation11], 0
      %s100 = sshll.u32 %s7, 4
      %s101 = int_to_ptr.hbm [resolvable:$true] %s100
      %s102 = sshll.u32 [#allocation12], 4
      %s103 = int_to_ptr.vmem [resolvable:$true] %s102
      %108 = dma.hbm_to_vmem [thread:$0]  %s101, 16384, %s103, [#allocation11], 128, 128, 8
    $region33: #{net72_forward.1} parent=1 // pred_fallthru
      _
    // Predicated region
    $region34: #{net72_forward.1} parent=1 // pred_check
      _
    $region35: #{net72_forward.1} parent=1 // pred_check_branch
      %110 = sbr.rel (0) target = $region37
    $region36: #{net72_forward.1} parent=1 // pred_region
      %112 = vsyncadd [#allocation14], 0
      %s114 = sshll.u32 %s8, 4
      %s115 = int_to_ptr.hbm [resolvable:$true] %s114
      %s116 = sshll.u32 [#allocation13], 4
      %s117 = int_to_ptr.vmem [resolvable:$true] %s116
      %119 = dma.hbm_to_vmem [thread:$0]  %s115, 32, %s117, [#allocation14]
    $region37: #{net72_forward.1} parent=1 // pred_fallthru
      _
    // Predicated region
    $region38: #{net72_forward.1} parent=1 // pred_check
      _
    $region39: #{net72_forward.1} parent=1 // pred_check_branch
      %121 = sbr.rel (0) target = $region41
    $region40: #{net72_forward.1} parent=1 // pred_region
      %123 = vsyncadd [#allocation14], 0
      %s124 = sshll.u32 %s9, 4
      %s125 = int_to_ptr.hbm [resolvable:$true] %s124
      %s126 = sshll.u32 [#allocation15], 4
      %s127 = int_to_ptr.vmem [resolvable:$true] %s126
      %132 = dma.hbm_to_vmem [thread:$0]  %s125, 2048, %s127, [#allocation14], 64, 64, 4
    $region41: #{net72_forward.1} parent=1 // pred_fallthru
      _
    // Predicated region
    $region42: #{net72_forward.1} parent=1 // pred_check
      _
    $region43: #{net72_forward.1} parent=1 // pred_check_branch
      %134 = sbr.rel (0) target = $region45
    $region44: #{net72_forward.1} parent=1 // pred_region
      %136 = vsyncadd [#allocation17], 0
      %s138 = sshll.u32 %s10, 4
      %s139 = int_to_ptr.hbm [resolvable:$true] %s138
      %s140 = sshll.u32 [#allocation16], 4
      %s141 = int_to_ptr.vmem [resolvable:$true] %s140
      %143 = dma.hbm_to_vmem [thread:$0]  %s139, 16, %s141, [#allocation17]
    $region45: #{net72_forward.1} parent=1 // pred_fallthru
      _
    // Predicated region
    $region46: #{net72_forward.1} parent=1 // pred_check
      _
    $region47: #{net72_forward.1} parent=1 // pred_check_branch
      %145 = sbr.rel (0) target = $region49
    $region48: #{net72_forward.1} parent=1 // pred_region
      %147 = dma.done [#allocation3], 6144
    $region49: #{net72_forward.1} parent=1 // pred_fallthru
      _
    // Predicated region
    $region50: #{net72_forward.1} parent=1 // pred_check
      _
    $region51: #{net72_forward.1} parent=1 // pred_check_branch
      %149 = sbr.rel (0) target = $region53
    $region52: #{net72_forward.1} parent=1 // pred_region
      %151 = dma.done [#allocation5], 128
    $region53: #{net72_forward.1} parent=1 // pred_fallthru
      _
    // Predicated region
    $region54: #{net72_forward.1} parent=1 // pred_check
      _
    $region55: #{net72_forward.1} parent=1 // pred_check_branch
      %153 = sbr.rel (0) target = $region57
    $region56: #{net72_forward.1} parent=1 // pred_region
      %155 = dma.done [#allocation5], 98304
    $region57: #{net72_forward.1} parent=1 // pred_fallthru
      _
    // Predicated region
    $region58: #{net72_forward.1} parent=1 // pred_check
      _
    $region59: #{net72_forward.1} parent=1 // pred_check_branch
      %157 = sbr.rel (0) target = $region61
    $region60: #{net72_forward.1} parent=1 // pred_region
      %159 = dma.done [#allocation8], 64
    $region61: #{net72_forward.1} parent=1 // pred_fallthru
      _
    // Predicated region
    $region62: #{net72_forward.1} parent=1 // pred_check
      _
    $region63: #{net72_forward.1} parent=1 // pred_check_branch
      %161 = sbr.rel (0) target = $region65
    $region64: #{net72_forward.1} parent=1 // pred_region
      %163 = dma.done [#allocation8], 24576
    $region65: #{net72_forward.1} parent=1 // pred_fallthru
      _
    // Predicated region
    $region66: #{net72_forward.1} parent=1 // pred_check
      _
    $region67: #{net72_forward.1} parent=1 // pred_check_branch
      %165 = sbr.rel (0) target = $region69
    $region68: #{net72_forward.1} parent=1 // pred_region
      %167 = dma.done [#allocation11], 32
    $region69: #{net72_forward.1} parent=1 // pred_fallthru
      _
    // Predicated region
    $region70: #{net72_forward.1} parent=1 // pred_check
      _
    $region71: #{net72_forward.1} parent=1 // pred_check_branch
      %169 = sbr.rel (0) target = $region73
    $region72: #{net72_forward.1} parent=1 // pred_region
      %171 = dma.done [#allocation11], 16384
    $region73: #{net72_forward.1} parent=1 // pred_fallthru
      _
    // Predicated region
    $region74: #{net72_forward.1} parent=1 // pred_check
      _
    $region75: #{net72_forward.1} parent=1 // pred_check_branch
      %173 = sbr.rel (0) target = $region77
    $region76: #{net72_forward.1} parent=1 // pred_region
      %175 = dma.done [#allocation14], 32
    $region77: #{net72_forward.1} parent=1 // pred_fallthru
      _
    // Predicated region
    $region78: #{net72_forward.1} parent=1 // pred_check
      _
    $region79: #{net72_forward.1} parent=1 // pred_check_branch
      %177 = sbr.rel (0) target = $region81
    $region80: #{net72_forward.1} parent=1 // pred_region
      %179 = dma.done [#allocation14], 2048
    $region81: #{net72_forward.1} parent=1 // pred_fallthru
      _
    // Predicated region
    $region82: #{net72_forward.1} parent=1 // pred_check
      _
    $region83: #{net72_forward.1} parent=1 // pred_check_branch
      %181 = sbr.rel (0) target = $region85
    $region84: #{net72_forward.1} parent=1 // pred_region
      %183 = dma.done [#allocation17], 16
    $region85: #{net72_forward.1} parent=1 // pred_fallthru
      _
    %v185 = vld [vmem:[%s0] sm:$0xff]
    %v186 = vld [vmem:[%s0 + $0x8] sm:$0xff]
    %v187 = vld [vmem:[%s0 + $0x10] sm:$0xff]
    %v188 = vld [vmem:[%s0 + $0x18] sm:$0xff]
    %v189 = vld [vmem:[%s0 + $0x20] sm:$0xff]
    %v190 = vld [vmem:[%s0 + $0x28] sm:$0xff]
    %v191 = vld [vmem:[%s0 + $0x30] sm:$0xff]
    %v192 = vld [vmem:[%s0 + $0x38] sm:$0xff]
    %v193 = vld [vmem:[%s0 + $0x40] sm:$0xff]
    %v194 = vld [vmem:[%s0 + $0x48] sm:$0xff]
    %v195 = vld [vmem:[%s0 + $0x50] sm:$0xff]
    %v196 = vld [vmem:[%s0 + $0x58] sm:$0xff]
    %v197 = vld [vmem:[%s0 + $0x60] sm:$0xff]
    %v198 = vld [vmem:[%s0 + $0x68] sm:$0xff]
    %v199 = vld [vmem:[%s0 + $0x70] sm:$0xff]
    %v200 = vld [vmem:[%s0 + $0x78] sm:$0xff]
    %v201 = vld [vmem:[%s0 + $0x80] sm:$0xff]
    %v202 = vld [vmem:[%s0 + $0x88] sm:$0xff]
    %v203 = vld [vmem:[%s0 + $0x90] sm:$0xff]
    %v204 = vld [vmem:[%s0 + $0x98] sm:$0xff]
    %v205 = vld [vmem:[%s0 + $0xa0] sm:$0xff]
    %v206 = vld [vmem:[%s0 + $0xa8] sm:$0xff]
    %v207 = vld [vmem:[%s0 + $0xb0] sm:$0xff]
    %v208 = vld [vmem:[%s0 + $0xb8] sm:$0xff]
    %v209 = vld [vmem:[%s0 + $0xc0] sm:$0xff]
    %v210 = vld [vmem:[%s0 + $0xc8] sm:$0xff]
    %v211 = vld [vmem:[%s0 + $0xd0] sm:$0xff]
    %v212 = vld [vmem:[%s0 + $0xd8] sm:$0xff]
    %v213 = vld [vmem:[%s0 + $0xe0] sm:$0xff]
    %v214 = vld [vmem:[%s0 + $0xe8] sm:$0xff]
    %v215 = vld [vmem:[%s0 + $0xf0] sm:$0xff]
    %v216 = vld [vmem:[%s0 + $0xf8] sm:$0xff]
    %v217 = vrot.slane %v193, 4
    %vm218 = vcmask 1047556
    %v219 = vsel %vm218, %v217, %v185
    %v220 = vrot.slane %v185, 4
    %v221 = vsel %vm218, %v193, %v220
    %v223 = vunpack.c.l.s4 1983009808
    %v224 = vunpack.c.0.s8 %v223
    %v225 = vperm.slane %v219, %v224
    %v227 = vunpack.c.l.s4 1983009808
    %v228 = vunpack.c.0.s8 %v227
    %v229 = vperm.slane %v221, %v228
    %v230 = vrot.slane %v197, 4
    %v231 = vsel %vm218, %v230, %v189
    %v232 = vrot.slane %v189, 4
    %v233 = vsel %vm218, %v197, %v232
    %v235 = vunpack.c.l.s4 1983009808
    %v236 = vunpack.c.0.s8 %v235
    %v237 = vperm.slane %v231, %v236
    %v239 = vunpack.c.l.s4 1983009808
    %v240 = vunpack.c.0.s8 %v239
    %v241 = vperm.slane %v233, %v240
    %v242 = vrot.slane %v209, 4
    %v243 = vsel %vm218, %v242, %v201
    %v244 = vrot.slane %v201, 4
    %v245 = vsel %vm218, %v209, %v244
    %v247 = vunpack.c.l.s4 1983009808
    %v248 = vunpack.c.0.s8 %v247
    %v249 = vperm.slane %v243, %v248
    %v251 = vunpack.c.l.s4 1983009808
    %v252 = vunpack.c.0.s8 %v251
    %v253 = vperm.slane %v245, %v252
    %v254 = vrot.slane %v213, 4
    %v255 = vsel %vm218, %v254, %v205
    %v256 = vrot.slane %v205, 4
    %v257 = vsel %vm218, %v213, %v256
    %v259 = vunpack.c.l.s4 1983009808
    %v260 = vunpack.c.0.s8 %v259
    %v261 = vperm.slane %v255, %v260
    %v263 = vunpack.c.l.s4 1983009808
    %v264 = vunpack.c.0.s8 %v263
    %v265 = vperm.slane %v257, %v264
    %v266 = vrot.slane %v237, 4
    %v267 = vsel %vm218, %v266, %v225
    %v268 = vrot.slane %v225, 4
    %v269 = vsel %vm218, %v237, %v268
    %v271 = vunpack.c.l.s4 1934713408
    %v272 = vunpack.c.0.s8 %v271
    %v273 = vperm.slane %v267, %v272
    %v275 = vunpack.c.l.s4 1934713408
    %v276 = vunpack.c.0.s8 %v275
    %v277 = vperm.slane %v269, %v276
    %v278 = vrot.slane %v241, 4
    %v279 = vsel %vm218, %v278, %v229
    %v280 = vrot.slane %v229, 4
    %v281 = vsel %vm218, %v241, %v280
    %v283 = vunpack.c.l.s4 1934713408
    %v284 = vunpack.c.0.s8 %v283
    %v285 = vperm.slane %v279, %v284
    %v287 = vunpack.c.l.s4 1934713408
    %v288 = vunpack.c.0.s8 %v287
    %v289 = vperm.slane %v281, %v288
    %v290 = vrot.slane %v261, 4
    %v291 = vsel %vm218, %v290, %v249
    %v292 = vrot.slane %v249, 4
    %v293 = vsel %vm218, %v261, %v292
    %v295 = vunpack.c.l.s4 1934713408
    %v296 = vunpack.c.0.s8 %v295
    %v297 = vperm.slane %v291, %v296
    %v299 = vunpack.c.l.s4 1934713408
    %v300 = vunpack.c.0.s8 %v299
    %v301 = vperm.slane %v293, %v300
    %v302 = vrot.slane %v265, 4
    %v303 = vsel %vm218, %v302, %v253
    %v304 = vrot.slane %v253, 4
    %v305 = vsel %vm218, %v265, %v304
    %v307 = vunpack.c.l.s4 1934713408
    %v308 = vunpack.c.0.s8 %v307
    %v309 = vperm.slane %v303, %v308
    %v311 = vunpack.c.l.s4 1934713408
    %v312 = vunpack.c.0.s8 %v311
    %v313 = vperm.slane %v305, %v312
    %v314 = vrot.slane %v297, 4
    %v315 = vsel %vm218, %v314, %v273
    %v316 = vrot.slane %v273, 4
    %v317 = vsel %vm218, %v297, %v316
    %v318 = vrot.slane %v301, 4
    %v319 = vsel %vm218, %v318, %v277
    %v320 = vrot.slane %v277, 4
    %v321 = vsel %vm218, %v301, %v320
    %v322 = vrot.slane %v309, 4
    %v323 = vsel %vm218, %v322, %v285
    %v324 = vrot.slane %v285, 4
    %v325 = vsel %vm218, %v309, %v324
    %v326 = vrot.slane %v313, 4
    %v327 = vsel %vm218, %v326, %v289
    %v328 = vrot.slane %v289, 4
    %v329 = vsel %vm218, %v313, %v328
    %v330 = vrot.slane %v194, 4
    %v331 = vsel %vm218, %v330, %v186
    %v332 = vrot.slane %v186, 4
    %v333 = vsel %vm218, %v194, %v332
    %v335 = vunpack.c.l.s4 1983009808
    %v336 = vunpack.c.0.s8 %v335
    %v337 = vperm.slane %v331, %v336
    %v339 = vunpack.c.l.s4 1983009808
    %v340 = vunpack.c.0.s8 %v339
    %v341 = vperm.slane %v333, %v340
    %v342 = vrot.slane %v198, 4
    %v343 = vsel %vm218, %v342, %v190
    %v344 = vrot.slane %v190, 4
    %v345 = vsel %vm218, %v198, %v344
    %v347 = vunpack.c.l.s4 1983009808
    %v348 = vunpack.c.0.s8 %v347
    %v349 = vperm.slane %v343, %v348
    %v351 = vunpack.c.l.s4 1983009808
    %v352 = vunpack.c.0.s8 %v351
    %v353 = vperm.slane %v345, %v352
    %v354 = vrot.slane %v210, 4
    %v355 = vsel %vm218, %v354, %v202
    %v356 = vrot.slane %v202, 4
    %v357 = vsel %vm218, %v210, %v356
    %v359 = vunpack.c.l.s4 1983009808
    %v360 = vunpack.c.0.s8 %v359
    %v361 = vperm.slane %v355, %v360
    %v363 = vunpack.c.l.s4 1983009808
    %v364 = vunpack.c.0.s8 %v363
    %v365 = vperm.slane %v357, %v364
    %v366 = vrot.slane %v214, 4
    %v367 = vsel %vm218, %v366, %v206
    %v368 = vrot.slane %v206, 4
    %v369 = vsel %vm218, %v214, %v368
    %v371 = vunpack.c.l.s4 1983009808
    %v372 = vunpack.c.0.s8 %v371
    %v373 = vperm.slane %v367, %v372
    %v375 = vunpack.c.l.s4 1983009808
    %v376 = vunpack.c.0.s8 %v375
    %v377 = vperm.slane %v369, %v376
    %v378 = vrot.slane %v349, 4
    %v379 = vsel %vm218, %v378, %v337
    %v380 = vrot.slane %v337, 4
    %v381 = vsel %vm218, %v349, %v380
    %v383 = vunpack.c.l.s4 1934713408
    %v384 = vunpack.c.0.s8 %v383
    %v385 = vperm.slane %v379, %v384
    %v387 = vunpack.c.l.s4 1934713408
    %v388 = vunpack.c.0.s8 %v387
    %v389 = vperm.slane %v381, %v388
    %v390 = vrot.slane %v353, 4
    %v391 = vsel %vm218, %v390, %v341
    %v392 = vrot.slane %v341, 4
    %v393 = vsel %vm218, %v353, %v392
    %v395 = vunpack.c.l.s4 1934713408
    %v396 = vunpack.c.0.s8 %v395
    %v397 = vperm.slane %v391, %v396
    %v399 = vunpack.c.l.s4 1934713408
    %v400 = vunpack.c.0.s8 %v399
    %v401 = vperm.slane %v393, %v400
    %v402 = vrot.slane %v373, 4
    %v403 = vsel %vm218, %v402, %v361
    %v404 = vrot.slane %v361, 4
    %v405 = vsel %vm218, %v373, %v404
    %v407 = vunpack.c.l.s4 1934713408
    %v408 = vunpack.c.0.s8 %v407
    %v409 = vperm.slane %v403, %v408
    %v411 = vunpack.c.l.s4 1934713408
    %v412 = vunpack.c.0.s8 %v411
    %v413 = vperm.slane %v405, %v412
    %v414 = vrot.slane %v377, 4
    %v415 = vsel %vm218, %v414, %v365
    %v416 = vrot.slane %v365, 4
    %v417 = vsel %vm218, %v377, %v416
    %v419 = vunpack.c.l.s4 1934713408
    %v420 = vunpack.c.0.s8 %v419
    %v421 = vperm.slane %v415, %v420
    %v423 = vunpack.c.l.s4 1934713408
    %v424 = vunpack.c.0.s8 %v423
    %v425 = vperm.slane %v417, %v424
    %v426 = vrot.slane %v409, 4
    %v427 = vsel %vm218, %v426, %v385
    %v428 = vrot.slane %v385, 4
    %v429 = vsel %vm218, %v409, %v428
    %v430 = vrot.slane %v413, 4
    %v431 = vsel %vm218, %v430, %v389
    %v432 = vrot.slane %v389, 4
    %v433 = vsel %vm218, %v413, %v432
    %v434 = vrot.slane %v421, 4
    %v435 = vsel %vm218, %v434, %v397
    %v436 = vrot.slane %v397, 4
    %v437 = vsel %vm218, %v421, %v436
    %v438 = vrot.slane %v425, 4
    %v439 = vsel %vm218, %v438, %v401
    %v440 = vrot.slane %v401, 4
    %v441 = vsel %vm218, %v425, %v440
    %v442 = vrot.slane %v195, 4
    %v443 = vsel %vm218, %v442, %v187
    %v444 = vrot.slane %v187, 4
    %v445 = vsel %vm218, %v195, %v444
    %v447 = vunpack.c.l.s4 1983009808
    %v448 = vunpack.c.0.s8 %v447
    %v449 = vperm.slane %v443, %v448
    %v451 = vunpack.c.l.s4 1983009808
    %v452 = vunpack.c.0.s8 %v451
    %v453 = vperm.slane %v445, %v452
    %v454 = vrot.slane %v199, 4
    %v455 = vsel %vm218, %v454, %v191
    %v456 = vrot.slane %v191, 4
    %v457 = vsel %vm218, %v199, %v456
    %v459 = vunpack.c.l.s4 1983009808
    %v460 = vunpack.c.0.s8 %v459
    %v461 = vperm.slane %v455, %v460
    %v463 = vunpack.c.l.s4 1983009808
    %v464 = vunpack.c.0.s8 %v463
    %v465 = vperm.slane %v457, %v464
    %v466 = vrot.slane %v211, 4
    %v467 = vsel %vm218, %v466, %v203
    %v468 = vrot.slane %v203, 4
    %v469 = vsel %vm218, %v211, %v468
    %v471 = vunpack.c.l.s4 1983009808
    %v472 = vunpack.c.0.s8 %v471
    %v473 = vperm.slane %v467, %v472
    %v475 = vunpack.c.l.s4 1983009808
    %v476 = vunpack.c.0.s8 %v475
    %v477 = vperm.slane %v469, %v476
    %v478 = vrot.slane %v215, 4
    %v479 = vsel %vm218, %v478, %v207
    %v480 = vrot.slane %v207, 4
    %v481 = vsel %vm218, %v215, %v480
    %v483 = vunpack.c.l.s4 1983009808
    %v484 = vunpack.c.0.s8 %v483
    %v485 = vperm.slane %v479, %v484
    %v487 = vunpack.c.l.s4 1983009808
    %v488 = vunpack.c.0.s8 %v487
    %v489 = vperm.slane %v481, %v488
    %v490 = vrot.slane %v461, 4
    %v491 = vsel %vm218, %v490, %v449
    %v492 = vrot.slane %v449, 4
    %v493 = vsel %vm218, %v461, %v492
    %v495 = vunpack.c.l.s4 1934713408
    %v496 = vunpack.c.0.s8 %v495
    %v497 = vperm.slane %v491, %v496
    %v499 = vunpack.c.l.s4 1934713408
    %v500 = vunpack.c.0.s8 %v499
    %v501 = vperm.slane %v493, %v500
    %v502 = vrot.slane %v465, 4
    %v503 = vsel %vm218, %v502, %v453
    %v504 = vrot.slane %v453, 4
    %v505 = vsel %vm218, %v465, %v504
    %v507 = vunpack.c.l.s4 1934713408
    %v508 = vunpack.c.0.s8 %v507
    %v509 = vperm.slane %v503, %v508
    %v511 = vunpack.c.l.s4 1934713408
    %v512 = vunpack.c.0.s8 %v511
    %v513 = vperm.slane %v505, %v512
    %v514 = vrot.slane %v485, 4
    %v515 = vsel %vm218, %v514, %v473
    %v516 = vrot.slane %v473, 4
    %v517 = vsel %vm218, %v485, %v516
    %v519 = vunpack.c.l.s4 1934713408
    %v520 = vunpack.c.0.s8 %v519
    %v521 = vperm.slane %v515, %v520
    %v523 = vunpack.c.l.s4 1934713408
    %v524 = vunpack.c.0.s8 %v523
    %v525 = vperm.slane %v517, %v524
    %v526 = vrot.slane %v489, 4
    %v527 = vsel %vm218, %v526, %v477
    %v528 = vrot.slane %v477, 4
    %v529 = vsel %vm218, %v489, %v528
    %v531 = vunpack.c.l.s4 1934713408
    %v532 = vunpack.c.0.s8 %v531
    %v533 = vperm.slane %v527, %v532
    %v535 = vunpack.c.l.s4 1934713408
    %v536 = vunpack.c.0.s8 %v535
    %v537 = vperm.slane %v529, %v536
    %v538 = vrot.slane %v521, 4
    %v539 = vsel %vm218, %v538, %v497
    %v540 = vrot.slane %v497, 4
    %v541 = vsel %vm218, %v521, %v540
    %v542 = vrot.slane %v525, 4
    %v543 = vsel %vm218, %v542, %v501
    %v544 = vrot.slane %v501, 4
    %v545 = vsel %vm218, %v525, %v544
    %v546 = vrot.slane %v533, 4
    %v547 = vsel %vm218, %v546, %v509
    %v548 = vrot.slane %v509, 4
    %v549 = vsel %vm218, %v533, %v548
    %v550 = vrot.slane %v537, 4
    %v551 = vsel %vm218, %v550, %v513
    %v552 = vrot.slane %v513, 4
    %v553 = vsel %vm218, %v537, %v552
    %v554 = vrot.slane %v196, 4
    %v555 = vsel %vm218, %v554, %v188
    %v556 = vrot.slane %v188, 4
    %v557 = vsel %vm218, %v196, %v556
    %v559 = vunpack.c.l.s4 1983009808
    %v560 = vunpack.c.0.s8 %v559
    %v561 = vperm.slane %v555, %v560
    %v563 = vunpack.c.l.s4 1983009808
    %v564 = vunpack.c.0.s8 %v563
    %v565 = vperm.slane %v557, %v564
    %v566 = vrot.slane %v200, 4
    %v567 = vsel %vm218, %v566, %v192
    %v568 = vrot.slane %v192, 4
    %v569 = vsel %vm218, %v200, %v568
    %v571 = vunpack.c.l.s4 1983009808
    %v572 = vunpack.c.0.s8 %v571
    %v573 = vperm.slane %v567, %v572
    %v575 = vunpack.c.l.s4 1983009808
    %v576 = vunpack.c.0.s8 %v575
    %v577 = vperm.slane %v569, %v576
    %v578 = vrot.slane %v212, 4
    %v579 = vsel %vm218, %v578, %v204
    %v580 = vrot.slane %v204, 4
    %v581 = vsel %vm218, %v212, %v580
    %v583 = vunpack.c.l.s4 1983009808
    %v584 = vunpack.c.0.s8 %v583
    %v585 = vperm.slane %v579, %v584
    %v587 = vunpack.c.l.s4 1983009808
    %v588 = vunpack.c.0.s8 %v587
    %v589 = vperm.slane %v581, %v588
    %v590 = vrot.slane %v216, 4
    %v591 = vsel %vm218, %v590, %v208
    %v592 = vrot.slane %v208, 4
    %v593 = vsel %vm218, %v216, %v592
    %v595 = vunpack.c.l.s4 1983009808
    %v596 = vunpack.c.0.s8 %v595
    %v597 = vperm.slane %v591, %v596
    %v599 = vunpack.c.l.s4 1983009808
    %v600 = vunpack.c.0.s8 %v599
    %v601 = vperm.slane %v593, %v600
    %v602 = vrot.slane %v573, 4
    %v603 = vsel %vm218, %v602, %v561
    %v604 = vrot.slane %v561, 4
    %v605 = vsel %vm218, %v573, %v604
    %v607 = vunpack.c.l.s4 1934713408
    %v608 = vunpack.c.0.s8 %v607
    %v609 = vperm.slane %v603, %v608
    %v611 = vunpack.c.l.s4 1934713408
    %v612 = vunpack.c.0.s8 %v611
    %v613 = vperm.slane %v605, %v612
    %v614 = vrot.slane %v577, 4
    %v615 = vsel %vm218, %v614, %v565
    %v616 = vrot.slane %v565, 4
    %v617 = vsel %vm218, %v577, %v616
    %v619 = vunpack.c.l.s4 1934713408
    %v620 = vunpack.c.0.s8 %v619
    %v621 = vperm.slane %v615, %v620
    %v623 = vunpack.c.l.s4 1934713408
    %v624 = vunpack.c.0.s8 %v623
    %v625 = vperm.slane %v617, %v624
    %v626 = vrot.slane %v597, 4
    %v627 = vsel %vm218, %v626, %v585
    %v628 = vrot.slane %v585, 4
    %v629 = vsel %vm218, %v597, %v628
    %v631 = vunpack.c.l.s4 1934713408
    %v632 = vunpack.c.0.s8 %v631
    %v633 = vperm.slane %v627, %v632
    %v635 = vunpack.c.l.s4 1934713408
    %v636 = vunpack.c.0.s8 %v635
    %v637 = vperm.slane %v629, %v636
    %v638 = vrot.slane %v601, 4
    %v639 = vsel %vm218, %v638, %v589
    %v640 = vrot.slane %v589, 4
    %v641 = vsel %vm218, %v601, %v640
    %v643 = vunpack.c.l.s4 1934713408
    %v644 = vunpack.c.0.s8 %v643
    %v645 = vperm.slane %v639, %v644
    %v647 = vunpack.c.l.s4 1934713408
    %v648 = vunpack.c.0.s8 %v647
    %v649 = vperm.slane %v641, %v648
    %v650 = vrot.slane %v633, 4
    %v651 = vsel %vm218, %v650, %v609
    %v652 = vrot.slane %v609, 4
    %v653 = vsel %vm218, %v633, %v652
    %v654 = vrot.slane %v637, 4
    %v655 = vsel %vm218, %v654, %v613
    %v656 = vrot.slane %v613, 4
    %v657 = vsel %vm218, %v637, %v656
    %v658 = vrot.slane %v645, 4
    %v659 = vsel %vm218, %v658, %v621
    %v660 = vrot.slane %v621, 4
    %v661 = vsel %vm218, %v645, %v660
    %v662 = vrot.slane %v649, 4
    %v663 = vsel %vm218, %v662, %v625
    %v664 = vrot.slane %v625, 4
    %v665 = vsel %vm218, %v649, %v664
    %682 = vrot.lane.b32.xlu0 %v315, 32
    %v683 = vpop.permute.xlu0 %682
    %684 = vrot.lane.b32.xlu0 %v319, 32
    %v685 = vpop.permute.xlu0 %684
    %686 = vrot.lane.b32.xlu0 %v323, 32
    %v687 = vpop.permute.xlu0 %686
    %688 = vrot.lane.b32.xlu0 %v327, 32
    %v689 = vpop.permute.xlu0 %688
    %690 = vrot.lane.b32.xlu0 %v427, 32
    %v691 = vpop.permute.xlu0 %690
    %692 = vrot.lane.b32.xlu0 %v431, 32
    %v693 = vpop.permute.xlu0 %692
    %694 = vrot.lane.b32.xlu0 %v435, 32
    %v695 = vpop.permute.xlu0 %694
    %696 = vrot.lane.b32.xlu0 %v439, 32
    %v697 = vpop.permute.xlu0 %696
    %698 = vrot.lane.b32.xlu0 %v539, 32
    %v699 = vpop.permute.xlu0 %698
    %700 = vrot.lane.b32.xlu0 %v543, 32
    %v701 = vpop.permute.xlu0 %700
    %702 = vrot.lane.b32.xlu0 %v547, 32
    %v703 = vpop.permute.xlu0 %702
    %704 = vrot.lane.b32.xlu0 %v551, 32
    %v705 = vpop.permute.xlu0 %704
    %706 = vrot.lane.b32.xlu0 %v651, 32
    %v707 = vpop.permute.xlu0 %706
    %708 = vrot.lane.b32.xlu0 %v655, 32
    %v709 = vpop.permute.xlu0 %708
    %710 = vrot.lane.b32.xlu0 %v659, 32
    %v711 = vpop.permute.xlu0 %710
    %712 = vrot.lane.b32.xlu0 %v663, 32
    %v713 = vpop.permute.xlu0 %712
    %746 = vrot.lane.b32.xlu0 %v317, 64
    %v747 = vpop.permute.xlu0 %746
    %748 = vrot.lane.b32.xlu0 %v321, 64
    %v749 = vpop.permute.xlu0 %748
    %750 = vrot.lane.b32.xlu0 %v325, 64
    %v751 = vpop.permute.xlu0 %750
    %752 = vrot.lane.b32.xlu0 %v329, 64
    %v753 = vpop.permute.xlu0 %752
    %754 = vrot.lane.b32.xlu0 %v429, 64
    %v755 = vpop.permute.xlu0 %754
    %756 = vrot.lane.b32.xlu0 %v433, 64
    %v757 = vpop.permute.xlu0 %756
    %758 = vrot.lane.b32.xlu0 %v437, 64
    %v759 = vpop.permute.xlu0 %758
    %760 = vrot.lane.b32.xlu0 %v441, 64
    %v761 = vpop.permute.xlu0 %760
    %762 = vrot.lane.b32.xlu0 %v541, 64
    %v763 = vpop.permute.xlu0 %762
    %764 = vrot.lane.b32.xlu0 %v545, 64
    %v765 = vpop.permute.xlu0 %764
    %766 = vrot.lane.b32.xlu0 %v549, 64
    %v767 = vpop.permute.xlu0 %766
    %768 = vrot.lane.b32.xlu0 %v553, 64
    %v769 = vpop.permute.xlu0 %768
    %770 = vrot.lane.b32.xlu0 %v653, 64
    %v771 = vpop.permute.xlu0 %770
    %772 = vrot.lane.b32.xlu0 %v657, 64
    %v773 = vpop.permute.xlu0 %772
    %774 = vrot.lane.b32.xlu0 %v661, 64
    %v775 = vpop.permute.xlu0 %774
    %776 = vrot.lane.b32.xlu0 %v665, 64
    %v777 = vpop.permute.xlu0 %776
    %vm794 = vcmask 261120
    %v795 = vsel %vm794, 0.0, %v683
    %v796 = vsel %vm794, %v317, %v685
    %v797 = vsel %vm794, %v321, %v687
    %v798 = vsel %vm794, %v325, %v689
    %v799 = vsel %vm794, %v329, %v691
    %v800 = vsel %vm794, %v429, %v693
    %v801 = vsel %vm794, %v433, %v695
    %v802 = vsel %vm794, %v437, %v697
    %v803 = vsel %vm794, %v441, %v699
    %v804 = vsel %vm794, %v541, %v701
    %v805 = vsel %vm794, %v545, %v703
    %v806 = vsel %vm794, %v549, %v705
    %v807 = vsel %vm794, %v553, %v707
    %v808 = vsel %vm794, %v653, %v709
    %v809 = vsel %vm794, %v657, %v711
    %v810 = vsel %vm794, %v661, %v713
    %vm811 = vcmask 523264
    %v812 = vsel %vm811, %v795, %v747
    %v813 = vsel %vm811, %v796, %v749
    %v814 = vsel %vm811, %v797, %v751
    %v815 = vsel %vm811, %v798, %v753
    %v816 = vsel %vm811, %v799, %v755
    %v817 = vsel %vm811, %v800, %v757
    %v818 = vsel %vm811, %v801, %v759
    %v819 = vsel %vm811, %v802, %v761
    %v820 = vsel %vm811, %v803, %v763
    %v821 = vsel %vm811, %v804, %v765
    %v822 = vsel %vm811, %v805, %v767
    %v823 = vsel %vm811, %v806, %v769
    %v824 = vsel %vm811, %v807, %v771
    %v825 = vsel %vm811, %v808, %v773
    %v826 = vsel %vm811, %v809, %v775
    %v827 = vsel %vm811, %v810, %v777
    %v828 = vpack.c.bf16 %v813, %v812
    %v829 = vpack.c.bf16 %v815, %v814
    %v830 = vpack.c.bf16 %v817, %v816
    %v831 = vpack.c.bf16 %v819, %v818
    %v832 = vpack.c.bf16 %v821, %v820
    %v833 = vpack.c.bf16 %v823, %v822
    %v834 = vpack.c.bf16 %v825, %v824
    %v835 = vpack.c.bf16 %v827, %v826
    %v836 = vld [vmem:[#allocation2] sm:$0xff]
    %v837 = vld [vmem:[#allocation2 + $0x8] sm:$0xff]
    %v838 = vld [vmem:[#allocation2 + $0x10] sm:$0xff]
    %v839 = vld [vmem:[#allocation2 + $0x18] sm:$0xff]
    %v840 = vld [vmem:[#allocation2 + $0x20] sm:$0xff]
    %v841 = vld [vmem:[#allocation2 + $0x28] sm:$0xff]
    %v842 = vld [vmem:[#allocation2 + $0x30] sm:$0xff]
    %v843 = vld [vmem:[#allocation2 + $0x38] sm:$0xff]
    %v844 = vld [vmem:[#allocation2 + $0x40] sm:$0xff]
    %v845 = vld [vmem:[#allocation2 + $0x48] sm:$0xff]
    %v846 = vld [vmem:[#allocation2 + $0x50] sm:$0xff]
    %v847 = vld [vmem:[#allocation2 + $0x58] sm:$0xff]
    %v848 = vld [vmem:[#allocation2 + $0x60] sm:$0xff]
    %v849 = vld [vmem:[#allocation2 + $0x68] sm:$0xff]
    %v850 = vld [vmem:[#allocation2 + $0x70] sm:$0xff]
    %v851 = vld [vmem:[#allocation2 + $0x78] sm:$0xff]
    %v852 = vld [vmem:[#allocation2 + $0x80] sm:$0xff]
    %v853 = vld [vmem:[#allocation2 + $0x88] sm:$0xff]
    %v854 = vld [vmem:[#allocation2 + $0x90] sm:$0xff]
    %v855 = vld [vmem:[#allocation2 + $0x98] sm:$0xff]
    %v856 = vld [vmem:[#allocation2 + $0xa0] sm:$0xff]
    %v857 = vld [vmem:[#allocation2 + $0xa8] sm:$0xff]
    %v858 = vld [vmem:[#allocation2 + $0xb0] sm:$0xff]
    %v859 = vld [vmem:[#allocation2 + $0xb8] sm:$0xff]
    %v860 = vld [vmem:[#allocation2 + $0xc0] sm:$0xff]
    %v861 = vld [vmem:[#allocation2 + $0xc8] sm:$0xff]
    %v862 = vld [vmem:[#allocation2 + $0xd0] sm:$0xff]
    %v863 = vld [vmem:[#allocation2 + $0xd8] sm:$0xff]
    %v864 = vld [vmem:[#allocation2 + $0xe0] sm:$0xff]
    %v865 = vld [vmem:[#allocation2 + $0xe8] sm:$0xff]
    %v866 = vld [vmem:[#allocation2 + $0xf0] sm:$0xff]
    %v867 = vld [vmem:[#allocation2 + $0xf8] sm:$0xff]
    %v868 = vld [vmem:[#allocation2 + $0x100] sm:$0xff]
    %v869 = vld [vmem:[#allocation2 + $0x108] sm:$0xff]
    %v870 = vld [vmem:[#allocation2 + $0x110] sm:$0xff]
    %v871 = vld [vmem:[#allocation2 + $0x118] sm:$0xff]
    %v872 = vld [vmem:[#allocation2 + $0x120] sm:$0xff]
    %v873 = vld [vmem:[#allocation2 + $0x128] sm:$0xff]
    %v874 = vld [vmem:[#allocation2 + $0x130] sm:$0xff]
    %v875 = vld [vmem:[#allocation2 + $0x138] sm:$0xff]
    %v876 = vld [vmem:[#allocation2 + $0x140] sm:$0xff]
    %v877 = vld [vmem:[#allocation2 + $0x148] sm:$0xff]
    %v878 = vld [vmem:[#allocation2 + $0x150] sm:$0xff]
    %v879 = vld [vmem:[#allocation2 + $0x158] sm:$0xff]
    %v880 = vld [vmem:[#allocation2 + $0x160] sm:$0xff]
    %v881 = vld [vmem:[#allocation2 + $0x168] sm:$0xff]
    %v882 = vld [vmem:[#allocation2 + $0x170] sm:$0xff]
    %v883 = vld [vmem:[#allocation2 + $0x178] sm:$0xff]
    %v884 = vld [vmem:[#allocation4] sm:$0xff]
    %v886 = vperm.slane %v884, 0
    %v887 = vperm.slane %v884, 1
    %v888 = vperm.slane %v884, 2
    %v889 = vperm.slane %v884, 3
    %v890 = vperm.slane %v884, 4
    %v891 = vperm.slane %v884, 5
    %v892 = vperm.slane %v884, 6
    %v893 = vperm.slane %v884, 7
    %v950 = vunpack.c.l.b16 %v836
    %v951 = vunpack.c.h.b16 %v836
    %v952 = vunpack.c.l.b16 %v837
    %v953 = vunpack.c.h.b16 %v837
    %v954 = vunpack.c.l.b16 %v838
    %v955 = vunpack.c.h.b16 %v838
    %v956 = vunpack.c.l.b16 %v839
    %v957 = vunpack.c.h.b16 %v839
    %v958 = vunpack.c.l.b16 %v840
    %v959 = vunpack.c.h.b16 %v840
    %v960 = vunpack.c.l.b16 %v841
    %v961 = vunpack.c.h.b16 %v841
    %v962 = vunpack.c.l.b16 %v842
    %v963 = vunpack.c.h.b16 %v842
    %v964 = vunpack.c.l.b16 %v843
    %v965 = vunpack.c.h.b16 %v843
    %v966 = vunpack.c.l.b16 %v844
    %v967 = vunpack.c.h.b16 %v844
    %v968 = vunpack.c.l.b16 %v845
    %v969 = vunpack.c.h.b16 %v845
    %v970 = vunpack.c.l.b16 %v846
    %v971 = vunpack.c.h.b16 %v846
    %v972 = vunpack.c.l.b16 %v847
    %v973 = vunpack.c.h.b16 %v847
    %v974 = vunpack.c.l.b16 %v848
    %v975 = vunpack.c.h.b16 %v848
    %v976 = vunpack.c.l.b16 %v849
    %v977 = vunpack.c.h.b16 %v849
    %v978 = vunpack.c.l.b16 %v850
    %v979 = vunpack.c.h.b16 %v850
    %v980 = vunpack.c.l.b16 %v851
    %v981 = vunpack.c.h.b16 %v851
    %v982 = vunpack.c.l.b16 %v852
    %v983 = vunpack.c.h.b16 %v852
    %v984 = vunpack.c.l.b16 %v853
    %v985 = vunpack.c.h.b16 %v853
    %v986 = vunpack.c.l.b16 %v854
    %v987 = vunpack.c.h.b16 %v854
    %v988 = vunpack.c.l.b16 %v855
    %v989 = vunpack.c.h.b16 %v855
    %v990 = vunpack.c.l.b16 %v856
    %v991 = vunpack.c.h.b16 %v856
    %v992 = vunpack.c.l.b16 %v857
    %v993 = vunpack.c.h.b16 %v857
    %v994 = vunpack.c.l.b16 %v858
    %v995 = vunpack.c.h.b16 %v858
    %v996 = vunpack.c.l.b16 %v859
    %v997 = vunpack.c.h.b16 %v859
    %v998 = vunpack.c.l.b16 %v860
    %v999 = vunpack.c.h.b16 %v860
    %v1000 = vunpack.c.l.b16 %v861
    %v1001 = vunpack.c.h.b16 %v861
    %v1002 = vunpack.c.l.b16 %v862
    %v1003 = vunpack.c.h.b16 %v862
    %v1004 = vunpack.c.l.b16 %v863
    %v1005 = vunpack.c.h.b16 %v863
    %v1006 = vunpack.c.l.b16 %v864
    %v1007 = vunpack.c.h.b16 %v864
    %v1008 = vunpack.c.l.b16 %v865
    %v1009 = vunpack.c.h.b16 %v865
    %v1010 = vunpack.c.l.b16 %v866
    %v1011 = vunpack.c.h.b16 %v866
    %v1012 = vunpack.c.l.b16 %v867
    %v1013 = vunpack.c.h.b16 %v867
    %v1014 = vunpack.c.l.b16 %v868
    %v1015 = vunpack.c.h.b16 %v868
    %v1016 = vunpack.c.l.b16 %v869
    %v1017 = vunpack.c.h.b16 %v869
    %v1018 = vunpack.c.l.b16 %v870
    %v1019 = vunpack.c.h.b16 %v870
    %v1020 = vunpack.c.l.b16 %v871
    %v1021 = vunpack.c.h.b16 %v871
    %v1022 = vunpack.c.l.b16 %v872
    %v1023 = vunpack.c.h.b16 %v872
    %v1024 = vunpack.c.l.b16 %v873
    %v1025 = vunpack.c.h.b16 %v873
    %v1026 = vunpack.c.l.b16 %v874
    %v1027 = vunpack.c.h.b16 %v874
    %v1028 = vunpack.c.l.b16 %v875
    %v1029 = vunpack.c.h.b16 %v875
    %v1030 = vunpack.c.l.b16 %v876
    %v1031 = vunpack.c.h.b16 %v876
    %v1032 = vunpack.c.l.b16 %v877
    %v1033 = vunpack.c.h.b16 %v877
    %v1034 = vunpack.c.l.b16 %v878
    %v1035 = vunpack.c.h.b16 %v878
    %v1036 = vunpack.c.l.b16 %v879
    %v1037 = vunpack.c.h.b16 %v879
    %v1038 = vunpack.c.l.b16 %v880
    %v1039 = vunpack.c.h.b16 %v880
    %v1040 = vunpack.c.l.b16 %v881
    %v1041 = vunpack.c.h.b16 %v881
    %v1042 = vunpack.c.l.b16 %v882
    %v1043 = vunpack.c.h.b16 %v882
    %v1044 = vunpack.c.l.b16 %v883
    %v1045 = vunpack.c.h.b16 %v883
    %v1046 = vpack.c.b16 %v958, %v950
    %v1047 = vpack.c.b16 %v959, %v951
    %v1048 = vpack.c.b16 %v960, %v952
    %v1049 = vpack.c.b16 %v961, %v953
    %v1050 = vpack.c.b16 %v962, %v954
    %v1051 = vpack.c.b16 %v963, %v955
    %v1052 = vpack.c.b16 %v964, %v956
    %v1053 = vpack.c.b16 %v965, %v957
    %v1054 = vpack.c.b16 %v974, %v966
    %v1055 = vpack.c.b16 %v975, %v967
    %v1056 = vpack.c.b16 %v976, %v968
    %v1057 = vpack.c.b16 %v977, %v969
    %v1058 = vpack.c.b16 %v978, %v970
    %v1059 = vpack.c.b16 %v979, %v971
    %v1060 = vpack.c.b16 %v980, %v972
    %v1061 = vpack.c.b16 %v981, %v973
    %v1062 = vpack.c.b16 %v990, %v982
    %v1063 = vpack.c.b16 %v991, %v983
    %v1064 = vpack.c.b16 %v992, %v984
    %v1065 = vpack.c.b16 %v993, %v985
    %v1066 = vpack.c.b16 %v994, %v986
    %v1067 = vpack.c.b16 %v995, %v987
    %v1068 = vpack.c.b16 %v996, %v988
    %v1069 = vpack.c.b16 %v997, %v989
    %v1070 = vpack.c.b16 %v1006, %v998
    %v1071 = vpack.c.b16 %v1007, %v999
    %v1072 = vpack.c.b16 %v1008, %v1000
    %v1073 = vpack.c.b16 %v1009, %v1001
    %v1074 = vpack.c.b16 %v1010, %v1002
    %v1075 = vpack.c.b16 %v1011, %v1003
    %v1076 = vpack.c.b16 %v1012, %v1004
    %v1077 = vpack.c.b16 %v1013, %v1005
    %v1078 = vpack.c.b16 %v1022, %v1014
    %v1079 = vpack.c.b16 %v1023, %v1015
    %v1080 = vpack.c.b16 %v1024, %v1016
    %v1081 = vpack.c.b16 %v1025, %v1017
    %v1082 = vpack.c.b16 %v1026, %v1018
    %v1083 = vpack.c.b16 %v1027, %v1019
    %v1084 = vpack.c.b16 %v1028, %v1020
    %v1085 = vpack.c.b16 %v1029, %v1021
    %v1086 = vpack.c.b16 %v1038, %v1030
    %v1087 = vpack.c.b16 %v1039, %v1031
    %v1088 = vpack.c.b16 %v1040, %v1032
    %v1089 = vpack.c.b16 %v1041, %v1033
    %v1090 = vpack.c.b16 %v1042, %v1034
    %v1091 = vpack.c.b16 %v1043, %v1035
    %v1092 = vpack.c.b16 %v1044, %v1036
    %v1093 = vpack.c.b16 %v1045, %v1037
    %vm1142 = vcmask 785408
    %v1144 = vsel %vm1142, %v828, 0
    %v1147 = vsel %vm1142, %v829, 0
    %v1150 = vsel %vm1142, %v830, 0
    %v1153 = vsel %vm1142, %v831, 0
    %v1156 = vsel %vm1142, %v832, 0
    %v1159 = vsel %vm1142, %v833, 0
    %v1162 = vsel %vm1142, %v834, 0
    %v1165 = vsel %vm1142, %v835, 0
    %1167 = vmatpush.bf16.msra.mxu0 0
    %1168 = vmatpush.bf16.msra.mxu0 0
    %1169 = vmatpush.bf16.msra.mxu0 %v1086
    %1170 = vmatpush.bf16.msra.mxu0 %v1078
    %1171 = vmatpush.bf16.msra.mxu0 %v1070
    %1172 = vmatpush.bf16.msra.mxu0 %v1062
    %1173 = vmatpush.bf16.msra.mxu0 %v1054
    %1174 = vmatpush.bf16.msra.mxu0 %v1046
    %1175 = vmatmul.bf16.gmra.mxu0 %v1144
    %v1176 = vpop.f32.mrf.mxu0
    %v1177 = vadd.f32 %v886, %v1176
    %v1178 = vpop.f32.mrf.mxu0
    %v1179 = vadd.f32 %v886, %v1178
    %1180 = vmatmul.bf16.gmra.mxu0 %v1147
    %v1181 = vpop.f32.mrf.mxu0
    %v1182 = vadd.f32 %v886, %v1181
    %v1183 = vpop.f32.mrf.mxu0
    %v1184 = vadd.f32 %v886, %v1183
    %1185 = vmatmul.bf16.gmra.mxu0 %v1150
    %v1186 = vpop.f32.mrf.mxu0
    %v1187 = vadd.f32 %v886, %v1186
    %v1188 = vpop.f32.mrf.mxu0
    %v1189 = vadd.f32 %v886, %v1188
    %1190 = vmatmul.bf16.gmra.mxu0 %v1153
    %v1191 = vpop.f32.mrf.mxu0
    %v1192 = vadd.f32 %v886, %v1191
    %v1193 = vpop.f32.mrf.mxu0
    %v1194 = vadd.f32 %v886, %v1193
    %1195 = vmatmul.bf16.gmra.mxu0 %v1156
    %v1196 = vpop.f32.mrf.mxu0
    %v1197 = vadd.f32 %v886, %v1196
    %v1198 = vpop.f32.mrf.mxu0
    %v1199 = vadd.f32 %v886, %v1198
    %1200 = vmatmul.bf16.gmra.mxu0 %v1159
    %v1201 = vpop.f32.mrf.mxu0
    %v1202 = vadd.f32 %v886, %v1201
    %v1203 = vpop.f32.mrf.mxu0
    %v1204 = vadd.f32 %v886, %v1203
    %1205 = vmatmul.bf16.gmra.mxu0 %v1162
    %v1206 = vpop.f32.mrf.mxu0
    %v1207 = vadd.f32 %v886, %v1206
    %v1208 = vpop.f32.mrf.mxu0
    %v1209 = vadd.f32 %v886, %v1208
    %1210 = vmatmul.bf16.gmra.mxu0 %v1165
    %v1211 = vpop.f32.mrf.mxu0
    %v1212 = vadd.f32 %v886, %v1211
    %v1213 = vpop.f32.mrf.mxu0
    %v1214 = vadd.f32 %v886, %v1213
    %1215 = vdwg.mxu0
    %1216 = vmatpush.bf16.msra.mxu0 0
    %1217 = vmatpush.bf16.msra.mxu0 0
    %1218 = vmatpush.bf16.msra.mxu0 %v1087
    %1219 = vmatpush.bf16.msra.mxu0 %v1079
    %1220 = vmatpush.bf16.msra.mxu0 %v1071
    %1221 = vmatpush.bf16.msra.mxu0 %v1063
    %1222 = vmatpush.bf16.msra.mxu0 %v1055
    %1223 = vmatpush.bf16.msra.mxu0 %v1047
    %1224 = vmatmul.bf16.gmra.mxu0 %v1144
    %v1225 = vpop.f32.mrf.mxu0
    %v1226 = vadd.f32 %v887, %v1225
    %v1227 = vpop.f32.mrf.mxu0
    %v1228 = vadd.f32 %v887, %v1227
    %1229 = vmatmul.bf16.gmra.mxu0 %v1147
    %v1230 = vpop.f32.mrf.mxu0
    %v1231 = vadd.f32 %v887, %v1230
    %v1232 = vpop.f32.mrf.mxu0
    %v1233 = vadd.f32 %v887, %v1232
    %1234 = vmatmul.bf16.gmra.mxu0 %v1150
    %v1235 = vpop.f32.mrf.mxu0
    %v1236 = vadd.f32 %v887, %v1235
    %v1237 = vpop.f32.mrf.mxu0
    %v1238 = vadd.f32 %v887, %v1237
    %1239 = vmatmul.bf16.gmra.mxu0 %v1153
    %v1240 = vpop.f32.mrf.mxu0
    %v1241 = vadd.f32 %v887, %v1240
    %v1242 = vpop.f32.mrf.mxu0
    %v1243 = vadd.f32 %v887, %v1242
    %1244 = vmatmul.bf16.gmra.mxu0 %v1156
    %v1245 = vpop.f32.mrf.mxu0
    %v1246 = vadd.f32 %v887, %v1245
    %v1247 = vpop.f32.mrf.mxu0
    %v1248 = vadd.f32 %v887, %v1247
    %1249 = vmatmul.bf16.gmra.mxu0 %v1159
    %v1250 = vpop.f32.mrf.mxu0
    %v1251 = vadd.f32 %v887, %v1250
    %v1252 = vpop.f32.mrf.mxu0
    %v1253 = vadd.f32 %v887, %v1252
    %1254 = vmatmul.bf16.gmra.mxu0 %v1162
    %v1255 = vpop.f32.mrf.mxu0
    %v1256 = vadd.f32 %v887, %v1255
    %v1257 = vpop.f32.mrf.mxu0
    %v1258 = vadd.f32 %v887, %v1257
    %1259 = vmatmul.bf16.gmra.mxu0 %v1165
    %v1260 = vpop.f32.mrf.mxu0
    %v1261 = vadd.f32 %v887, %v1260
    %v1262 = vpop.f32.mrf.mxu0
    %v1263 = vadd.f32 %v887, %v1262
    %1264 = vdwg.mxu0
    %1265 = vmatpush.bf16.msra.mxu0 0
    %1266 = vmatpush.bf16.msra.mxu0 0
    %1267 = vmatpush.bf16.msra.mxu0 %v1088
    %1268 = vmatpush.bf16.msra.mxu0 %v1080
    %1269 = vmatpush.bf16.msra.mxu0 %v1072
    %1270 = vmatpush.bf16.msra.mxu0 %v1064
    %1271 = vmatpush.bf16.msra.mxu0 %v1056
    %1272 = vmatpush.bf16.msra.mxu0 %v1048
    %1273 = vmatmul.bf16.gmra.mxu0 %v1144
    %v1274 = vpop.f32.mrf.mxu0
    %v1275 = vadd.f32 %v888, %v1274
    %v1276 = vpop.f32.mrf.mxu0
    %v1277 = vadd.f32 %v888, %v1276
    %1278 = vmatmul.bf16.gmra.mxu0 %v1147
    %v1279 = vpop.f32.mrf.mxu0
    %v1280 = vadd.f32 %v888, %v1279
    %v1281 = vpop.f32.mrf.mxu0
    %v1282 = vadd.f32 %v888, %v1281
    %1283 = vmatmul.bf16.gmra.mxu0 %v1150
    %v1284 = vpop.f32.mrf.mxu0
    %v1285 = vadd.f32 %v888, %v1284
    %v1286 = vpop.f32.mrf.mxu0
    %v1287 = vadd.f32 %v888, %v1286
    %1288 = vmatmul.bf16.gmra.mxu0 %v1153
    %v1289 = vpop.f32.mrf.mxu0
    %v1290 = vadd.f32 %v888, %v1289
    %v1291 = vpop.f32.mrf.mxu0
    %v1292 = vadd.f32 %v888, %v1291
    %1293 = vmatmul.bf16.gmra.mxu0 %v1156
    %v1294 = vpop.f32.mrf.mxu0
    %v1295 = vadd.f32 %v888, %v1294
    %v1296 = vpop.f32.mrf.mxu0
    %v1297 = vadd.f32 %v888, %v1296
    %1298 = vmatmul.bf16.gmra.mxu0 %v1159
    %v1299 = vpop.f32.mrf.mxu0
    %v1300 = vadd.f32 %v888, %v1299
    %v1301 = vpop.f32.mrf.mxu0
    %v1302 = vadd.f32 %v888, %v1301
    %1303 = vmatmul.bf16.gmra.mxu0 %v1162
    %v1304 = vpop.f32.mrf.mxu0
    %v1305 = vadd.f32 %v888, %v1304
    %v1306 = vpop.f32.mrf.mxu0
    %v1307 = vadd.f32 %v888, %v1306
    %1308 = vmatmul.bf16.gmra.mxu0 %v1165
    %v1309 = vpop.f32.mrf.mxu0
    %v1310 = vadd.f32 %v888, %v1309
    %v1311 = vpop.f32.mrf.mxu0
    %v1312 = vadd.f32 %v888, %v1311
    %1313 = vdwg.mxu0
    %1314 = vmatpush.bf16.msra.mxu0 0
    %1315 = vmatpush.bf16.msra.mxu0 0
    %1316 = vmatpush.bf16.msra.mxu0 %v1089
    %1317 = vmatpush.bf16.msra.mxu0 %v1081
    %1318 = vmatpush.bf16.msra.mxu0 %v1073
    %1319 = vmatpush.bf16.msra.mxu0 %v1065
    %1320 = vmatpush.bf16.msra.mxu0 %v1057
    %1321 = vmatpush.bf16.msra.mxu0 %v1049
    %1322 = vmatmul.bf16.gmra.mxu0 %v1144
    %v1323 = vpop.f32.mrf.mxu0
    %v1324 = vadd.f32 %v889, %v1323
    %v1325 = vpop.f32.mrf.mxu0
    %v1326 = vadd.f32 %v889, %v1325
    %1327 = vmatmul.bf16.gmra.mxu0 %v1147
    %v1328 = vpop.f32.mrf.mxu0
    %v1329 = vadd.f32 %v889, %v1328
    %v1330 = vpop.f32.mrf.mxu0
    %v1331 = vadd.f32 %v889, %v1330
    %1332 = vmatmul.bf16.gmra.mxu0 %v1150
    %v1333 = vpop.f32.mrf.mxu0
    %v1334 = vadd.f32 %v889, %v1333
    %v1335 = vpop.f32.mrf.mxu0
    %v1336 = vadd.f32 %v889, %v1335
    %1337 = vmatmul.bf16.gmra.mxu0 %v1153
    %v1338 = vpop.f32.mrf.mxu0
    %v1339 = vadd.f32 %v889, %v1338
    %v1340 = vpop.f32.mrf.mxu0
    %v1341 = vadd.f32 %v889, %v1340
    %1342 = vmatmul.bf16.gmra.mxu0 %v1156
    %v1343 = vpop.f32.mrf.mxu0
    %v1344 = vadd.f32 %v889, %v1343
    %v1345 = vpop.f32.mrf.mxu0
    %v1346 = vadd.f32 %v889, %v1345
    %1347 = vmatmul.bf16.gmra.mxu0 %v1159
    %v1348 = vpop.f32.mrf.mxu0
    %v1349 = vadd.f32 %v889, %v1348
    %v1350 = vpop.f32.mrf.mxu0
    %v1351 = vadd.f32 %v889, %v1350
    %1352 = vmatmul.bf16.gmra.mxu0 %v1162
    %v1353 = vpop.f32.mrf.mxu0
    %v1354 = vadd.f32 %v889, %v1353
    %v1355 = vpop.f32.mrf.mxu0
    %v1356 = vadd.f32 %v889, %v1355
    %1357 = vmatmul.bf16.gmra.mxu0 %v1165
    %v1358 = vpop.f32.mrf.mxu0
    %v1359 = vadd.f32 %v889, %v1358
    %v1360 = vpop.f32.mrf.mxu0
    %v1361 = vadd.f32 %v889, %v1360
    %1362 = vdwg.mxu0
    %1363 = vmatpush.bf16.msra.mxu0 0
    %1364 = vmatpush.bf16.msra.mxu0 0
    %1365 = vmatpush.bf16.msra.mxu0 %v1090
    %1366 = vmatpush.bf16.msra.mxu0 %v1082
    %1367 = vmatpush.bf16.msra.mxu0 %v1074
    %1368 = vmatpush.bf16.msra.mxu0 %v1066
    %1369 = vmatpush.bf16.msra.mxu0 %v1058
    %1370 = vmatpush.bf16.msra.mxu0 %v1050
    %1371 = vmatmul.bf16.gmra.mxu0 %v1144
    %v1372 = vpop.f32.mrf.mxu0
    %v1373 = vadd.f32 %v890, %v1372
    %v1374 = vpop.f32.mrf.mxu0
    %v1375 = vadd.f32 %v890, %v1374
    %1376 = vmatmul.bf16.gmra.mxu0 %v1147
    %v1377 = vpop.f32.mrf.mxu0
    %v1378 = vadd.f32 %v890, %v1377
    %v1379 = vpop.f32.mrf.mxu0
    %v1380 = vadd.f32 %v890, %v1379
    %1381 = vmatmul.bf16.gmra.mxu0 %v1150
    %v1382 = vpop.f32.mrf.mxu0
    %v1383 = vadd.f32 %v890, %v1382
    %v1384 = vpop.f32.mrf.mxu0
    %v1385 = vadd.f32 %v890, %v1384
    %1386 = vmatmul.bf16.gmra.mxu0 %v1153
    %v1387 = vpop.f32.mrf.mxu0
    %v1388 = vadd.f32 %v890, %v1387
    %v1389 = vpop.f32.mrf.mxu0
    %v1390 = vadd.f32 %v890, %v1389
    %1391 = vmatmul.bf16.gmra.mxu0 %v1156
    %v1392 = vpop.f32.mrf.mxu0
    %v1393 = vadd.f32 %v890, %v1392
    %v1394 = vpop.f32.mrf.mxu0
    %v1395 = vadd.f32 %v890, %v1394
    %1396 = vmatmul.bf16.gmra.mxu0 %v1159
    %v1397 = vpop.f32.mrf.mxu0
    %v1398 = vadd.f32 %v890, %v1397
    %v1399 = vpop.f32.mrf.mxu0
    %v1400 = vadd.f32 %v890, %v1399
    %1401 = vmatmul.bf16.gmra.mxu0 %v1162
    %v1402 = vpop.f32.mrf.mxu0
    %v1403 = vadd.f32 %v890, %v1402
    %v1404 = vpop.f32.mrf.mxu0
    %v1405 = vadd.f32 %v890, %v1404
    %1406 = vmatmul.bf16.gmra.mxu0 %v1165
    %v1407 = vpop.f32.mrf.mxu0
    %v1408 = vadd.f32 %v890, %v1407
    %v1409 = vpop.f32.mrf.mxu0
    %v1410 = vadd.f32 %v890, %v1409
    %1411 = vdwg.mxu0
    %1412 = vmatpush.bf16.msra.mxu0 0
    %1413 = vmatpush.bf16.msra.mxu0 0
    %1414 = vmatpush.bf16.msra.mxu0 %v1091
    %1415 = vmatpush.bf16.msra.mxu0 %v1083
    %1416 = vmatpush.bf16.msra.mxu0 %v1075
    %1417 = vmatpush.bf16.msra.mxu0 %v1067
    %1418 = vmatpush.bf16.msra.mxu0 %v1059
    %1419 = vmatpush.bf16.msra.mxu0 %v1051
    %1420 = vmatmul.bf16.gmra.mxu0 %v1144
    %v1421 = vpop.f32.mrf.mxu0
    %v1422 = vadd.f32 %v891, %v1421
    %v1423 = vpop.f32.mrf.mxu0
    %v1424 = vadd.f32 %v891, %v1423
    %1425 = vmatmul.bf16.gmra.mxu0 %v1147
    %v1426 = vpop.f32.mrf.mxu0
    %v1427 = vadd.f32 %v891, %v1426
    %v1428 = vpop.f32.mrf.mxu0
    %v1429 = vadd.f32 %v891, %v1428
    %1430 = vmatmul.bf16.gmra.mxu0 %v1150
    %v1431 = vpop.f32.mrf.mxu0
    %v1432 = vadd.f32 %v891, %v1431
    %v1433 = vpop.f32.mrf.mxu0
    %v1434 = vadd.f32 %v891, %v1433
    %1435 = vmatmul.bf16.gmra.mxu0 %v1153
    %v1436 = vpop.f32.mrf.mxu0
    %v1437 = vadd.f32 %v891, %v1436
    %v1438 = vpop.f32.mrf.mxu0
    %v1439 = vadd.f32 %v891, %v1438
    %1440 = vmatmul.bf16.gmra.mxu0 %v1156
    %v1441 = vpop.f32.mrf.mxu0
    %v1442 = vadd.f32 %v891, %v1441
    %v1443 = vpop.f32.mrf.mxu0
    %v1444 = vadd.f32 %v891, %v1443
    %1445 = vmatmul.bf16.gmra.mxu0 %v1159
    %v1446 = vpop.f32.mrf.mxu0
    %v1447 = vadd.f32 %v891, %v1446
    %v1448 = vpop.f32.mrf.mxu0
    %v1449 = vadd.f32 %v891, %v1448
    %1450 = vmatmul.bf16.gmra.mxu0 %v1162
    %v1451 = vpop.f32.mrf.mxu0
    %v1452 = vadd.f32 %v891, %v1451
    %v1453 = vpop.f32.mrf.mxu0
    %v1454 = vadd.f32 %v891, %v1453
    %1455 = vmatmul.bf16.gmra.mxu0 %v1165
    %v1456 = vpop.f32.mrf.mxu0
    %v1457 = vadd.f32 %v891, %v1456
    %v1458 = vpop.f32.mrf.mxu0
    %v1459 = vadd.f32 %v891, %v1458
    %1460 = vdwg.mxu0
    %1461 = vmatpush.bf16.msra.mxu0 0
    %1462 = vmatpush.bf16.msra.mxu0 0
    %1463 = vmatpush.bf16.msra.mxu0 %v1092
    %1464 = vmatpush.bf16.msra.mxu0 %v1084
    %1465 = vmatpush.bf16.msra.mxu0 %v1076
    %1466 = vmatpush.bf16.msra.mxu0 %v1068
    %1467 = vmatpush.bf16.msra.mxu0 %v1060
    %1468 = vmatpush.bf16.msra.mxu0 %v1052
    %1469 = vmatmul.bf16.gmra.mxu0 %v1144
    %v1470 = vpop.f32.mrf.mxu0
    %v1471 = vadd.f32 %v892, %v1470
    %v1472 = vpop.f32.mrf.mxu0
    %v1473 = vadd.f32 %v892, %v1472
    %1474 = vmatmul.bf16.gmra.mxu0 %v1147
    %v1475 = vpop.f32.mrf.mxu0
    %v1476 = vadd.f32 %v892, %v1475
    %v1477 = vpop.f32.mrf.mxu0
    %v1478 = vadd.f32 %v892, %v1477
    %1479 = vmatmul.bf16.gmra.mxu0 %v1150
    %v1480 = vpop.f32.mrf.mxu0
    %v1481 = vadd.f32 %v892, %v1480
    %v1482 = vpop.f32.mrf.mxu0
    %v1483 = vadd.f32 %v892, %v1482
    %1484 = vmatmul.bf16.gmra.mxu0 %v1153
    %v1485 = vpop.f32.mrf.mxu0
    %v1486 = vadd.f32 %v892, %v1485
    %v1487 = vpop.f32.mrf.mxu0
    %v1488 = vadd.f32 %v892, %v1487
    %1489 = vmatmul.bf16.gmra.mxu0 %v1156
    %v1490 = vpop.f32.mrf.mxu0
    %v1491 = vadd.f32 %v892, %v1490
    %v1492 = vpop.f32.mrf.mxu0
    %v1493 = vadd.f32 %v892, %v1492
    %1494 = vmatmul.bf16.gmra.mxu0 %v1159
    %v1495 = vpop.f32.mrf.mxu0
    %v1496 = vadd.f32 %v892, %v1495
    %v1497 = vpop.f32.mrf.mxu0
    %v1498 = vadd.f32 %v892, %v1497
    %1499 = vmatmul.bf16.gmra.mxu0 %v1162
    %v1500 = vpop.f32.mrf.mxu0
    %v1501 = vadd.f32 %v892, %v1500
    %v1502 = vpop.f32.mrf.mxu0
    %v1503 = vadd.f32 %v892, %v1502
    %1504 = vmatmul.bf16.gmra.mxu0 %v1165
    %v1505 = vpop.f32.mrf.mxu0
    %v1506 = vadd.f32 %v892, %v1505
    %v1507 = vpop.f32.mrf.mxu0
    %v1508 = vadd.f32 %v892, %v1507
    %1509 = vdwg.mxu0
    %1510 = vmatpush.bf16.msra.mxu0 0
    %1511 = vmatpush.bf16.msra.mxu0 0
    %1512 = vmatpush.bf16.msra.mxu0 %v1093
    %1513 = vmatpush.bf16.msra.mxu0 %v1085
    %1514 = vmatpush.bf16.msra.mxu0 %v1077
    %1515 = vmatpush.bf16.msra.mxu0 %v1069
    %1516 = vmatpush.bf16.msra.mxu0 %v1061
    %1517 = vmatpush.bf16.msra.mxu0 %v1053
    %1518 = vmatmul.bf16.gmra.mxu0 %v1144
    %v1519 = vpop.f32.mrf.mxu0
    %v1520 = vadd.f32 %v893, %v1519
    %v1521 = vpop.f32.mrf.mxu0
    %v1522 = vadd.f32 %v893, %v1521
    %1523 = vmatmul.bf16.gmra.mxu0 %v1147
    %v1524 = vpop.f32.mrf.mxu0
    %v1525 = vadd.f32 %v893, %v1524
    %v1526 = vpop.f32.mrf.mxu0
    %v1527 = vadd.f32 %v893, %v1526
    %1528 = vmatmul.bf16.gmra.mxu0 %v1150
    %v1529 = vpop.f32.mrf.mxu0
    %v1530 = vadd.f32 %v893, %v1529
    %v1531 = vpop.f32.mrf.mxu0
    %v1532 = vadd.f32 %v893, %v1531
    %1533 = vmatmul.bf16.gmra.mxu0 %v1153
    %v1534 = vpop.f32.mrf.mxu0
    %v1535 = vadd.f32 %v893, %v1534
    %v1536 = vpop.f32.mrf.mxu0
    %v1537 = vadd.f32 %v893, %v1536
    %1538 = vmatmul.bf16.gmra.mxu0 %v1156
    %v1539 = vpop.f32.mrf.mxu0
    %v1540 = vadd.f32 %v893, %v1539
    %v1541 = vpop.f32.mrf.mxu0
    %v1542 = vadd.f32 %v893, %v1541
    %1543 = vmatmul.bf16.gmra.mxu0 %v1159
    %v1544 = vpop.f32.mrf.mxu0
    %v1545 = vadd.f32 %v893, %v1544
    %v1546 = vpop.f32.mrf.mxu0
    %v1547 = vadd.f32 %v893, %v1546
    %1548 = vmatmul.bf16.gmra.mxu0 %v1162
    %v1549 = vpop.f32.mrf.mxu0
    %v1550 = vadd.f32 %v893, %v1549
    %v1551 = vpop.f32.mrf.mxu0
    %v1552 = vadd.f32 %v893, %v1551
    %1553 = vmatmul.bf16.gmra.mxu0 %v1165
    %v1554 = vpop.f32.mrf.mxu0
    %v1555 = vadd.f32 %v893, %v1554
    %v1556 = vpop.f32.mrf.mxu0
    %v1557 = vadd.f32 %v893, %v1556
    %1558 = vdwg.mxu0
    %v1559 = vmax.f32 %v1177, 0.0
    %v1560 = vmax.f32 %v1226, 0.0
    %v1561 = vmax.f32 %v1275, 0.0
    %v1562 = vmax.f32 %v1324, 0.0
    %v1563 = vmax.f32 %v1373, 0.0
    %v1564 = vmax.f32 %v1422, 0.0
    %v1565 = vmax.f32 %v1471, 0.0
    %v1566 = vmax.f32 %v1520, 0.0
    %v1567 = vmax.f32 %v1179, 0.0
    %v1568 = vmax.f32 %v1228, 0.0
    %v1569 = vmax.f32 %v1277, 0.0
    %v1570 = vmax.f32 %v1326, 0.0
    %v1571 = vmax.f32 %v1375, 0.0
    %v1572 = vmax.f32 %v1424, 0.0
    %v1573 = vmax.f32 %v1473, 0.0
    %v1574 = vmax.f32 %v1522, 0.0
    %v1575 = vmax.f32 %v1182, 0.0
    %v1576 = vmax.f32 %v1231, 0.0
    %v1577 = vmax.f32 %v1280, 0.0
    %v1578 = vmax.f32 %v1329, 0.0
    %v1579 = vmax.f32 %v1378, 0.0
    %v1580 = vmax.f32 %v1427, 0.0
    %v1581 = vmax.f32 %v1476, 0.0
    %v1582 = vmax.f32 %v1525, 0.0
    %v1583 = vmax.f32 %v1184, 0.0
    %v1584 = vmax.f32 %v1233, 0.0
    %v1585 = vmax.f32 %v1282, 0.0
    %v1586 = vmax.f32 %v1331, 0.0
    %v1587 = vmax.f32 %v1380, 0.0
    %v1588 = vmax.f32 %v1429, 0.0
    %v1589 = vmax.f32 %v1478, 0.0
    %v1590 = vmax.f32 %v1527, 0.0
    %v1591 = vmax.f32 %v1187, 0.0
    %v1592 = vmax.f32 %v1236, 0.0
    %v1593 = vmax.f32 %v1285, 0.0
    %v1594 = vmax.f32 %v1334, 0.0
    %v1595 = vmax.f32 %v1383, 0.0
    %v1596 = vmax.f32 %v1432, 0.0
    %v1597 = vmax.f32 %v1481, 0.0
    %v1598 = vmax.f32 %v1530, 0.0
    %v1599 = vmax.f32 %v1189, 0.0
    %v1600 = vmax.f32 %v1238, 0.0
    %v1601 = vmax.f32 %v1287, 0.0
    %v1602 = vmax.f32 %v1336, 0.0
    %v1603 = vmax.f32 %v1385, 0.0
    %v1604 = vmax.f32 %v1434, 0.0
    %v1605 = vmax.f32 %v1483, 0.0
    %v1606 = vmax.f32 %v1532, 0.0
    %v1607 = vmax.f32 %v1192, 0.0
    %v1608 = vmax.f32 %v1241, 0.0
    %v1609 = vmax.f32 %v1290, 0.0
    %v1610 = vmax.f32 %v1339, 0.0
    %v1611 = vmax.f32 %v1388, 0.0
    %v1612 = vmax.f32 %v1437, 0.0
    %v1613 = vmax.f32 %v1486, 0.0
    %v1614 = vmax.f32 %v1535, 0.0
    %v1615 = vmax.f32 %v1194, 0.0
    %v1616 = vmax.f32 %v1243, 0.0
    %v1617 = vmax.f32 %v1292, 0.0
    %v1618 = vmax.f32 %v1341, 0.0
    %v1619 = vmax.f32 %v1390, 0.0
    %v1620 = vmax.f32 %v1439, 0.0
    %v1621 = vmax.f32 %v1488, 0.0
    %v1622 = vmax.f32 %v1537, 0.0
    %v1623 = vmax.f32 %v1197, 0.0
    %v1624 = vmax.f32 %v1246, 0.0
    %v1625 = vmax.f32 %v1295, 0.0
    %v1626 = vmax.f32 %v1344, 0.0
    %v1627 = vmax.f32 %v1393, 0.0
    %v1628 = vmax.f32 %v1442, 0.0
    %v1629 = vmax.f32 %v1491, 0.0
    %v1630 = vmax.f32 %v1540, 0.0
    %v1631 = vmax.f32 %v1199, 0.0
    %v1632 = vmax.f32 %v1248, 0.0
    %v1633 = vmax.f32 %v1297, 0.0
    %v1634 = vmax.f32 %v1346, 0.0
    %v1635 = vmax.f32 %v1395, 0.0
    %v1636 = vmax.f32 %v1444, 0.0
    %v1637 = vmax.f32 %v1493, 0.0
    %v1638 = vmax.f32 %v1542, 0.0
    %v1639 = vmax.f32 %v1202, 0.0
    %v1640 = vmax.f32 %v1251, 0.0
    %v1641 = vmax.f32 %v1300, 0.0
    %v1642 = vmax.f32 %v1349, 0.0
    %v1643 = vmax.f32 %v1398, 0.0
    %v1644 = vmax.f32 %v1447, 0.0
    %v1645 = vmax.f32 %v1496, 0.0
    %v1646 = vmax.f32 %v1545, 0.0
    %v1647 = vmax.f32 %v1204, 0.0
    %v1648 = vmax.f32 %v1253, 0.0
    %v1649 = vmax.f32 %v1302, 0.0
    %v1650 = vmax.f32 %v1351, 0.0
    %v1651 = vmax.f32 %v1400, 0.0
    %v1652 = vmax.f32 %v1449, 0.0
    %v1653 = vmax.f32 %v1498, 0.0
    %v1654 = vmax.f32 %v1547, 0.0
    %v1655 = vmax.f32 %v1207, 0.0
    %v1656 = vmax.f32 %v1256, 0.0
    %v1657 = vmax.f32 %v1305, 0.0
    %v1658 = vmax.f32 %v1354, 0.0
    %v1659 = vmax.f32 %v1403, 0.0
    %v1660 = vmax.f32 %v1452, 0.0
    %v1661 = vmax.f32 %v1501, 0.0
    %v1662 = vmax.f32 %v1550, 0.0
    %v1663 = vmax.f32 %v1209, 0.0
    %v1664 = vmax.f32 %v1258, 0.0
    %v1665 = vmax.f32 %v1307, 0.0
    %v1666 = vmax.f32 %v1356, 0.0
    %v1667 = vmax.f32 %v1405, 0.0
    %v1668 = vmax.f32 %v1454, 0.0
    %v1669 = vmax.f32 %v1503, 0.0
    %v1670 = vmax.f32 %v1552, 0.0
    %v1671 = vmax.f32 %v1212, 0.0
    %v1672 = vmax.f32 %v1261, 0.0
    %v1673 = vmax.f32 %v1310, 0.0
    %v1674 = vmax.f32 %v1359, 0.0
    %v1675 = vmax.f32 %v1408, 0.0
    %v1676 = vmax.f32 %v1457, 0.0
    %v1677 = vmax.f32 %v1506, 0.0
    %v1678 = vmax.f32 %v1555, 0.0
    %v1679 = vmax.f32 %v1214, 0.0
    %v1680 = vmax.f32 %v1263, 0.0
    %v1681 = vmax.f32 %v1312, 0.0
    %v1682 = vmax.f32 %v1361, 0.0
    %v1683 = vmax.f32 %v1410, 0.0
    %v1684 = vmax.f32 %v1459, 0.0
    %v1685 = vmax.f32 %v1508, 0.0
    %v1686 = vmax.f32 %v1557, 0.0
    %v1687 = vpack.c.bf16 %v1560, %v1559
    %v1688 = vpack.c.bf16 %v1562, %v1561
    %v1689 = vpack.c.bf16 %v1564, %v1563
    %v1690 = vpack.c.bf16 %v1566, %v1565
    %v1691 = vpack.c.bf16 %v1568, %v1567
    %v1692 = vpack.c.bf16 %v1570, %v1569
    %v1693 = vpack.c.bf16 %v1572, %v1571
    %v1694 = vpack.c.bf16 %v1574, %v1573
    %v1695 = vpack.c.bf16 %v1576, %v1575
    %v1696 = vpack.c.bf16 %v1578, %v1577
    %v1697 = vpack.c.bf16 %v1580, %v1579
    %v1698 = vpack.c.bf16 %v1582, %v1581
    %v1699 = vpack.c.bf16 %v1584, %v1583
    %v1700 = vpack.c.bf16 %v1586, %v1585
    %v1701 = vpack.c.bf16 %v1588, %v1587
    %v1702 = vpack.c.bf16 %v1590, %v1589
    %v1703 = vpack.c.bf16 %v1592, %v1591
    %v1704 = vpack.c.bf16 %v1594, %v1593
    %v1705 = vpack.c.bf16 %v1596, %v1595
    %v1706 = vpack.c.bf16 %v1598, %v1597
    %v1707 = vpack.c.bf16 %v1600, %v1599
    %v1708 = vpack.c.bf16 %v1602, %v1601
    %v1709 = vpack.c.bf16 %v1604, %v1603
    %v1710 = vpack.c.bf16 %v1606, %v1605
    %v1711 = vpack.c.bf16 %v1608, %v1607
    %v1712 = vpack.c.bf16 %v1610, %v1609
    %v1713 = vpack.c.bf16 %v1612, %v1611
    %v1714 = vpack.c.bf16 %v1614, %v1613
    %v1715 = vpack.c.bf16 %v1616, %v1615
    %v1716 = vpack.c.bf16 %v1618, %v1617
    %v1717 = vpack.c.bf16 %v1620, %v1619
    %v1718 = vpack.c.bf16 %v1622, %v1621
    %v1719 = vpack.c.bf16 %v1624, %v1623
    %v1720 = vpack.c.bf16 %v1626, %v1625
    %v1721 = vpack.c.bf16 %v1628, %v1627
    %v1722 = vpack.c.bf16 %v1630, %v1629
    %v1723 = vpack.c.bf16 %v1632, %v1631
    %v1724 = vpack.c.bf16 %v1634, %v1633
    %v1725 = vpack.c.bf16 %v1636, %v1635
    %v1726 = vpack.c.bf16 %v1638, %v1637
    %v1727 = vpack.c.bf16 %v1640, %v1639
    %v1728 = vpack.c.bf16 %v1642, %v1641
    %v1729 = vpack.c.bf16 %v1644, %v1643
    %v1730 = vpack.c.bf16 %v1646, %v1645
    %v1731 = vpack.c.bf16 %v1648, %v1647
    %v1732 = vpack.c.bf16 %v1650, %v1649
    %v1733 = vpack.c.bf16 %v1652, %v1651
    %v1734 = vpack.c.bf16 %v1654, %v1653
    %v1735 = vpack.c.bf16 %v1656, %v1655
    %v1736 = vpack.c.bf16 %v1658, %v1657
    %v1737 = vpack.c.bf16 %v1660, %v1659
    %v1738 = vpack.c.bf16 %v1662, %v1661
    %v1739 = vpack.c.bf16 %v1664, %v1663
    %v1740 = vpack.c.bf16 %v1666, %v1665
    %v1741 = vpack.c.bf16 %v1668, %v1667
    %v1742 = vpack.c.bf16 %v1670, %v1669
    %v1743 = vpack.c.bf16 %v1672, %v1671
    %v1744 = vpack.c.bf16 %v1674, %v1673
    %v1745 = vpack.c.bf16 %v1676, %v1675
    %v1746 = vpack.c.bf16 %v1678, %v1677
    %v1747 = vpack.c.bf16 %v1680, %v1679
    %v1748 = vpack.c.bf16 %v1682, %v1681
    %v1749 = vpack.c.bf16 %v1684, %v1683
    %v1750 = vpack.c.bf16 %v1686, %v1685
    %v1779 = vunpack.c.l.b16 %v1691
    %v1780 = vunpack.c.h.b16 %v1691
    %v1781 = vunpack.c.l.b16 %v1692
    %v1782 = vunpack.c.h.b16 %v1692
    %v1783 = vunpack.c.l.b16 %v1693
    %v1784 = vunpack.c.h.b16 %v1693
    %v1785 = vunpack.c.l.b16 %v1694
    %v1786 = vunpack.c.h.b16 %v1694
    %v1787 = vunpack.c.l.b16 %v1699
    %v1788 = vunpack.c.h.b16 %v1699
    %v1789 = vunpack.c.l.b16 %v1700
    %v1790 = vunpack.c.h.b16 %v1700
    %v1791 = vunpack.c.l.b16 %v1701
    %v1792 = vunpack.c.h.b16 %v1701
    %v1793 = vunpack.c.l.b16 %v1702
    %v1794 = vunpack.c.h.b16 %v1702
    %v1795 = vunpack.c.l.b16 %v1707
    %v1796 = vunpack.c.h.b16 %v1707
    %v1797 = vunpack.c.l.b16 %v1708
    %v1798 = vunpack.c.h.b16 %v1708
    %v1799 = vunpack.c.l.b16 %v1709
    %v1800 = vunpack.c.h.b16 %v1709
    %v1801 = vunpack.c.l.b16 %v1710
    %v1802 = vunpack.c.h.b16 %v1710
    %v1803 = vunpack.c.l.b16 %v1715
    %v1804 = vunpack.c.h.b16 %v1715
    %v1805 = vunpack.c.l.b16 %v1716
    %v1806 = vunpack.c.h.b16 %v1716
    %v1807 = vunpack.c.l.b16 %v1717
    %v1808 = vunpack.c.h.b16 %v1717
    %v1809 = vunpack.c.l.b16 %v1718
    %v1810 = vunpack.c.h.b16 %v1718
    %v1811 = vunpack.c.l.b16 %v1723
    %v1812 = vunpack.c.h.b16 %v1723
    %v1813 = vunpack.c.l.b16 %v1724
    %v1814 = vunpack.c.h.b16 %v1724
    %v1815 = vunpack.c.l.b16 %v1725
    %v1816 = vunpack.c.h.b16 %v1725
    %v1817 = vunpack.c.l.b16 %v1726
    %v1818 = vunpack.c.h.b16 %v1726
    %v1819 = vunpack.c.l.b16 %v1731
    %v1820 = vunpack.c.h.b16 %v1731
    %v1821 = vunpack.c.l.b16 %v1732
    %v1822 = vunpack.c.h.b16 %v1732
    %v1823 = vunpack.c.l.b16 %v1733
    %v1824 = vunpack.c.h.b16 %v1733
    %v1825 = vunpack.c.l.b16 %v1734
    %v1826 = vunpack.c.h.b16 %v1734
    %v1827 = vunpack.c.l.b16 %v1739
    %v1828 = vunpack.c.h.b16 %v1739
    %v1829 = vunpack.c.l.b16 %v1740
    %v1830 = vunpack.c.h.b16 %v1740
    %v1831 = vunpack.c.l.b16 %v1741
    %v1832 = vunpack.c.h.b16 %v1741
    %v1833 = vunpack.c.l.b16 %v1742
    %v1834 = vunpack.c.h.b16 %v1742
    %v1836 = vunpack.c.l.b16 0
    %v1837 = vld [vmem:[#allocation6] sm:$0xff]
    %v1838 = vld [vmem:[#allocation6 + $0x8] sm:$0xff]
    %v1839 = vld [vmem:[#allocation6 + $0x10] sm:$0xff]
    %v1840 = vld [vmem:[#allocation6 + $0x18] sm:$0xff]
    %v1841 = vld [vmem:[#allocation6 + $0x20] sm:$0xff]
    %v1842 = vld [vmem:[#allocation6 + $0x28] sm:$0xff]
    %v1843 = vld [vmem:[#allocation6 + $0x30] sm:$0xff]
    %v1844 = vld [vmem:[#allocation6 + $0x38] sm:$0xff]
    %v1845 = vld [vmem:[#allocation6 + $0x40] sm:$0xff]
    %v1846 = vld [vmem:[#allocation6 + $0x48] sm:$0xff]
    %v1847 = vld [vmem:[#allocation6 + $0x50] sm:$0xff]
    %v1848 = vld [vmem:[#allocation6 + $0x58] sm:$0xff]
    %v1849 = vld [vmem:[#allocation6 + $0x60] sm:$0xff]
    %v1850 = vld [vmem:[#allocation6 + $0x68] sm:$0xff]
    %v1851 = vld [vmem:[#allocation6 + $0x70] sm:$0xff]
    %v1852 = vld [vmem:[#allocation6 + $0x78] sm:$0xff]
    %v1853 = vld [vmem:[#allocation6 + $0x80] sm:$0xff]
    %v1854 = vld [vmem:[#allocation6 + $0x88] sm:$0xff]
    %v1855 = vld [vmem:[#allocation6 + $0x90] sm:$0xff]
    %v1856 = vld [vmem:[#allocation6 + $0x98] sm:$0xff]
    %v1857 = vld [vmem:[#allocation6 + $0xa0] sm:$0xff]
    %v1858 = vld [vmem:[#allocation6 + $0xa8] sm:$0xff]
    %v1859 = vld [vmem:[#allocation6 + $0xb0] sm:$0xff]
    %v1860 = vld [vmem:[#allocation6 + $0xb8] sm:$0xff]
    %v1861 = vld [vmem:[#allocation6 + $0xc0] sm:$0xff]
    %v1862 = vld [vmem:[#allocation6 + $0xc8] sm:$0xff]
    %v1863 = vld [vmem:[#allocation6 + $0xd0] sm:$0xff]
    %v1864 = vld [vmem:[#allocation6 + $0xd8] sm:$0xff]
    %v1865 = vld [vmem:[#allocation6 + $0xe0] sm:$0xff]
    %v1866 = vld [vmem:[#allocation6 + $0xe8] sm:$0xff]
    %v1867 = vld [vmem:[#allocation6 + $0xf0] sm:$0xff]
    %v1868 = vld [vmem:[#allocation6 + $0xf8] sm:$0xff]
    %v1869 = vld [vmem:[#allocation6 + $0x100] sm:$0xff]
    %v1870 = vld [vmem:[#allocation6 + $0x108] sm:$0xff]
    %v1871 = vld [vmem:[#allocation6 + $0x110] sm:$0xff]
    %v1872 = vld [vmem:[#allocation6 + $0x118] sm:$0xff]
    %v1873 = vld [vmem:[#allocation6 + $0x120] sm:$0xff]
    %v1874 = vld [vmem:[#allocation6 + $0x128] sm:$0xff]
    %v1875 = vld [vmem:[#allocation6 + $0x130] sm:$0xff]
    %v1876 = vld [vmem:[#allocation6 + $0x138] sm:$0xff]
    %v1877 = vld [vmem:[#allocation6 + $0x140] sm:$0xff]
    %v1878 = vld [vmem:[#allocation6 + $0x148] sm:$0xff]
    %v1879 = vld [vmem:[#allocation6 + $0x150] sm:$0xff]
    %v1880 = vld [vmem:[#allocation6 + $0x158] sm:$0xff]
    %v1881 = vld [vmem:[#allocation6 + $0x160] sm:$0xff]
    %v1882 = vld [vmem:[#allocation6 + $0x168] sm:$0xff]
    %v1883 = vld [vmem:[#allocation6 + $0x170] sm:$0xff]
    %v1884 = vld [vmem:[#allocation6 + $0x178] sm:$0xff]
    %v1885 = vld [vmem:[#allocation6 + $0x180] sm:$0xff]
    %v1886 = vld [vmem:[#allocation6 + $0x188] sm:$0xff]
    %v1887 = vld [vmem:[#allocation6 + $0x190] sm:$0xff]
    %v1888 = vld [vmem:[#allocation6 + $0x198] sm:$0xff]
    %v1889 = vld [vmem:[#allocation6 + $0x1a0] sm:$0xff]
    %v1890 = vld [vmem:[#allocation6 + $0x1a8] sm:$0xff]
    %v1891 = vld [vmem:[#allocation6 + $0x1b0] sm:$0xff]
    %v1892 = vld [vmem:[#allocation6 + $0x1b8] sm:$0xff]
    %v1893 = vld [vmem:[#allocation6 + $0x1c0] sm:$0xff]
    %v1894 = vld [vmem:[#allocation6 + $0x1c8] sm:$0xff]
    %v1895 = vld [vmem:[#allocation6 + $0x1d0] sm:$0xff]
    %v1896 = vld [vmem:[#allocation6 + $0x1d8] sm:$0xff]
    %v1897 = vld [vmem:[#allocation6 + $0x1e0] sm:$0xff]
    %v1898 = vld [vmem:[#allocation6 + $0x1e8] sm:$0xff]
    %v1899 = vld [vmem:[#allocation6 + $0x1f0] sm:$0xff]
    %v1900 = vld [vmem:[#allocation6 + $0x1f8] sm:$0xff]
    %v1901 = vld [vmem:[#allocation6 + $0x200] sm:$0xff]
    %v1902 = vld [vmem:[#allocation6 + $0x208] sm:$0xff]
    %v1903 = vld [vmem:[#allocation6 + $0x210] sm:$0xff]
    %v1904 = vld [vmem:[#allocation6 + $0x218] sm:$0xff]
    %v1905 = vld [vmem:[#allocation6 + $0x220] sm:$0xff]
    %v1906 = vld [vmem:[#allocation6 + $0x228] sm:$0xff]
    %v1907 = vld [vmem:[#allocation6 + $0x230] sm:$0xff]
    %v1908 = vld [vmem:[#allocation6 + $0x238] sm:$0xff]
    %v1909 = vld [vmem:[#allocation6 + $0x240] sm:$0xff]
    %v1910 = vld [vmem:[#allocation6 + $0x248] sm:$0xff]
    %v1911 = vld [vmem:[#allocation6 + $0x250] sm:$0xff]
    %v1912 = vld [vmem:[#allocation6 + $0x258] sm:$0xff]
    %v1913 = vld [vmem:[#allocation6 + $0x260] sm:$0xff]
    %v1914 = vld [vmem:[#allocation6 + $0x268] sm:$0xff]
    %v1915 = vld [vmem:[#allocation6 + $0x270] sm:$0xff]
    %v1916 = vld [vmem:[#allocation6 + $0x278] sm:$0xff]
    %v1917 = vld [vmem:[#allocation6 + $0x280] sm:$0xff]
    %v1918 = vld [vmem:[#allocation6 + $0x288] sm:$0xff]
    %v1919 = vld [vmem:[#allocation6 + $0x290] sm:$0xff]
    %v1920 = vld [vmem:[#allocation6 + $0x298] sm:$0xff]
    %v1921 = vld [vmem:[#allocation6 + $0x2a0] sm:$0xff]
    %v1922 = vld [vmem:[#allocation6 + $0x2a8] sm:$0xff]
    %v1923 = vld [vmem:[#allocation6 + $0x2b0] sm:$0xff]
    %v1924 = vld [vmem:[#allocation6 + $0x2b8] sm:$0xff]
    %v1925 = vld [vmem:[#allocation6 + $0x2c0] sm:$0xff]
    %v1926 = vld [vmem:[#allocation6 + $0x2c8] sm:$0xff]
    %v1927 = vld [vmem:[#allocation6 + $0x2d0] sm:$0xff]
    %v1928 = vld [vmem:[#allocation6 + $0x2d8] sm:$0xff]
    %v1929 = vld [vmem:[#allocation6 + $0x2e0] sm:$0xff]
    %v1930 = vld [vmem:[#allocation6 + $0x2e8] sm:$0xff]
    %v1931 = vld [vmem:[#allocation6 + $0x2f0] sm:$0xff]
    %v1932 = vld [vmem:[#allocation6 + $0x2f8] sm:$0xff]
    %v1933 = vld [vmem:[#allocation6 + $0x300] sm:$0xff]
    %v1934 = vld [vmem:[#allocation6 + $0x308] sm:$0xff]
    %v1935 = vld [vmem:[#allocation6 + $0x310] sm:$0xff]
    %v1936 = vld [vmem:[#allocation6 + $0x318] sm:$0xff]
    %v1937 = vld [vmem:[#allocation6 + $0x320] sm:$0xff]
    %v1938 = vld [vmem:[#allocation6 + $0x328] sm:$0xff]
    %v1939 = vld [vmem:[#allocation6 + $0x330] sm:$0xff]
    %v1940 = vld [vmem:[#allocation6 + $0x338] sm:$0xff]
    %v1941 = vld [vmem:[#allocation6 + $0x340] sm:$0xff]
    %v1942 = vld [vmem:[#allocation6 + $0x348] sm:$0xff]
    %v1943 = vld [vmem:[#allocation6 + $0x350] sm:$0xff]
    %v1944 = vld [vmem:[#allocation6 + $0x358] sm:$0xff]
    %v1945 = vld [vmem:[#allocation6 + $0x360] sm:$0xff]
    %v1946 = vld [vmem:[#allocation6 + $0x368] sm:$0xff]
    %v1947 = vld [vmem:[#allocation6 + $0x370] sm:$0xff]
    %v1948 = vld [vmem:[#allocation6 + $0x378] sm:$0xff]
    %v1949 = vld [vmem:[#allocation6 + $0x380] sm:$0xff]
    %v1950 = vld [vmem:[#allocation6 + $0x388] sm:$0xff]
    %v1951 = vld [vmem:[#allocation6 + $0x390] sm:$0xff]
    %v1952 = vld [vmem:[#allocation6 + $0x398] sm:$0xff]
    %v1953 = vld [vmem:[#allocation6 + $0x3a0] sm:$0xff]
    %v1954 = vld [vmem:[#allocation6 + $0x3a8] sm:$0xff]
    %v1955 = vld [vmem:[#allocation6 + $0x3b0] sm:$0xff]
    %v1956 = vld [vmem:[#allocation6 + $0x3b8] sm:$0xff]
    %v1957 = vld [vmem:[#allocation6 + $0x3c0] sm:$0xff]
    %v1958 = vld [vmem:[#allocation6 + $0x3c8] sm:$0xff]
    %v1959 = vld [vmem:[#allocation6 + $0x3d0] sm:$0xff]
    %v1960 = vld [vmem:[#allocation6 + $0x3d8] sm:$0xff]
    %v1961 = vld [vmem:[#allocation6 + $0x3e0] sm:$0xff]
    %v1962 = vld [vmem:[#allocation6 + $0x3e8] sm:$0xff]
    %v1963 = vld [vmem:[#allocation6 + $0x3f0] sm:$0xff]
    %v1964 = vld [vmem:[#allocation6 + $0x3f8] sm:$0xff]
    %v1965 = vld [vmem:[#allocation6 + $0x400] sm:$0xff]
    %v1966 = vld [vmem:[#allocation6 + $0x408] sm:$0xff]
    %v1967 = vld [vmem:[#allocation6 + $0x410] sm:$0xff]
    %v1968 = vld [vmem:[#allocation6 + $0x418] sm:$0xff]
    %v1969 = vld [vmem:[#allocation6 + $0x420] sm:$0xff]
    %v1970 = vld [vmem:[#allocation6 + $0x428] sm:$0xff]
    %v1971 = vld [vmem:[#allocation6 + $0x430] sm:$0xff]
    %v1972 = vld [vmem:[#allocation6 + $0x438] sm:$0xff]
    %v1973 = vld [vmem:[#allocation6 + $0x440] sm:$0xff]
    %v1974 = vld [vmem:[#allocation6 + $0x448] sm:$0xff]
    %v1975 = vld [vmem:[#allocation6 + $0x450] sm:$0xff]
    %v1976 = vld [vmem:[#allocation6 + $0x458] sm:$0xff]
    %v1977 = vld [vmem:[#allocation6 + $0x460] sm:$0xff]
    %v1978 = vld [vmem:[#allocation6 + $0x468] sm:$0xff]
    %v1979 = vld [vmem:[#allocation6 + $0x470] sm:$0xff]
    %v1980 = vld [vmem:[#allocation6 + $0x478] sm:$0xff]
    %v1981 = vld [vmem:[#allocation6 + $0x480] sm:$0xff]
    %v1982 = vld [vmem:[#allocation6 + $0x488] sm:$0xff]
    %v1983 = vld [vmem:[#allocation6 + $0x490] sm:$0xff]
    %v1984 = vld [vmem:[#allocation6 + $0x498] sm:$0xff]
    %v1985 = vld [vmem:[#allocation6 + $0x4a0] sm:$0xff]
    %v1986 = vld [vmem:[#allocation6 + $0x4a8] sm:$0xff]
    %v1987 = vld [vmem:[#allocation6 + $0x4b0] sm:$0xff]
    %v1988 = vld [vmem:[#allocation6 + $0x4b8] sm:$0xff]
    %v1989 = vld [vmem:[#allocation6 + $0x4c0] sm:$0xff]
    %v1990 = vld [vmem:[#allocation6 + $0x4c8] sm:$0xff]
    %v1991 = vld [vmem:[#allocation6 + $0x4d0] sm:$0xff]
    %v1992 = vld [vmem:[#allocation6 + $0x4d8] sm:$0xff]
    %v1993 = vld [vmem:[#allocation6 + $0x4e0] sm:$0xff]
    %v1994 = vld [vmem:[#allocation6 + $0x4e8] sm:$0xff]
    %v1995 = vld [vmem:[#allocation6 + $0x4f0] sm:$0xff]
    %v1996 = vld [vmem:[#allocation6 + $0x4f8] sm:$0xff]
    %v1997 = vld [vmem:[#allocation6 + $0x500] sm:$0xff]
    %v1998 = vld [vmem:[#allocation6 + $0x508] sm:$0xff]
    %v1999 = vld [vmem:[#allocation6 + $0x510] sm:$0xff]
    %v2000 = vld [vmem:[#allocation6 + $0x518] sm:$0xff]
    %v2001 = vld [vmem:[#allocation6 + $0x520] sm:$0xff]
    %v2002 = vld [vmem:[#allocation6 + $0x528] sm:$0xff]
    %v2003 = vld [vmem:[#allocation6 + $0x530] sm:$0xff]
    %v2004 = vld [vmem:[#allocation6 + $0x538] sm:$0xff]
    %v2005 = vld [vmem:[#allocation6 + $0x540] sm:$0xff]
    %v2006 = vld [vmem:[#allocation6 + $0x548] sm:$0xff]
    %v2007 = vld [vmem:[#allocation6 + $0x550] sm:$0xff]
    %v2008 = vld [vmem:[#allocation6 + $0x558] sm:$0xff]
    %v2009 = vld [vmem:[#allocation6 + $0x560] sm:$0xff]
    %v2010 = vld [vmem:[#allocation6 + $0x568] sm:$0xff]
    %v2011 = vld [vmem:[#allocation6 + $0x570] sm:$0xff]
    %v2012 = vld [vmem:[#allocation6 + $0x578] sm:$0xff]
    %v2013 = vld [vmem:[#allocation6 + $0x580] sm:$0xff]
    %v2014 = vld [vmem:[#allocation6 + $0x588] sm:$0xff]
    %v2015 = vld [vmem:[#allocation6 + $0x590] sm:$0xff]
    %v2016 = vld [vmem:[#allocation6 + $0x598] sm:$0xff]
    %v2017 = vld [vmem:[#allocation6 + $0x5a0] sm:$0xff]
    %v2018 = vld [vmem:[#allocation6 + $0x5a8] sm:$0xff]
    %v2019 = vld [vmem:[#allocation6 + $0x5b0] sm:$0xff]
    %v2020 = vld [vmem:[#allocation6 + $0x5b8] sm:$0xff]
    %v2021 = vld [vmem:[#allocation6 + $0x5c0] sm:$0xff]
    %v2022 = vld [vmem:[#allocation6 + $0x5c8] sm:$0xff]
    %v2023 = vld [vmem:[#allocation6 + $0x5d0] sm:$0xff]
    %v2024 = vld [vmem:[#allocation6 + $0x5d8] sm:$0xff]
    %v2025 = vld [vmem:[#allocation6 + $0x5e0] sm:$0xff]
    %v2026 = vld [vmem:[#allocation6 + $0x5e8] sm:$0xff]
    %v2027 = vld [vmem:[#allocation6 + $0x5f0] sm:$0xff]
    %v2028 = vld [vmem:[#allocation6 + $0x5f8] sm:$0xff]
    %v2029 = vld [vmem:[#allocation6 + $0x600] sm:$0xff]
    %v2030 = vld [vmem:[#allocation6 + $0x608] sm:$0xff]
    %v2031 = vld [vmem:[#allocation6 + $0x610] sm:$0xff]
    %v2032 = vld [vmem:[#allocation6 + $0x618] sm:$0xff]
    %v2033 = vld [vmem:[#allocation6 + $0x620] sm:$0xff]
    %v2034 = vld [vmem:[#allocation6 + $0x628] sm:$0xff]
    %v2035 = vld [vmem:[#allocation6 + $0x630] sm:$0xff]
    %v2036 = vld [vmem:[#allocation6 + $0x638] sm:$0xff]
    %v2037 = vld [vmem:[#allocation6 + $0x640] sm:$0xff]
    %v2038 = vld [vmem:[#allocation6 + $0x648] sm:$0xff]
    %v2039 = vld [vmem:[#allocation6 + $0x650] sm:$0xff]
    %v2040 = vld [vmem:[#allocation6 + $0x658] sm:$0xff]
    %v2041 = vld [vmem:[#allocation6 + $0x660] sm:$0xff]
    %v2042 = vld [vmem:[#allocation6 + $0x668] sm:$0xff]
    %v2043 = vld [vmem:[#allocation6 + $0x670] sm:$0xff]
    %v2044 = vld [vmem:[#allocation6 + $0x678] sm:$0xff]
    %v2045 = vld [vmem:[#allocation6 + $0x680] sm:$0xff]
    %v2046 = vld [vmem:[#allocation6 + $0x688] sm:$0xff]
    %v2047 = vld [vmem:[#allocation6 + $0x690] sm:$0xff]
    %v2048 = vld [vmem:[#allocation6 + $0x698] sm:$0xff]
    %v2049 = vld [vmem:[#allocation6 + $0x6a0] sm:$0xff]
    %v2050 = vld [vmem:[#allocation6 + $0x6a8] sm:$0xff]
    %v2051 = vld [vmem:[#allocation6 + $0x6b0] sm:$0xff]
    %v2052 = vld [vmem:[#allocation6 + $0x6b8] sm:$0xff]
    %v2053 = vld [vmem:[#allocation6 + $0x6c0] sm:$0xff]
    %v2054 = vld [vmem:[#allocation6 + $0x6c8] sm:$0xff]
    %v2055 = vld [vmem:[#allocation6 + $0x6d0] sm:$0xff]
    %v2056 = vld [vmem:[#allocation6 + $0x6d8] sm:$0xff]
    %v2057 = vld [vmem:[#allocation6 + $0x6e0] sm:$0xff]
    %v2058 = vld [vmem:[#allocation6 + $0x6e8] sm:$0xff]
    %v2059 = vld [vmem:[#allocation6 + $0x6f0] sm:$0xff]
    %v2060 = vld [vmem:[#allocation6 + $0x6f8] sm:$0xff]
    %v2061 = vld [vmem:[#allocation6 + $0x700] sm:$0xff]
    %v2062 = vld [vmem:[#allocation6 + $0x708] sm:$0xff]
    %v2063 = vld [vmem:[#allocation6 + $0x710] sm:$0xff]
    %v2064 = vld [vmem:[#allocation6 + $0x718] sm:$0xff]
    %v2065 = vld [vmem:[#allocation6 + $0x720] sm:$0xff]
    %v2066 = vld [vmem:[#allocation6 + $0x728] sm:$0xff]
    %v2067 = vld [vmem:[#allocation6 + $0x730] sm:$0xff]
    %v2068 = vld [vmem:[#allocation6 + $0x738] sm:$0xff]
    %v2069 = vld [vmem:[#allocation6 + $0x740] sm:$0xff]
    %v2070 = vld [vmem:[#allocation6 + $0x748] sm:$0xff]
    %v2071 = vld [vmem:[#allocation6 + $0x750] sm:$0xff]
    %v2072 = vld [vmem:[#allocation6 + $0x758] sm:$0xff]
    %v2073 = vld [vmem:[#allocation6 + $0x760] sm:$0xff]
    %v2074 = vld [vmem:[#allocation6 + $0x768] sm:$0xff]
    %v2075 = vld [vmem:[#allocation6 + $0x770] sm:$0xff]
    %v2076 = vld [vmem:[#allocation6 + $0x778] sm:$0xff]
    %v2077 = vld [vmem:[#allocation6 + $0x780] sm:$0xff]
    %v2078 = vld [vmem:[#allocation6 + $0x788] sm:$0xff]
    %v2079 = vld [vmem:[#allocation6 + $0x790] sm:$0xff]
    %v2080 = vld [vmem:[#allocation6 + $0x798] sm:$0xff]
    %v2081 = vld [vmem:[#allocation6 + $0x7a0] sm:$0xff]
    %v2082 = vld [vmem:[#allocation6 + $0x7a8] sm:$0xff]
    %v2083 = vld [vmem:[#allocation6 + $0x7b0] sm:$0xff]
    %v2084 = vld [vmem:[#allocation6 + $0x7b8] sm:$0xff]
    %v2085 = vld [vmem:[#allocation6 + $0x7c0] sm:$0xff]
    %v2086 = vld [vmem:[#allocation6 + $0x7c8] sm:$0xff]
    %v2087 = vld [vmem:[#allocation6 + $0x7d0] sm:$0xff]
    %v2088 = vld [vmem:[#allocation6 + $0x7d8] sm:$0xff]
    %v2089 = vld [vmem:[#allocation6 + $0x7e0] sm:$0xff]
    %v2090 = vld [vmem:[#allocation6 + $0x7e8] sm:$0xff]
    %v2091 = vld [vmem:[#allocation6 + $0x7f0] sm:$0xff]
    %v2092 = vld [vmem:[#allocation6 + $0x7f8] sm:$0xff]
    %s2093 = scalar_lea.vmem [#allocation6], 2048
    %v2094 = vld [vmem:[%s2093] sm:$0xff]
    %v2095 = vld [vmem:[%s2093 + $0x8] sm:$0xff]
    %v2096 = vld [vmem:[%s2093 + $0x10] sm:$0xff]
    %v2097 = vld [vmem:[%s2093 + $0x18] sm:$0xff]
    %v2098 = vld [vmem:[%s2093 + $0x20] sm:$0xff]
    %v2099 = vld [vmem:[%s2093 + $0x28] sm:$0xff]
    %v2100 = vld [vmem:[%s2093 + $0x30] sm:$0xff]
    %v2101 = vld [vmem:[%s2093 + $0x38] sm:$0xff]
    %v2102 = vld [vmem:[%s2093 + $0x40] sm:$0xff]
    %v2103 = vld [vmem:[%s2093 + $0x48] sm:$0xff]
    %v2104 = vld [vmem:[%s2093 + $0x50] sm:$0xff]
    %v2105 = vld [vmem:[%s2093 + $0x58] sm:$0xff]
    %v2106 = vld [vmem:[%s2093 + $0x60] sm:$0xff]
    %v2107 = vld [vmem:[%s2093 + $0x68] sm:$0xff]
    %v2108 = vld [vmem:[%s2093 + $0x70] sm:$0xff]
    %v2109 = vld [vmem:[%s2093 + $0x78] sm:$0xff]
    %v2110 = vld [vmem:[%s2093 + $0x80] sm:$0xff]
    %v2111 = vld [vmem:[%s2093 + $0x88] sm:$0xff]
    %v2112 = vld [vmem:[%s2093 + $0x90] sm:$0xff]
    %v2113 = vld [vmem:[%s2093 + $0x98] sm:$0xff]
    %v2114 = vld [vmem:[%s2093 + $0xa0] sm:$0xff]
    %v2115 = vld [vmem:[%s2093 + $0xa8] sm:$0xff]
    %v2116 = vld [vmem:[%s2093 + $0xb0] sm:$0xff]
    %v2117 = vld [vmem:[%s2093 + $0xb8] sm:$0xff]
    %v2118 = vld [vmem:[%s2093 + $0xc0] sm:$0xff]
    %v2119 = vld [vmem:[%s2093 + $0xc8] sm:$0xff]
    %v2120 = vld [vmem:[%s2093 + $0xd0] sm:$0xff]
    %v2121 = vld [vmem:[%s2093 + $0xd8] sm:$0xff]
    %v2122 = vld [vmem:[%s2093 + $0xe0] sm:$0xff]
    %v2123 = vld [vmem:[%s2093 + $0xe8] sm:$0xff]
    %v2124 = vld [vmem:[%s2093 + $0xf0] sm:$0xff]
    %v2125 = vld [vmem:[%s2093 + $0xf8] sm:$0xff]
    %v2126 = vld [vmem:[%s2093 + $0x100] sm:$0xff]
    %v2127 = vld [vmem:[%s2093 + $0x108] sm:$0xff]
    %v2128 = vld [vmem:[%s2093 + $0x110] sm:$0xff]
    %v2129 = vld [vmem:[%s2093 + $0x118] sm:$0xff]
    %v2130 = vld [vmem:[%s2093 + $0x120] sm:$0xff]
    %v2131 = vld [vmem:[%s2093 + $0x128] sm:$0xff]
    %v2132 = vld [vmem:[%s2093 + $0x130] sm:$0xff]
    %v2133 = vld [vmem:[%s2093 + $0x138] sm:$0xff]
    %v2134 = vld [vmem:[%s2093 + $0x140] sm:$0xff]
    %v2135 = vld [vmem:[%s2093 + $0x148] sm:$0xff]
    %v2136 = vld [vmem:[%s2093 + $0x150] sm:$0xff]
    %v2137 = vld [vmem:[%s2093 + $0x158] sm:$0xff]
    %v2138 = vld [vmem:[%s2093 + $0x160] sm:$0xff]
    %v2139 = vld [vmem:[%s2093 + $0x168] sm:$0xff]
    %v2140 = vld [vmem:[%s2093 + $0x170] sm:$0xff]
    %v2141 = vld [vmem:[%s2093 + $0x178] sm:$0xff]
    %v2142 = vld [vmem:[%s2093 + $0x180] sm:$0xff]
    %v2143 = vld [vmem:[%s2093 + $0x188] sm:$0xff]
    %v2144 = vld [vmem:[%s2093 + $0x190] sm:$0xff]
    %v2145 = vld [vmem:[%s2093 + $0x198] sm:$0xff]
    %v2146 = vld [vmem:[%s2093 + $0x1a0] sm:$0xff]
    %v2147 = vld [vmem:[%s2093 + $0x1a8] sm:$0xff]
    %v2148 = vld [vmem:[%s2093 + $0x1b0] sm:$0xff]
    %v2149 = vld [vmem:[%s2093 + $0x1b8] sm:$0xff]
    %v2150 = vld [vmem:[%s2093 + $0x1c0] sm:$0xff]
    %v2151 = vld [vmem:[%s2093 + $0x1c8] sm:$0xff]
    %v2152 = vld [vmem:[%s2093 + $0x1d0] sm:$0xff]
    %v2153 = vld [vmem:[%s2093 + $0x1d8] sm:$0xff]
    %v2154 = vld [vmem:[%s2093 + $0x1e0] sm:$0xff]
    %v2155 = vld [vmem:[%s2093 + $0x1e8] sm:$0xff]
    %v2156 = vld [vmem:[%s2093 + $0x1f0] sm:$0xff]
    %v2157 = vld [vmem:[%s2093 + $0x1f8] sm:$0xff]
    %v2158 = vld [vmem:[%s2093 + $0x200] sm:$0xff]
    %v2159 = vld [vmem:[%s2093 + $0x208] sm:$0xff]
    %v2160 = vld [vmem:[%s2093 + $0x210] sm:$0xff]
    %v2161 = vld [vmem:[%s2093 + $0x218] sm:$0xff]
    %v2162 = vld [vmem:[%s2093 + $0x220] sm:$0xff]
    %v2163 = vld [vmem:[%s2093 + $0x228] sm:$0xff]
    %v2164 = vld [vmem:[%s2093 + $0x230] sm:$0xff]
    %v2165 = vld [vmem:[%s2093 + $0x238] sm:$0xff]
    %v2166 = vld [vmem:[%s2093 + $0x240] sm:$0xff]
    %v2167 = vld [vmem:[%s2093 + $0x248] sm:$0xff]
    %v2168 = vld [vmem:[%s2093 + $0x250] sm:$0xff]
    %v2169 = vld [vmem:[%s2093 + $0x258] sm:$0xff]
    %v2170 = vld [vmem:[%s2093 + $0x260] sm:$0xff]
    %v2171 = vld [vmem:[%s2093 + $0x268] sm:$0xff]
    %v2172 = vld [vmem:[%s2093 + $0x270] sm:$0xff]
    %v2173 = vld [vmem:[%s2093 + $0x278] sm:$0xff]
    %v2174 = vld [vmem:[%s2093 + $0x280] sm:$0xff]
    %v2175 = vld [vmem:[%s2093 + $0x288] sm:$0xff]
    %v2176 = vld [vmem:[%s2093 + $0x290] sm:$0xff]
    %v2177 = vld [vmem:[%s2093 + $0x298] sm:$0xff]
    %v2178 = vld [vmem:[%s2093 + $0x2a0] sm:$0xff]
    %v2179 = vld [vmem:[%s2093 + $0x2a8] sm:$0xff]
    %v2180 = vld [vmem:[%s2093 + $0x2b0] sm:$0xff]
    %v2181 = vld [vmem:[%s2093 + $0x2b8] sm:$0xff]
    %v2182 = vld [vmem:[%s2093 + $0x2c0] sm:$0xff]
    %v2183 = vld [vmem:[%s2093 + $0x2c8] sm:$0xff]
    %v2184 = vld [vmem:[%s2093 + $0x2d0] sm:$0xff]
    %v2185 = vld [vmem:[%s2093 + $0x2d8] sm:$0xff]
    %v2186 = vld [vmem:[%s2093 + $0x2e0] sm:$0xff]
    %v2187 = vld [vmem:[%s2093 + $0x2e8] sm:$0xff]
    %v2188 = vld [vmem:[%s2093 + $0x2f0] sm:$0xff]
    %v2189 = vld [vmem:[%s2093 + $0x2f8] sm:$0xff]
    %v2190 = vld [vmem:[%s2093 + $0x300] sm:$0xff]
    %v2191 = vld [vmem:[%s2093 + $0x308] sm:$0xff]
    %v2192 = vld [vmem:[%s2093 + $0x310] sm:$0xff]
    %v2193 = vld [vmem:[%s2093 + $0x318] sm:$0xff]
    %v2194 = vld [vmem:[%s2093 + $0x320] sm:$0xff]
    %v2195 = vld [vmem:[%s2093 + $0x328] sm:$0xff]
    %v2196 = vld [vmem:[%s2093 + $0x330] sm:$0xff]
    %v2197 = vld [vmem:[%s2093 + $0x338] sm:$0xff]
    %v2198 = vld [vmem:[%s2093 + $0x340] sm:$0xff]
    %v2199 = vld [vmem:[%s2093 + $0x348] sm:$0xff]
    %v2200 = vld [vmem:[%s2093 + $0x350] sm:$0xff]
    %v2201 = vld [vmem:[%s2093 + $0x358] sm:$0xff]
    %v2202 = vld [vmem:[%s2093 + $0x360] sm:$0xff]
    %v2203 = vld [vmem:[%s2093 + $0x368] sm:$0xff]
    %v2204 = vld [vmem:[%s2093 + $0x370] sm:$0xff]
    %v2205 = vld [vmem:[%s2093 + $0x378] sm:$0xff]
    %v2206 = vld [vmem:[%s2093 + $0x380] sm:$0xff]
    %v2207 = vld [vmem:[%s2093 + $0x388] sm:$0xff]
    %v2208 = vld [vmem:[%s2093 + $0x390] sm:$0xff]
    %v2209 = vld [vmem:[%s2093 + $0x398] sm:$0xff]
    %v2210 = vld [vmem:[%s2093 + $0x3a0] sm:$0xff]
    %v2211 = vld [vmem:[%s2093 + $0x3a8] sm:$0xff]
    %v2212 = vld [vmem:[%s2093 + $0x3b0] sm:$0xff]
    %v2213 = vld [vmem:[%s2093 + $0x3b8] sm:$0xff]
    %v2214 = vld [vmem:[%s2093 + $0x3c0] sm:$0xff]
    %v2215 = vld [vmem:[%s2093 + $0x3c8] sm:$0xff]
    %v2216 = vld [vmem:[%s2093 + $0x3d0] sm:$0xff]
    %v2217 = vld [vmem:[%s2093 + $0x3d8] sm:$0xff]
    %v2218 = vld [vmem:[%s2093 + $0x3e0] sm:$0xff]
    %v2219 = vld [vmem:[%s2093 + $0x3e8] sm:$0xff]
    %v2220 = vld [vmem:[%s2093 + $0x3f0] sm:$0xff]
    %v2221 = vld [vmem:[%s2093 + $0x3f8] sm:$0xff]
    %v2222 = vld [vmem:[%s2093 + $0x400] sm:$0xff]
    %v2223 = vld [vmem:[%s2093 + $0x408] sm:$0xff]
    %v2224 = vld [vmem:[%s2093 + $0x410] sm:$0xff]
    %v2225 = vld [vmem:[%s2093 + $0x418] sm:$0xff]
    %v2226 = vld [vmem:[%s2093 + $0x420] sm:$0xff]
    %v2227 = vld [vmem:[%s2093 + $0x428] sm:$0xff]
    %v2228 = vld [vmem:[%s2093 + $0x430] sm:$0xff]
    %v2229 = vld [vmem:[%s2093 + $0x438] sm:$0xff]
    %v2230 = vld [vmem:[%s2093 + $0x440] sm:$0xff]
    %v2231 = vld [vmem:[%s2093 + $0x448] sm:$0xff]
    %v2232 = vld [vmem:[%s2093 + $0x450] sm:$0xff]
    %v2233 = vld [vmem:[%s2093 + $0x458] sm:$0xff]
    %v2234 = vld [vmem:[%s2093 + $0x460] sm:$0xff]
    %v2235 = vld [vmem:[%s2093 + $0x468] sm:$0xff]
    %v2236 = vld [vmem:[%s2093 + $0x470] sm:$0xff]
    %v2237 = vld [vmem:[%s2093 + $0x478] sm:$0xff]
    %v2238 = vld [vmem:[%s2093 + $0x480] sm:$0xff]
    %v2239 = vld [vmem:[%s2093 + $0x488] sm:$0xff]
    %v2240 = vld [vmem:[%s2093 + $0x490] sm:$0xff]
    %v2241 = vld [vmem:[%s2093 + $0x498] sm:$0xff]
    %v2242 = vld [vmem:[%s2093 + $0x4a0] sm:$0xff]
    %v2243 = vld [vmem:[%s2093 + $0x4a8] sm:$0xff]
    %v2244 = vld [vmem:[%s2093 + $0x4b0] sm:$0xff]
    %v2245 = vld [vmem:[%s2093 + $0x4b8] sm:$0xff]
    %v2246 = vld [vmem:[%s2093 + $0x4c0] sm:$0xff]
    %v2247 = vld [vmem:[%s2093 + $0x4c8] sm:$0xff]
    %v2248 = vld [vmem:[%s2093 + $0x4d0] sm:$0xff]
    %v2249 = vld [vmem:[%s2093 + $0x4d8] sm:$0xff]
    %v2250 = vld [vmem:[%s2093 + $0x4e0] sm:$0xff]
    %v2251 = vld [vmem:[%s2093 + $0x4e8] sm:$0xff]
    %v2252 = vld [vmem:[%s2093 + $0x4f0] sm:$0xff]
    %v2253 = vld [vmem:[%s2093 + $0x4f8] sm:$0xff]
    %v2254 = vld [vmem:[%s2093 + $0x500] sm:$0xff]
    %v2255 = vld [vmem:[%s2093 + $0x508] sm:$0xff]
    %v2256 = vld [vmem:[%s2093 + $0x510] sm:$0xff]
    %v2257 = vld [vmem:[%s2093 + $0x518] sm:$0xff]
    %v2258 = vld [vmem:[%s2093 + $0x520] sm:$0xff]
    %v2259 = vld [vmem:[%s2093 + $0x528] sm:$0xff]
    %v2260 = vld [vmem:[%s2093 + $0x530] sm:$0xff]
    %v2261 = vld [vmem:[%s2093 + $0x538] sm:$0xff]
    %v2262 = vld [vmem:[%s2093 + $0x540] sm:$0xff]
    %v2263 = vld [vmem:[%s2093 + $0x548] sm:$0xff]
    %v2264 = vld [vmem:[%s2093 + $0x550] sm:$0xff]
    %v2265 = vld [vmem:[%s2093 + $0x558] sm:$0xff]
    %v2266 = vld [vmem:[%s2093 + $0x560] sm:$0xff]
    %v2267 = vld [vmem:[%s2093 + $0x568] sm:$0xff]
    %v2268 = vld [vmem:[%s2093 + $0x570] sm:$0xff]
    %v2269 = vld [vmem:[%s2093 + $0x578] sm:$0xff]
    %v2270 = vld [vmem:[%s2093 + $0x580] sm:$0xff]
    %v2271 = vld [vmem:[%s2093 + $0x588] sm:$0xff]
    %v2272 = vld [vmem:[%s2093 + $0x590] sm:$0xff]
    %v2273 = vld [vmem:[%s2093 + $0x598] sm:$0xff]
    %v2274 = vld [vmem:[%s2093 + $0x5a0] sm:$0xff]
    %v2275 = vld [vmem:[%s2093 + $0x5a8] sm:$0xff]
    %v2276 = vld [vmem:[%s2093 + $0x5b0] sm:$0xff]
    %v2277 = vld [vmem:[%s2093 + $0x5b8] sm:$0xff]
    %v2278 = vld [vmem:[%s2093 + $0x5c0] sm:$0xff]
    %v2279 = vld [vmem:[%s2093 + $0x5c8] sm:$0xff]
    %v2280 = vld [vmem:[%s2093 + $0x5d0] sm:$0xff]
    %v2281 = vld [vmem:[%s2093 + $0x5d8] sm:$0xff]
    %v2282 = vld [vmem:[%s2093 + $0x5e0] sm:$0xff]
    %v2283 = vld [vmem:[%s2093 + $0x5e8] sm:$0xff]
    %v2284 = vld [vmem:[%s2093 + $0x5f0] sm:$0xff]
    %v2285 = vld [vmem:[%s2093 + $0x5f8] sm:$0xff]
    %v2286 = vld [vmem:[%s2093 + $0x600] sm:$0xff]
    %v2287 = vld [vmem:[%s2093 + $0x608] sm:$0xff]
    %v2288 = vld [vmem:[%s2093 + $0x610] sm:$0xff]
    %v2289 = vld [vmem:[%s2093 + $0x618] sm:$0xff]
    %v2290 = vld [vmem:[%s2093 + $0x620] sm:$0xff]
    %v2291 = vld [vmem:[%s2093 + $0x628] sm:$0xff]
    %v2292 = vld [vmem:[%s2093 + $0x630] sm:$0xff]
    %v2293 = vld [vmem:[%s2093 + $0x638] sm:$0xff]
    %v2294 = vld [vmem:[%s2093 + $0x640] sm:$0xff]
    %v2295 = vld [vmem:[%s2093 + $0x648] sm:$0xff]
    %v2296 = vld [vmem:[%s2093 + $0x650] sm:$0xff]
    %v2297 = vld [vmem:[%s2093 + $0x658] sm:$0xff]
    %v2298 = vld [vmem:[%s2093 + $0x660] sm:$0xff]
    %v2299 = vld [vmem:[%s2093 + $0x668] sm:$0xff]
    %v2300 = vld [vmem:[%s2093 + $0x670] sm:$0xff]
    %v2301 = vld [vmem:[%s2093 + $0x678] sm:$0xff]
    %v2302 = vld [vmem:[%s2093 + $0x680] sm:$0xff]
    %v2303 = vld [vmem:[%s2093 + $0x688] sm:$0xff]
    %v2304 = vld [vmem:[%s2093 + $0x690] sm:$0xff]
    %v2305 = vld [vmem:[%s2093 + $0x698] sm:$0xff]
    %v2306 = vld [vmem:[%s2093 + $0x6a0] sm:$0xff]
    %v2307 = vld [vmem:[%s2093 + $0x6a8] sm:$0xff]
    %v2308 = vld [vmem:[%s2093 + $0x6b0] sm:$0xff]
    %v2309 = vld [vmem:[%s2093 + $0x6b8] sm:$0xff]
    %v2310 = vld [vmem:[%s2093 + $0x6c0] sm:$0xff]
    %v2311 = vld [vmem:[%s2093 + $0x6c8] sm:$0xff]
    %v2312 = vld [vmem:[%s2093 + $0x6d0] sm:$0xff]
    %v2313 = vld [vmem:[%s2093 + $0x6d8] sm:$0xff]
    %v2314 = vld [vmem:[%s2093 + $0x6e0] sm:$0xff]
    %v2315 = vld [vmem:[%s2093 + $0x6e8] sm:$0xff]
    %v2316 = vld [vmem:[%s2093 + $0x6f0] sm:$0xff]
    %v2317 = vld [vmem:[%s2093 + $0x6f8] sm:$0xff]
    %v2318 = vld [vmem:[%s2093 + $0x700] sm:$0xff]
    %v2319 = vld [vmem:[%s2093 + $0x708] sm:$0xff]
    %v2320 = vld [vmem:[%s2093 + $0x710] sm:$0xff]
    %v2321 = vld [vmem:[%s2093 + $0x718] sm:$0xff]
    %v2322 = vld [vmem:[%s2093 + $0x720] sm:$0xff]
    %v2323 = vld [vmem:[%s2093 + $0x728] sm:$0xff]
    %v2324 = vld [vmem:[%s2093 + $0x730] sm:$0xff]
    %v2325 = vld [vmem:[%s2093 + $0x738] sm:$0xff]
    %v2326 = vld [vmem:[%s2093 + $0x740] sm:$0xff]
    %v2327 = vld [vmem:[%s2093 + $0x748] sm:$0xff]
    %v2328 = vld [vmem:[%s2093 + $0x750] sm:$0xff]
    %v2329 = vld [vmem:[%s2093 + $0x758] sm:$0xff]
    %v2330 = vld [vmem:[%s2093 + $0x760] sm:$0xff]
    %v2331 = vld [vmem:[%s2093 + $0x768] sm:$0xff]
    %v2332 = vld [vmem:[%s2093 + $0x770] sm:$0xff]
    %v2333 = vld [vmem:[%s2093 + $0x778] sm:$0xff]
    %v2334 = vld [vmem:[%s2093 + $0x780] sm:$0xff]
    %v2335 = vld [vmem:[%s2093 + $0x788] sm:$0xff]
    %v2336 = vld [vmem:[%s2093 + $0x790] sm:$0xff]
    %v2337 = vld [vmem:[%s2093 + $0x798] sm:$0xff]
    %v2338 = vld [vmem:[%s2093 + $0x7a0] sm:$0xff]
    %v2339 = vld [vmem:[%s2093 + $0x7a8] sm:$0xff]
    %v2340 = vld [vmem:[%s2093 + $0x7b0] sm:$0xff]
    %v2341 = vld [vmem:[%s2093 + $0x7b8] sm:$0xff]
    %v2342 = vld [vmem:[%s2093 + $0x7c0] sm:$0xff]
    %v2343 = vld [vmem:[%s2093 + $0x7c8] sm:$0xff]
    %v2344 = vld [vmem:[%s2093 + $0x7d0] sm:$0xff]
    %v2345 = vld [vmem:[%s2093 + $0x7d8] sm:$0xff]
    %v2346 = vld [vmem:[%s2093 + $0x7e0] sm:$0xff]
    %v2347 = vld [vmem:[%s2093 + $0x7e8] sm:$0xff]
    %v2348 = vld [vmem:[%s2093 + $0x7f0] sm:$0xff]
    %v2349 = vld [vmem:[%s2093 + $0x7f8] sm:$0xff]
    %v2382 = vunpack.c.l.b16 %v1687
    %v2383 = vunpack.c.h.b16 %v1687
    %v2384 = vunpack.c.l.b16 %v1688
    %v2385 = vunpack.c.h.b16 %v1688
    %v2386 = vunpack.c.l.b16 %v1689
    %v2387 = vunpack.c.h.b16 %v1689
    %v2388 = vunpack.c.l.b16 %v1690
    %v2389 = vunpack.c.h.b16 %v1690
    %v2390 = vunpack.c.l.b16 %v1695
    %v2391 = vunpack.c.h.b16 %v1695
    %v2392 = vunpack.c.l.b16 %v1696
    %v2393 = vunpack.c.h.b16 %v1696
    %v2394 = vunpack.c.l.b16 %v1697
    %v2395 = vunpack.c.h.b16 %v1697
    %v2396 = vunpack.c.l.b16 %v1698
    %v2397 = vunpack.c.h.b16 %v1698
    %v2398 = vunpack.c.l.b16 %v1703
    %v2399 = vunpack.c.h.b16 %v1703
    %v2400 = vunpack.c.l.b16 %v1704
    %v2401 = vunpack.c.h.b16 %v1704
    %v2402 = vunpack.c.l.b16 %v1705
    %v2403 = vunpack.c.h.b16 %v1705
    %v2404 = vunpack.c.l.b16 %v1706
    %v2405 = vunpack.c.h.b16 %v1706
    %v2406 = vunpack.c.l.b16 %v1711
    %v2407 = vunpack.c.h.b16 %v1711
    %v2408 = vunpack.c.l.b16 %v1712
    %v2409 = vunpack.c.h.b16 %v1712
    %v2410 = vunpack.c.l.b16 %v1713
    %v2411 = vunpack.c.h.b16 %v1713
    %v2412 = vunpack.c.l.b16 %v1714
    %v2413 = vunpack.c.h.b16 %v1714
    %v2414 = vunpack.c.l.b16 %v1719
    %v2415 = vunpack.c.h.b16 %v1719
    %v2416 = vunpack.c.l.b16 %v1720
    %v2417 = vunpack.c.h.b16 %v1720
    %v2418 = vunpack.c.l.b16 %v1721
    %v2419 = vunpack.c.h.b16 %v1721
    %v2420 = vunpack.c.l.b16 %v1722
    %v2421 = vunpack.c.h.b16 %v1722
    %v2422 = vunpack.c.l.b16 %v1727
    %v2423 = vunpack.c.h.b16 %v1727
    %v2424 = vunpack.c.l.b16 %v1728
    %v2425 = vunpack.c.h.b16 %v1728
    %v2426 = vunpack.c.l.b16 %v1729
    %v2427 = vunpack.c.h.b16 %v1729
    %v2428 = vunpack.c.l.b16 %v1730
    %v2429 = vunpack.c.h.b16 %v1730
    %v2430 = vunpack.c.l.b16 %v1735
    %v2431 = vunpack.c.h.b16 %v1735
    %v2432 = vunpack.c.l.b16 %v1736
    %v2433 = vunpack.c.h.b16 %v1736
    %v2434 = vunpack.c.l.b16 %v1737
    %v2435 = vunpack.c.h.b16 %v1737
    %v2436 = vunpack.c.l.b16 %v1738
    %v2437 = vunpack.c.h.b16 %v1738
    %v2438 = vunpack.c.l.b16 %v1743
    %v2439 = vunpack.c.h.b16 %v1743
    %v2440 = vunpack.c.l.b16 %v1744
    %v2441 = vunpack.c.h.b16 %v1744
    %v2442 = vunpack.c.l.b16 %v1745
    %v2443 = vunpack.c.h.b16 %v1745
    %v2444 = vunpack.c.l.b16 %v1746
    %v2445 = vunpack.c.h.b16 %v1746
    %v2446 = vpack.c.b16 %v2390, %v2382
    %v2447 = vpack.c.b16 %v2391, %v2383
    %v2448 = vpack.c.b16 %v2392, %v2384
    %v2449 = vpack.c.b16 %v2393, %v2385
    %v2450 = vpack.c.b16 %v2394, %v2386
    %v2451 = vpack.c.b16 %v2395, %v2387
    %v2452 = vpack.c.b16 %v2396, %v2388
    %v2453 = vpack.c.b16 %v2397, %v2389
    %v2454 = vpack.c.b16 %v2406, %v2398
    %v2455 = vpack.c.b16 %v2407, %v2399
    %v2456 = vpack.c.b16 %v2408, %v2400
    %v2457 = vpack.c.b16 %v2409, %v2401
    %v2458 = vpack.c.b16 %v2410, %v2402
    %v2459 = vpack.c.b16 %v2411, %v2403
    %v2460 = vpack.c.b16 %v2412, %v2404
    %v2461 = vpack.c.b16 %v2413, %v2405
    %v2462 = vpack.c.b16 %v2422, %v2414
    %v2463 = vpack.c.b16 %v2423, %v2415
    %v2464 = vpack.c.b16 %v2424, %v2416
    %v2465 = vpack.c.b16 %v2425, %v2417
    %v2466 = vpack.c.b16 %v2426, %v2418
    %v2467 = vpack.c.b16 %v2427, %v2419
    %v2468 = vpack.c.b16 %v2428, %v2420
    %v2469 = vpack.c.b16 %v2429, %v2421
    %v2470 = vpack.c.b16 %v2438, %v2430
    %v2471 = vpack.c.b16 %v2439, %v2431
    %v2472 = vpack.c.b16 %v2440, %v2432
    %v2473 = vpack.c.b16 %v2441, %v2433
    %v2474 = vpack.c.b16 %v2442, %v2434
    %v2475 = vpack.c.b16 %v2443, %v2435
    %v2476 = vpack.c.b16 %v2444, %v2436
    %v2477 = vpack.c.b16 %v2445, %v2437
    %v2766 = vunpack.c.l.b16 %v2094
    %v2767 = vunpack.c.h.b16 %v2094
    %v2768 = vunpack.c.l.b16 %v2095
    %v2769 = vunpack.c.h.b16 %v2095
    %v2770 = vunpack.c.l.b16 %v2096
    %v2771 = vunpack.c.h.b16 %v2096
    %v2772 = vunpack.c.l.b16 %v2097
    %v2773 = vunpack.c.h.b16 %v2097
    %v2774 = vunpack.c.l.b16 %v2098
    %v2775 = vunpack.c.h.b16 %v2098
    %v2776 = vunpack.c.l.b16 %v2099
    %v2777 = vunpack.c.h.b16 %v2099
    %v2778 = vunpack.c.l.b16 %v2100
    %v2779 = vunpack.c.h.b16 %v2100
    %v2780 = vunpack.c.l.b16 %v2101
    %v2781 = vunpack.c.h.b16 %v2101
    %v2782 = vunpack.c.l.b16 %v2102
    %v2783 = vunpack.c.h.b16 %v2102
    %v2784 = vunpack.c.l.b16 %v2103
    %v2785 = vunpack.c.h.b16 %v2103
    %v2786 = vunpack.c.l.b16 %v2104
    %v2787 = vunpack.c.h.b16 %v2104
    %v2788 = vunpack.c.l.b16 %v2105
    %v2789 = vunpack.c.h.b16 %v2105
    %v2790 = vunpack.c.l.b16 %v2106
    %v2791 = vunpack.c.h.b16 %v2106
    %v2792 = vunpack.c.l.b16 %v2107
    %v2793 = vunpack.c.h.b16 %v2107
    %v2794 = vunpack.c.l.b16 %v2108
    %v2795 = vunpack.c.h.b16 %v2108
    %v2796 = vunpack.c.l.b16 %v2109
    %v2797 = vunpack.c.h.b16 %v2109
    %v2798 = vunpack.c.l.b16 %v2110
    %v2799 = vunpack.c.h.b16 %v2110
    %v2800 = vunpack.c.l.b16 %v2111
    %v2801 = vunpack.c.h.b16 %v2111
    %v2802 = vunpack.c.l.b16 %v2112
    %v2803 = vunpack.c.h.b16 %v2112
    %v2804 = vunpack.c.l.b16 %v2113
    %v2805 = vunpack.c.h.b16 %v2113
    %v2806 = vunpack.c.l.b16 %v2114
    %v2807 = vunpack.c.h.b16 %v2114
    %v2808 = vunpack.c.l.b16 %v2115
    %v2809 = vunpack.c.h.b16 %v2115
    %v2810 = vunpack.c.l.b16 %v2116
    %v2811 = vunpack.c.h.b16 %v2116
    %v2812 = vunpack.c.l.b16 %v2117
    %v2813 = vunpack.c.h.b16 %v2117
    %v2814 = vunpack.c.l.b16 %v2118
    %v2815 = vunpack.c.h.b16 %v2118
    %v2816 = vunpack.c.l.b16 %v2119
    %v2817 = vunpack.c.h.b16 %v2119
    %v2818 = vunpack.c.l.b16 %v2120
    %v2819 = vunpack.c.h.b16 %v2120
    %v2820 = vunpack.c.l.b16 %v2121
    %v2821 = vunpack.c.h.b16 %v2121
    %v2822 = vunpack.c.l.b16 %v2122
    %v2823 = vunpack.c.h.b16 %v2122
    %v2824 = vunpack.c.l.b16 %v2123
    %v2825 = vunpack.c.h.b16 %v2123
    %v2826 = vunpack.c.l.b16 %v2124
    %v2827 = vunpack.c.h.b16 %v2124
    %v2828 = vunpack.c.l.b16 %v2125
    %v2829 = vunpack.c.h.b16 %v2125
    %v2830 = vunpack.c.l.b16 %v2126
    %v2831 = vunpack.c.h.b16 %v2126
    %v2832 = vunpack.c.l.b16 %v2127
    %v2833 = vunpack.c.h.b16 %v2127
    %v2834 = vunpack.c.l.b16 %v2128
    %v2835 = vunpack.c.h.b16 %v2128
    %v2836 = vunpack.c.l.b16 %v2129
    %v2837 = vunpack.c.h.b16 %v2129
    %v2838 = vunpack.c.l.b16 %v2130
    %v2839 = vunpack.c.h.b16 %v2130
    %v2840 = vunpack.c.l.b16 %v2131
    %v2841 = vunpack.c.h.b16 %v2131
    %v2842 = vunpack.c.l.b16 %v2132
    %v2843 = vunpack.c.h.b16 %v2132
    %v2844 = vunpack.c.l.b16 %v2133
    %v2845 = vunpack.c.h.b16 %v2133
    %v2846 = vunpack.c.l.b16 %v2134
    %v2847 = vunpack.c.h.b16 %v2134
    %v2848 = vunpack.c.l.b16 %v2135
    %v2849 = vunpack.c.h.b16 %v2135
    %v2850 = vunpack.c.l.b16 %v2136
    %v2851 = vunpack.c.h.b16 %v2136
    %v2852 = vunpack.c.l.b16 %v2137
    %v2853 = vunpack.c.h.b16 %v2137
    %v2854 = vunpack.c.l.b16 %v2138
    %v2855 = vunpack.c.h.b16 %v2138
    %v2856 = vunpack.c.l.b16 %v2139
    %v2857 = vunpack.c.h.b16 %v2139
    %v2858 = vunpack.c.l.b16 %v2140
    %v2859 = vunpack.c.h.b16 %v2140
    %v2860 = vunpack.c.l.b16 %v2141
    %v2861 = vunpack.c.h.b16 %v2141
    %v2862 = vunpack.c.l.b16 %v2142
    %v2863 = vunpack.c.h.b16 %v2142
    %v2864 = vunpack.c.l.b16 %v2143
    %v2865 = vunpack.c.h.b16 %v2143
    %v2866 = vunpack.c.l.b16 %v2144
    %v2867 = vunpack.c.h.b16 %v2144
    %v2868 = vunpack.c.l.b16 %v2145
    %v2869 = vunpack.c.h.b16 %v2145
    %v2870 = vunpack.c.l.b16 %v2146
    %v2871 = vunpack.c.h.b16 %v2146
    %v2872 = vunpack.c.l.b16 %v2147
    %v2873 = vunpack.c.h.b16 %v2147
    %v2874 = vunpack.c.l.b16 %v2148
    %v2875 = vunpack.c.h.b16 %v2148
    %v2876 = vunpack.c.l.b16 %v2149
    %v2877 = vunpack.c.h.b16 %v2149
    %v2878 = vunpack.c.l.b16 %v2150
    %v2879 = vunpack.c.h.b16 %v2150
    %v2880 = vunpack.c.l.b16 %v2151
    %v2881 = vunpack.c.h.b16 %v2151
    %v2882 = vunpack.c.l.b16 %v2152
    %v2883 = vunpack.c.h.b16 %v2152
    %v2884 = vunpack.c.l.b16 %v2153
    %v2885 = vunpack.c.h.b16 %v2153
    %v2886 = vunpack.c.l.b16 %v2154
    %v2887 = vunpack.c.h.b16 %v2154
    %v2888 = vunpack.c.l.b16 %v2155
    %v2889 = vunpack.c.h.b16 %v2155
    %v2890 = vunpack.c.l.b16 %v2156
    %v2891 = vunpack.c.h.b16 %v2156
    %v2892 = vunpack.c.l.b16 %v2157
    %v2893 = vunpack.c.h.b16 %v2157
    %v2894 = vunpack.c.l.b16 %v2158
    %v2895 = vunpack.c.h.b16 %v2158
    %v2896 = vunpack.c.l.b16 %v2159
    %v2897 = vunpack.c.h.b16 %v2159
    %v2898 = vunpack.c.l.b16 %v2160
    %v2899 = vunpack.c.h.b16 %v2160
    %v2900 = vunpack.c.l.b16 %v2161
    %v2901 = vunpack.c.h.b16 %v2161
    %v2902 = vunpack.c.l.b16 %v2162
    %v2903 = vunpack.c.h.b16 %v2162
    %v2904 = vunpack.c.l.b16 %v2163
    %v2905 = vunpack.c.h.b16 %v2163
    %v2906 = vunpack.c.l.b16 %v2164
    %v2907 = vunpack.c.h.b16 %v2164
    %v2908 = vunpack.c.l.b16 %v2165
    %v2909 = vunpack.c.h.b16 %v2165
    %v2910 = vunpack.c.l.b16 %v2166
    %v2911 = vunpack.c.h.b16 %v2166
    %v2912 = vunpack.c.l.b16 %v2167
    %v2913 = vunpack.c.h.b16 %v2167
    %v2914 = vunpack.c.l.b16 %v2168
    %v2915 = vunpack.c.h.b16 %v2168
    %v2916 = vunpack.c.l.b16 %v2169
    %v2917 = vunpack.c.h.b16 %v2169
    %v2918 = vunpack.c.l.b16 %v2170
    %v2919 = vunpack.c.h.b16 %v2170
    %v2920 = vunpack.c.l.b16 %v2171
    %v2921 = vunpack.c.h.b16 %v2171
    %v2922 = vunpack.c.l.b16 %v2172
    %v2923 = vunpack.c.h.b16 %v2172
    %v2924 = vunpack.c.l.b16 %v2173
    %v2925 = vunpack.c.h.b16 %v2173
    %v2926 = vunpack.c.l.b16 %v2174
    %v2927 = vunpack.c.h.b16 %v2174
    %v2928 = vunpack.c.l.b16 %v2175
    %v2929 = vunpack.c.h.b16 %v2175
    %v2930 = vunpack.c.l.b16 %v2176
    %v2931 = vunpack.c.h.b16 %v2176
    %v2932 = vunpack.c.l.b16 %v2177
    %v2933 = vunpack.c.h.b16 %v2177
    %v2934 = vunpack.c.l.b16 %v2178
    %v2935 = vunpack.c.h.b16 %v2178
    %v2936 = vunpack.c.l.b16 %v2179
    %v2937 = vunpack.c.h.b16 %v2179
    %v2938 = vunpack.c.l.b16 %v2180
    %v2939 = vunpack.c.h.b16 %v2180
    %v2940 = vunpack.c.l.b16 %v2181
    %v2941 = vunpack.c.h.b16 %v2181
    %v2942 = vunpack.c.l.b16 %v2182
    %v2943 = vunpack.c.h.b16 %v2182
    %v2944 = vunpack.c.l.b16 %v2183
    %v2945 = vunpack.c.h.b16 %v2183
    %v2946 = vunpack.c.l.b16 %v2184
    %v2947 = vunpack.c.h.b16 %v2184
    %v2948 = vunpack.c.l.b16 %v2185
    %v2949 = vunpack.c.h.b16 %v2185
    %v2950 = vunpack.c.l.b16 %v2186
    %v2951 = vunpack.c.h.b16 %v2186
    %v2952 = vunpack.c.l.b16 %v2187
    %v2953 = vunpack.c.h.b16 %v2187
    %v2954 = vunpack.c.l.b16 %v2188
    %v2955 = vunpack.c.h.b16 %v2188
    %v2956 = vunpack.c.l.b16 %v2189
    %v2957 = vunpack.c.h.b16 %v2189
    %v2958 = vunpack.c.l.b16 %v2190
    %v2959 = vunpack.c.h.b16 %v2190
    %v2960 = vunpack.c.l.b16 %v2191
    %v2961 = vunpack.c.h.b16 %v2191
    %v2962 = vunpack.c.l.b16 %v2192
    %v2963 = vunpack.c.h.b16 %v2192
    %v2964 = vunpack.c.l.b16 %v2193
    %v2965 = vunpack.c.h.b16 %v2193
    %v2966 = vunpack.c.l.b16 %v2194
    %v2967 = vunpack.c.h.b16 %v2194
    %v2968 = vunpack.c.l.b16 %v2195
    %v2969 = vunpack.c.h.b16 %v2195
    %v2970 = vunpack.c.l.b16 %v2196
    %v2971 = vunpack.c.h.b16 %v2196
    %v2972 = vunpack.c.l.b16 %v2197
    %v2973 = vunpack.c.h.b16 %v2197
    %v2974 = vunpack.c.l.b16 %v2198
    %v2975 = vunpack.c.h.b16 %v2198
    %v2976 = vunpack.c.l.b16 %v2199
    %v2977 = vunpack.c.h.b16 %v2199
    %v2978 = vunpack.c.l.b16 %v2200
    %v2979 = vunpack.c.h.b16 %v2200
    %v2980 = vunpack.c.l.b16 %v2201
    %v2981 = vunpack.c.h.b16 %v2201
    %v2982 = vunpack.c.l.b16 %v2202
    %v2983 = vunpack.c.h.b16 %v2202
    %v2984 = vunpack.c.l.b16 %v2203
    %v2985 = vunpack.c.h.b16 %v2203
    %v2986 = vunpack.c.l.b16 %v2204
    %v2987 = vunpack.c.h.b16 %v2204
    %v2988 = vunpack.c.l.b16 %v2205
    %v2989 = vunpack.c.h.b16 %v2205
    %v2990 = vunpack.c.l.b16 %v2206
    %v2991 = vunpack.c.h.b16 %v2206
    %v2992 = vunpack.c.l.b16 %v2207
    %v2993 = vunpack.c.h.b16 %v2207
    %v2994 = vunpack.c.l.b16 %v2208
    %v2995 = vunpack.c.h.b16 %v2208
    %v2996 = vunpack.c.l.b16 %v2209
    %v2997 = vunpack.c.h.b16 %v2209
    %v2998 = vunpack.c.l.b16 %v2210
    %v2999 = vunpack.c.h.b16 %v2210
    %v3000 = vunpack.c.l.b16 %v2211
    %v3001 = vunpack.c.h.b16 %v2211
    %v3002 = vunpack.c.l.b16 %v2212
    %v3003 = vunpack.c.h.b16 %v2212
    %v3004 = vunpack.c.l.b16 %v2213
    %v3005 = vunpack.c.h.b16 %v2213
    %v3006 = vunpack.c.l.b16 %v2214
    %v3007 = vunpack.c.h.b16 %v2214
    %v3008 = vunpack.c.l.b16 %v2215
    %v3009 = vunpack.c.h.b16 %v2215
    %v3010 = vunpack.c.l.b16 %v2216
    %v3011 = vunpack.c.h.b16 %v2216
    %v3012 = vunpack.c.l.b16 %v2217
    %v3013 = vunpack.c.h.b16 %v2217
    %v3014 = vunpack.c.l.b16 %v2218
    %v3015 = vunpack.c.h.b16 %v2218
    %v3016 = vunpack.c.l.b16 %v2219
    %v3017 = vunpack.c.h.b16 %v2219
    %v3018 = vunpack.c.l.b16 %v2220
    %v3019 = vunpack.c.h.b16 %v2220
    %v3020 = vunpack.c.l.b16 %v2221
    %v3021 = vunpack.c.h.b16 %v2221
    %v3022 = vunpack.c.l.b16 %v2222
    %v3023 = vunpack.c.h.b16 %v2222
    %v3024 = vunpack.c.l.b16 %v2223
    %v3025 = vunpack.c.h.b16 %v2223
    %v3026 = vunpack.c.l.b16 %v2224
    %v3027 = vunpack.c.h.b16 %v2224
    %v3028 = vunpack.c.l.b16 %v2225
    %v3029 = vunpack.c.h.b16 %v2225
    %v3030 = vunpack.c.l.b16 %v2226
    %v3031 = vunpack.c.h.b16 %v2226
    %v3032 = vunpack.c.l.b16 %v2227
    %v3033 = vunpack.c.h.b16 %v2227
    %v3034 = vunpack.c.l.b16 %v2228
    %v3035 = vunpack.c.h.b16 %v2228
    %v3036 = vunpack.c.l.b16 %v2229
    %v3037 = vunpack.c.h.b16 %v2229
    %v3038 = vunpack.c.l.b16 %v2230
    %v3039 = vunpack.c.h.b16 %v2230
    %v3040 = vunpack.c.l.b16 %v2231
    %v3041 = vunpack.c.h.b16 %v2231
    %v3042 = vunpack.c.l.b16 %v2232
    %v3043 = vunpack.c.h.b16 %v2232
    %v3044 = vunpack.c.l.b16 %v2233
    %v3045 = vunpack.c.h.b16 %v2233
    %v3046 = vunpack.c.l.b16 %v2234
    %v3047 = vunpack.c.h.b16 %v2234
    %v3048 = vunpack.c.l.b16 %v2235
    %v3049 = vunpack.c.h.b16 %v2235
    %v3050 = vunpack.c.l.b16 %v2236
    %v3051 = vunpack.c.h.b16 %v2236
    %v3052 = vunpack.c.l.b16 %v2237
    %v3053 = vunpack.c.h.b16 %v2237
    %v3054 = vunpack.c.l.b16 %v2238
    %v3055 = vunpack.c.h.b16 %v2238
    %v3056 = vunpack.c.l.b16 %v2239
    %v3057 = vunpack.c.h.b16 %v2239
    %v3058 = vunpack.c.l.b16 %v2240
    %v3059 = vunpack.c.h.b16 %v2240
    %v3060 = vunpack.c.l.b16 %v2241
    %v3061 = vunpack.c.h.b16 %v2241
    %v3062 = vunpack.c.l.b16 %v2242
    %v3063 = vunpack.c.h.b16 %v2242
    %v3064 = vunpack.c.l.b16 %v2243
    %v3065 = vunpack.c.h.b16 %v2243
    %v3066 = vunpack.c.l.b16 %v2244
    %v3067 = vunpack.c.h.b16 %v2244
    %v3068 = vunpack.c.l.b16 %v2245
    %v3069 = vunpack.c.h.b16 %v2245
    %v3070 = vunpack.c.l.b16 %v2246
    %v3071 = vunpack.c.h.b16 %v2246
    %v3072 = vunpack.c.l.b16 %v2247
    %v3073 = vunpack.c.h.b16 %v2247
    %v3074 = vunpack.c.l.b16 %v2248
    %v3075 = vunpack.c.h.b16 %v2248
    %v3076 = vunpack.c.l.b16 %v2249
    %v3077 = vunpack.c.h.b16 %v2249
    %v3078 = vunpack.c.l.b16 %v2250
    %v3079 = vunpack.c.h.b16 %v2250
    %v3080 = vunpack.c.l.b16 %v2251
    %v3081 = vunpack.c.h.b16 %v2251
    %v3082 = vunpack.c.l.b16 %v2252
    %v3083 = vunpack.c.h.b16 %v2252
    %v3084 = vunpack.c.l.b16 %v2253
    %v3085 = vunpack.c.h.b16 %v2253
    %v3086 = vunpack.c.l.b16 %v2254
    %v3087 = vunpack.c.h.b16 %v2254
    %v3088 = vunpack.c.l.b16 %v2255
    %v3089 = vunpack.c.h.b16 %v2255
    %v3090 = vunpack.c.l.b16 %v2256
    %v3091 = vunpack.c.h.b16 %v2256
    %v3092 = vunpack.c.l.b16 %v2257
    %v3093 = vunpack.c.h.b16 %v2257
    %v3094 = vunpack.c.l.b16 %v2258
    %v3095 = vunpack.c.h.b16 %v2258
    %v3096 = vunpack.c.l.b16 %v2259
    %v3097 = vunpack.c.h.b16 %v2259
    %v3098 = vunpack.c.l.b16 %v2260
    %v3099 = vunpack.c.h.b16 %v2260
    %v3100 = vunpack.c.l.b16 %v2261
    %v3101 = vunpack.c.h.b16 %v2261
    %v3102 = vunpack.c.l.b16 %v2262
    %v3103 = vunpack.c.h.b16 %v2262
    %v3104 = vunpack.c.l.b16 %v2263
    %v3105 = vunpack.c.h.b16 %v2263
    %v3106 = vunpack.c.l.b16 %v2264
    %v3107 = vunpack.c.h.b16 %v2264
    %v3108 = vunpack.c.l.b16 %v2265
    %v3109 = vunpack.c.h.b16 %v2265
    %v3110 = vunpack.c.l.b16 %v2266
    %v3111 = vunpack.c.h.b16 %v2266
    %v3112 = vunpack.c.l.b16 %v2267
    %v3113 = vunpack.c.h.b16 %v2267
    %v3114 = vunpack.c.l.b16 %v2268
    %v3115 = vunpack.c.h.b16 %v2268
    %v3116 = vunpack.c.l.b16 %v2269
    %v3117 = vunpack.c.h.b16 %v2269
    %v3118 = vunpack.c.l.b16 %v2270
    %v3119 = vunpack.c.h.b16 %v2270
    %v3120 = vunpack.c.l.b16 %v2271
    %v3121 = vunpack.c.h.b16 %v2271
    %v3122 = vunpack.c.l.b16 %v2272
    %v3123 = vunpack.c.h.b16 %v2272
    %v3124 = vunpack.c.l.b16 %v2273
    %v3125 = vunpack.c.h.b16 %v2273
    %v3126 = vunpack.c.l.b16 %v2274
    %v3127 = vunpack.c.h.b16 %v2274
    %v3128 = vunpack.c.l.b16 %v2275
    %v3129 = vunpack.c.h.b16 %v2275
    %v3130 = vunpack.c.l.b16 %v2276
    %v3131 = vunpack.c.h.b16 %v2276
    %v3132 = vunpack.c.l.b16 %v2277
    %v3133 = vunpack.c.h.b16 %v2277
    %v3134 = vunpack.c.l.b16 %v2278
    %v3135 = vunpack.c.h.b16 %v2278
    %v3136 = vunpack.c.l.b16 %v2279
    %v3137 = vunpack.c.h.b16 %v2279
    %v3138 = vunpack.c.l.b16 %v2280
    %v3139 = vunpack.c.h.b16 %v2280
    %v3140 = vunpack.c.l.b16 %v2281
    %v3141 = vunpack.c.h.b16 %v2281
    %v3142 = vunpack.c.l.b16 %v2282
    %v3143 = vunpack.c.h.b16 %v2282
    %v3144 = vunpack.c.l.b16 %v2283
    %v3145 = vunpack.c.h.b16 %v2283
    %v3146 = vunpack.c.l.b16 %v2284
    %v3147 = vunpack.c.h.b16 %v2284
    %v3148 = vunpack.c.l.b16 %v2285
    %v3149 = vunpack.c.h.b16 %v2285
    %v3150 = vunpack.c.l.b16 %v2286
    %v3151 = vunpack.c.h.b16 %v2286
    %v3152 = vunpack.c.l.b16 %v2287
    %v3153 = vunpack.c.h.b16 %v2287
    %v3154 = vunpack.c.l.b16 %v2288
    %v3155 = vunpack.c.h.b16 %v2288
    %v3156 = vunpack.c.l.b16 %v2289
    %v3157 = vunpack.c.h.b16 %v2289
    %v3158 = vunpack.c.l.b16 %v2290
    %v3159 = vunpack.c.h.b16 %v2290
    %v3160 = vunpack.c.l.b16 %v2291
    %v3161 = vunpack.c.h.b16 %v2291
    %v3162 = vunpack.c.l.b16 %v2292
    %v3163 = vunpack.c.h.b16 %v2292
    %v3164 = vunpack.c.l.b16 %v2293
    %v3165 = vunpack.c.h.b16 %v2293
    %v3166 = vunpack.c.l.b16 %v2294
    %v3167 = vunpack.c.h.b16 %v2294
    %v3168 = vunpack.c.l.b16 %v2295
    %v3169 = vunpack.c.h.b16 %v2295
    %v3170 = vunpack.c.l.b16 %v2296
    %v3171 = vunpack.c.h.b16 %v2296
    %v3172 = vunpack.c.l.b16 %v2297
    %v3173 = vunpack.c.h.b16 %v2297
    %v3174 = vunpack.c.l.b16 %v2298
    %v3175 = vunpack.c.h.b16 %v2298
    %v3176 = vunpack.c.l.b16 %v2299
    %v3177 = vunpack.c.h.b16 %v2299
    %v3178 = vunpack.c.l.b16 %v2300
    %v3179 = vunpack.c.h.b16 %v2300
    %v3180 = vunpack.c.l.b16 %v2301
    %v3181 = vunpack.c.h.b16 %v2301
    %v3182 = vunpack.c.l.b16 %v2302
    %v3183 = vunpack.c.h.b16 %v2302
    %v3184 = vunpack.c.l.b16 %v2303
    %v3185 = vunpack.c.h.b16 %v2303
    %v3186 = vunpack.c.l.b16 %v2304
    %v3187 = vunpack.c.h.b16 %v2304
    %v3188 = vunpack.c.l.b16 %v2305
    %v3189 = vunpack.c.h.b16 %v2305
    %v3190 = vunpack.c.l.b16 %v2306
    %v3191 = vunpack.c.h.b16 %v2306
    %v3192 = vunpack.c.l.b16 %v2307
    %v3193 = vunpack.c.h.b16 %v2307
    %v3194 = vunpack.c.l.b16 %v2308
    %v3195 = vunpack.c.h.b16 %v2308
    %v3196 = vunpack.c.l.b16 %v2309
    %v3197 = vunpack.c.h.b16 %v2309
    %v3198 = vunpack.c.l.b16 %v2310
    %v3199 = vunpack.c.h.b16 %v2310
    %v3200 = vunpack.c.l.b16 %v2311
    %v3201 = vunpack.c.h.b16 %v2311
    %v3202 = vunpack.c.l.b16 %v2312
    %v3203 = vunpack.c.h.b16 %v2312
    %v3204 = vunpack.c.l.b16 %v2313
    %v3205 = vunpack.c.h.b16 %v2313
    %v3206 = vunpack.c.l.b16 %v2314
    %v3207 = vunpack.c.h.b16 %v2314
    %v3208 = vunpack.c.l.b16 %v2315
    %v3209 = vunpack.c.h.b16 %v2315
    %v3210 = vunpack.c.l.b16 %v2316
    %v3211 = vunpack.c.h.b16 %v2316
    %v3212 = vunpack.c.l.b16 %v2317
    %v3213 = vunpack.c.h.b16 %v2317
    %v3214 = vunpack.c.l.b16 %v2318
    %v3215 = vunpack.c.h.b16 %v2318
    %v3216 = vunpack.c.l.b16 %v2319
    %v3217 = vunpack.c.h.b16 %v2319
    %v3218 = vunpack.c.l.b16 %v2320
    %v3219 = vunpack.c.h.b16 %v2320
    %v3220 = vunpack.c.l.b16 %v2321
    %v3221 = vunpack.c.h.b16 %v2321
    %v3222 = vunpack.c.l.b16 %v2322
    %v3223 = vunpack.c.h.b16 %v2322
    %v3224 = vunpack.c.l.b16 %v2323
    %v3225 = vunpack.c.h.b16 %v2323
    %v3226 = vunpack.c.l.b16 %v2324
    %v3227 = vunpack.c.h.b16 %v2324
    %v3228 = vunpack.c.l.b16 %v2325
    %v3229 = vunpack.c.h.b16 %v2325
    %v3230 = vunpack.c.l.b16 %v2326
    %v3231 = vunpack.c.h.b16 %v2326
    %v3232 = vunpack.c.l.b16 %v2327
    %v3233 = vunpack.c.h.b16 %v2327
    %v3234 = vunpack.c.l.b16 %v2328
    %v3235 = vunpack.c.h.b16 %v2328
    %v3236 = vunpack.c.l.b16 %v2329
    %v3237 = vunpack.c.h.b16 %v2329
    %v3238 = vunpack.c.l.b16 %v2330
    %v3239 = vunpack.c.h.b16 %v2330
    %v3240 = vunpack.c.l.b16 %v2331
    %v3241 = vunpack.c.h.b16 %v2331
    %v3242 = vunpack.c.l.b16 %v2332
    %v3243 = vunpack.c.h.b16 %v2332
    %v3244 = vunpack.c.l.b16 %v2333
    %v3245 = vunpack.c.h.b16 %v2333
    %v3246 = vunpack.c.l.b16 %v2334
    %v3247 = vunpack.c.h.b16 %v2334
    %v3248 = vunpack.c.l.b16 %v2335
    %v3249 = vunpack.c.h.b16 %v2335
    %v3250 = vunpack.c.l.b16 %v2336
    %v3251 = vunpack.c.h.b16 %v2336
    %v3252 = vunpack.c.l.b16 %v2337
    %v3253 = vunpack.c.h.b16 %v2337
    %v3254 = vunpack.c.l.b16 %v2338
    %v3255 = vunpack.c.h.b16 %v2338
    %v3256 = vunpack.c.l.b16 %v2339
    %v3257 = vunpack.c.h.b16 %v2339
    %v3258 = vunpack.c.l.b16 %v2340
    %v3259 = vunpack.c.h.b16 %v2340
    %v3260 = vunpack.c.l.b16 %v2341
    %v3261 = vunpack.c.h.b16 %v2341
    %v3262 = vunpack.c.l.b16 %v2342
    %v3263 = vunpack.c.h.b16 %v2342
    %v3264 = vunpack.c.l.b16 %v2343
    %v3265 = vunpack.c.h.b16 %v2343
    %v3266 = vunpack.c.l.b16 %v2344
    %v3267 = vunpack.c.h.b16 %v2344
    %v3268 = vunpack.c.l.b16 %v2345
    %v3269 = vunpack.c.h.b16 %v2345
    %v3270 = vunpack.c.l.b16 %v2346
    %v3271 = vunpack.c.h.b16 %v2346
    %v3272 = vunpack.c.l.b16 %v2347
    %v3273 = vunpack.c.h.b16 %v2347
    %v3274 = vunpack.c.l.b16 %v2348
    %v3275 = vunpack.c.h.b16 %v2348
    %v3276 = vunpack.c.l.b16 %v2349
    %v3277 = vunpack.c.h.b16 %v2349
    %v3278 = vpack.c.b16 %v2770, %v2766
    %v3279 = vpack.c.b16 %v2771, %v2767
    %v3280 = vpack.c.b16 %v2772, %v2768
    %v3281 = vpack.c.b16 %v2773, %v2769
    %v3282 = vpack.c.b16 %v2778, %v2774
    %v3283 = vpack.c.b16 %v2779, %v2775
    %v3284 = vpack.c.b16 %v2780, %v2776
    %v3285 = vpack.c.b16 %v2781, %v2777
    %v3286 = vpack.c.b16 %v2786, %v2782
    %v3287 = vpack.c.b16 %v2787, %v2783
    %v3288 = vpack.c.b16 %v2788, %v2784
    %v3289 = vpack.c.b16 %v2789, %v2785
    %v3290 = vpack.c.b16 %v2794, %v2790
    %v3291 = vpack.c.b16 %v2795, %v2791
    %v3292 = vpack.c.b16 %v2796, %v2792
    %v3293 = vpack.c.b16 %v2797, %v2793
    %v3294 = vpack.c.b16 %v2802, %v2798
    %v3295 = vpack.c.b16 %v2803, %v2799
    %v3296 = vpack.c.b16 %v2804, %v2800
    %v3297 = vpack.c.b16 %v2805, %v2801
    %v3298 = vpack.c.b16 %v2810, %v2806
    %v3299 = vpack.c.b16 %v2811, %v2807
    %v3300 = vpack.c.b16 %v2812, %v2808
    %v3301 = vpack.c.b16 %v2813, %v2809
    %v3302 = vpack.c.b16 %v2818, %v2814
    %v3303 = vpack.c.b16 %v2819, %v2815
    %v3304 = vpack.c.b16 %v2820, %v2816
    %v3305 = vpack.c.b16 %v2821, %v2817
    %v3306 = vpack.c.b16 %v2826, %v2822
    %v3307 = vpack.c.b16 %v2827, %v2823
    %v3308 = vpack.c.b16 %v2828, %v2824
    %v3309 = vpack.c.b16 %v2829, %v2825
    %v3310 = vpack.c.b16 %v2834, %v2830
    %v3311 = vpack.c.b16 %v2835, %v2831
    %v3312 = vpack.c.b16 %v2836, %v2832
    %v3313 = vpack.c.b16 %v2837, %v2833
    %v3314 = vpack.c.b16 %v2842, %v2838
    %v3315 = vpack.c.b16 %v2843, %v2839
    %v3316 = vpack.c.b16 %v2844, %v2840
    %v3317 = vpack.c.b16 %v2845, %v2841
    %v3318 = vpack.c.b16 %v2850, %v2846
    %v3319 = vpack.c.b16 %v2851, %v2847
    %v3320 = vpack.c.b16 %v2852, %v2848
    %v3321 = vpack.c.b16 %v2853, %v2849
    %v3322 = vpack.c.b16 %v2858, %v2854
    %v3323 = vpack.c.b16 %v2859, %v2855
    %v3324 = vpack.c.b16 %v2860, %v2856
    %v3325 = vpack.c.b16 %v2861, %v2857
    %v3326 = vpack.c.b16 %v2866, %v2862
    %v3327 = vpack.c.b16 %v2867, %v2863
    %v3328 = vpack.c.b16 %v2868, %v2864
    %v3329 = vpack.c.b16 %v2869, %v2865
    %v3330 = vpack.c.b16 %v2874, %v2870
    %v3331 = vpack.c.b16 %v2875, %v2871
    %v3332 = vpack.c.b16 %v2876, %v2872
    %v3333 = vpack.c.b16 %v2877, %v2873
    %v3334 = vpack.c.b16 %v2882, %v2878
    %v3335 = vpack.c.b16 %v2883, %v2879
    %v3336 = vpack.c.b16 %v2884, %v2880
    %v3337 = vpack.c.b16 %v2885, %v2881
    %v3338 = vpack.c.b16 %v2890, %v2886
    %v3339 = vpack.c.b16 %v2891, %v2887
    %v3340 = vpack.c.b16 %v2892, %v2888
    %v3341 = vpack.c.b16 %v2893, %v2889
    %v3342 = vpack.c.b16 %v2898, %v2894
    %v3343 = vpack.c.b16 %v2899, %v2895
    %v3344 = vpack.c.b16 %v2900, %v2896
    %v3345 = vpack.c.b16 %v2901, %v2897
    %v3346 = vpack.c.b16 %v2906, %v2902
    %v3347 = vpack.c.b16 %v2907, %v2903
    %v3348 = vpack.c.b16 %v2908, %v2904
    %v3349 = vpack.c.b16 %v2909, %v2905
    %v3350 = vpack.c.b16 %v2914, %v2910
    %v3351 = vpack.c.b16 %v2915, %v2911
    %v3352 = vpack.c.b16 %v2916, %v2912
    %v3353 = vpack.c.b16 %v2917, %v2913
    %v3354 = vpack.c.b16 %v2922, %v2918
    %v3355 = vpack.c.b16 %v2923, %v2919
    %v3356 = vpack.c.b16 %v2924, %v2920
    %v3357 = vpack.c.b16 %v2925, %v2921
    %v3358 = vpack.c.b16 %v2930, %v2926
    %v3359 = vpack.c.b16 %v2931, %v2927
    %v3360 = vpack.c.b16 %v2932, %v2928
    %v3361 = vpack.c.b16 %v2933, %v2929
    %v3362 = vpack.c.b16 %v2938, %v2934
    %v3363 = vpack.c.b16 %v2939, %v2935
    %v3364 = vpack.c.b16 %v2940, %v2936
    %v3365 = vpack.c.b16 %v2941, %v2937
    %v3366 = vpack.c.b16 %v2946, %v2942
    %v3367 = vpack.c.b16 %v2947, %v2943
    %v3368 = vpack.c.b16 %v2948, %v2944
    %v3369 = vpack.c.b16 %v2949, %v2945
    %v3370 = vpack.c.b16 %v2954, %v2950
    %v3371 = vpack.c.b16 %v2955, %v2951
    %v3372 = vpack.c.b16 %v2956, %v2952
    %v3373 = vpack.c.b16 %v2957, %v2953
    %v3374 = vpack.c.b16 %v2962, %v2958
    %v3375 = vpack.c.b16 %v2963, %v2959
    %v3376 = vpack.c.b16 %v2964, %v2960
    %v3377 = vpack.c.b16 %v2965, %v2961
    %v3378 = vpack.c.b16 %v2970, %v2966
    %v3379 = vpack.c.b16 %v2971, %v2967
    %v3380 = vpack.c.b16 %v2972, %v2968
    %v3381 = vpack.c.b16 %v2973, %v2969
    %v3382 = vpack.c.b16 %v2978, %v2974
    %v3383 = vpack.c.b16 %v2979, %v2975
    %v3384 = vpack.c.b16 %v2980, %v2976
    %v3385 = vpack.c.b16 %v2981, %v2977
    %v3386 = vpack.c.b16 %v2986, %v2982
    %v3387 = vpack.c.b16 %v2987, %v2983
    %v3388 = vpack.c.b16 %v2988, %v2984
    %v3389 = vpack.c.b16 %v2989, %v2985
    %v3390 = vpack.c.b16 %v2994, %v2990
    %v3391 = vpack.c.b16 %v2995, %v2991
    %v3392 = vpack.c.b16 %v2996, %v2992
    %v3393 = vpack.c.b16 %v2997, %v2993
    %v3394 = vpack.c.b16 %v3002, %v2998
    %v3395 = vpack.c.b16 %v3003, %v2999
    %v3396 = vpack.c.b16 %v3004, %v3000
    %v3397 = vpack.c.b16 %v3005, %v3001
    %v3398 = vpack.c.b16 %v3010, %v3006
    %v3399 = vpack.c.b16 %v3011, %v3007
    %v3400 = vpack.c.b16 %v3012, %v3008
    %v3401 = vpack.c.b16 %v3013, %v3009
    %v3402 = vpack.c.b16 %v3018, %v3014
    %v3403 = vpack.c.b16 %v3019, %v3015
    %v3404 = vpack.c.b16 %v3020, %v3016
    %v3405 = vpack.c.b16 %v3021, %v3017
    %v3406 = vpack.c.b16 %v3026, %v3022
    %v3407 = vpack.c.b16 %v3027, %v3023
    %v3408 = vpack.c.b16 %v3028, %v3024
    %v3409 = vpack.c.b16 %v3029, %v3025
    %v3410 = vpack.c.b16 %v3034, %v3030
    %v3411 = vpack.c.b16 %v3035, %v3031
    %v3412 = vpack.c.b16 %v3036, %v3032
    %v3413 = vpack.c.b16 %v3037, %v3033
    %v3414 = vpack.c.b16 %v3042, %v3038
    %v3415 = vpack.c.b16 %v3043, %v3039
    %v3416 = vpack.c.b16 %v3044, %v3040
    %v3417 = vpack.c.b16 %v3045, %v3041
    %v3418 = vpack.c.b16 %v3050, %v3046
    %v3419 = vpack.c.b16 %v3051, %v3047
    %v3420 = vpack.c.b16 %v3052, %v3048
    %v3421 = vpack.c.b16 %v3053, %v3049
    %v3422 = vpack.c.b16 %v3058, %v3054
    %v3423 = vpack.c.b16 %v3059, %v3055
    %v3424 = vpack.c.b16 %v3060, %v3056
    %v3425 = vpack.c.b16 %v3061, %v3057
    %v3426 = vpack.c.b16 %v3066, %v3062
    %v3427 = vpack.c.b16 %v3067, %v3063
    %v3428 = vpack.c.b16 %v3068, %v3064
    %v3429 = vpack.c.b16 %v3069, %v3065
    %v3430 = vpack.c.b16 %v3074, %v3070
    %v3431 = vpack.c.b16 %v3075, %v3071
    %v3432 = vpack.c.b16 %v3076, %v3072
    %v3433 = vpack.c.b16 %v3077, %v3073
    %v3434 = vpack.c.b16 %v3082, %v3078
    %v3435 = vpack.c.b16 %v3083, %v3079
    %v3436 = vpack.c.b16 %v3084, %v3080
    %v3437 = vpack.c.b16 %v3085, %v3081
    %v3438 = vpack.c.b16 %v3090, %v3086
    %v3439 = vpack.c.b16 %v3091, %v3087
    %v3440 = vpack.c.b16 %v3092, %v3088
    %v3441 = vpack.c.b16 %v3093, %v3089
    %v3442 = vpack.c.b16 %v3098, %v3094
    %v3443 = vpack.c.b16 %v3099, %v3095
    %v3444 = vpack.c.b16 %v3100, %v3096
    %v3445 = vpack.c.b16 %v3101, %v3097
    %v3446 = vpack.c.b16 %v3106, %v3102
    %v3447 = vpack.c.b16 %v3107, %v3103
    %v3448 = vpack.c.b16 %v3108, %v3104
    %v3449 = vpack.c.b16 %v3109, %v3105
    %v3450 = vpack.c.b16 %v3114, %v3110
    %v3451 = vpack.c.b16 %v3115, %v3111
    %v3452 = vpack.c.b16 %v3116, %v3112
    %v3453 = vpack.c.b16 %v3117, %v3113
    %v3454 = vpack.c.b16 %v3122, %v3118
    %v3455 = vpack.c.b16 %v3123, %v3119
    %v3456 = vpack.c.b16 %v3124, %v3120
    %v3457 = vpack.c.b16 %v3125, %v3121
    %v3458 = vpack.c.b16 %v3130, %v3126
    %v3459 = vpack.c.b16 %v3131, %v3127
    %v3460 = vpack.c.b16 %v3132, %v3128
    %v3461 = vpack.c.b16 %v3133, %v3129
    %v3462 = vpack.c.b16 %v3138, %v3134
    %v3463 = vpack.c.b16 %v3139, %v3135
    %v3464 = vpack.c.b16 %v3140, %v3136
    %v3465 = vpack.c.b16 %v3141, %v3137
    %v3466 = vpack.c.b16 %v3146, %v3142
    %v3467 = vpack.c.b16 %v3147, %v3143
    %v3468 = vpack.c.b16 %v3148, %v3144
    %v3469 = vpack.c.b16 %v3149, %v3145
    %v3470 = vpack.c.b16 %v3154, %v3150
    %v3471 = vpack.c.b16 %v3155, %v3151
    %v3472 = vpack.c.b16 %v3156, %v3152
    %v3473 = vpack.c.b16 %v3157, %v3153
    %v3474 = vpack.c.b16 %v3162, %v3158
    %v3475 = vpack.c.b16 %v3163, %v3159
    %v3476 = vpack.c.b16 %v3164, %v3160
    %v3477 = vpack.c.b16 %v3165, %v3161
    %v3478 = vpack.c.b16 %v3170, %v3166
    %v3479 = vpack.c.b16 %v3171, %v3167
    %v3480 = vpack.c.b16 %v3172, %v3168
    %v3481 = vpack.c.b16 %v3173, %v3169
    %v3482 = vpack.c.b16 %v3178, %v3174
    %v3483 = vpack.c.b16 %v3179, %v3175
    %v3484 = vpack.c.b16 %v3180, %v3176
    %v3485 = vpack.c.b16 %v3181, %v3177
    %v3486 = vpack.c.b16 %v3186, %v3182
    %v3487 = vpack.c.b16 %v3187, %v3183
    %v3488 = vpack.c.b16 %v3188, %v3184
    %v3489 = vpack.c.b16 %v3189, %v3185
    %v3490 = vpack.c.b16 %v3194, %v3190
    %v3491 = vpack.c.b16 %v3195, %v3191
    %v3492 = vpack.c.b16 %v3196, %v3192
    %v3493 = vpack.c.b16 %v3197, %v3193
    %v3494 = vpack.c.b16 %v3202, %v3198
    %v3495 = vpack.c.b16 %v3203, %v3199
    %v3496 = vpack.c.b16 %v3204, %v3200
    %v3497 = vpack.c.b16 %v3205, %v3201
    %v3498 = vpack.c.b16 %v3210, %v3206
    %v3499 = vpack.c.b16 %v3211, %v3207
    %v3500 = vpack.c.b16 %v3212, %v3208
    %v3501 = vpack.c.b16 %v3213, %v3209
    %v3502 = vpack.c.b16 %v3218, %v3214
    %v3503 = vpack.c.b16 %v3219, %v3215
    %v3504 = vpack.c.b16 %v3220, %v3216
    %v3505 = vpack.c.b16 %v3221, %v3217
    %v3506 = vpack.c.b16 %v3226, %v3222
    %v3507 = vpack.c.b16 %v3227, %v3223
    %v3508 = vpack.c.b16 %v3228, %v3224
    %v3509 = vpack.c.b16 %v3229, %v3225
    %v3510 = vpack.c.b16 %v3234, %v3230
    %v3511 = vpack.c.b16 %v3235, %v3231
    %v3512 = vpack.c.b16 %v3236, %v3232
    %v3513 = vpack.c.b16 %v3237, %v3233
    %v3514 = vpack.c.b16 %v3242, %v3238
    %v3515 = vpack.c.b16 %v3243, %v3239
    %v3516 = vpack.c.b16 %v3244, %v3240
    %v3517 = vpack.c.b16 %v3245, %v3241
    %v3518 = vpack.c.b16 %v3250, %v3246
    %v3519 = vpack.c.b16 %v3251, %v3247
    %v3520 = vpack.c.b16 %v3252, %v3248
    %v3521 = vpack.c.b16 %v3253, %v3249
    %v3522 = vpack.c.b16 %v3258, %v3254
    %v3523 = vpack.c.b16 %v3259, %v3255
    %v3524 = vpack.c.b16 %v3260, %v3256
    %v3525 = vpack.c.b16 %v3261, %v3257
    %v3526 = vpack.c.b16 %v3266, %v3262
    %v3527 = vpack.c.b16 %v3267, %v3263
    %v3528 = vpack.c.b16 %v3268, %v3264
    %v3529 = vpack.c.b16 %v3269, %v3265
    %v3530 = vpack.c.b16 %v3274, %v3270
    %v3531 = vpack.c.b16 %v3275, %v3271
    %v3532 = vpack.c.b16 %v3276, %v3272
    %v3533 = vpack.c.b16 %v3277, %v3273
    %3790 = vmatpush.bf16.msra.mxu0 %v3306
    %3791 = vmatpush.bf16.msra.mxu0 %v3302
    %3792 = vmatpush.bf16.msra.mxu0 %v3298
    %3793 = vmatpush.bf16.msra.mxu0 %v3294
    %3794 = vmatpush.bf16.msra.mxu0 %v3290
    %3795 = vmatpush.bf16.msra.mxu0 %v3286
    %3796 = vmatpush.bf16.msra.mxu0 %v3282
    %3797 = vmatpush.bf16.msra.mxu0 %v3278
    %3798 = vmatmul.bf16.gmra.mxu0 %v2446
    %v3799 = vpop.f32.mrf.mxu0
    %v3800 = vadd.f32 0.0, %v3799
    %v3801 = vpop.f32.mrf.mxu0
    %v3802 = vadd.f32 0.0, %v3801
    %3803 = vmatmul.bf16.gmra.mxu0 %v2454
    %v3804 = vpop.f32.mrf.mxu0
    %v3805 = vadd.f32 0.0, %v3804
    %v3806 = vpop.f32.mrf.mxu0
    %v3807 = vadd.f32 0.0, %v3806
    %3808 = vmatmul.bf16.gmra.mxu0 %v2462
    %v3809 = vpop.f32.mrf.mxu0
    %v3810 = vadd.f32 0.0, %v3809
    %v3811 = vpop.f32.mrf.mxu0
    %v3812 = vadd.f32 0.0, %v3811
    %3813 = vmatmul.bf16.gmra.mxu0 %v2470
    %v3814 = vpop.f32.mrf.mxu0
    %v3815 = vadd.f32 0.0, %v3814
    %v3816 = vpop.f32.mrf.mxu0
    %v3817 = vadd.f32 0.0, %v3816
    %3818 = vdwg.mxu0
    %3819 = vmatpush.bf16.msra.mxu0 %v3338
    %3820 = vmatpush.bf16.msra.mxu0 %v3334
    %3821 = vmatpush.bf16.msra.mxu0 %v3330
    %3822 = vmatpush.bf16.msra.mxu0 %v3326
    %3823 = vmatpush.bf16.msra.mxu0 %v3322
    %3824 = vmatpush.bf16.msra.mxu0 %v3318
    %3825 = vmatpush.bf16.msra.mxu0 %v3314
    %3826 = vmatpush.bf16.msra.mxu0 %v3310
    %3827 = vmatmul.bf16.gmra.mxu0 %v2447
    %v3828 = vpop.f32.mrf.mxu0
    %v3829 = vadd.f32 %v3800, %v3828
    %v3830 = vpop.f32.mrf.mxu0
    %v3831 = vadd.f32 %v3802, %v3830
    %3832 = vmatmul.bf16.gmra.mxu0 %v2455
    %v3833 = vpop.f32.mrf.mxu0
    %v3834 = vadd.f32 %v3805, %v3833
    %v3835 = vpop.f32.mrf.mxu0
    %v3836 = vadd.f32 %v3807, %v3835
    %3837 = vmatmul.bf16.gmra.mxu0 %v2463
    %v3838 = vpop.f32.mrf.mxu0
    %v3839 = vadd.f32 %v3810, %v3838
    %v3840 = vpop.f32.mrf.mxu0
    %v3841 = vadd.f32 %v3812, %v3840
    %3842 = vmatmul.bf16.gmra.mxu0 %v2471
    %v3843 = vpop.f32.mrf.mxu0
    %v3844 = vadd.f32 %v3815, %v3843
    %v3845 = vpop.f32.mrf.mxu0
    %v3846 = vadd.f32 %v3817, %v3845
    %3847 = vdwg.mxu0
    %3848 = vmatpush.bf16.msra.mxu0 %v3370
    %3849 = vmatpush.bf16.msra.mxu0 %v3366
    %3850 = vmatpush.bf16.msra.mxu0 %v3362
    %3851 = vmatpush.bf16.msra.mxu0 %v3358
    %3852 = vmatpush.bf16.msra.mxu0 %v3354
    %3853 = vmatpush.bf16.msra.mxu0 %v3350
    %3854 = vmatpush.bf16.msra.mxu0 %v3346
    %3855 = vmatpush.bf16.msra.mxu0 %v3342
    %3856 = vmatmul.bf16.gmra.mxu0 %v2448
    %v3857 = vpop.f32.mrf.mxu0
    %v3858 = vadd.f32 %v3829, %v3857
    %v3859 = vpop.f32.mrf.mxu0
    %v3860 = vadd.f32 %v3831, %v3859
    %3861 = vmatmul.bf16.gmra.mxu0 %v2456
    %v3862 = vpop.f32.mrf.mxu0
    %v3863 = vadd.f32 %v3834, %v3862
    %v3864 = vpop.f32.mrf.mxu0
    %v3865 = vadd.f32 %v3836, %v3864
    %3866 = vmatmul.bf16.gmra.mxu0 %v2464
    %v3867 = vpop.f32.mrf.mxu0
    %v3868 = vadd.f32 %v3839, %v3867
    %v3869 = vpop.f32.mrf.mxu0
    %v3870 = vadd.f32 %v3841, %v3869
    %3871 = vmatmul.bf16.gmra.mxu0 %v2472
    %v3872 = vpop.f32.mrf.mxu0
    %v3873 = vadd.f32 %v3844, %v3872
    %v3874 = vpop.f32.mrf.mxu0
    %v3875 = vadd.f32 %v3846, %v3874
    %3876 = vdwg.mxu0
    %3877 = vmatpush.bf16.msra.mxu0 %v3402
    %3878 = vmatpush.bf16.msra.mxu0 %v3398
    %3879 = vmatpush.bf16.msra.mxu0 %v3394
    %3880 = vmatpush.bf16.msra.mxu0 %v3390
    %3881 = vmatpush.bf16.msra.mxu0 %v3386
    %3882 = vmatpush.bf16.msra.mxu0 %v3382
    %3883 = vmatpush.bf16.msra.mxu0 %v3378
    %3884 = vmatpush.bf16.msra.mxu0 %v3374
    %3885 = vmatmul.bf16.gmra.mxu0 %v2449
    %v3886 = vpop.f32.mrf.mxu0
    %v3887 = vadd.f32 %v3858, %v3886
    %v3888 = vpop.f32.mrf.mxu0
    %v3889 = vadd.f32 %v3860, %v3888
    %3890 = vmatmul.bf16.gmra.mxu0 %v2457
    %v3891 = vpop.f32.mrf.mxu0
    %v3892 = vadd.f32 %v3863, %v3891
    %v3893 = vpop.f32.mrf.mxu0
    %v3894 = vadd.f32 %v3865, %v3893
    %3895 = vmatmul.bf16.gmra.mxu0 %v2465
    %v3896 = vpop.f32.mrf.mxu0
    %v3897 = vadd.f32 %v3868, %v3896
    %v3898 = vpop.f32.mrf.mxu0
    %v3899 = vadd.f32 %v3870, %v3898
    %3900 = vmatmul.bf16.gmra.mxu0 %v2473
    %v3901 = vpop.f32.mrf.mxu0
    %v3902 = vadd.f32 %v3873, %v3901
    %v3903 = vpop.f32.mrf.mxu0
    %v3904 = vadd.f32 %v3875, %v3903
    %3905 = vdwg.mxu0
    %3906 = vmatpush.bf16.msra.mxu0 %v3434
    %3907 = vmatpush.bf16.msra.mxu0 %v3430
    %3908 = vmatpush.bf16.msra.mxu0 %v3426
    %3909 = vmatpush.bf16.msra.mxu0 %v3422
    %3910 = vmatpush.bf16.msra.mxu0 %v3418
    %3911 = vmatpush.bf16.msra.mxu0 %v3414
    %3912 = vmatpush.bf16.msra.mxu0 %v3410
    %3913 = vmatpush.bf16.msra.mxu0 %v3406
    %3914 = vmatmul.bf16.gmra.mxu0 %v2450
    %v3915 = vpop.f32.mrf.mxu0
    %v3916 = vadd.f32 %v3887, %v3915
    %v3917 = vpop.f32.mrf.mxu0
    %v3918 = vadd.f32 %v3889, %v3917
    %3919 = vmatmul.bf16.gmra.mxu0 %v2458
    %v3920 = vpop.f32.mrf.mxu0
    %v3921 = vadd.f32 %v3892, %v3920
    %v3922 = vpop.f32.mrf.mxu0
    %v3923 = vadd.f32 %v3894, %v3922
    %3924 = vmatmul.bf16.gmra.mxu0 %v2466
    %v3925 = vpop.f32.mrf.mxu0
    %v3926 = vadd.f32 %v3897, %v3925
    %v3927 = vpop.f32.mrf.mxu0
    %v3928 = vadd.f32 %v3899, %v3927
    %3929 = vmatmul.bf16.gmra.mxu0 %v2474
    %v3930 = vpop.f32.mrf.mxu0
    %v3931 = vadd.f32 %v3902, %v3930
    %v3932 = vpop.f32.mrf.mxu0
    %v3933 = vadd.f32 %v3904, %v3932
    %3934 = vdwg.mxu0
    %3935 = vmatpush.bf16.msra.mxu0 %v3466
    %3936 = vmatpush.bf16.msra.mxu0 %v3462
    %3937 = vmatpush.bf16.msra.mxu0 %v3458
    %3938 = vmatpush.bf16.msra.mxu0 %v3454
    %3939 = vmatpush.bf16.msra.mxu0 %v3450
    %3940 = vmatpush.bf16.msra.mxu0 %v3446
    %3941 = vmatpush.bf16.msra.mxu0 %v3442
    %3942 = vmatpush.bf16.msra.mxu0 %v3438
    %3943 = vmatmul.bf16.gmra.mxu0 %v2451
    %v3944 = vpop.f32.mrf.mxu0
    %v3945 = vadd.f32 %v3916, %v3944
    %v3946 = vpop.f32.mrf.mxu0
    %v3947 = vadd.f32 %v3918, %v3946
    %3948 = vmatmul.bf16.gmra.mxu0 %v2459
    %v3949 = vpop.f32.mrf.mxu0
    %v3950 = vadd.f32 %v3921, %v3949
    %v3951 = vpop.f32.mrf.mxu0
    %v3952 = vadd.f32 %v3923, %v3951
    %3953 = vmatmul.bf16.gmra.mxu0 %v2467
    %v3954 = vpop.f32.mrf.mxu0
    %v3955 = vadd.f32 %v3926, %v3954
    %v3956 = vpop.f32.mrf.mxu0
    %v3957 = vadd.f32 %v3928, %v3956
    %3958 = vmatmul.bf16.gmra.mxu0 %v2475
    %v3959 = vpop.f32.mrf.mxu0
    %v3960 = vadd.f32 %v3931, %v3959
    %v3961 = vpop.f32.mrf.mxu0
    %v3962 = vadd.f32 %v3933, %v3961
    %3963 = vdwg.mxu0
    %3964 = vmatpush.bf16.msra.mxu0 %v3498
    %3965 = vmatpush.bf16.msra.mxu0 %v3494
    %3966 = vmatpush.bf16.msra.mxu0 %v3490
    %3967 = vmatpush.bf16.msra.mxu0 %v3486
    %3968 = vmatpush.bf16.msra.mxu0 %v3482
    %3969 = vmatpush.bf16.msra.mxu0 %v3478
    %3970 = vmatpush.bf16.msra.mxu0 %v3474
    %3971 = vmatpush.bf16.msra.mxu0 %v3470
    %3972 = vmatmul.bf16.gmra.mxu0 %v2452
    %v3973 = vpop.f32.mrf.mxu0
    %v3974 = vadd.f32 %v3945, %v3973
    %v3975 = vpop.f32.mrf.mxu0
    %v3976 = vadd.f32 %v3947, %v3975
    %3977 = vmatmul.bf16.gmra.mxu0 %v2460
    %v3978 = vpop.f32.mrf.mxu0
    %v3979 = vadd.f32 %v3950, %v3978
    %v3980 = vpop.f32.mrf.mxu0
    %v3981 = vadd.f32 %v3952, %v3980
    %3982 = vmatmul.bf16.gmra.mxu0 %v2468
    %v3983 = vpop.f32.mrf.mxu0
    %v3984 = vadd.f32 %v3955, %v3983
    %v3985 = vpop.f32.mrf.mxu0
    %v3986 = vadd.f32 %v3957, %v3985
    %3987 = vmatmul.bf16.gmra.mxu0 %v2476
    %v3988 = vpop.f32.mrf.mxu0
    %v3989 = vadd.f32 %v3960, %v3988
    %v3990 = vpop.f32.mrf.mxu0
    %v3991 = vadd.f32 %v3962, %v3990
    %3992 = vdwg.mxu0
    %3993 = vmatpush.bf16.msra.mxu0 %v3530
    %3994 = vmatpush.bf16.msra.mxu0 %v3526
    %3995 = vmatpush.bf16.msra.mxu0 %v3522
    %3996 = vmatpush.bf16.msra.mxu0 %v3518
    %3997 = vmatpush.bf16.msra.mxu0 %v3514
    %3998 = vmatpush.bf16.msra.mxu0 %v3510
    %3999 = vmatpush.bf16.msra.mxu0 %v3506
    %4000 = vmatpush.bf16.msra.mxu0 %v3502
    %4001 = vmatmul.bf16.gmra.mxu0 %v2453
    %v4002 = vpop.f32.mrf.mxu0
    %v4003 = vadd.f32 %v3974, %v4002
    %v4004 = vpop.f32.mrf.mxu0
    %v4005 = vadd.f32 %v3976, %v4004
    %4006 = vmatmul.bf16.gmra.mxu0 %v2461
    %v4007 = vpop.f32.mrf.mxu0
    %v4008 = vadd.f32 %v3979, %v4007
    %v4009 = vpop.f32.mrf.mxu0
    %v4010 = vadd.f32 %v3981, %v4009
    %4011 = vmatmul.bf16.gmra.mxu0 %v2469
    %v4012 = vpop.f32.mrf.mxu0
    %v4013 = vadd.f32 %v3984, %v4012
    %v4014 = vpop.f32.mrf.mxu0
    %v4015 = vadd.f32 %v3986, %v4014
    %4016 = vmatmul.bf16.gmra.mxu0 %v2477
    %v4017 = vpop.f32.mrf.mxu0
    %v4018 = vadd.f32 %v3989, %v4017
    %v4019 = vpop.f32.mrf.mxu0
    %v4020 = vadd.f32 %v3991, %v4019
    %4021 = vdwg.mxu0
    %4022 = vmatpush.bf16.msra.mxu0 %v3307
    %4023 = vmatpush.bf16.msra.mxu0 %v3303
    %4024 = vmatpush.bf16.msra.mxu0 %v3299
    %4025 = vmatpush.bf16.msra.mxu0 %v3295
    %4026 = vmatpush.bf16.msra.mxu0 %v3291
    %4027 = vmatpush.bf16.msra.mxu0 %v3287
    %4028 = vmatpush.bf16.msra.mxu0 %v3283
    %4029 = vmatpush.bf16.msra.mxu0 %v3279
    %4030 = vmatmul.bf16.gmra.mxu0 %v2446
    %v4031 = vpop.f32.mrf.mxu0
    %v4032 = vadd.f32 0.0, %v4031
    %v4033 = vpop.f32.mrf.mxu0
    %v4034 = vadd.f32 0.0, %v4033
    %4035 = vmatmul.bf16.gmra.mxu0 %v2454
    %v4036 = vpop.f32.mrf.mxu0
    %v4037 = vadd.f32 0.0, %v4036
    %v4038 = vpop.f32.mrf.mxu0
    %v4039 = vadd.f32 0.0, %v4038
    %4040 = vmatmul.bf16.gmra.mxu0 %v2462
    %v4041 = vpop.f32.mrf.mxu0
    %v4042 = vadd.f32 0.0, %v4041
    %v4043 = vpop.f32.mrf.mxu0
    %v4044 = vadd.f32 0.0, %v4043
    %4045 = vmatmul.bf16.gmra.mxu0 %v2470
    %v4046 = vpop.f32.mrf.mxu0
    %v4047 = vadd.f32 0.0, %v4046
    %v4048 = vpop.f32.mrf.mxu0
    %v4049 = vadd.f32 0.0, %v4048
    %4050 = vdwg.mxu0
    %4051 = vmatpush.bf16.msra.mxu0 %v3339
    %4052 = vmatpush.bf16.msra.mxu0 %v3335
    %4053 = vmatpush.bf16.msra.mxu0 %v3331
    %4054 = vmatpush.bf16.msra.mxu0 %v3327
    %4055 = vmatpush.bf16.msra.mxu0 %v3323
    %4056 = vmatpush.bf16.msra.mxu0 %v3319
    %4057 = vmatpush.bf16.msra.mxu0 %v3315
    %4058 = vmatpush.bf16.msra.mxu0 %v3311
    %4059 = vmatmul.bf16.gmra.mxu0 %v2447
    %v4060 = vpop.f32.mrf.mxu0
    %v4061 = vadd.f32 %v4032, %v4060
    %v4062 = vpop.f32.mrf.mxu0
    %v4063 = vadd.f32 %v4034, %v4062
    %4064 = vmatmul.bf16.gmra.mxu0 %v2455
    %v4065 = vpop.f32.mrf.mxu0
    %v4066 = vadd.f32 %v4037, %v4065
    %v4067 = vpop.f32.mrf.mxu0
    %v4068 = vadd.f32 %v4039, %v4067
    %4069 = vmatmul.bf16.gmra.mxu0 %v2463
    %v4070 = vpop.f32.mrf.mxu0
    %v4071 = vadd.f32 %v4042, %v4070
    %v4072 = vpop.f32.mrf.mxu0
    %v4073 = vadd.f32 %v4044, %v4072
    %4074 = vmatmul.bf16.gmra.mxu0 %v2471
    %v4075 = vpop.f32.mrf.mxu0
    %v4076 = vadd.f32 %v4047, %v4075
    %v4077 = vpop.f32.mrf.mxu0
    %v4078 = vadd.f32 %v4049, %v4077
    %4079 = vdwg.mxu0
    %4080 = vmatpush.bf16.msra.mxu0 %v3371
    %4081 = vmatpush.bf16.msra.mxu0 %v3367
    %4082 = vmatpush.bf16.msra.mxu0 %v3363
    %4083 = vmatpush.bf16.msra.mxu0 %v3359
    %4084 = vmatpush.bf16.msra.mxu0 %v3355
    %4085 = vmatpush.bf16.msra.mxu0 %v3351
    %4086 = vmatpush.bf16.msra.mxu0 %v3347
    %4087 = vmatpush.bf16.msra.mxu0 %v3343
    %4088 = vmatmul.bf16.gmra.mxu0 %v2448
    %v4089 = vpop.f32.mrf.mxu0
    %v4090 = vadd.f32 %v4061, %v4089
    %v4091 = vpop.f32.mrf.mxu0
    %v4092 = vadd.f32 %v4063, %v4091
    %4093 = vmatmul.bf16.gmra.mxu0 %v2456
    %v4094 = vpop.f32.mrf.mxu0
    %v4095 = vadd.f32 %v4066, %v4094
    %v4096 = vpop.f32.mrf.mxu0
    %v4097 = vadd.f32 %v4068, %v4096
    %4098 = vmatmul.bf16.gmra.mxu0 %v2464
    %v4099 = vpop.f32.mrf.mxu0
    %v4100 = vadd.f32 %v4071, %v4099
    %v4101 = vpop.f32.mrf.mxu0
    %v4102 = vadd.f32 %v4073, %v4101
    %4103 = vmatmul.bf16.gmra.mxu0 %v2472
    %v4104 = vpop.f32.mrf.mxu0
    %v4105 = vadd.f32 %v4076, %v4104
    %v4106 = vpop.f32.mrf.mxu0
    %v4107 = vadd.f32 %v4078, %v4106
    %4108 = vdwg.mxu0
    %4109 = vmatpush.bf16.msra.mxu0 %v3403
    %4110 = vmatpush.bf16.msra.mxu0 %v3399
    %4111 = vmatpush.bf16.msra.mxu0 %v3395
    %4112 = vmatpush.bf16.msra.mxu0 %v3391
    %4113 = vmatpush.bf16.msra.mxu0 %v3387
    %4114 = vmatpush.bf16.msra.mxu0 %v3383
    %4115 = vmatpush.bf16.msra.mxu0 %v3379
    %4116 = vmatpush.bf16.msra.mxu0 %v3375
    %4117 = vmatmul.bf16.gmra.mxu0 %v2449
    %v4118 = vpop.f32.mrf.mxu0
    %v4119 = vadd.f32 %v4090, %v4118
    %v4120 = vpop.f32.mrf.mxu0
    %v4121 = vadd.f32 %v4092, %v4120
    %4122 = vmatmul.bf16.gmra.mxu0 %v2457
    %v4123 = vpop.f32.mrf.mxu0
    %v4124 = vadd.f32 %v4095, %v4123
    %v4125 = vpop.f32.mrf.mxu0
    %v4126 = vadd.f32 %v4097, %v4125
    %4127 = vmatmul.bf16.gmra.mxu0 %v2465
    %v4128 = vpop.f32.mrf.mxu0
    %v4129 = vadd.f32 %v4100, %v4128
    %v4130 = vpop.f32.mrf.mxu0
    %v4131 = vadd.f32 %v4102, %v4130
    %4132 = vmatmul.bf16.gmra.mxu0 %v2473
    %v4133 = vpop.f32.mrf.mxu0
    %v4134 = vadd.f32 %v4105, %v4133
    %v4135 = vpop.f32.mrf.mxu0
    %v4136 = vadd.f32 %v4107, %v4135
    %4137 = vdwg.mxu0
    %4138 = vmatpush.bf16.msra.mxu0 %v3435
    %4139 = vmatpush.bf16.msra.mxu0 %v3431
    %4140 = vmatpush.bf16.msra.mxu0 %v3427
    %4141 = vmatpush.bf16.msra.mxu0 %v3423
    %4142 = vmatpush.bf16.msra.mxu0 %v3419
    %4143 = vmatpush.bf16.msra.mxu0 %v3415
    %4144 = vmatpush.bf16.msra.mxu0 %v3411
    %4145 = vmatpush.bf16.msra.mxu0 %v3407
    %4146 = vmatmul.bf16.gmra.mxu0 %v2450
    %v4147 = vpop.f32.mrf.mxu0
    %v4148 = vadd.f32 %v4119, %v4147
    %v4149 = vpop.f32.mrf.mxu0
    %v4150 = vadd.f32 %v4121, %v4149
    %4151 = vmatmul.bf16.gmra.mxu0 %v2458
    %v4152 = vpop.f32.mrf.mxu0
    %v4153 = vadd.f32 %v4124, %v4152
    %v4154 = vpop.f32.mrf.mxu0
    %v4155 = vadd.f32 %v4126, %v4154
    %4156 = vmatmul.bf16.gmra.mxu0 %v2466
    %v4157 = vpop.f32.mrf.mxu0
    %v4158 = vadd.f32 %v4129, %v4157
    %v4159 = vpop.f32.mrf.mxu0
    %v4160 = vadd.f32 %v4131, %v4159
    %4161 = vmatmul.bf16.gmra.mxu0 %v2474
    %v4162 = vpop.f32.mrf.mxu0
    %v4163 = vadd.f32 %v4134, %v4162
    %v4164 = vpop.f32.mrf.mxu0
    %v4165 = vadd.f32 %v4136, %v4164
    %4166 = vdwg.mxu0
    %4167 = vmatpush.bf16.msra.mxu0 %v3467
    %4168 = vmatpush.bf16.msra.mxu0 %v3463
    %4169 = vmatpush.bf16.msra.mxu0 %v3459
    %4170 = vmatpush.bf16.msra.mxu0 %v3455
    %4171 = vmatpush.bf16.msra.mxu0 %v3451
    %4172 = vmatpush.bf16.msra.mxu0 %v3447
    %4173 = vmatpush.bf16.msra.mxu0 %v3443
    %4174 = vmatpush.bf16.msra.mxu0 %v3439
    %4175 = vmatmul.bf16.gmra.mxu0 %v2451
    %v4176 = vpop.f32.mrf.mxu0
    %v4177 = vadd.f32 %v4148, %v4176
    %v4178 = vpop.f32.mrf.mxu0
    %v4179 = vadd.f32 %v4150, %v4178
    %4180 = vmatmul.bf16.gmra.mxu0 %v2459
    %v4181 = vpop.f32.mrf.mxu0
    %v4182 = vadd.f32 %v4153, %v4181
    %v4183 = vpop.f32.mrf.mxu0
    %v4184 = vadd.f32 %v4155, %v4183
    %4185 = vmatmul.bf16.gmra.mxu0 %v2467
    %v4186 = vpop.f32.mrf.mxu0
    %v4187 = vadd.f32 %v4158, %v4186
    %v4188 = vpop.f32.mrf.mxu0
    %v4189 = vadd.f32 %v4160, %v4188
    %4190 = vmatmul.bf16.gmra.mxu0 %v2475
    %v4191 = vpop.f32.mrf.mxu0
    %v4192 = vadd.f32 %v4163, %v4191
    %v4193 = vpop.f32.mrf.mxu0
    %v4194 = vadd.f32 %v4165, %v4193
    %4195 = vdwg.mxu0
    %4196 = vmatpush.bf16.msra.mxu0 %v3499
    %4197 = vmatpush.bf16.msra.mxu0 %v3495
    %4198 = vmatpush.bf16.msra.mxu0 %v3491
    %4199 = vmatpush.bf16.msra.mxu0 %v3487
    %4200 = vmatpush.bf16.msra.mxu0 %v3483
    %4201 = vmatpush.bf16.msra.mxu0 %v3479
    %4202 = vmatpush.bf16.msra.mxu0 %v3475
    %4203 = vmatpush.bf16.msra.mxu0 %v3471
    %4204 = vmatmul.bf16.gmra.mxu0 %v2452
    %v4205 = vpop.f32.mrf.mxu0
    %v4206 = vadd.f32 %v4177, %v4205
    %v4207 = vpop.f32.mrf.mxu0
    %v4208 = vadd.f32 %v4179, %v4207
    %4209 = vmatmul.bf16.gmra.mxu0 %v2460
    %v4210 = vpop.f32.mrf.mxu0
    %v4211 = vadd.f32 %v4182, %v4210
    %v4212 = vpop.f32.mrf.mxu0
    %v4213 = vadd.f32 %v4184, %v4212
    %4214 = vmatmul.bf16.gmra.mxu0 %v2468
    %v4215 = vpop.f32.mrf.mxu0
    %v4216 = vadd.f32 %v4187, %v4215
    %v4217 = vpop.f32.mrf.mxu0
    %v4218 = vadd.f32 %v4189, %v4217
    %4219 = vmatmul.bf16.gmra.mxu0 %v2476
    %v4220 = vpop.f32.mrf.mxu0
    %v4221 = vadd.f32 %v4192, %v4220
    %v4222 = vpop.f32.mrf.mxu0
    %v4223 = vadd.f32 %v4194, %v4222
    %4224 = vdwg.mxu0
    %4225 = vmatpush.bf16.msra.mxu0 %v3531
    %4226 = vmatpush.bf16.msra.mxu0 %v3527
    %4227 = vmatpush.bf16.msra.mxu0 %v3523
    %4228 = vmatpush.bf16.msra.mxu0 %v3519
    %4229 = vmatpush.bf16.msra.mxu0 %v3515
    %4230 = vmatpush.bf16.msra.mxu0 %v3511
    %4231 = vmatpush.bf16.msra.mxu0 %v3507
    %4232 = vmatpush.bf16.msra.mxu0 %v3503
    %4233 = vmatmul.bf16.gmra.mxu0 %v2453
    %v4234 = vpop.f32.mrf.mxu0
    %v4235 = vadd.f32 %v4206, %v4234
    %v4236 = vpop.f32.mrf.mxu0
    %v4237 = vadd.f32 %v4208, %v4236
    %4238 = vmatmul.bf16.gmra.mxu0 %v2461
    %v4239 = vpop.f32.mrf.mxu0
    %v4240 = vadd.f32 %v4211, %v4239
    %v4241 = vpop.f32.mrf.mxu0
    %v4242 = vadd.f32 %v4213, %v4241
    %4243 = vmatmul.bf16.gmra.mxu0 %v2469
    %v4244 = vpop.f32.mrf.mxu0
    %v4245 = vadd.f32 %v4216, %v4244
    %v4246 = vpop.f32.mrf.mxu0
    %v4247 = vadd.f32 %v4218, %v4246
    %4248 = vmatmul.bf16.gmra.mxu0 %v2477
    %v4249 = vpop.f32.mrf.mxu0
    %v4250 = vadd.f32 %v4221, %v4249
    %v4251 = vpop.f32.mrf.mxu0
    %v4252 = vadd.f32 %v4223, %v4251
    %4253 = vdwg.mxu0
    %4254 = vmatpush.bf16.msra.mxu0 %v3308
    %4255 = vmatpush.bf16.msra.mxu0 %v3304
    %4256 = vmatpush.bf16.msra.mxu0 %v3300
    %4257 = vmatpush.bf16.msra.mxu0 %v3296
    %4258 = vmatpush.bf16.msra.mxu0 %v3292
    %4259 = vmatpush.bf16.msra.mxu0 %v3288
    %4260 = vmatpush.bf16.msra.mxu0 %v3284
    %4261 = vmatpush.bf16.msra.mxu0 %v3280
    %4262 = vmatmul.bf16.gmra.mxu0 %v2446
    %v4263 = vpop.f32.mrf.mxu0
    %v4264 = vadd.f32 0.0, %v4263
    %v4265 = vpop.f32.mrf.mxu0
    %v4266 = vadd.f32 0.0, %v4265
    %4267 = vmatmul.bf16.gmra.mxu0 %v2454
    %v4268 = vpop.f32.mrf.mxu0
    %v4269 = vadd.f32 0.0, %v4268
    %v4270 = vpop.f32.mrf.mxu0
    %v4271 = vadd.f32 0.0, %v4270
    %4272 = vmatmul.bf16.gmra.mxu0 %v2462
    %v4273 = vpop.f32.mrf.mxu0
    %v4274 = vadd.f32 0.0, %v4273
    %v4275 = vpop.f32.mrf.mxu0
    %v4276 = vadd.f32 0.0, %v4275
    %4277 = vmatmul.bf16.gmra.mxu0 %v2470
    %v4278 = vpop.f32.mrf.mxu0
    %v4279 = vadd.f32 0.0, %v4278
    %v4280 = vpop.f32.mrf.mxu0
    %v4281 = vadd.f32 0.0, %v4280
    %4282 = vdwg.mxu0
    %4283 = vmatpush.bf16.msra.mxu0 %v3340
    %4284 = vmatpush.bf16.msra.mxu0 %v3336
    %4285 = vmatpush.bf16.msra.mxu0 %v3332
    %4286 = vmatpush.bf16.msra.mxu0 %v3328
    %4287 = vmatpush.bf16.msra.mxu0 %v3324
    %4288 = vmatpush.bf16.msra.mxu0 %v3320
    %4289 = vmatpush.bf16.msra.mxu0 %v3316
    %4290 = vmatpush.bf16.msra.mxu0 %v3312
    %4291 = vmatmul.bf16.gmra.mxu0 %v2447
    %v4292 = vpop.f32.mrf.mxu0
    %v4293 = vadd.f32 %v4264, %v4292
    %v4294 = vpop.f32.mrf.mxu0
    %v4295 = vadd.f32 %v4266, %v4294
    %4296 = vmatmul.bf16.gmra.mxu0 %v2455
    %v4297 = vpop.f32.mrf.mxu0
    %v4298 = vadd.f32 %v4269, %v4297
    %v4299 = vpop.f32.mrf.mxu0
    %v4300 = vadd.f32 %v4271, %v4299
    %4301 = vmatmul.bf16.gmra.mxu0 %v2463
    %v4302 = vpop.f32.mrf.mxu0
    %v4303 = vadd.f32 %v4274, %v4302
    %v4304 = vpop.f32.mrf.mxu0
    %v4305 = vadd.f32 %v4276, %v4304
    %4306 = vmatmul.bf16.gmra.mxu0 %v2471
    %v4307 = vpop.f32.mrf.mxu0
    %v4308 = vadd.f32 %v4279, %v4307
    %v4309 = vpop.f32.mrf.mxu0
    %v4310 = vadd.f32 %v4281, %v4309
    %4311 = vdwg.mxu0
    %4312 = vmatpush.bf16.msra.mxu0 %v3372
    %4313 = vmatpush.bf16.msra.mxu0 %v3368
    %4314 = vmatpush.bf16.msra.mxu0 %v3364
    %4315 = vmatpush.bf16.msra.mxu0 %v3360
    %4316 = vmatpush.bf16.msra.mxu0 %v3356
    %4317 = vmatpush.bf16.msra.mxu0 %v3352
    %4318 = vmatpush.bf16.msra.mxu0 %v3348
    %4319 = vmatpush.bf16.msra.mxu0 %v3344
    %4320 = vmatmul.bf16.gmra.mxu0 %v2448
    %v4321 = vpop.f32.mrf.mxu0
    %v4322 = vadd.f32 %v4293, %v4321
    %v4323 = vpop.f32.mrf.mxu0
    %v4324 = vadd.f32 %v4295, %v4323
    %4325 = vmatmul.bf16.gmra.mxu0 %v2456
    %v4326 = vpop.f32.mrf.mxu0
    %v4327 = vadd.f32 %v4298, %v4326
    %v4328 = vpop.f32.mrf.mxu0
    %v4329 = vadd.f32 %v4300, %v4328
    %4330 = vmatmul.bf16.gmra.mxu0 %v2464
    %v4331 = vpop.f32.mrf.mxu0
    %v4332 = vadd.f32 %v4303, %v4331
    %v4333 = vpop.f32.mrf.mxu0
    %v4334 = vadd.f32 %v4305, %v4333
    %4335 = vmatmul.bf16.gmra.mxu0 %v2472
    %v4336 = vpop.f32.mrf.mxu0
    %v4337 = vadd.f32 %v4308, %v4336
    %v4338 = vpop.f32.mrf.mxu0
    %v4339 = vadd.f32 %v4310, %v4338
    %4340 = vdwg.mxu0
    %4341 = vmatpush.bf16.msra.mxu0 %v3404
    %4342 = vmatpush.bf16.msra.mxu0 %v3400
    %4343 = vmatpush.bf16.msra.mxu0 %v3396
    %4344 = vmatpush.bf16.msra.mxu0 %v3392
    %4345 = vmatpush.bf16.msra.mxu0 %v3388
    %4346 = vmatpush.bf16.msra.mxu0 %v3384
    %4347 = vmatpush.bf16.msra.mxu0 %v3380
    %4348 = vmatpush.bf16.msra.mxu0 %v3376
    %4349 = vmatmul.bf16.gmra.mxu0 %v2449
    %v4350 = vpop.f32.mrf.mxu0
    %v4351 = vadd.f32 %v4322, %v4350
    %v4352 = vpop.f32.mrf.mxu0
    %v4353 = vadd.f32 %v4324, %v4352
    %4354 = vmatmul.bf16.gmra.mxu0 %v2457
    %v4355 = vpop.f32.mrf.mxu0
    %v4356 = vadd.f32 %v4327, %v4355
    %v4357 = vpop.f32.mrf.mxu0
    %v4358 = vadd.f32 %v4329, %v4357
    %4359 = vmatmul.bf16.gmra.mxu0 %v2465
    %v4360 = vpop.f32.mrf.mxu0
    %v4361 = vadd.f32 %v4332, %v4360
    %v4362 = vpop.f32.mrf.mxu0
    %v4363 = vadd.f32 %v4334, %v4362
    %4364 = vmatmul.bf16.gmra.mxu0 %v2473
    %v4365 = vpop.f32.mrf.mxu0
    %v4366 = vadd.f32 %v4337, %v4365
    %v4367 = vpop.f32.mrf.mxu0
    %v4368 = vadd.f32 %v4339, %v4367
    %4369 = vdwg.mxu0
    %4370 = vmatpush.bf16.msra.mxu0 %v3436
    %4371 = vmatpush.bf16.msra.mxu0 %v3432
    %4372 = vmatpush.bf16.msra.mxu0 %v3428
    %4373 = vmatpush.bf16.msra.mxu0 %v3424
    %4374 = vmatpush.bf16.msra.mxu0 %v3420
    %4375 = vmatpush.bf16.msra.mxu0 %v3416
    %4376 = vmatpush.bf16.msra.mxu0 %v3412
    %4377 = vmatpush.bf16.msra.mxu0 %v3408
    %4378 = vmatmul.bf16.gmra.mxu0 %v2450
    %v4379 = vpop.f32.mrf.mxu0
    %v4380 = vadd.f32 %v4351, %v4379
    %v4381 = vpop.f32.mrf.mxu0
    %v4382 = vadd.f32 %v4353, %v4381
    %4383 = vmatmul.bf16.gmra.mxu0 %v2458
    %v4384 = vpop.f32.mrf.mxu0
    %v4385 = vadd.f32 %v4356, %v4384
    %v4386 = vpop.f32.mrf.mxu0
    %v4387 = vadd.f32 %v4358, %v4386
    %4388 = vmatmul.bf16.gmra.mxu0 %v2466
    %v4389 = vpop.f32.mrf.mxu0
    %v4390 = vadd.f32 %v4361, %v4389
    %v4391 = vpop.f32.mrf.mxu0
    %v4392 = vadd.f32 %v4363, %v4391
    %4393 = vmatmul.bf16.gmra.mxu0 %v2474
    %v4394 = vpop.f32.mrf.mxu0
    %v4395 = vadd.f32 %v4366, %v4394
    %v4396 = vpop.f32.mrf.mxu0
    %v4397 = vadd.f32 %v4368, %v4396
    %4398 = vdwg.mxu0
    %4399 = vmatpush.bf16.msra.mxu0 %v3468
    %4400 = vmatpush.bf16.msra.mxu0 %v3464
    %4401 = vmatpush.bf16.msra.mxu0 %v3460
    %4402 = vmatpush.bf16.msra.mxu0 %v3456
    %4403 = vmatpush.bf16.msra.mxu0 %v3452
    %4404 = vmatpush.bf16.msra.mxu0 %v3448
    %4405 = vmatpush.bf16.msra.mxu0 %v3444
    %4406 = vmatpush.bf16.msra.mxu0 %v3440
    %4407 = vmatmul.bf16.gmra.mxu0 %v2451
    %v4408 = vpop.f32.mrf.mxu0
    %v4409 = vadd.f32 %v4380, %v4408
    %v4410 = vpop.f32.mrf.mxu0
    %v4411 = vadd.f32 %v4382, %v4410
    %4412 = vmatmul.bf16.gmra.mxu0 %v2459
    %v4413 = vpop.f32.mrf.mxu0
    %v4414 = vadd.f32 %v4385, %v4413
    %v4415 = vpop.f32.mrf.mxu0
    %v4416 = vadd.f32 %v4387, %v4415
    %4417 = vmatmul.bf16.gmra.mxu0 %v2467
    %v4418 = vpop.f32.mrf.mxu0
    %v4419 = vadd.f32 %v4390, %v4418
    %v4420 = vpop.f32.mrf.mxu0
    %v4421 = vadd.f32 %v4392, %v4420
    %4422 = vmatmul.bf16.gmra.mxu0 %v2475
    %v4423 = vpop.f32.mrf.mxu0
    %v4424 = vadd.f32 %v4395, %v4423
    %v4425 = vpop.f32.mrf.mxu0
    %v4426 = vadd.f32 %v4397, %v4425
    %4427 = vdwg.mxu0
    %4428 = vmatpush.bf16.msra.mxu0 %v3500
    %4429 = vmatpush.bf16.msra.mxu0 %v3496
    %4430 = vmatpush.bf16.msra.mxu0 %v3492
    %4431 = vmatpush.bf16.msra.mxu0 %v3488
    %4432 = vmatpush.bf16.msra.mxu0 %v3484
    %4433 = vmatpush.bf16.msra.mxu0 %v3480
    %4434 = vmatpush.bf16.msra.mxu0 %v3476
    %4435 = vmatpush.bf16.msra.mxu0 %v3472
    %4436 = vmatmul.bf16.gmra.mxu0 %v2452
    %v4437 = vpop.f32.mrf.mxu0
    %v4438 = vadd.f32 %v4409, %v4437
    %v4439 = vpop.f32.mrf.mxu0
    %v4440 = vadd.f32 %v4411, %v4439
    %4441 = vmatmul.bf16.gmra.mxu0 %v2460
    %v4442 = vpop.f32.mrf.mxu0
    %v4443 = vadd.f32 %v4414, %v4442
    %v4444 = vpop.f32.mrf.mxu0
    %v4445 = vadd.f32 %v4416, %v4444
    %4446 = vmatmul.bf16.gmra.mxu0 %v2468
    %v4447 = vpop.f32.mrf.mxu0
    %v4448 = vadd.f32 %v4419, %v4447
    %v4449 = vpop.f32.mrf.mxu0
    %v4450 = vadd.f32 %v4421, %v4449
    %4451 = vmatmul.bf16.gmra.mxu0 %v2476
    %v4452 = vpop.f32.mrf.mxu0
    %v4453 = vadd.f32 %v4424, %v4452
    %v4454 = vpop.f32.mrf.mxu0
    %v4455 = vadd.f32 %v4426, %v4454
    %4456 = vdwg.mxu0
    %4457 = vmatpush.bf16.msra.mxu0 %v3532
    %4458 = vmatpush.bf16.msra.mxu0 %v3528
    %4459 = vmatpush.bf16.msra.mxu0 %v3524
    %4460 = vmatpush.bf16.msra.mxu0 %v3520
    %4461 = vmatpush.bf16.msra.mxu0 %v3516
    %4462 = vmatpush.bf16.msra.mxu0 %v3512
    %4463 = vmatpush.bf16.msra.mxu0 %v3508
    %4464 = vmatpush.bf16.msra.mxu0 %v3504
    %4465 = vmatmul.bf16.gmra.mxu0 %v2453
    %v4466 = vpop.f32.mrf.mxu0
    %v4467 = vadd.f32 %v4438, %v4466
    %v4468 = vpop.f32.mrf.mxu0
    %v4469 = vadd.f32 %v4440, %v4468
    %4470 = vmatmul.bf16.gmra.mxu0 %v2461
    %v4471 = vpop.f32.mrf.mxu0
    %v4472 = vadd.f32 %v4443, %v4471
    %v4473 = vpop.f32.mrf.mxu0
    %v4474 = vadd.f32 %v4445, %v4473
    %4475 = vmatmul.bf16.gmra.mxu0 %v2469
    %v4476 = vpop.f32.mrf.mxu0
    %v4477 = vadd.f32 %v4448, %v4476
    %v4478 = vpop.f32.mrf.mxu0
    %v4479 = vadd.f32 %v4450, %v4478
    %4480 = vmatmul.bf16.gmra.mxu0 %v2477
    %v4481 = vpop.f32.mrf.mxu0
    %v4482 = vadd.f32 %v4453, %v4481
    %v4483 = vpop.f32.mrf.mxu0
    %v4484 = vadd.f32 %v4455, %v4483
    %4485 = vdwg.mxu0
    %4486 = vmatpush.bf16.msra.mxu0 %v3309
    %4487 = vmatpush.bf16.msra.mxu0 %v3305
    %4488 = vmatpush.bf16.msra.mxu0 %v3301
    %4489 = vmatpush.bf16.msra.mxu0 %v3297
    %4490 = vmatpush.bf16.msra.mxu0 %v3293
    %4491 = vmatpush.bf16.msra.mxu0 %v3289
    %4492 = vmatpush.bf16.msra.mxu0 %v3285
    %4493 = vmatpush.bf16.msra.mxu0 %v3281
    %4494 = vmatmul.bf16.gmra.mxu0 %v2446
    %v4495 = vpop.f32.mrf.mxu0
    %v4496 = vadd.f32 0.0, %v4495
    %v4497 = vpop.f32.mrf.mxu0
    %v4498 = vadd.f32 0.0, %v4497
    %4499 = vmatmul.bf16.gmra.mxu0 %v2454
    %v4500 = vpop.f32.mrf.mxu0
    %v4501 = vadd.f32 0.0, %v4500
    %v4502 = vpop.f32.mrf.mxu0
    %v4503 = vadd.f32 0.0, %v4502
    %4504 = vmatmul.bf16.gmra.mxu0 %v2462
    %v4505 = vpop.f32.mrf.mxu0
    %v4506 = vadd.f32 0.0, %v4505
    %v4507 = vpop.f32.mrf.mxu0
    %v4508 = vadd.f32 0.0, %v4507
    %4509 = vmatmul.bf16.gmra.mxu0 %v2470
    %v4510 = vpop.f32.mrf.mxu0
    %v4511 = vadd.f32 0.0, %v4510
    %v4512 = vpop.f32.mrf.mxu0
    %v4513 = vadd.f32 0.0, %v4512
    %4514 = vdwg.mxu0
    %4515 = vmatpush.bf16.msra.mxu0 %v3341
    %4516 = vmatpush.bf16.msra.mxu0 %v3337
    %4517 = vmatpush.bf16.msra.mxu0 %v3333
    %4518 = vmatpush.bf16.msra.mxu0 %v3329
    %4519 = vmatpush.bf16.msra.mxu0 %v3325
    %4520 = vmatpush.bf16.msra.mxu0 %v3321
    %4521 = vmatpush.bf16.msra.mxu0 %v3317
    %4522 = vmatpush.bf16.msra.mxu0 %v3313
    %4523 = vmatmul.bf16.gmra.mxu0 %v2447
    %v4524 = vpop.f32.mrf.mxu0
    %v4525 = vadd.f32 %v4496, %v4524
    %v4526 = vpop.f32.mrf.mxu0
    %v4527 = vadd.f32 %v4498, %v4526
    %4528 = vmatmul.bf16.gmra.mxu0 %v2455
    %v4529 = vpop.f32.mrf.mxu0
    %v4530 = vadd.f32 %v4501, %v4529
    %v4531 = vpop.f32.mrf.mxu0
    %v4532 = vadd.f32 %v4503, %v4531
    %4533 = vmatmul.bf16.gmra.mxu0 %v2463
    %v4534 = vpop.f32.mrf.mxu0
    %v4535 = vadd.f32 %v4506, %v4534
    %v4536 = vpop.f32.mrf.mxu0
    %v4537 = vadd.f32 %v4508, %v4536
    %4538 = vmatmul.bf16.gmra.mxu0 %v2471
    %v4539 = vpop.f32.mrf.mxu0
    %v4540 = vadd.f32 %v4511, %v4539
    %v4541 = vpop.f32.mrf.mxu0
    %v4542 = vadd.f32 %v4513, %v4541
    %4543 = vdwg.mxu0
    %4544 = vmatpush.bf16.msra.mxu0 %v3373
    %4545 = vmatpush.bf16.msra.mxu0 %v3369
    %4546 = vmatpush.bf16.msra.mxu0 %v3365
    %4547 = vmatpush.bf16.msra.mxu0 %v3361
    %4548 = vmatpush.bf16.msra.mxu0 %v3357
    %4549 = vmatpush.bf16.msra.mxu0 %v3353
    %4550 = vmatpush.bf16.msra.mxu0 %v3349
    %4551 = vmatpush.bf16.msra.mxu0 %v3345
    %4552 = vmatmul.bf16.gmra.mxu0 %v2448
    %v4553 = vpop.f32.mrf.mxu0
    %v4554 = vadd.f32 %v4525, %v4553
    %v4555 = vpop.f32.mrf.mxu0
    %v4556 = vadd.f32 %v4527, %v4555
    %4557 = vmatmul.bf16.gmra.mxu0 %v2456
    %v4558 = vpop.f32.mrf.mxu0
    %v4559 = vadd.f32 %v4530, %v4558
    %v4560 = vpop.f32.mrf.mxu0
    %v4561 = vadd.f32 %v4532, %v4560
    %4562 = vmatmul.bf16.gmra.mxu0 %v2464
    %v4563 = vpop.f32.mrf.mxu0
    %v4564 = vadd.f32 %v4535, %v4563
    %v4565 = vpop.f32.mrf.mxu0
    %v4566 = vadd.f32 %v4537, %v4565
    %4567 = vmatmul.bf16.gmra.mxu0 %v2472
    %v4568 = vpop.f32.mrf.mxu0
    %v4569 = vadd.f32 %v4540, %v4568
    %v4570 = vpop.f32.mrf.mxu0
    %v4571 = vadd.f32 %v4542, %v4570
    %4572 = vdwg.mxu0
    %4573 = vmatpush.bf16.msra.mxu0 %v3405
    %4574 = vmatpush.bf16.msra.mxu0 %v3401
    %4575 = vmatpush.bf16.msra.mxu0 %v3397
    %4576 = vmatpush.bf16.msra.mxu0 %v3393
    %4577 = vmatpush.bf16.msra.mxu0 %v3389
    %4578 = vmatpush.bf16.msra.mxu0 %v3385
    %4579 = vmatpush.bf16.msra.mxu0 %v3381
    %4580 = vmatpush.bf16.msra.mxu0 %v3377
    %4581 = vmatmul.bf16.gmra.mxu0 %v2449
    %v4582 = vpop.f32.mrf.mxu0
    %v4583 = vadd.f32 %v4554, %v4582
    %v4584 = vpop.f32.mrf.mxu0
    %v4585 = vadd.f32 %v4556, %v4584
    %4586 = vmatmul.bf16.gmra.mxu0 %v2457
    %v4587 = vpop.f32.mrf.mxu0
    %v4588 = vadd.f32 %v4559, %v4587
    %v4589 = vpop.f32.mrf.mxu0
    %v4590 = vadd.f32 %v4561, %v4589
    %4591 = vmatmul.bf16.gmra.mxu0 %v2465
    %v4592 = vpop.f32.mrf.mxu0
    %v4593 = vadd.f32 %v4564, %v4592
    %v4594 = vpop.f32.mrf.mxu0
    %v4595 = vadd.f32 %v4566, %v4594
    %4596 = vmatmul.bf16.gmra.mxu0 %v2473
    %v4597 = vpop.f32.mrf.mxu0
    %v4598 = vadd.f32 %v4569, %v4597
    %v4599 = vpop.f32.mrf.mxu0
    %v4600 = vadd.f32 %v4571, %v4599
    %4601 = vdwg.mxu0
    %4602 = vmatpush.bf16.msra.mxu0 %v3437
    %4603 = vmatpush.bf16.msra.mxu0 %v3433
    %4604 = vmatpush.bf16.msra.mxu0 %v3429
    %4605 = vmatpush.bf16.msra.mxu0 %v3425
    %4606 = vmatpush.bf16.msra.mxu0 %v3421
    %4607 = vmatpush.bf16.msra.mxu0 %v3417
    %4608 = vmatpush.bf16.msra.mxu0 %v3413
    %4609 = vmatpush.bf16.msra.mxu0 %v3409
    %4610 = vmatmul.bf16.gmra.mxu0 %v2450
    %v4611 = vpop.f32.mrf.mxu0
    %v4612 = vadd.f32 %v4583, %v4611
    %v4613 = vpop.f32.mrf.mxu0
    %v4614 = vadd.f32 %v4585, %v4613
    %4615 = vmatmul.bf16.gmra.mxu0 %v2458
    %v4616 = vpop.f32.mrf.mxu0
    %v4617 = vadd.f32 %v4588, %v4616
    %v4618 = vpop.f32.mrf.mxu0
    %v4619 = vadd.f32 %v4590, %v4618
    %4620 = vmatmul.bf16.gmra.mxu0 %v2466
    %v4621 = vpop.f32.mrf.mxu0
    %v4622 = vadd.f32 %v4593, %v4621
    %v4623 = vpop.f32.mrf.mxu0
    %v4624 = vadd.f32 %v4595, %v4623
    %4625 = vmatmul.bf16.gmra.mxu0 %v2474
    %v4626 = vpop.f32.mrf.mxu0
    %v4627 = vadd.f32 %v4598, %v4626
    %v4628 = vpop.f32.mrf.mxu0
    %v4629 = vadd.f32 %v4600, %v4628
    %4630 = vdwg.mxu0
    %4631 = vmatpush.bf16.msra.mxu0 %v3469
    %4632 = vmatpush.bf16.msra.mxu0 %v3465
    %4633 = vmatpush.bf16.msra.mxu0 %v3461
    %4634 = vmatpush.bf16.msra.mxu0 %v3457
    %4635 = vmatpush.bf16.msra.mxu0 %v3453
    %4636 = vmatpush.bf16.msra.mxu0 %v3449
    %4637 = vmatpush.bf16.msra.mxu0 %v3445
    %4638 = vmatpush.bf16.msra.mxu0 %v3441
    %4639 = vmatmul.bf16.gmra.mxu0 %v2451
    %v4640 = vpop.f32.mrf.mxu0
    %v4641 = vadd.f32 %v4612, %v4640
    %v4642 = vpop.f32.mrf.mxu0
    %v4643 = vadd.f32 %v4614, %v4642
    %4644 = vmatmul.bf16.gmra.mxu0 %v2459
    %v4645 = vpop.f32.mrf.mxu0
    %v4646 = vadd.f32 %v4617, %v4645
    %v4647 = vpop.f32.mrf.mxu0
    %v4648 = vadd.f32 %v4619, %v4647
    %4649 = vmatmul.bf16.gmra.mxu0 %v2467
    %v4650 = vpop.f32.mrf.mxu0
    %v4651 = vadd.f32 %v4622, %v4650
    %v4652 = vpop.f32.mrf.mxu0
    %v4653 = vadd.f32 %v4624, %v4652
    %4654 = vmatmul.bf16.gmra.mxu0 %v2475
    %v4655 = vpop.f32.mrf.mxu0
    %v4656 = vadd.f32 %v4627, %v4655
    %v4657 = vpop.f32.mrf.mxu0
    %v4658 = vadd.f32 %v4629, %v4657
    %4659 = vdwg.mxu0
    %4660 = vmatpush.bf16.msra.mxu0 %v3501
    %4661 = vmatpush.bf16.msra.mxu0 %v3497
    %4662 = vmatpush.bf16.msra.mxu0 %v3493
    %4663 = vmatpush.bf16.msra.mxu0 %v3489
    %4664 = vmatpush.bf16.msra.mxu0 %v3485
    %4665 = vmatpush.bf16.msra.mxu0 %v3481
    %4666 = vmatpush.bf16.msra.mxu0 %v3477
    %4667 = vmatpush.bf16.msra.mxu0 %v3473
    %4668 = vmatmul.bf16.gmra.mxu0 %v2452
    %v4669 = vpop.f32.mrf.mxu0
    %v4670 = vadd.f32 %v4641, %v4669
    %v4671 = vpop.f32.mrf.mxu0
    %v4672 = vadd.f32 %v4643, %v4671
    %4673 = vmatmul.bf16.gmra.mxu0 %v2460
    %v4674 = vpop.f32.mrf.mxu0
    %v4675 = vadd.f32 %v4646, %v4674
    %v4676 = vpop.f32.mrf.mxu0
    %v4677 = vadd.f32 %v4648, %v4676
    %4678 = vmatmul.bf16.gmra.mxu0 %v2468
    %v4679 = vpop.f32.mrf.mxu0
    %v4680 = vadd.f32 %v4651, %v4679
    %v4681 = vpop.f32.mrf.mxu0
    %v4682 = vadd.f32 %v4653, %v4681
    %4683 = vmatmul.bf16.gmra.mxu0 %v2476
    %v4684 = vpop.f32.mrf.mxu0
    %v4685 = vadd.f32 %v4656, %v4684
    %v4686 = vpop.f32.mrf.mxu0
    %v4687 = vadd.f32 %v4658, %v4686
    %4688 = vdwg.mxu0
    %4689 = vmatpush.bf16.msra.mxu0 %v3533
    %4690 = vmatpush.bf16.msra.mxu0 %v3529
    %4691 = vmatpush.bf16.msra.mxu0 %v3525
    %4692 = vmatpush.bf16.msra.mxu0 %v3521
    %4693 = vmatpush.bf16.msra.mxu0 %v3517
    %4694 = vmatpush.bf16.msra.mxu0 %v3513
    %4695 = vmatpush.bf16.msra.mxu0 %v3509
    %4696 = vmatpush.bf16.msra.mxu0 %v3505
    %4697 = vmatmul.bf16.gmra.mxu0 %v2453
    %v4698 = vpop.f32.mrf.mxu0
    %v4699 = vadd.f32 %v4670, %v4698
    %v4700 = vpop.f32.mrf.mxu0
    %v4701 = vadd.f32 %v4672, %v4700
    %4702 = vmatmul.bf16.gmra.mxu0 %v2461
    %v4703 = vpop.f32.mrf.mxu0
    %v4704 = vadd.f32 %v4675, %v4703
    %v4705 = vpop.f32.mrf.mxu0
    %v4706 = vadd.f32 %v4677, %v4705
    %4707 = vmatmul.bf16.gmra.mxu0 %v2469
    %v4708 = vpop.f32.mrf.mxu0
    %v4709 = vadd.f32 %v4680, %v4708
    %v4710 = vpop.f32.mrf.mxu0
    %v4711 = vadd.f32 %v4682, %v4710
    %4712 = vmatmul.bf16.gmra.mxu0 %v2477
    %v4713 = vpop.f32.mrf.mxu0
    %v4714 = vadd.f32 %v4685, %v4713
    %v4715 = vpop.f32.mrf.mxu0
    %v4716 = vadd.f32 %v4687, %v4715
    %4717 = vdwg.mxu0
    %v4718 = vpack.c.b16 %v1779, %v1836
    %v4719 = vpack.c.b16 %v1780, %v1836
    %v4720 = vpack.c.b16 %v1781, %v1836
    %v4721 = vpack.c.b16 %v1782, %v1836
    %v4722 = vpack.c.b16 %v1783, %v1836
    %v4723 = vpack.c.b16 %v1784, %v1836
    %v4724 = vpack.c.b16 %v1785, %v1836
    %v4725 = vpack.c.b16 %v1786, %v1836
    %v4726 = vpack.c.b16 %v1795, %v1787
    %v4727 = vpack.c.b16 %v1796, %v1788
    %v4728 = vpack.c.b16 %v1797, %v1789
    %v4729 = vpack.c.b16 %v1798, %v1790
    %v4730 = vpack.c.b16 %v1799, %v1791
    %v4731 = vpack.c.b16 %v1800, %v1792
    %v4732 = vpack.c.b16 %v1801, %v1793
    %v4733 = vpack.c.b16 %v1802, %v1794
    %v4734 = vpack.c.b16 %v1811, %v1803
    %v4735 = vpack.c.b16 %v1812, %v1804
    %v4736 = vpack.c.b16 %v1813, %v1805
    %v4737 = vpack.c.b16 %v1814, %v1806
    %v4738 = vpack.c.b16 %v1815, %v1807
    %v4739 = vpack.c.b16 %v1816, %v1808
    %v4740 = vpack.c.b16 %v1817, %v1809
    %v4741 = vpack.c.b16 %v1818, %v1810
    %v4742 = vpack.c.b16 %v1827, %v1819
    %v4743 = vpack.c.b16 %v1828, %v1820
    %v4744 = vpack.c.b16 %v1829, %v1821
    %v4745 = vpack.c.b16 %v1830, %v1822
    %v4746 = vpack.c.b16 %v1831, %v1823
    %v4747 = vpack.c.b16 %v1832, %v1824
    %v4748 = vpack.c.b16 %v1833, %v1825
    %v4749 = vpack.c.b16 %v1834, %v1826
    %v5038 = vunpack.c.l.b16 %v1837
    %v5039 = vunpack.c.h.b16 %v1837
    %v5040 = vunpack.c.l.b16 %v1838
    %v5041 = vunpack.c.h.b16 %v1838
    %v5042 = vunpack.c.l.b16 %v1839
    %v5043 = vunpack.c.h.b16 %v1839
    %v5044 = vunpack.c.l.b16 %v1840
    %v5045 = vunpack.c.h.b16 %v1840
    %v5046 = vunpack.c.l.b16 %v1841
    %v5047 = vunpack.c.h.b16 %v1841
    %v5048 = vunpack.c.l.b16 %v1842
    %v5049 = vunpack.c.h.b16 %v1842
    %v5050 = vunpack.c.l.b16 %v1843
    %v5051 = vunpack.c.h.b16 %v1843
    %v5052 = vunpack.c.l.b16 %v1844
    %v5053 = vunpack.c.h.b16 %v1844
    %v5054 = vunpack.c.l.b16 %v1845
    %v5055 = vunpack.c.h.b16 %v1845
    %v5056 = vunpack.c.l.b16 %v1846
    %v5057 = vunpack.c.h.b16 %v1846
    %v5058 = vunpack.c.l.b16 %v1847
    %v5059 = vunpack.c.h.b16 %v1847
    %v5060 = vunpack.c.l.b16 %v1848
    %v5061 = vunpack.c.h.b16 %v1848
    %v5062 = vunpack.c.l.b16 %v1849
    %v5063 = vunpack.c.h.b16 %v1849
    %v5064 = vunpack.c.l.b16 %v1850
    %v5065 = vunpack.c.h.b16 %v1850
    %v5066 = vunpack.c.l.b16 %v1851
    %v5067 = vunpack.c.h.b16 %v1851
    %v5068 = vunpack.c.l.b16 %v1852
    %v5069 = vunpack.c.h.b16 %v1852
    %v5070 = vunpack.c.l.b16 %v1853
    %v5071 = vunpack.c.h.b16 %v1853
    %v5072 = vunpack.c.l.b16 %v1854
    %v5073 = vunpack.c.h.b16 %v1854
    %v5074 = vunpack.c.l.b16 %v1855
    %v5075 = vunpack.c.h.b16 %v1855
    %v5076 = vunpack.c.l.b16 %v1856
    %v5077 = vunpack.c.h.b16 %v1856
    %v5078 = vunpack.c.l.b16 %v1857
    %v5079 = vunpack.c.h.b16 %v1857
    %v5080 = vunpack.c.l.b16 %v1858
    %v5081 = vunpack.c.h.b16 %v1858
    %v5082 = vunpack.c.l.b16 %v1859
    %v5083 = vunpack.c.h.b16 %v1859
    %v5084 = vunpack.c.l.b16 %v1860
    %v5085 = vunpack.c.h.b16 %v1860
    %v5086 = vunpack.c.l.b16 %v1861
    %v5087 = vunpack.c.h.b16 %v1861
    %v5088 = vunpack.c.l.b16 %v1862
    %v5089 = vunpack.c.h.b16 %v1862
    %v5090 = vunpack.c.l.b16 %v1863
    %v5091 = vunpack.c.h.b16 %v1863
    %v5092 = vunpack.c.l.b16 %v1864
    %v5093 = vunpack.c.h.b16 %v1864
    %v5094 = vunpack.c.l.b16 %v1865
    %v5095 = vunpack.c.h.b16 %v1865
    %v5096 = vunpack.c.l.b16 %v1866
    %v5097 = vunpack.c.h.b16 %v1866
    %v5098 = vunpack.c.l.b16 %v1867
    %v5099 = vunpack.c.h.b16 %v1867
    %v5100 = vunpack.c.l.b16 %v1868
    %v5101 = vunpack.c.h.b16 %v1868
    %v5102 = vunpack.c.l.b16 %v1869
    %v5103 = vunpack.c.h.b16 %v1869
    %v5104 = vunpack.c.l.b16 %v1870
    %v5105 = vunpack.c.h.b16 %v1870
    %v5106 = vunpack.c.l.b16 %v1871
    %v5107 = vunpack.c.h.b16 %v1871
    %v5108 = vunpack.c.l.b16 %v1872
    %v5109 = vunpack.c.h.b16 %v1872
    %v5110 = vunpack.c.l.b16 %v1873
    %v5111 = vunpack.c.h.b16 %v1873
    %v5112 = vunpack.c.l.b16 %v1874
    %v5113 = vunpack.c.h.b16 %v1874
    %v5114 = vunpack.c.l.b16 %v1875
    %v5115 = vunpack.c.h.b16 %v1875
    %v5116 = vunpack.c.l.b16 %v1876
    %v5117 = vunpack.c.h.b16 %v1876
    %v5118 = vunpack.c.l.b16 %v1877
    %v5119 = vunpack.c.h.b16 %v1877
    %v5120 = vunpack.c.l.b16 %v1878
    %v5121 = vunpack.c.h.b16 %v1878
    %v5122 = vunpack.c.l.b16 %v1879
    %v5123 = vunpack.c.h.b16 %v1879
    %v5124 = vunpack.c.l.b16 %v1880
    %v5125 = vunpack.c.h.b16 %v1880
    %v5126 = vunpack.c.l.b16 %v1881
    %v5127 = vunpack.c.h.b16 %v1881
    %v5128 = vunpack.c.l.b16 %v1882
    %v5129 = vunpack.c.h.b16 %v1882
    %v5130 = vunpack.c.l.b16 %v1883
    %v5131 = vunpack.c.h.b16 %v1883
    %v5132 = vunpack.c.l.b16 %v1884
    %v5133 = vunpack.c.h.b16 %v1884
    %v5134 = vunpack.c.l.b16 %v1885
    %v5135 = vunpack.c.h.b16 %v1885
    %v5136 = vunpack.c.l.b16 %v1886
    %v5137 = vunpack.c.h.b16 %v1886
    %v5138 = vunpack.c.l.b16 %v1887
    %v5139 = vunpack.c.h.b16 %v1887
    %v5140 = vunpack.c.l.b16 %v1888
    %v5141 = vunpack.c.h.b16 %v1888
    %v5142 = vunpack.c.l.b16 %v1889
    %v5143 = vunpack.c.h.b16 %v1889
    %v5144 = vunpack.c.l.b16 %v1890
    %v5145 = vunpack.c.h.b16 %v1890
    %v5146 = vunpack.c.l.b16 %v1891
    %v5147 = vunpack.c.h.b16 %v1891
    %v5148 = vunpack.c.l.b16 %v1892
    %v5149 = vunpack.c.h.b16 %v1892
    %v5150 = vunpack.c.l.b16 %v1893
    %v5151 = vunpack.c.h.b16 %v1893
    %v5152 = vunpack.c.l.b16 %v1894
    %v5153 = vunpack.c.h.b16 %v1894
    %v5154 = vunpack.c.l.b16 %v1895
    %v5155 = vunpack.c.h.b16 %v1895
    %v5156 = vunpack.c.l.b16 %v1896
    %v5157 = vunpack.c.h.b16 %v1896
    %v5158 = vunpack.c.l.b16 %v1897
    %v5159 = vunpack.c.h.b16 %v1897
    %v5160 = vunpack.c.l.b16 %v1898
    %v5161 = vunpack.c.h.b16 %v1898
    %v5162 = vunpack.c.l.b16 %v1899
    %v5163 = vunpack.c.h.b16 %v1899
    %v5164 = vunpack.c.l.b16 %v1900
    %v5165 = vunpack.c.h.b16 %v1900
    %v5166 = vunpack.c.l.b16 %v1901
    %v5167 = vunpack.c.h.b16 %v1901
    %v5168 = vunpack.c.l.b16 %v1902
    %v5169 = vunpack.c.h.b16 %v1902
    %v5170 = vunpack.c.l.b16 %v1903
    %v5171 = vunpack.c.h.b16 %v1903
    %v5172 = vunpack.c.l.b16 %v1904
    %v5173 = vunpack.c.h.b16 %v1904
    %v5174 = vunpack.c.l.b16 %v1905
    %v5175 = vunpack.c.h.b16 %v1905
    %v5176 = vunpack.c.l.b16 %v1906
    %v5177 = vunpack.c.h.b16 %v1906
    %v5178 = vunpack.c.l.b16 %v1907
    %v5179 = vunpack.c.h.b16 %v1907
    %v5180 = vunpack.c.l.b16 %v1908
    %v5181 = vunpack.c.h.b16 %v1908
    %v5182 = vunpack.c.l.b16 %v1909
    %v5183 = vunpack.c.h.b16 %v1909
    %v5184 = vunpack.c.l.b16 %v1910
    %v5185 = vunpack.c.h.b16 %v1910
    %v5186 = vunpack.c.l.b16 %v1911
    %v5187 = vunpack.c.h.b16 %v1911
    %v5188 = vunpack.c.l.b16 %v1912
    %v5189 = vunpack.c.h.b16 %v1912
    %v5190 = vunpack.c.l.b16 %v1913
    %v5191 = vunpack.c.h.b16 %v1913
    %v5192 = vunpack.c.l.b16 %v1914
    %v5193 = vunpack.c.h.b16 %v1914
    %v5194 = vunpack.c.l.b16 %v1915
    %v5195 = vunpack.c.h.b16 %v1915
    %v5196 = vunpack.c.l.b16 %v1916
    %v5197 = vunpack.c.h.b16 %v1916
    %v5198 = vunpack.c.l.b16 %v1917
    %v5199 = vunpack.c.h.b16 %v1917
    %v5200 = vunpack.c.l.b16 %v1918
    %v5201 = vunpack.c.h.b16 %v1918
    %v5202 = vunpack.c.l.b16 %v1919
    %v5203 = vunpack.c.h.b16 %v1919
    %v5204 = vunpack.c.l.b16 %v1920
    %v5205 = vunpack.c.h.b16 %v1920
    %v5206 = vunpack.c.l.b16 %v1921
    %v5207 = vunpack.c.h.b16 %v1921
    %v5208 = vunpack.c.l.b16 %v1922
    %v5209 = vunpack.c.h.b16 %v1922
    %v5210 = vunpack.c.l.b16 %v1923
    %v5211 = vunpack.c.h.b16 %v1923
    %v5212 = vunpack.c.l.b16 %v1924
    %v5213 = vunpack.c.h.b16 %v1924
    %v5214 = vunpack.c.l.b16 %v1925
    %v5215 = vunpack.c.h.b16 %v1925
    %v5216 = vunpack.c.l.b16 %v1926
    %v5217 = vunpack.c.h.b16 %v1926
    %v5218 = vunpack.c.l.b16 %v1927
    %v5219 = vunpack.c.h.b16 %v1927
    %v5220 = vunpack.c.l.b16 %v1928
    %v5221 = vunpack.c.h.b16 %v1928
    %v5222 = vunpack.c.l.b16 %v1929
    %v5223 = vunpack.c.h.b16 %v1929
    %v5224 = vunpack.c.l.b16 %v1930
    %v5225 = vunpack.c.h.b16 %v1930
    %v5226 = vunpack.c.l.b16 %v1931
    %v5227 = vunpack.c.h.b16 %v1931
    %v5228 = vunpack.c.l.b16 %v1932
    %v5229 = vunpack.c.h.b16 %v1932
    %v5230 = vunpack.c.l.b16 %v1933
    %v5231 = vunpack.c.h.b16 %v1933
    %v5232 = vunpack.c.l.b16 %v1934
    %v5233 = vunpack.c.h.b16 %v1934
    %v5234 = vunpack.c.l.b16 %v1935
    %v5235 = vunpack.c.h.b16 %v1935
    %v5236 = vunpack.c.l.b16 %v1936
    %v5237 = vunpack.c.h.b16 %v1936
    %v5238 = vunpack.c.l.b16 %v1937
    %v5239 = vunpack.c.h.b16 %v1937
    %v5240 = vunpack.c.l.b16 %v1938
    %v5241 = vunpack.c.h.b16 %v1938
    %v5242 = vunpack.c.l.b16 %v1939
    %v5243 = vunpack.c.h.b16 %v1939
    %v5244 = vunpack.c.l.b16 %v1940
    %v5245 = vunpack.c.h.b16 %v1940
    %v5246 = vunpack.c.l.b16 %v1941
    %v5247 = vunpack.c.h.b16 %v1941
    %v5248 = vunpack.c.l.b16 %v1942
    %v5249 = vunpack.c.h.b16 %v1942
    %v5250 = vunpack.c.l.b16 %v1943
    %v5251 = vunpack.c.h.b16 %v1943
    %v5252 = vunpack.c.l.b16 %v1944
    %v5253 = vunpack.c.h.b16 %v1944
    %v5254 = vunpack.c.l.b16 %v1945
    %v5255 = vunpack.c.h.b16 %v1945
    %v5256 = vunpack.c.l.b16 %v1946
    %v5257 = vunpack.c.h.b16 %v1946
    %v5258 = vunpack.c.l.b16 %v1947
    %v5259 = vunpack.c.h.b16 %v1947
    %v5260 = vunpack.c.l.b16 %v1948
    %v5261 = vunpack.c.h.b16 %v1948
    %v5262 = vunpack.c.l.b16 %v1949
    %v5263 = vunpack.c.h.b16 %v1949
    %v5264 = vunpack.c.l.b16 %v1950
    %v5265 = vunpack.c.h.b16 %v1950
    %v5266 = vunpack.c.l.b16 %v1951
    %v5267 = vunpack.c.h.b16 %v1951
    %v5268 = vunpack.c.l.b16 %v1952
    %v5269 = vunpack.c.h.b16 %v1952
    %v5270 = vunpack.c.l.b16 %v1953
    %v5271 = vunpack.c.h.b16 %v1953
    %v5272 = vunpack.c.l.b16 %v1954
    %v5273 = vunpack.c.h.b16 %v1954
    %v5274 = vunpack.c.l.b16 %v1955
    %v5275 = vunpack.c.h.b16 %v1955
    %v5276 = vunpack.c.l.b16 %v1956
    %v5277 = vunpack.c.h.b16 %v1956
    %v5278 = vunpack.c.l.b16 %v1957
    %v5279 = vunpack.c.h.b16 %v1957
    %v5280 = vunpack.c.l.b16 %v1958
    %v5281 = vunpack.c.h.b16 %v1958
    %v5282 = vunpack.c.l.b16 %v1959
    %v5283 = vunpack.c.h.b16 %v1959
    %v5284 = vunpack.c.l.b16 %v1960
    %v5285 = vunpack.c.h.b16 %v1960
    %v5286 = vunpack.c.l.b16 %v1961
    %v5287 = vunpack.c.h.b16 %v1961
    %v5288 = vunpack.c.l.b16 %v1962
    %v5289 = vunpack.c.h.b16 %v1962
    %v5290 = vunpack.c.l.b16 %v1963
    %v5291 = vunpack.c.h.b16 %v1963
    %v5292 = vunpack.c.l.b16 %v1964
    %v5293 = vunpack.c.h.b16 %v1964
    %v5294 = vunpack.c.l.b16 %v1965
    %v5295 = vunpack.c.h.b16 %v1965
    %v5296 = vunpack.c.l.b16 %v1966
    %v5297 = vunpack.c.h.b16 %v1966
    %v5298 = vunpack.c.l.b16 %v1967
    %v5299 = vunpack.c.h.b16 %v1967
    %v5300 = vunpack.c.l.b16 %v1968
    %v5301 = vunpack.c.h.b16 %v1968
    %v5302 = vunpack.c.l.b16 %v1969
    %v5303 = vunpack.c.h.b16 %v1969
    %v5304 = vunpack.c.l.b16 %v1970
    %v5305 = vunpack.c.h.b16 %v1970
    %v5306 = vunpack.c.l.b16 %v1971
    %v5307 = vunpack.c.h.b16 %v1971
    %v5308 = vunpack.c.l.b16 %v1972
    %v5309 = vunpack.c.h.b16 %v1972
    %v5310 = vunpack.c.l.b16 %v1973
    %v5311 = vunpack.c.h.b16 %v1973
    %v5312 = vunpack.c.l.b16 %v1974
    %v5313 = vunpack.c.h.b16 %v1974
    %v5314 = vunpack.c.l.b16 %v1975
    %v5315 = vunpack.c.h.b16 %v1975
    %v5316 = vunpack.c.l.b16 %v1976
    %v5317 = vunpack.c.h.b16 %v1976
    %v5318 = vunpack.c.l.b16 %v1977
    %v5319 = vunpack.c.h.b16 %v1977
    %v5320 = vunpack.c.l.b16 %v1978
    %v5321 = vunpack.c.h.b16 %v1978
    %v5322 = vunpack.c.l.b16 %v1979
    %v5323 = vunpack.c.h.b16 %v1979
    %v5324 = vunpack.c.l.b16 %v1980
    %v5325 = vunpack.c.h.b16 %v1980
    %v5326 = vunpack.c.l.b16 %v1981
    %v5327 = vunpack.c.h.b16 %v1981
    %v5328 = vunpack.c.l.b16 %v1982
    %v5329 = vunpack.c.h.b16 %v1982
    %v5330 = vunpack.c.l.b16 %v1983
    %v5331 = vunpack.c.h.b16 %v1983
    %v5332 = vunpack.c.l.b16 %v1984
    %v5333 = vunpack.c.h.b16 %v1984
    %v5334 = vunpack.c.l.b16 %v1985
    %v5335 = vunpack.c.h.b16 %v1985
    %v5336 = vunpack.c.l.b16 %v1986
    %v5337 = vunpack.c.h.b16 %v1986
    %v5338 = vunpack.c.l.b16 %v1987
    %v5339 = vunpack.c.h.b16 %v1987
    %v5340 = vunpack.c.l.b16 %v1988
    %v5341 = vunpack.c.h.b16 %v1988
    %v5342 = vunpack.c.l.b16 %v1989
    %v5343 = vunpack.c.h.b16 %v1989
    %v5344 = vunpack.c.l.b16 %v1990
    %v5345 = vunpack.c.h.b16 %v1990
    %v5346 = vunpack.c.l.b16 %v1991
    %v5347 = vunpack.c.h.b16 %v1991
    %v5348 = vunpack.c.l.b16 %v1992
    %v5349 = vunpack.c.h.b16 %v1992
    %v5350 = vunpack.c.l.b16 %v1993
    %v5351 = vunpack.c.h.b16 %v1993
    %v5352 = vunpack.c.l.b16 %v1994
    %v5353 = vunpack.c.h.b16 %v1994
    %v5354 = vunpack.c.l.b16 %v1995
    %v5355 = vunpack.c.h.b16 %v1995
    %v5356 = vunpack.c.l.b16 %v1996
    %v5357 = vunpack.c.h.b16 %v1996
    %v5358 = vunpack.c.l.b16 %v1997
    %v5359 = vunpack.c.h.b16 %v1997
    %v5360 = vunpack.c.l.b16 %v1998
    %v5361 = vunpack.c.h.b16 %v1998
    %v5362 = vunpack.c.l.b16 %v1999
    %v5363 = vunpack.c.h.b16 %v1999
    %v5364 = vunpack.c.l.b16 %v2000
    %v5365 = vunpack.c.h.b16 %v2000
    %v5366 = vunpack.c.l.b16 %v2001
    %v5367 = vunpack.c.h.b16 %v2001
    %v5368 = vunpack.c.l.b16 %v2002
    %v5369 = vunpack.c.h.b16 %v2002
    %v5370 = vunpack.c.l.b16 %v2003
    %v5371 = vunpack.c.h.b16 %v2003
    %v5372 = vunpack.c.l.b16 %v2004
    %v5373 = vunpack.c.h.b16 %v2004
    %v5374 = vunpack.c.l.b16 %v2005
    %v5375 = vunpack.c.h.b16 %v2005
    %v5376 = vunpack.c.l.b16 %v2006
    %v5377 = vunpack.c.h.b16 %v2006
    %v5378 = vunpack.c.l.b16 %v2007
    %v5379 = vunpack.c.h.b16 %v2007
    %v5380 = vunpack.c.l.b16 %v2008
    %v5381 = vunpack.c.h.b16 %v2008
    %v5382 = vunpack.c.l.b16 %v2009
    %v5383 = vunpack.c.h.b16 %v2009
    %v5384 = vunpack.c.l.b16 %v2010
    %v5385 = vunpack.c.h.b16 %v2010
    %v5386 = vunpack.c.l.b16 %v2011
    %v5387 = vunpack.c.h.b16 %v2011
    %v5388 = vunpack.c.l.b16 %v2012
    %v5389 = vunpack.c.h.b16 %v2012
    %v5390 = vunpack.c.l.b16 %v2013
    %v5391 = vunpack.c.h.b16 %v2013
    %v5392 = vunpack.c.l.b16 %v2014
    %v5393 = vunpack.c.h.b16 %v2014
    %v5394 = vunpack.c.l.b16 %v2015
    %v5395 = vunpack.c.h.b16 %v2015
    %v5396 = vunpack.c.l.b16 %v2016
    %v5397 = vunpack.c.h.b16 %v2016
    %v5398 = vunpack.c.l.b16 %v2017
    %v5399 = vunpack.c.h.b16 %v2017
    %v5400 = vunpack.c.l.b16 %v2018
    %v5401 = vunpack.c.h.b16 %v2018
    %v5402 = vunpack.c.l.b16 %v2019
    %v5403 = vunpack.c.h.b16 %v2019
    %v5404 = vunpack.c.l.b16 %v2020
    %v5405 = vunpack.c.h.b16 %v2020
    %v5406 = vunpack.c.l.b16 %v2021
    %v5407 = vunpack.c.h.b16 %v2021
    %v5408 = vunpack.c.l.b16 %v2022
    %v5409 = vunpack.c.h.b16 %v2022
    %v5410 = vunpack.c.l.b16 %v2023
    %v5411 = vunpack.c.h.b16 %v2023
    %v5412 = vunpack.c.l.b16 %v2024
    %v5413 = vunpack.c.h.b16 %v2024
    %v5414 = vunpack.c.l.b16 %v2025
    %v5415 = vunpack.c.h.b16 %v2025
    %v5416 = vunpack.c.l.b16 %v2026
    %v5417 = vunpack.c.h.b16 %v2026
    %v5418 = vunpack.c.l.b16 %v2027
    %v5419 = vunpack.c.h.b16 %v2027
    %v5420 = vunpack.c.l.b16 %v2028
    %v5421 = vunpack.c.h.b16 %v2028
    %v5422 = vunpack.c.l.b16 %v2029
    %v5423 = vunpack.c.h.b16 %v2029
    %v5424 = vunpack.c.l.b16 %v2030
    %v5425 = vunpack.c.h.b16 %v2030
    %v5426 = vunpack.c.l.b16 %v2031
    %v5427 = vunpack.c.h.b16 %v2031
    %v5428 = vunpack.c.l.b16 %v2032
    %v5429 = vunpack.c.h.b16 %v2032
    %v5430 = vunpack.c.l.b16 %v2033
    %v5431 = vunpack.c.h.b16 %v2033
    %v5432 = vunpack.c.l.b16 %v2034
    %v5433 = vunpack.c.h.b16 %v2034
    %v5434 = vunpack.c.l.b16 %v2035
    %v5435 = vunpack.c.h.b16 %v2035
    %v5436 = vunpack.c.l.b16 %v2036
    %v5437 = vunpack.c.h.b16 %v2036
    %v5438 = vunpack.c.l.b16 %v2037
    %v5439 = vunpack.c.h.b16 %v2037
    %v5440 = vunpack.c.l.b16 %v2038
    %v5441 = vunpack.c.h.b16 %v2038
    %v5442 = vunpack.c.l.b16 %v2039
    %v5443 = vunpack.c.h.b16 %v2039
    %v5444 = vunpack.c.l.b16 %v2040
    %v5445 = vunpack.c.h.b16 %v2040
    %v5446 = vunpack.c.l.b16 %v2041
    %v5447 = vunpack.c.h.b16 %v2041
    %v5448 = vunpack.c.l.b16 %v2042
    %v5449 = vunpack.c.h.b16 %v2042
    %v5450 = vunpack.c.l.b16 %v2043
    %v5451 = vunpack.c.h.b16 %v2043
    %v5452 = vunpack.c.l.b16 %v2044
    %v5453 = vunpack.c.h.b16 %v2044
    %v5454 = vunpack.c.l.b16 %v2045
    %v5455 = vunpack.c.h.b16 %v2045
    %v5456 = vunpack.c.l.b16 %v2046
    %v5457 = vunpack.c.h.b16 %v2046
    %v5458 = vunpack.c.l.b16 %v2047
    %v5459 = vunpack.c.h.b16 %v2047
    %v5460 = vunpack.c.l.b16 %v2048
    %v5461 = vunpack.c.h.b16 %v2048
    %v5462 = vunpack.c.l.b16 %v2049
    %v5463 = vunpack.c.h.b16 %v2049
    %v5464 = vunpack.c.l.b16 %v2050
    %v5465 = vunpack.c.h.b16 %v2050
    %v5466 = vunpack.c.l.b16 %v2051
    %v5467 = vunpack.c.h.b16 %v2051
    %v5468 = vunpack.c.l.b16 %v2052
    %v5469 = vunpack.c.h.b16 %v2052
    %v5470 = vunpack.c.l.b16 %v2053
    %v5471 = vunpack.c.h.b16 %v2053
    %v5472 = vunpack.c.l.b16 %v2054
    %v5473 = vunpack.c.h.b16 %v2054
    %v5474 = vunpack.c.l.b16 %v2055
    %v5475 = vunpack.c.h.b16 %v2055
    %v5476 = vunpack.c.l.b16 %v2056
    %v5477 = vunpack.c.h.b16 %v2056
    %v5478 = vunpack.c.l.b16 %v2057
    %v5479 = vunpack.c.h.b16 %v2057
    %v5480 = vunpack.c.l.b16 %v2058
    %v5481 = vunpack.c.h.b16 %v2058
    %v5482 = vunpack.c.l.b16 %v2059
    %v5483 = vunpack.c.h.b16 %v2059
    %v5484 = vunpack.c.l.b16 %v2060
    %v5485 = vunpack.c.h.b16 %v2060
    %v5486 = vunpack.c.l.b16 %v2061
    %v5487 = vunpack.c.h.b16 %v2061
    %v5488 = vunpack.c.l.b16 %v2062
    %v5489 = vunpack.c.h.b16 %v2062
    %v5490 = vunpack.c.l.b16 %v2063
    %v5491 = vunpack.c.h.b16 %v2063
    %v5492 = vunpack.c.l.b16 %v2064
    %v5493 = vunpack.c.h.b16 %v2064
    %v5494 = vunpack.c.l.b16 %v2065
    %v5495 = vunpack.c.h.b16 %v2065
    %v5496 = vunpack.c.l.b16 %v2066
    %v5497 = vunpack.c.h.b16 %v2066
    %v5498 = vunpack.c.l.b16 %v2067
    %v5499 = vunpack.c.h.b16 %v2067
    %v5500 = vunpack.c.l.b16 %v2068
    %v5501 = vunpack.c.h.b16 %v2068
    %v5502 = vunpack.c.l.b16 %v2069
    %v5503 = vunpack.c.h.b16 %v2069
    %v5504 = vunpack.c.l.b16 %v2070
    %v5505 = vunpack.c.h.b16 %v2070
    %v5506 = vunpack.c.l.b16 %v2071
    %v5507 = vunpack.c.h.b16 %v2071
    %v5508 = vunpack.c.l.b16 %v2072
    %v5509 = vunpack.c.h.b16 %v2072
    %v5510 = vunpack.c.l.b16 %v2073
    %v5511 = vunpack.c.h.b16 %v2073
    %v5512 = vunpack.c.l.b16 %v2074
    %v5513 = vunpack.c.h.b16 %v2074
    %v5514 = vunpack.c.l.b16 %v2075
    %v5515 = vunpack.c.h.b16 %v2075
    %v5516 = vunpack.c.l.b16 %v2076
    %v5517 = vunpack.c.h.b16 %v2076
    %v5518 = vunpack.c.l.b16 %v2077
    %v5519 = vunpack.c.h.b16 %v2077
    %v5520 = vunpack.c.l.b16 %v2078
    %v5521 = vunpack.c.h.b16 %v2078
    %v5522 = vunpack.c.l.b16 %v2079
    %v5523 = vunpack.c.h.b16 %v2079
    %v5524 = vunpack.c.l.b16 %v2080
    %v5525 = vunpack.c.h.b16 %v2080
    %v5526 = vunpack.c.l.b16 %v2081
    %v5527 = vunpack.c.h.b16 %v2081
    %v5528 = vunpack.c.l.b16 %v2082
    %v5529 = vunpack.c.h.b16 %v2082
    %v5530 = vunpack.c.l.b16 %v2083
    %v5531 = vunpack.c.h.b16 %v2083
    %v5532 = vunpack.c.l.b16 %v2084
    %v5533 = vunpack.c.h.b16 %v2084
    %v5534 = vunpack.c.l.b16 %v2085
    %v5535 = vunpack.c.h.b16 %v2085
    %v5536 = vunpack.c.l.b16 %v2086
    %v5537 = vunpack.c.h.b16 %v2086
    %v5538 = vunpack.c.l.b16 %v2087
    %v5539 = vunpack.c.h.b16 %v2087
    %v5540 = vunpack.c.l.b16 %v2088
    %v5541 = vunpack.c.h.b16 %v2088
    %v5542 = vunpack.c.l.b16 %v2089
    %v5543 = vunpack.c.h.b16 %v2089
    %v5544 = vunpack.c.l.b16 %v2090
    %v5545 = vunpack.c.h.b16 %v2090
    %v5546 = vunpack.c.l.b16 %v2091
    %v5547 = vunpack.c.h.b16 %v2091
    %v5548 = vunpack.c.l.b16 %v2092
    %v5549 = vunpack.c.h.b16 %v2092
    %v5550 = vpack.c.b16 %v5042, %v5038
    %v5551 = vpack.c.b16 %v5043, %v5039
    %v5552 = vpack.c.b16 %v5044, %v5040
    %v5553 = vpack.c.b16 %v5045, %v5041
    %v5554 = vpack.c.b16 %v5050, %v5046
    %v5555 = vpack.c.b16 %v5051, %v5047
    %v5556 = vpack.c.b16 %v5052, %v5048
    %v5557 = vpack.c.b16 %v5053, %v5049
    %v5558 = vpack.c.b16 %v5058, %v5054
    %v5559 = vpack.c.b16 %v5059, %v5055
    %v5560 = vpack.c.b16 %v5060, %v5056
    %v5561 = vpack.c.b16 %v5061, %v5057
    %v5562 = vpack.c.b16 %v5066, %v5062
    %v5563 = vpack.c.b16 %v5067, %v5063
    %v5564 = vpack.c.b16 %v5068, %v5064
    %v5565 = vpack.c.b16 %v5069, %v5065
    %v5566 = vpack.c.b16 %v5074, %v5070
    %v5567 = vpack.c.b16 %v5075, %v5071
    %v5568 = vpack.c.b16 %v5076, %v5072
    %v5569 = vpack.c.b16 %v5077, %v5073
    %v5570 = vpack.c.b16 %v5082, %v5078
    %v5571 = vpack.c.b16 %v5083, %v5079
    %v5572 = vpack.c.b16 %v5084, %v5080
    %v5573 = vpack.c.b16 %v5085, %v5081
    %v5574 = vpack.c.b16 %v5090, %v5086
    %v5575 = vpack.c.b16 %v5091, %v5087
    %v5576 = vpack.c.b16 %v5092, %v5088
    %v5577 = vpack.c.b16 %v5093, %v5089
    %v5578 = vpack.c.b16 %v5098, %v5094
    %v5579 = vpack.c.b16 %v5099, %v5095
    %v5580 = vpack.c.b16 %v5100, %v5096
    %v5581 = vpack.c.b16 %v5101, %v5097
    %v5582 = vpack.c.b16 %v5106, %v5102
    %v5583 = vpack.c.b16 %v5107, %v5103
    %v5584 = vpack.c.b16 %v5108, %v5104
    %v5585 = vpack.c.b16 %v5109, %v5105
    %v5586 = vpack.c.b16 %v5114, %v5110
    %v5587 = vpack.c.b16 %v5115, %v5111
    %v5588 = vpack.c.b16 %v5116, %v5112
    %v5589 = vpack.c.b16 %v5117, %v5113
    %v5590 = vpack.c.b16 %v5122, %v5118
    %v5591 = vpack.c.b16 %v5123, %v5119
    %v5592 = vpack.c.b16 %v5124, %v5120
    %v5593 = vpack.c.b16 %v5125, %v5121
    %v5594 = vpack.c.b16 %v5130, %v5126
    %v5595 = vpack.c.b16 %v5131, %v5127
    %v5596 = vpack.c.b16 %v5132, %v5128
    %v5597 = vpack.c.b16 %v5133, %v5129
    %v5598 = vpack.c.b16 %v5138, %v5134
    %v5599 = vpack.c.b16 %v5139, %v5135
    %v5600 = vpack.c.b16 %v5140, %v5136
    %v5601 = vpack.c.b16 %v5141, %v5137
    %v5602 = vpack.c.b16 %v5146, %v5142
    %v5603 = vpack.c.b16 %v5147, %v5143
    %v5604 = vpack.c.b16 %v5148, %v5144
    %v5605 = vpack.c.b16 %v5149, %v5145
    %v5606 = vpack.c.b16 %v5154, %v5150
    %v5607 = vpack.c.b16 %v5155, %v5151
    %v5608 = vpack.c.b16 %v5156, %v5152
    %v5609 = vpack.c.b16 %v5157, %v5153
    %v5610 = vpack.c.b16 %v5162, %v5158
    %v5611 = vpack.c.b16 %v5163, %v5159
    %v5612 = vpack.c.b16 %v5164, %v5160
    %v5613 = vpack.c.b16 %v5165, %v5161
    %v5614 = vpack.c.b16 %v5170, %v5166
    %v5615 = vpack.c.b16 %v5171, %v5167
    %v5616 = vpack.c.b16 %v5172, %v5168
    %v5617 = vpack.c.b16 %v5173, %v5169
    %v5618 = vpack.c.b16 %v5178, %v5174
    %v5619 = vpack.c.b16 %v5179, %v5175
    %v5620 = vpack.c.b16 %v5180, %v5176
    %v5621 = vpack.c.b16 %v5181, %v5177
    %v5622 = vpack.c.b16 %v5186, %v5182
    %v5623 = vpack.c.b16 %v5187, %v5183
    %v5624 = vpack.c.b16 %v5188, %v5184
    %v5625 = vpack.c.b16 %v5189, %v5185
    %v5626 = vpack.c.b16 %v5194, %v5190
    %v5627 = vpack.c.b16 %v5195, %v5191
    %v5628 = vpack.c.b16 %v5196, %v5192
    %v5629 = vpack.c.b16 %v5197, %v5193
    %v5630 = vpack.c.b16 %v5202, %v5198
    %v5631 = vpack.c.b16 %v5203, %v5199
    %v5632 = vpack.c.b16 %v5204, %v5200
    %v5633 = vpack.c.b16 %v5205, %v5201
    %v5634 = vpack.c.b16 %v5210, %v5206
    %v5635 = vpack.c.b16 %v5211, %v5207
    %v5636 = vpack.c.b16 %v5212, %v5208
    %v5637 = vpack.c.b16 %v5213, %v5209
    %v5638 = vpack.c.b16 %v5218, %v5214
    %v5639 = vpack.c.b16 %v5219, %v5215
    %v5640 = vpack.c.b16 %v5220, %v5216
    %v5641 = vpack.c.b16 %v5221, %v5217
    %v5642 = vpack.c.b16 %v5226, %v5222
    %v5643 = vpack.c.b16 %v5227, %v5223
    %v5644 = vpack.c.b16 %v5228, %v5224
    %v5645 = vpack.c.b16 %v5229, %v5225
    %v5646 = vpack.c.b16 %v5234, %v5230
    %v5647 = vpack.c.b16 %v5235, %v5231
    %v5648 = vpack.c.b16 %v5236, %v5232
    %v5649 = vpack.c.b16 %v5237, %v5233
    %v5650 = vpack.c.b16 %v5242, %v5238
    %v5651 = vpack.c.b16 %v5243, %v5239
    %v5652 = vpack.c.b16 %v5244, %v5240
    %v5653 = vpack.c.b16 %v5245, %v5241
    %v5654 = vpack.c.b16 %v5250, %v5246
    %v5655 = vpack.c.b16 %v5251, %v5247
    %v5656 = vpack.c.b16 %v5252, %v5248
    %v5657 = vpack.c.b16 %v5253, %v5249
    %v5658 = vpack.c.b16 %v5258, %v5254
    %v5659 = vpack.c.b16 %v5259, %v5255
    %v5660 = vpack.c.b16 %v5260, %v5256
    %v5661 = vpack.c.b16 %v5261, %v5257
    %v5662 = vpack.c.b16 %v5266, %v5262
    %v5663 = vpack.c.b16 %v5267, %v5263
    %v5664 = vpack.c.b16 %v5268, %v5264
    %v5665 = vpack.c.b16 %v5269, %v5265
    %v5666 = vpack.c.b16 %v5274, %v5270
    %v5667 = vpack.c.b16 %v5275, %v5271
    %v5668 = vpack.c.b16 %v5276, %v5272
    %v5669 = vpack.c.b16 %v5277, %v5273
    %v5670 = vpack.c.b16 %v5282, %v5278
    %v5671 = vpack.c.b16 %v5283, %v5279
    %v5672 = vpack.c.b16 %v5284, %v5280
    %v5673 = vpack.c.b16 %v5285, %v5281
    %v5674 = vpack.c.b16 %v5290, %v5286
    %v5675 = vpack.c.b16 %v5291, %v5287
    %v5676 = vpack.c.b16 %v5292, %v5288
    %v5677 = vpack.c.b16 %v5293, %v5289
    %v5678 = vpack.c.b16 %v5298, %v5294
    %v5679 = vpack.c.b16 %v5299, %v5295
    %v5680 = vpack.c.b16 %v5300, %v5296
    %v5681 = vpack.c.b16 %v5301, %v5297
    %v5682 = vpack.c.b16 %v5306, %v5302
    %v5683 = vpack.c.b16 %v5307, %v5303
    %v5684 = vpack.c.b16 %v5308, %v5304
    %v5685 = vpack.c.b16 %v5309, %v5305
    %v5686 = vpack.c.b16 %v5314, %v5310
    %v5687 = vpack.c.b16 %v5315, %v5311
    %v5688 = vpack.c.b16 %v5316, %v5312
    %v5689 = vpack.c.b16 %v5317, %v5313
    %v5690 = vpack.c.b16 %v5322, %v5318
    %v5691 = vpack.c.b16 %v5323, %v5319
    %v5692 = vpack.c.b16 %v5324, %v5320
    %v5693 = vpack.c.b16 %v5325, %v5321
    %v5694 = vpack.c.b16 %v5330, %v5326
    %v5695 = vpack.c.b16 %v5331, %v5327
    %v5696 = vpack.c.b16 %v5332, %v5328
    %v5697 = vpack.c.b16 %v5333, %v5329
    %v5698 = vpack.c.b16 %v5338, %v5334
    %v5699 = vpack.c.b16 %v5339, %v5335
    %v5700 = vpack.c.b16 %v5340, %v5336
    %v5701 = vpack.c.b16 %v5341, %v5337
    %v5702 = vpack.c.b16 %v5346, %v5342
    %v5703 = vpack.c.b16 %v5347, %v5343
    %v5704 = vpack.c.b16 %v5348, %v5344
    %v5705 = vpack.c.b16 %v5349, %v5345
    %v5706 = vpack.c.b16 %v5354, %v5350
    %v5707 = vpack.c.b16 %v5355, %v5351
    %v5708 = vpack.c.b16 %v5356, %v5352
    %v5709 = vpack.c.b16 %v5357, %v5353
    %v5710 = vpack.c.b16 %v5362, %v5358
    %v5711 = vpack.c.b16 %v5363, %v5359
    %v5712 = vpack.c.b16 %v5364, %v5360
    %v5713 = vpack.c.b16 %v5365, %v5361
    %v5714 = vpack.c.b16 %v5370, %v5366
    %v5715 = vpack.c.b16 %v5371, %v5367
    %v5716 = vpack.c.b16 %v5372, %v5368
    %v5717 = vpack.c.b16 %v5373, %v5369
    %v5718 = vpack.c.b16 %v5378, %v5374
    %v5719 = vpack.c.b16 %v5379, %v5375
    %v5720 = vpack.c.b16 %v5380, %v5376
    %v5721 = vpack.c.b16 %v5381, %v5377
    %v5722 = vpack.c.b16 %v5386, %v5382
    %v5723 = vpack.c.b16 %v5387, %v5383
    %v5724 = vpack.c.b16 %v5388, %v5384
    %v5725 = vpack.c.b16 %v5389, %v5385
    %v5726 = vpack.c.b16 %v5394, %v5390
    %v5727 = vpack.c.b16 %v5395, %v5391
    %v5728 = vpack.c.b16 %v5396, %v5392
    %v5729 = vpack.c.b16 %v5397, %v5393
    %v5730 = vpack.c.b16 %v5402, %v5398
    %v5731 = vpack.c.b16 %v5403, %v5399
    %v5732 = vpack.c.b16 %v5404, %v5400
    %v5733 = vpack.c.b16 %v5405, %v5401
    %v5734 = vpack.c.b16 %v5410, %v5406
    %v5735 = vpack.c.b16 %v5411, %v5407
    %v5736 = vpack.c.b16 %v5412, %v5408
    %v5737 = vpack.c.b16 %v5413, %v5409
    %v5738 = vpack.c.b16 %v5418, %v5414
    %v5739 = vpack.c.b16 %v5419, %v5415
    %v5740 = vpack.c.b16 %v5420, %v5416
    %v5741 = vpack.c.b16 %v5421, %v5417
    %v5742 = vpack.c.b16 %v5426, %v5422
    %v5743 = vpack.c.b16 %v5427, %v5423
    %v5744 = vpack.c.b16 %v5428, %v5424
    %v5745 = vpack.c.b16 %v5429, %v5425
    %v5746 = vpack.c.b16 %v5434, %v5430
    %v5747 = vpack.c.b16 %v5435, %v5431
    %v5748 = vpack.c.b16 %v5436, %v5432
    %v5749 = vpack.c.b16 %v5437, %v5433
    %v5750 = vpack.c.b16 %v5442, %v5438
    %v5751 = vpack.c.b16 %v5443, %v5439
    %v5752 = vpack.c.b16 %v5444, %v5440
    %v5753 = vpack.c.b16 %v5445, %v5441
    %v5754 = vpack.c.b16 %v5450, %v5446
    %v5755 = vpack.c.b16 %v5451, %v5447
    %v5756 = vpack.c.b16 %v5452, %v5448
    %v5757 = vpack.c.b16 %v5453, %v5449
    %v5758 = vpack.c.b16 %v5458, %v5454
    %v5759 = vpack.c.b16 %v5459, %v5455
    %v5760 = vpack.c.b16 %v5460, %v5456
    %v5761 = vpack.c.b16 %v5461, %v5457
    %v5762 = vpack.c.b16 %v5466, %v5462
    %v5763 = vpack.c.b16 %v5467, %v5463
    %v5764 = vpack.c.b16 %v5468, %v5464
    %v5765 = vpack.c.b16 %v5469, %v5465
    %v5766 = vpack.c.b16 %v5474, %v5470
    %v5767 = vpack.c.b16 %v5475, %v5471
    %v5768 = vpack.c.b16 %v5476, %v5472
    %v5769 = vpack.c.b16 %v5477, %v5473
    %v5770 = vpack.c.b16 %v5482, %v5478
    %v5771 = vpack.c.b16 %v5483, %v5479
    %v5772 = vpack.c.b16 %v5484, %v5480
    %v5773 = vpack.c.b16 %v5485, %v5481
    %v5774 = vpack.c.b16 %v5490, %v5486
    %v5775 = vpack.c.b16 %v5491, %v5487
    %v5776 = vpack.c.b16 %v5492, %v5488
    %v5777 = vpack.c.b16 %v5493, %v5489
    %v5778 = vpack.c.b16 %v5498, %v5494
    %v5779 = vpack.c.b16 %v5499, %v5495
    %v5780 = vpack.c.b16 %v5500, %v5496
    %v5781 = vpack.c.b16 %v5501, %v5497
    %v5782 = vpack.c.b16 %v5506, %v5502
    %v5783 = vpack.c.b16 %v5507, %v5503
    %v5784 = vpack.c.b16 %v5508, %v5504
    %v5785 = vpack.c.b16 %v5509, %v5505
    %v5786 = vpack.c.b16 %v5514, %v5510
    %v5787 = vpack.c.b16 %v5515, %v5511
    %v5788 = vpack.c.b16 %v5516, %v5512
    %v5789 = vpack.c.b16 %v5517, %v5513
    %v5790 = vpack.c.b16 %v5522, %v5518
    %v5791 = vpack.c.b16 %v5523, %v5519
    %v5792 = vpack.c.b16 %v5524, %v5520
    %v5793 = vpack.c.b16 %v5525, %v5521
    %v5794 = vpack.c.b16 %v5530, %v5526
    %v5795 = vpack.c.b16 %v5531, %v5527
    %v5796 = vpack.c.b16 %v5532, %v5528
    %v5797 = vpack.c.b16 %v5533, %v5529
    %v5798 = vpack.c.b16 %v5538, %v5534
    %v5799 = vpack.c.b16 %v5539, %v5535
    %v5800 = vpack.c.b16 %v5540, %v5536
    %v5801 = vpack.c.b16 %v5541, %v5537
    %v5802 = vpack.c.b16 %v5546, %v5542
    %v5803 = vpack.c.b16 %v5547, %v5543
    %v5804 = vpack.c.b16 %v5548, %v5544
    %v5805 = vpack.c.b16 %v5549, %v5545
    %6062 = vmatpush.bf16.msra.mxu0 %v5578
    %6063 = vmatpush.bf16.msra.mxu0 %v5574
    %6064 = vmatpush.bf16.msra.mxu0 %v5570
    %6065 = vmatpush.bf16.msra.mxu0 %v5566
    %6066 = vmatpush.bf16.msra.mxu0 %v5562
    %6067 = vmatpush.bf16.msra.mxu0 %v5558
    %6068 = vmatpush.bf16.msra.mxu0 %v5554
    %6069 = vmatpush.bf16.msra.mxu0 %v5550
    %6070 = vmatmul.bf16.gmra.mxu0 %v4718
    %v6071 = vpop.f32.mrf.mxu0
    %v6072 = vadd.f32 %v4003, %v6071
    %v6073 = vpop.f32.mrf.mxu0
    %v6074 = vadd.f32 %v4005, %v6073
    %6075 = vmatmul.bf16.gmra.mxu0 %v4726
    %v6076 = vpop.f32.mrf.mxu0
    %v6077 = vadd.f32 %v4008, %v6076
    %v6078 = vpop.f32.mrf.mxu0
    %v6079 = vadd.f32 %v4010, %v6078
    %6080 = vmatmul.bf16.gmra.mxu0 %v4734
    %v6081 = vpop.f32.mrf.mxu0
    %v6082 = vadd.f32 %v4013, %v6081
    %v6083 = vpop.f32.mrf.mxu0
    %v6084 = vadd.f32 %v4015, %v6083
    %6085 = vmatmul.bf16.gmra.mxu0 %v4742
    %v6086 = vpop.f32.mrf.mxu0
    %v6087 = vadd.f32 %v4018, %v6086
    %v6088 = vpop.f32.mrf.mxu0
    %v6089 = vadd.f32 %v4020, %v6088
    %6090 = vdwg.mxu0
    %6091 = vmatpush.bf16.msra.mxu0 %v5610
    %6092 = vmatpush.bf16.msra.mxu0 %v5606
    %6093 = vmatpush.bf16.msra.mxu0 %v5602
    %6094 = vmatpush.bf16.msra.mxu0 %v5598
    %6095 = vmatpush.bf16.msra.mxu0 %v5594
    %6096 = vmatpush.bf16.msra.mxu0 %v5590
    %6097 = vmatpush.bf16.msra.mxu0 %v5586
    %6098 = vmatpush.bf16.msra.mxu0 %v5582
    %6099 = vmatmul.bf16.gmra.mxu0 %v4719
    %v6100 = vpop.f32.mrf.mxu0
    %v6101 = vadd.f32 %v6072, %v6100
    %v6102 = vpop.f32.mrf.mxu0
    %v6103 = vadd.f32 %v6074, %v6102
    %6104 = vmatmul.bf16.gmra.mxu0 %v4727
    %v6105 = vpop.f32.mrf.mxu0
    %v6106 = vadd.f32 %v6077, %v6105
    %v6107 = vpop.f32.mrf.mxu0
    %v6108 = vadd.f32 %v6079, %v6107
    %6109 = vmatmul.bf16.gmra.mxu0 %v4735
    %v6110 = vpop.f32.mrf.mxu0
    %v6111 = vadd.f32 %v6082, %v6110
    %v6112 = vpop.f32.mrf.mxu0
    %v6113 = vadd.f32 %v6084, %v6112
    %6114 = vmatmul.bf16.gmra.mxu0 %v4743
    %v6115 = vpop.f32.mrf.mxu0
    %v6116 = vadd.f32 %v6087, %v6115
    %v6117 = vpop.f32.mrf.mxu0
    %v6118 = vadd.f32 %v6089, %v6117
    %6119 = vdwg.mxu0
    %6120 = vmatpush.bf16.msra.mxu0 %v5642
    %6121 = vmatpush.bf16.msra.mxu0 %v5638
    %6122 = vmatpush.bf16.msra.mxu0 %v5634
    %6123 = vmatpush.bf16.msra.mxu0 %v5630
    %6124 = vmatpush.bf16.msra.mxu0 %v5626
    %6125 = vmatpush.bf16.msra.mxu0 %v5622
    %6126 = vmatpush.bf16.msra.mxu0 %v5618
    %6127 = vmatpush.bf16.msra.mxu0 %v5614
    %6128 = vmatmul.bf16.gmra.mxu0 %v4720
    %v6129 = vpop.f32.mrf.mxu0
    %v6130 = vadd.f32 %v6101, %v6129
    %v6131 = vpop.f32.mrf.mxu0
    %v6132 = vadd.f32 %v6103, %v6131
    %6133 = vmatmul.bf16.gmra.mxu0 %v4728
    %v6134 = vpop.f32.mrf.mxu0
    %v6135 = vadd.f32 %v6106, %v6134
    %v6136 = vpop.f32.mrf.mxu0
    %v6137 = vadd.f32 %v6108, %v6136
    %6138 = vmatmul.bf16.gmra.mxu0 %v4736
    %v6139 = vpop.f32.mrf.mxu0
    %v6140 = vadd.f32 %v6111, %v6139
    %v6141 = vpop.f32.mrf.mxu0
    %v6142 = vadd.f32 %v6113, %v6141
    %6143 = vmatmul.bf16.gmra.mxu0 %v4744
    %v6144 = vpop.f32.mrf.mxu0
    %v6145 = vadd.f32 %v6116, %v6144
    %v6146 = vpop.f32.mrf.mxu0
    %v6147 = vadd.f32 %v6118, %v6146
    %6148 = vdwg.mxu0
    %6149 = vmatpush.bf16.msra.mxu0 %v5674
    %6150 = vmatpush.bf16.msra.mxu0 %v5670
    %6151 = vmatpush.bf16.msra.mxu0 %v5666
    %6152 = vmatpush.bf16.msra.mxu0 %v5662
    %6153 = vmatpush.bf16.msra.mxu0 %v5658
    %6154 = vmatpush.bf16.msra.mxu0 %v5654
    %6155 = vmatpush.bf16.msra.mxu0 %v5650
    %6156 = vmatpush.bf16.msra.mxu0 %v5646
    %6157 = vmatmul.bf16.gmra.mxu0 %v4721
    %v6158 = vpop.f32.mrf.mxu0
    %v6159 = vadd.f32 %v6130, %v6158
    %v6160 = vpop.f32.mrf.mxu0
    %v6161 = vadd.f32 %v6132, %v6160
    %6162 = vmatmul.bf16.gmra.mxu0 %v4729
    %v6163 = vpop.f32.mrf.mxu0
    %v6164 = vadd.f32 %v6135, %v6163
    %v6165 = vpop.f32.mrf.mxu0
    %v6166 = vadd.f32 %v6137, %v6165
    %6167 = vmatmul.bf16.gmra.mxu0 %v4737
    %v6168 = vpop.f32.mrf.mxu0
    %v6169 = vadd.f32 %v6140, %v6168
    %v6170 = vpop.f32.mrf.mxu0
    %v6171 = vadd.f32 %v6142, %v6170
    %6172 = vmatmul.bf16.gmra.mxu0 %v4745
    %v6173 = vpop.f32.mrf.mxu0
    %v6174 = vadd.f32 %v6145, %v6173
    %v6175 = vpop.f32.mrf.mxu0
    %v6176 = vadd.f32 %v6147, %v6175
    %6177 = vdwg.mxu0
    %6178 = vmatpush.bf16.msra.mxu0 %v5706
    %6179 = vmatpush.bf16.msra.mxu0 %v5702
    %6180 = vmatpush.bf16.msra.mxu0 %v5698
    %6181 = vmatpush.bf16.msra.mxu0 %v5694
    %6182 = vmatpush.bf16.msra.mxu0 %v5690
    %6183 = vmatpush.bf16.msra.mxu0 %v5686
    %6184 = vmatpush.bf16.msra.mxu0 %v5682
    %6185 = vmatpush.bf16.msra.mxu0 %v5678
    %6186 = vmatmul.bf16.gmra.mxu0 %v4722
    %v6187 = vpop.f32.mrf.mxu0
    %v6188 = vadd.f32 %v6159, %v6187
    %v6189 = vpop.f32.mrf.mxu0
    %v6190 = vadd.f32 %v6161, %v6189
    %6191 = vmatmul.bf16.gmra.mxu0 %v4730
    %v6192 = vpop.f32.mrf.mxu0
    %v6193 = vadd.f32 %v6164, %v6192
    %v6194 = vpop.f32.mrf.mxu0
    %v6195 = vadd.f32 %v6166, %v6194
    %6196 = vmatmul.bf16.gmra.mxu0 %v4738
    %v6197 = vpop.f32.mrf.mxu0
    %v6198 = vadd.f32 %v6169, %v6197
    %v6199 = vpop.f32.mrf.mxu0
    %v6200 = vadd.f32 %v6171, %v6199
    %6201 = vmatmul.bf16.gmra.mxu0 %v4746
    %v6202 = vpop.f32.mrf.mxu0
    %v6203 = vadd.f32 %v6174, %v6202
    %v6204 = vpop.f32.mrf.mxu0
    %v6205 = vadd.f32 %v6176, %v6204
    %6206 = vdwg.mxu0
    %6207 = vmatpush.bf16.msra.mxu0 %v5738
    %6208 = vmatpush.bf16.msra.mxu0 %v5734
    %6209 = vmatpush.bf16.msra.mxu0 %v5730
    %6210 = vmatpush.bf16.msra.mxu0 %v5726
    %6211 = vmatpush.bf16.msra.mxu0 %v5722
    %6212 = vmatpush.bf16.msra.mxu0 %v5718
    %6213 = vmatpush.bf16.msra.mxu0 %v5714
    %6214 = vmatpush.bf16.msra.mxu0 %v5710
    %6215 = vmatmul.bf16.gmra.mxu0 %v4723
    %v6216 = vpop.f32.mrf.mxu0
    %v6217 = vadd.f32 %v6188, %v6216
    %v6218 = vpop.f32.mrf.mxu0
    %v6219 = vadd.f32 %v6190, %v6218
    %6220 = vmatmul.bf16.gmra.mxu0 %v4731
    %v6221 = vpop.f32.mrf.mxu0
    %v6222 = vadd.f32 %v6193, %v6221
    %v6223 = vpop.f32.mrf.mxu0
    %v6224 = vadd.f32 %v6195, %v6223
    %6225 = vmatmul.bf16.gmra.mxu0 %v4739
    %v6226 = vpop.f32.mrf.mxu0
    %v6227 = vadd.f32 %v6198, %v6226
    %v6228 = vpop.f32.mrf.mxu0
    %v6229 = vadd.f32 %v6200, %v6228
    %6230 = vmatmul.bf16.gmra.mxu0 %v4747
    %v6231 = vpop.f32.mrf.mxu0
    %v6232 = vadd.f32 %v6203, %v6231
    %v6233 = vpop.f32.mrf.mxu0
    %v6234 = vadd.f32 %v6205, %v6233
    %6235 = vdwg.mxu0
    %6236 = vmatpush.bf16.msra.mxu0 %v5770
    %6237 = vmatpush.bf16.msra.mxu0 %v5766
    %6238 = vmatpush.bf16.msra.mxu0 %v5762
    %6239 = vmatpush.bf16.msra.mxu0 %v5758
    %6240 = vmatpush.bf16.msra.mxu0 %v5754
    %6241 = vmatpush.bf16.msra.mxu0 %v5750
    %6242 = vmatpush.bf16.msra.mxu0 %v5746
    %6243 = vmatpush.bf16.msra.mxu0 %v5742
    %6244 = vmatmul.bf16.gmra.mxu0 %v4724
    %v6245 = vpop.f32.mrf.mxu0
    %v6246 = vadd.f32 %v6217, %v6245
    %v6247 = vpop.f32.mrf.mxu0
    %v6248 = vadd.f32 %v6219, %v6247
    %6249 = vmatmul.bf16.gmra.mxu0 %v4732
    %v6250 = vpop.f32.mrf.mxu0
    %v6251 = vadd.f32 %v6222, %v6250
    %v6252 = vpop.f32.mrf.mxu0
    %v6253 = vadd.f32 %v6224, %v6252
    %6254 = vmatmul.bf16.gmra.mxu0 %v4740
    %v6255 = vpop.f32.mrf.mxu0
    %v6256 = vadd.f32 %v6227, %v6255
    %v6257 = vpop.f32.mrf.mxu0
    %v6258 = vadd.f32 %v6229, %v6257
    %6259 = vmatmul.bf16.gmra.mxu0 %v4748
    %v6260 = vpop.f32.mrf.mxu0
    %v6261 = vadd.f32 %v6232, %v6260
    %v6262 = vpop.f32.mrf.mxu0
    %v6263 = vadd.f32 %v6234, %v6262
    %6264 = vdwg.mxu0
    %6265 = vmatpush.bf16.msra.mxu0 %v5802
    %6266 = vmatpush.bf16.msra.mxu0 %v5798
    %6267 = vmatpush.bf16.msra.mxu0 %v5794
    %6268 = vmatpush.bf16.msra.mxu0 %v5790
    %6269 = vmatpush.bf16.msra.mxu0 %v5786
    %6270 = vmatpush.bf16.msra.mxu0 %v5782
    %6271 = vmatpush.bf16.msra.mxu0 %v5778
    %6272 = vmatpush.bf16.msra.mxu0 %v5774
    %6273 = vmatmul.bf16.gmra.mxu0 %v4725
    %v6274 = vpop.f32.mrf.mxu0
    %v6275 = vadd.f32 %v6246, %v6274
    %v6276 = vpop.f32.mrf.mxu0
    %v6277 = vadd.f32 %v6248, %v6276
    %6278 = vmatmul.bf16.gmra.mxu0 %v4733
    %v6279 = vpop.f32.mrf.mxu0
    %v6280 = vadd.f32 %v6251, %v6279
    %v6281 = vpop.f32.mrf.mxu0
    %v6282 = vadd.f32 %v6253, %v6281
    %6283 = vmatmul.bf16.gmra.mxu0 %v4741
    %v6284 = vpop.f32.mrf.mxu0
    %v6285 = vadd.f32 %v6256, %v6284
    %v6286 = vpop.f32.mrf.mxu0
    %v6287 = vadd.f32 %v6258, %v6286
    %6288 = vmatmul.bf16.gmra.mxu0 %v4749
    %v6289 = vpop.f32.mrf.mxu0
    %v6290 = vadd.f32 %v6261, %v6289
    %v6291 = vpop.f32.mrf.mxu0
    %v6292 = vadd.f32 %v6263, %v6291
    %6293 = vdwg.mxu0
    %6294 = vmatpush.bf16.msra.mxu0 %v5579
    %6295 = vmatpush.bf16.msra.mxu0 %v5575
    %6296 = vmatpush.bf16.msra.mxu0 %v5571
    %6297 = vmatpush.bf16.msra.mxu0 %v5567
    %6298 = vmatpush.bf16.msra.mxu0 %v5563
    %6299 = vmatpush.bf16.msra.mxu0 %v5559
    %6300 = vmatpush.bf16.msra.mxu0 %v5555
    %6301 = vmatpush.bf16.msra.mxu0 %v5551
    %6302 = vmatmul.bf16.gmra.mxu0 %v4718
    %v6303 = vpop.f32.mrf.mxu0
    %v6304 = vadd.f32 %v4235, %v6303
    %v6305 = vpop.f32.mrf.mxu0
    %v6306 = vadd.f32 %v4237, %v6305
    %6307 = vmatmul.bf16.gmra.mxu0 %v4726
    %v6308 = vpop.f32.mrf.mxu0
    %v6309 = vadd.f32 %v4240, %v6308
    %v6310 = vpop.f32.mrf.mxu0
    %v6311 = vadd.f32 %v4242, %v6310
    %6312 = vmatmul.bf16.gmra.mxu0 %v4734
    %v6313 = vpop.f32.mrf.mxu0
    %v6314 = vadd.f32 %v4245, %v6313
    %v6315 = vpop.f32.mrf.mxu0
    %v6316 = vadd.f32 %v4247, %v6315
    %6317 = vmatmul.bf16.gmra.mxu0 %v4742
    %v6318 = vpop.f32.mrf.mxu0
    %v6319 = vadd.f32 %v4250, %v6318
    %v6320 = vpop.f32.mrf.mxu0
    %v6321 = vadd.f32 %v4252, %v6320
    %6322 = vdwg.mxu0
    %6323 = vmatpush.bf16.msra.mxu0 %v5611
    %6324 = vmatpush.bf16.msra.mxu0 %v5607
    %6325 = vmatpush.bf16.msra.mxu0 %v5603
    %6326 = vmatpush.bf16.msra.mxu0 %v5599
    %6327 = vmatpush.bf16.msra.mxu0 %v5595
    %6328 = vmatpush.bf16.msra.mxu0 %v5591
    %6329 = vmatpush.bf16.msra.mxu0 %v5587
    %6330 = vmatpush.bf16.msra.mxu0 %v5583
    %6331 = vmatmul.bf16.gmra.mxu0 %v4719
    %v6332 = vpop.f32.mrf.mxu0
    %v6333 = vadd.f32 %v6304, %v6332
    %v6334 = vpop.f32.mrf.mxu0
    %v6335 = vadd.f32 %v6306, %v6334
    %6336 = vmatmul.bf16.gmra.mxu0 %v4727
    %v6337 = vpop.f32.mrf.mxu0
    %v6338 = vadd.f32 %v6309, %v6337
    %v6339 = vpop.f32.mrf.mxu0
    %v6340 = vadd.f32 %v6311, %v6339
    %6341 = vmatmul.bf16.gmra.mxu0 %v4735
    %v6342 = vpop.f32.mrf.mxu0
    %v6343 = vadd.f32 %v6314, %v6342
    %v6344 = vpop.f32.mrf.mxu0
    %v6345 = vadd.f32 %v6316, %v6344
    %6346 = vmatmul.bf16.gmra.mxu0 %v4743
    %v6347 = vpop.f32.mrf.mxu0
    %v6348 = vadd.f32 %v6319, %v6347
    %v6349 = vpop.f32.mrf.mxu0
    %v6350 = vadd.f32 %v6321, %v6349
    %6351 = vdwg.mxu0
    %6352 = vmatpush.bf16.msra.mxu0 %v5643
    %6353 = vmatpush.bf16.msra.mxu0 %v5639
    %6354 = vmatpush.bf16.msra.mxu0 %v5635
    %6355 = vmatpush.bf16.msra.mxu0 %v5631
    %6356 = vmatpush.bf16.msra.mxu0 %v5627
    %6357 = vmatpush.bf16.msra.mxu0 %v5623
    %6358 = vmatpush.bf16.msra.mxu0 %v5619
    %6359 = vmatpush.bf16.msra.mxu0 %v5615
    %6360 = vmatmul.bf16.gmra.mxu0 %v4720
    %v6361 = vpop.f32.mrf.mxu0
    %v6362 = vadd.f32 %v6333, %v6361
    %v6363 = vpop.f32.mrf.mxu0
    %v6364 = vadd.f32 %v6335, %v6363
    %6365 = vmatmul.bf16.gmra.mxu0 %v4728
    %v6366 = vpop.f32.mrf.mxu0
    %v6367 = vadd.f32 %v6338, %v6366
    %v6368 = vpop.f32.mrf.mxu0
    %v6369 = vadd.f32 %v6340, %v6368
    %6370 = vmatmul.bf16.gmra.mxu0 %v4736
    %v6371 = vpop.f32.mrf.mxu0
    %v6372 = vadd.f32 %v6343, %v6371
    %v6373 = vpop.f32.mrf.mxu0
    %v6374 = vadd.f32 %v6345, %v6373
    %6375 = vmatmul.bf16.gmra.mxu0 %v4744
    %v6376 = vpop.f32.mrf.mxu0
    %v6377 = vadd.f32 %v6348, %v6376
    %v6378 = vpop.f32.mrf.mxu0
    %v6379 = vadd.f32 %v6350, %v6378
    %6380 = vdwg.mxu0
    %6381 = vmatpush.bf16.msra.mxu0 %v5675
    %6382 = vmatpush.bf16.msra.mxu0 %v5671
    %6383 = vmatpush.bf16.msra.mxu0 %v5667
    %6384 = vmatpush.bf16.msra.mxu0 %v5663
    %6385 = vmatpush.bf16.msra.mxu0 %v5659
    %6386 = vmatpush.bf16.msra.mxu0 %v5655
    %6387 = vmatpush.bf16.msra.mxu0 %v5651
    %6388 = vmatpush.bf16.msra.mxu0 %v5647
    %6389 = vmatmul.bf16.gmra.mxu0 %v4721
    %v6390 = vpop.f32.mrf.mxu0
    %v6391 = vadd.f32 %v6362, %v6390
    %v6392 = vpop.f32.mrf.mxu0
    %v6393 = vadd.f32 %v6364, %v6392
    %6394 = vmatmul.bf16.gmra.mxu0 %v4729
    %v6395 = vpop.f32.mrf.mxu0
    %v6396 = vadd.f32 %v6367, %v6395
    %v6397 = vpop.f32.mrf.mxu0
    %v6398 = vadd.f32 %v6369, %v6397
    %6399 = vmatmul.bf16.gmra.mxu0 %v4737
    %v6400 = vpop.f32.mrf.mxu0
    %v6401 = vadd.f32 %v6372, %v6400
    %v6402 = vpop.f32.mrf.mxu0
    %v6403 = vadd.f32 %v6374, %v6402
    %6404 = vmatmul.bf16.gmra.mxu0 %v4745
    %v6405 = vpop.f32.mrf.mxu0
    %v6406 = vadd.f32 %v6377, %v6405
    %v6407 = vpop.f32.mrf.mxu0
    %v6408 = vadd.f32 %v6379, %v6407
    %6409 = vdwg.mxu0
    %6410 = vmatpush.bf16.msra.mxu0 %v5707
    %6411 = vmatpush.bf16.msra.mxu0 %v5703
    %6412 = vmatpush.bf16.msra.mxu0 %v5699
    %6413 = vmatpush.bf16.msra.mxu0 %v5695
    %6414 = vmatpush.bf16.msra.mxu0 %v5691
    %6415 = vmatpush.bf16.msra.mxu0 %v5687
    %6416 = vmatpush.bf16.msra.mxu0 %v5683
    %6417 = vmatpush.bf16.msra.mxu0 %v5679
    %6418 = vmatmul.bf16.gmra.mxu0 %v4722
    %v6419 = vpop.f32.mrf.mxu0
    %v6420 = vadd.f32 %v6391, %v6419
    %v6421 = vpop.f32.mrf.mxu0
    %v6422 = vadd.f32 %v6393, %v6421
    %6423 = vmatmul.bf16.gmra.mxu0 %v4730
    %v6424 = vpop.f32.mrf.mxu0
    %v6425 = vadd.f32 %v6396, %v6424
    %v6426 = vpop.f32.mrf.mxu0
    %v6427 = vadd.f32 %v6398, %v6426
    %6428 = vmatmul.bf16.gmra.mxu0 %v4738
    %v6429 = vpop.f32.mrf.mxu0
    %v6430 = vadd.f32 %v6401, %v6429
    %v6431 = vpop.f32.mrf.mxu0
    %v6432 = vadd.f32 %v6403, %v6431
    %6433 = vmatmul.bf16.gmra.mxu0 %v4746
    %v6434 = vpop.f32.mrf.mxu0
    %v6435 = vadd.f32 %v6406, %v6434
    %v6436 = vpop.f32.mrf.mxu0
    %v6437 = vadd.f32 %v6408, %v6436
    %6438 = vdwg.mxu0
    %6439 = vmatpush.bf16.msra.mxu0 %v5739
    %6440 = vmatpush.bf16.msra.mxu0 %v5735
    %6441 = vmatpush.bf16.msra.mxu0 %v5731
    %6442 = vmatpush.bf16.msra.mxu0 %v5727
    %6443 = vmatpush.bf16.msra.mxu0 %v5723
    %6444 = vmatpush.bf16.msra.mxu0 %v5719
    %6445 = vmatpush.bf16.msra.mxu0 %v5715
    %6446 = vmatpush.bf16.msra.mxu0 %v5711
    %6447 = vmatmul.bf16.gmra.mxu0 %v4723
    %v6448 = vpop.f32.mrf.mxu0
    %v6449 = vadd.f32 %v6420, %v6448
    %v6450 = vpop.f32.mrf.mxu0
    %v6451 = vadd.f32 %v6422, %v6450
    %6452 = vmatmul.bf16.gmra.mxu0 %v4731
    %v6453 = vpop.f32.mrf.mxu0
    %v6454 = vadd.f32 %v6425, %v6453
    %v6455 = vpop.f32.mrf.mxu0
    %v6456 = vadd.f32 %v6427, %v6455
    %6457 = vmatmul.bf16.gmra.mxu0 %v4739
    %v6458 = vpop.f32.mrf.mxu0
    %v6459 = vadd.f32 %v6430, %v6458
    %v6460 = vpop.f32.mrf.mxu0
    %v6461 = vadd.f32 %v6432, %v6460
    %6462 = vmatmul.bf16.gmra.mxu0 %v4747
    %v6463 = vpop.f32.mrf.mxu0
    %v6464 = vadd.f32 %v6435, %v6463
    %v6465 = vpop.f32.mrf.mxu0
    %v6466 = vadd.f32 %v6437, %v6465
    %6467 = vdwg.mxu0
    %6468 = vmatpush.bf16.msra.mxu0 %v5771
    %6469 = vmatpush.bf16.msra.mxu0 %v5767
    %6470 = vmatpush.bf16.msra.mxu0 %v5763
    %6471 = vmatpush.bf16.msra.mxu0 %v5759
    %6472 = vmatpush.bf16.msra.mxu0 %v5755
    %6473 = vmatpush.bf16.msra.mxu0 %v5751
    %6474 = vmatpush.bf16.msra.mxu0 %v5747
    %6475 = vmatpush.bf16.msra.mxu0 %v5743
    %6476 = vmatmul.bf16.gmra.mxu0 %v4724
    %v6477 = vpop.f32.mrf.mxu0
    %v6478 = vadd.f32 %v6449, %v6477
    %v6479 = vpop.f32.mrf.mxu0
    %v6480 = vadd.f32 %v6451, %v6479
    %6481 = vmatmul.bf16.gmra.mxu0 %v4732
    %v6482 = vpop.f32.mrf.mxu0
    %v6483 = vadd.f32 %v6454, %v6482
    %v6484 = vpop.f32.mrf.mxu0
    %v6485 = vadd.f32 %v6456, %v6484
    %6486 = vmatmul.bf16.gmra.mxu0 %v4740
    %v6487 = vpop.f32.mrf.mxu0
    %v6488 = vadd.f32 %v6459, %v6487
    %v6489 = vpop.f32.mrf.mxu0
    %v6490 = vadd.f32 %v6461, %v6489
    %6491 = vmatmul.bf16.gmra.mxu0 %v4748
    %v6492 = vpop.f32.mrf.mxu0
    %v6493 = vadd.f32 %v6464, %v6492
    %v6494 = vpop.f32.mrf.mxu0
    %v6495 = vadd.f32 %v6466, %v6494
    %6496 = vdwg.mxu0
    %6497 = vmatpush.bf16.msra.mxu0 %v5803
    %6498 = vmatpush.bf16.msra.mxu0 %v5799
    %6499 = vmatpush.bf16.msra.mxu0 %v5795
    %6500 = vmatpush.bf16.msra.mxu0 %v5791
    %6501 = vmatpush.bf16.msra.mxu0 %v5787
    %6502 = vmatpush.bf16.msra.mxu0 %v5783
    %6503 = vmatpush.bf16.msra.mxu0 %v5779
    %6504 = vmatpush.bf16.msra.mxu0 %v5775
    %6505 = vmatmul.bf16.gmra.mxu0 %v4725
    %v6506 = vpop.f32.mrf.mxu0
    %v6507 = vadd.f32 %v6478, %v6506
    %v6508 = vpop.f32.mrf.mxu0
    %v6509 = vadd.f32 %v6480, %v6508
    %6510 = vmatmul.bf16.gmra.mxu0 %v4733
    %v6511 = vpop.f32.mrf.mxu0
    %v6512 = vadd.f32 %v6483, %v6511
    %v6513 = vpop.f32.mrf.mxu0
    %v6514 = vadd.f32 %v6485, %v6513
    %6515 = vmatmul.bf16.gmra.mxu0 %v4741
    %v6516 = vpop.f32.mrf.mxu0
    %v6517 = vadd.f32 %v6488, %v6516
    %v6518 = vpop.f32.mrf.mxu0
    %v6519 = vadd.f32 %v6490, %v6518
    %6520 = vmatmul.bf16.gmra.mxu0 %v4749
    %v6521 = vpop.f32.mrf.mxu0
    %v6522 = vadd.f32 %v6493, %v6521
    %v6523 = vpop.f32.mrf.mxu0
    %v6524 = vadd.f32 %v6495, %v6523
    %6525 = vdwg.mxu0
    %6526 = vmatpush.bf16.msra.mxu0 %v5580
    %6527 = vmatpush.bf16.msra.mxu0 %v5576
    %6528 = vmatpush.bf16.msra.mxu0 %v5572
    %6529 = vmatpush.bf16.msra.mxu0 %v5568
    %6530 = vmatpush.bf16.msra.mxu0 %v5564
    %6531 = vmatpush.bf16.msra.mxu0 %v5560
    %6532 = vmatpush.bf16.msra.mxu0 %v5556
    %6533 = vmatpush.bf16.msra.mxu0 %v5552
    %6534 = vmatmul.bf16.gmra.mxu0 %v4718
    %v6535 = vpop.f32.mrf.mxu0
    %v6536 = vadd.f32 %v4467, %v6535
    %v6537 = vpop.f32.mrf.mxu0
    %v6538 = vadd.f32 %v4469, %v6537
    %6539 = vmatmul.bf16.gmra.mxu0 %v4726
    %v6540 = vpop.f32.mrf.mxu0
    %v6541 = vadd.f32 %v4472, %v6540
    %v6542 = vpop.f32.mrf.mxu0
    %v6543 = vadd.f32 %v4474, %v6542
    %6544 = vmatmul.bf16.gmra.mxu0 %v4734
    %v6545 = vpop.f32.mrf.mxu0
    %v6546 = vadd.f32 %v4477, %v6545
    %v6547 = vpop.f32.mrf.mxu0
    %v6548 = vadd.f32 %v4479, %v6547
    %6549 = vmatmul.bf16.gmra.mxu0 %v4742
    %v6550 = vpop.f32.mrf.mxu0
    %v6551 = vadd.f32 %v4482, %v6550
    %v6552 = vpop.f32.mrf.mxu0
    %v6553 = vadd.f32 %v4484, %v6552
    %6554 = vdwg.mxu0
    %6555 = vmatpush.bf16.msra.mxu0 %v5612
    %6556 = vmatpush.bf16.msra.mxu0 %v5608
    %6557 = vmatpush.bf16.msra.mxu0 %v5604
    %6558 = vmatpush.bf16.msra.mxu0 %v5600
    %6559 = vmatpush.bf16.msra.mxu0 %v5596
    %6560 = vmatpush.bf16.msra.mxu0 %v5592
    %6561 = vmatpush.bf16.msra.mxu0 %v5588
    %6562 = vmatpush.bf16.msra.mxu0 %v5584
    %6563 = vmatmul.bf16.gmra.mxu0 %v4719
    %v6564 = vpop.f32.mrf.mxu0
    %v6565 = vadd.f32 %v6536, %v6564
    %v6566 = vpop.f32.mrf.mxu0
    %v6567 = vadd.f32 %v6538, %v6566
    %6568 = vmatmul.bf16.gmra.mxu0 %v4727
    %v6569 = vpop.f32.mrf.mxu0
    %v6570 = vadd.f32 %v6541, %v6569
    %v6571 = vpop.f32.mrf.mxu0
    %v6572 = vadd.f32 %v6543, %v6571
    %6573 = vmatmul.bf16.gmra.mxu0 %v4735
    %v6574 = vpop.f32.mrf.mxu0
    %v6575 = vadd.f32 %v6546, %v6574
    %v6576 = vpop.f32.mrf.mxu0
    %v6577 = vadd.f32 %v6548, %v6576
    %6578 = vmatmul.bf16.gmra.mxu0 %v4743
    %v6579 = vpop.f32.mrf.mxu0
    %v6580 = vadd.f32 %v6551, %v6579
    %v6581 = vpop.f32.mrf.mxu0
    %v6582 = vadd.f32 %v6553, %v6581
    %6583 = vdwg.mxu0
    %6584 = vmatpush.bf16.msra.mxu0 %v5644
    %6585 = vmatpush.bf16.msra.mxu0 %v5640
    %6586 = vmatpush.bf16.msra.mxu0 %v5636
    %6587 = vmatpush.bf16.msra.mxu0 %v5632
    %6588 = vmatpush.bf16.msra.mxu0 %v5628
    %6589 = vmatpush.bf16.msra.mxu0 %v5624
    %6590 = vmatpush.bf16.msra.mxu0 %v5620
    %6591 = vmatpush.bf16.msra.mxu0 %v5616
    %6592 = vmatmul.bf16.gmra.mxu0 %v4720
    %v6593 = vpop.f32.mrf.mxu0
    %v6594 = vadd.f32 %v6565, %v6593
    %v6595 = vpop.f32.mrf.mxu0
    %v6596 = vadd.f32 %v6567, %v6595
    %6597 = vmatmul.bf16.gmra.mxu0 %v4728
    %v6598 = vpop.f32.mrf.mxu0
    %v6599 = vadd.f32 %v6570, %v6598
    %v6600 = vpop.f32.mrf.mxu0
    %v6601 = vadd.f32 %v6572, %v6600
    %6602 = vmatmul.bf16.gmra.mxu0 %v4736
    %v6603 = vpop.f32.mrf.mxu0
    %v6604 = vadd.f32 %v6575, %v6603
    %v6605 = vpop.f32.mrf.mxu0
    %v6606 = vadd.f32 %v6577, %v6605
    %6607 = vmatmul.bf16.gmra.mxu0 %v4744
    %v6608 = vpop.f32.mrf.mxu0
    %v6609 = vadd.f32 %v6580, %v6608
    %v6610 = vpop.f32.mrf.mxu0
    %v6611 = vadd.f32 %v6582, %v6610
    %6612 = vdwg.mxu0
    %6613 = vmatpush.bf16.msra.mxu0 %v5676
    %6614 = vmatpush.bf16.msra.mxu0 %v5672
    %6615 = vmatpush.bf16.msra.mxu0 %v5668
    %6616 = vmatpush.bf16.msra.mxu0 %v5664
    %6617 = vmatpush.bf16.msra.mxu0 %v5660
    %6618 = vmatpush.bf16.msra.mxu0 %v5656
    %6619 = vmatpush.bf16.msra.mxu0 %v5652
    %6620 = vmatpush.bf16.msra.mxu0 %v5648
    %6621 = vmatmul.bf16.gmra.mxu0 %v4721
    %v6622 = vpop.f32.mrf.mxu0
    %v6623 = vadd.f32 %v6594, %v6622
    %v6624 = vpop.f32.mrf.mxu0
    %v6625 = vadd.f32 %v6596, %v6624
    %6626 = vmatmul.bf16.gmra.mxu0 %v4729
    %v6627 = vpop.f32.mrf.mxu0
    %v6628 = vadd.f32 %v6599, %v6627
    %v6629 = vpop.f32.mrf.mxu0
    %v6630 = vadd.f32 %v6601, %v6629
    %6631 = vmatmul.bf16.gmra.mxu0 %v4737
    %v6632 = vpop.f32.mrf.mxu0
    %v6633 = vadd.f32 %v6604, %v6632
    %v6634 = vpop.f32.mrf.mxu0
    %v6635 = vadd.f32 %v6606, %v6634
    %6636 = vmatmul.bf16.gmra.mxu0 %v4745
    %v6637 = vpop.f32.mrf.mxu0
    %v6638 = vadd.f32 %v6609, %v6637
    %v6639 = vpop.f32.mrf.mxu0
    %v6640 = vadd.f32 %v6611, %v6639
    %6641 = vdwg.mxu0
    %6642 = vmatpush.bf16.msra.mxu0 %v5708
    %6643 = vmatpush.bf16.msra.mxu0 %v5704
    %6644 = vmatpush.bf16.msra.mxu0 %v5700
    %6645 = vmatpush.bf16.msra.mxu0 %v5696
    %6646 = vmatpush.bf16.msra.mxu0 %v5692
    %6647 = vmatpush.bf16.msra.mxu0 %v5688
    %6648 = vmatpush.bf16.msra.mxu0 %v5684
    %6649 = vmatpush.bf16.msra.mxu0 %v5680
    %6650 = vmatmul.bf16.gmra.mxu0 %v4722
    %v6651 = vpop.f32.mrf.mxu0
    %v6652 = vadd.f32 %v6623, %v6651
    %v6653 = vpop.f32.mrf.mxu0
    %v6654 = vadd.f32 %v6625, %v6653
    %6655 = vmatmul.bf16.gmra.mxu0 %v4730
    %v6656 = vpop.f32.mrf.mxu0
    %v6657 = vadd.f32 %v6628, %v6656
    %v6658 = vpop.f32.mrf.mxu0
    %v6659 = vadd.f32 %v6630, %v6658
    %6660 = vmatmul.bf16.gmra.mxu0 %v4738
    %v6661 = vpop.f32.mrf.mxu0
    %v6662 = vadd.f32 %v6633, %v6661
    %v6663 = vpop.f32.mrf.mxu0
    %v6664 = vadd.f32 %v6635, %v6663
    %6665 = vmatmul.bf16.gmra.mxu0 %v4746
    %v6666 = vpop.f32.mrf.mxu0
    %v6667 = vadd.f32 %v6638, %v6666
    %v6668 = vpop.f32.mrf.mxu0
    %v6669 = vadd.f32 %v6640, %v6668
    %6670 = vdwg.mxu0
    %6671 = vmatpush.bf16.msra.mxu0 %v5740
    %6672 = vmatpush.bf16.msra.mxu0 %v5736
    %6673 = vmatpush.bf16.msra.mxu0 %v5732
    %6674 = vmatpush.bf16.msra.mxu0 %v5728
    %6675 = vmatpush.bf16.msra.mxu0 %v5724
    %6676 = vmatpush.bf16.msra.mxu0 %v5720
    %6677 = vmatpush.bf16.msra.mxu0 %v5716
    %6678 = vmatpush.bf16.msra.mxu0 %v5712
    %6679 = vmatmul.bf16.gmra.mxu0 %v4723
    %v6680 = vpop.f32.mrf.mxu0
    %v6681 = vadd.f32 %v6652, %v6680
    %v6682 = vpop.f32.mrf.mxu0
    %v6683 = vadd.f32 %v6654, %v6682
    %6684 = vmatmul.bf16.gmra.mxu0 %v4731
    %v6685 = vpop.f32.mrf.mxu0
    %v6686 = vadd.f32 %v6657, %v6685
    %v6687 = vpop.f32.mrf.mxu0
    %v6688 = vadd.f32 %v6659, %v6687
    %6689 = vmatmul.bf16.gmra.mxu0 %v4739
    %v6690 = vpop.f32.mrf.mxu0
    %v6691 = vadd.f32 %v6662, %v6690
    %v6692 = vpop.f32.mrf.mxu0
    %v6693 = vadd.f32 %v6664, %v6692
    %6694 = vmatmul.bf16.gmra.mxu0 %v4747
    %v6695 = vpop.f32.mrf.mxu0
    %v6696 = vadd.f32 %v6667, %v6695
    %v6697 = vpop.f32.mrf.mxu0
    %v6698 = vadd.f32 %v6669, %v6697
    %6699 = vdwg.mxu0
    %6700 = vmatpush.bf16.msra.mxu0 %v5772
    %6701 = vmatpush.bf16.msra.mxu0 %v5768
    %6702 = vmatpush.bf16.msra.mxu0 %v5764
    %6703 = vmatpush.bf16.msra.mxu0 %v5760
    %6704 = vmatpush.bf16.msra.mxu0 %v5756
    %6705 = vmatpush.bf16.msra.mxu0 %v5752
    %6706 = vmatpush.bf16.msra.mxu0 %v5748
    %6707 = vmatpush.bf16.msra.mxu0 %v5744
    %6708 = vmatmul.bf16.gmra.mxu0 %v4724
    %v6709 = vpop.f32.mrf.mxu0
    %v6710 = vadd.f32 %v6681, %v6709
    %v6711 = vpop.f32.mrf.mxu0
    %v6712 = vadd.f32 %v6683, %v6711
    %6713 = vmatmul.bf16.gmra.mxu0 %v4732
    %v6714 = vpop.f32.mrf.mxu0
    %v6715 = vadd.f32 %v6686, %v6714
    %v6716 = vpop.f32.mrf.mxu0
    %v6717 = vadd.f32 %v6688, %v6716
    %6718 = vmatmul.bf16.gmra.mxu0 %v4740
    %v6719 = vpop.f32.mrf.mxu0
    %v6720 = vadd.f32 %v6691, %v6719
    %v6721 = vpop.f32.mrf.mxu0
    %v6722 = vadd.f32 %v6693, %v6721
    %6723 = vmatmul.bf16.gmra.mxu0 %v4748
    %v6724 = vpop.f32.mrf.mxu0
    %v6725 = vadd.f32 %v6696, %v6724
    %v6726 = vpop.f32.mrf.mxu0
    %v6727 = vadd.f32 %v6698, %v6726
    %6728 = vdwg.mxu0
    %6729 = vmatpush.bf16.msra.mxu0 %v5804
    %6730 = vmatpush.bf16.msra.mxu0 %v5800
    %6731 = vmatpush.bf16.msra.mxu0 %v5796
    %6732 = vmatpush.bf16.msra.mxu0 %v5792
    %6733 = vmatpush.bf16.msra.mxu0 %v5788
    %6734 = vmatpush.bf16.msra.mxu0 %v5784
    %6735 = vmatpush.bf16.msra.mxu0 %v5780
    %6736 = vmatpush.bf16.msra.mxu0 %v5776
    %6737 = vmatmul.bf16.gmra.mxu0 %v4725
    %v6738 = vpop.f32.mrf.mxu0
    %v6739 = vadd.f32 %v6710, %v6738
    %v6740 = vpop.f32.mrf.mxu0
    %v6741 = vadd.f32 %v6712, %v6740
    %6742 = vmatmul.bf16.gmra.mxu0 %v4733
    %v6743 = vpop.f32.mrf.mxu0
    %v6744 = vadd.f32 %v6715, %v6743
    %v6745 = vpop.f32.mrf.mxu0
    %v6746 = vadd.f32 %v6717, %v6745
    %6747 = vmatmul.bf16.gmra.mxu0 %v4741
    %v6748 = vpop.f32.mrf.mxu0
    %v6749 = vadd.f32 %v6720, %v6748
    %v6750 = vpop.f32.mrf.mxu0
    %v6751 = vadd.f32 %v6722, %v6750
    %6752 = vmatmul.bf16.gmra.mxu0 %v4749
    %v6753 = vpop.f32.mrf.mxu0
    %v6754 = vadd.f32 %v6725, %v6753
    %v6755 = vpop.f32.mrf.mxu0
    %v6756 = vadd.f32 %v6727, %v6755
    %6757 = vdwg.mxu0
    %6758 = vmatpush.bf16.msra.mxu0 %v5581
    %6759 = vmatpush.bf16.msra.mxu0 %v5577
    %6760 = vmatpush.bf16.msra.mxu0 %v5573
    %6761 = vmatpush.bf16.msra.mxu0 %v5569
    %6762 = vmatpush.bf16.msra.mxu0 %v5565
    %6763 = vmatpush.bf16.msra.mxu0 %v5561
    %6764 = vmatpush.bf16.msra.mxu0 %v5557
    %6765 = vmatpush.bf16.msra.mxu0 %v5553
    %6766 = vmatmul.bf16.gmra.mxu0 %v4718
    %v6767 = vpop.f32.mrf.mxu0
    %v6768 = vadd.f32 %v4699, %v6767
    %v6769 = vpop.f32.mrf.mxu0
    %v6770 = vadd.f32 %v4701, %v6769
    %6771 = vmatmul.bf16.gmra.mxu0 %v4726
    %v6772 = vpop.f32.mrf.mxu0
    %v6773 = vadd.f32 %v4704, %v6772
    %v6774 = vpop.f32.mrf.mxu0
    %v6775 = vadd.f32 %v4706, %v6774
    %6776 = vmatmul.bf16.gmra.mxu0 %v4734
    %v6777 = vpop.f32.mrf.mxu0
    %v6778 = vadd.f32 %v4709, %v6777
    %v6779 = vpop.f32.mrf.mxu0
    %v6780 = vadd.f32 %v4711, %v6779
    %6781 = vmatmul.bf16.gmra.mxu0 %v4742
    %v6782 = vpop.f32.mrf.mxu0
    %v6783 = vadd.f32 %v4714, %v6782
    %v6784 = vpop.f32.mrf.mxu0
    %v6785 = vadd.f32 %v4716, %v6784
    %6786 = vdwg.mxu0
    %6787 = vmatpush.bf16.msra.mxu0 %v5613
    %6788 = vmatpush.bf16.msra.mxu0 %v5609
    %6789 = vmatpush.bf16.msra.mxu0 %v5605
    %6790 = vmatpush.bf16.msra.mxu0 %v5601
    %6791 = vmatpush.bf16.msra.mxu0 %v5597
    %6792 = vmatpush.bf16.msra.mxu0 %v5593
    %6793 = vmatpush.bf16.msra.mxu0 %v5589
    %6794 = vmatpush.bf16.msra.mxu0 %v5585
    %6795 = vmatmul.bf16.gmra.mxu0 %v4719
    %v6796 = vpop.f32.mrf.mxu0
    %v6797 = vadd.f32 %v6768, %v6796
    %v6798 = vpop.f32.mrf.mxu0
    %v6799 = vadd.f32 %v6770, %v6798
    %6800 = vmatmul.bf16.gmra.mxu0 %v4727
    %v6801 = vpop.f32.mrf.mxu0
    %v6802 = vadd.f32 %v6773, %v6801
    %v6803 = vpop.f32.mrf.mxu0
    %v6804 = vadd.f32 %v6775, %v6803
    %6805 = vmatmul.bf16.gmra.mxu0 %v4735
    %v6806 = vpop.f32.mrf.mxu0
    %v6807 = vadd.f32 %v6778, %v6806
    %v6808 = vpop.f32.mrf.mxu0
    %v6809 = vadd.f32 %v6780, %v6808
    %6810 = vmatmul.bf16.gmra.mxu0 %v4743
    %v6811 = vpop.f32.mrf.mxu0
    %v6812 = vadd.f32 %v6783, %v6811
    %v6813 = vpop.f32.mrf.mxu0
    %v6814 = vadd.f32 %v6785, %v6813
    %6815 = vdwg.mxu0
    %6816 = vmatpush.bf16.msra.mxu0 %v5645
    %6817 = vmatpush.bf16.msra.mxu0 %v5641
    %6818 = vmatpush.bf16.msra.mxu0 %v5637
    %6819 = vmatpush.bf16.msra.mxu0 %v5633
    %6820 = vmatpush.bf16.msra.mxu0 %v5629
    %6821 = vmatpush.bf16.msra.mxu0 %v5625
    %6822 = vmatpush.bf16.msra.mxu0 %v5621
    %6823 = vmatpush.bf16.msra.mxu0 %v5617
    %6824 = vmatmul.bf16.gmra.mxu0 %v4720
    %v6825 = vpop.f32.mrf.mxu0
    %v6826 = vadd.f32 %v6797, %v6825
    %v6827 = vpop.f32.mrf.mxu0
    %v6828 = vadd.f32 %v6799, %v6827
    %6829 = vmatmul.bf16.gmra.mxu0 %v4728
    %v6830 = vpop.f32.mrf.mxu0
    %v6831 = vadd.f32 %v6802, %v6830
    %v6832 = vpop.f32.mrf.mxu0
    %v6833 = vadd.f32 %v6804, %v6832
    %6834 = vmatmul.bf16.gmra.mxu0 %v4736
    %v6835 = vpop.f32.mrf.mxu0
    %v6836 = vadd.f32 %v6807, %v6835
    %v6837 = vpop.f32.mrf.mxu0
    %v6838 = vadd.f32 %v6809, %v6837
    %6839 = vmatmul.bf16.gmra.mxu0 %v4744
    %v6840 = vpop.f32.mrf.mxu0
    %v6841 = vadd.f32 %v6812, %v6840
    %v6842 = vpop.f32.mrf.mxu0
    %v6843 = vadd.f32 %v6814, %v6842
    %6844 = vdwg.mxu0
    %6845 = vmatpush.bf16.msra.mxu0 %v5677
    %6846 = vmatpush.bf16.msra.mxu0 %v5673
    %6847 = vmatpush.bf16.msra.mxu0 %v5669
    %6848 = vmatpush.bf16.msra.mxu0 %v5665
    %6849 = vmatpush.bf16.msra.mxu0 %v5661
    %6850 = vmatpush.bf16.msra.mxu0 %v5657
    %6851 = vmatpush.bf16.msra.mxu0 %v5653
    %6852 = vmatpush.bf16.msra.mxu0 %v5649
    %6853 = vmatmul.bf16.gmra.mxu0 %v4721
    %v6854 = vpop.f32.mrf.mxu0
    %v6855 = vadd.f32 %v6826, %v6854
    %v6856 = vpop.f32.mrf.mxu0
    %v6857 = vadd.f32 %v6828, %v6856
    %6858 = vmatmul.bf16.gmra.mxu0 %v4729
    %v6859 = vpop.f32.mrf.mxu0
    %v6860 = vadd.f32 %v6831, %v6859
    %v6861 = vpop.f32.mrf.mxu0
    %v6862 = vadd.f32 %v6833, %v6861
    %6863 = vmatmul.bf16.gmra.mxu0 %v4737
    %v6864 = vpop.f32.mrf.mxu0
    %v6865 = vadd.f32 %v6836, %v6864
    %v6866 = vpop.f32.mrf.mxu0
    %v6867 = vadd.f32 %v6838, %v6866
    %6868 = vmatmul.bf16.gmra.mxu0 %v4745
    %v6869 = vpop.f32.mrf.mxu0
    %v6870 = vadd.f32 %v6841, %v6869
    %v6871 = vpop.f32.mrf.mxu0
    %v6872 = vadd.f32 %v6843, %v6871
    %6873 = vdwg.mxu0
    %6874 = vmatpush.bf16.msra.mxu0 %v5709
    %6875 = vmatpush.bf16.msra.mxu0 %v5705
    %6876 = vmatpush.bf16.msra.mxu0 %v5701
    %6877 = vmatpush.bf16.msra.mxu0 %v5697
    %6878 = vmatpush.bf16.msra.mxu0 %v5693
    %6879 = vmatpush.bf16.msra.mxu0 %v5689
    %6880 = vmatpush.bf16.msra.mxu0 %v5685
    %6881 = vmatpush.bf16.msra.mxu0 %v5681
    %6882 = vmatmul.bf16.gmra.mxu0 %v4722
    %v6883 = vpop.f32.mrf.mxu0
    %v6884 = vadd.f32 %v6855, %v6883
    %v6885 = vpop.f32.mrf.mxu0
    %v6886 = vadd.f32 %v6857, %v6885
    %6887 = vmatmul.bf16.gmra.mxu0 %v4730
    %v6888 = vpop.f32.mrf.mxu0
    %v6889 = vadd.f32 %v6860, %v6888
    %v6890 = vpop.f32.mrf.mxu0
    %v6891 = vadd.f32 %v6862, %v6890
    %6892 = vmatmul.bf16.gmra.mxu0 %v4738
    %v6893 = vpop.f32.mrf.mxu0
    %v6894 = vadd.f32 %v6865, %v6893
    %v6895 = vpop.f32.mrf.mxu0
    %v6896 = vadd.f32 %v6867, %v6895
    %6897 = vmatmul.bf16.gmra.mxu0 %v4746
    %v6898 = vpop.f32.mrf.mxu0
    %v6899 = vadd.f32 %v6870, %v6898
    %v6900 = vpop.f32.mrf.mxu0
    %v6901 = vadd.f32 %v6872, %v6900
    %6902 = vdwg.mxu0
    %6903 = vmatpush.bf16.msra.mxu0 %v5741
    %6904 = vmatpush.bf16.msra.mxu0 %v5737
    %6905 = vmatpush.bf16.msra.mxu0 %v5733
    %6906 = vmatpush.bf16.msra.mxu0 %v5729
    %6907 = vmatpush.bf16.msra.mxu0 %v5725
    %6908 = vmatpush.bf16.msra.mxu0 %v5721
    %6909 = vmatpush.bf16.msra.mxu0 %v5717
    %6910 = vmatpush.bf16.msra.mxu0 %v5713
    %6911 = vmatmul.bf16.gmra.mxu0 %v4723
    %v6912 = vpop.f32.mrf.mxu0
    %v6913 = vadd.f32 %v6884, %v6912
    %v6914 = vpop.f32.mrf.mxu0
    %v6915 = vadd.f32 %v6886, %v6914
    %6916 = vmatmul.bf16.gmra.mxu0 %v4731
    %v6917 = vpop.f32.mrf.mxu0
    %v6918 = vadd.f32 %v6889, %v6917
    %v6919 = vpop.f32.mrf.mxu0
    %v6920 = vadd.f32 %v6891, %v6919
    %6921 = vmatmul.bf16.gmra.mxu0 %v4739
    %v6922 = vpop.f32.mrf.mxu0
    %v6923 = vadd.f32 %v6894, %v6922
    %v6924 = vpop.f32.mrf.mxu0
    %v6925 = vadd.f32 %v6896, %v6924
    %6926 = vmatmul.bf16.gmra.mxu0 %v4747
    %v6927 = vpop.f32.mrf.mxu0
    %v6928 = vadd.f32 %v6899, %v6927
    %v6929 = vpop.f32.mrf.mxu0
    %v6930 = vadd.f32 %v6901, %v6929
    %6931 = vdwg.mxu0
    %6932 = vmatpush.bf16.msra.mxu0 %v5773
    %6933 = vmatpush.bf16.msra.mxu0 %v5769
    %6934 = vmatpush.bf16.msra.mxu0 %v5765
    %6935 = vmatpush.bf16.msra.mxu0 %v5761
    %6936 = vmatpush.bf16.msra.mxu0 %v5757
    %6937 = vmatpush.bf16.msra.mxu0 %v5753
    %6938 = vmatpush.bf16.msra.mxu0 %v5749
    %6939 = vmatpush.bf16.msra.mxu0 %v5745
    %6940 = vmatmul.bf16.gmra.mxu0 %v4724
    %v6941 = vpop.f32.mrf.mxu0
    %v6942 = vadd.f32 %v6913, %v6941
    %v6943 = vpop.f32.mrf.mxu0
    %v6944 = vadd.f32 %v6915, %v6943
    %6945 = vmatmul.bf16.gmra.mxu0 %v4732
    %v6946 = vpop.f32.mrf.mxu0
    %v6947 = vadd.f32 %v6918, %v6946
    %v6948 = vpop.f32.mrf.mxu0
    %v6949 = vadd.f32 %v6920, %v6948
    %6950 = vmatmul.bf16.gmra.mxu0 %v4740
    %v6951 = vpop.f32.mrf.mxu0
    %v6952 = vadd.f32 %v6923, %v6951
    %v6953 = vpop.f32.mrf.mxu0
    %v6954 = vadd.f32 %v6925, %v6953
    %6955 = vmatmul.bf16.gmra.mxu0 %v4748
    %v6956 = vpop.f32.mrf.mxu0
    %v6957 = vadd.f32 %v6928, %v6956
    %v6958 = vpop.f32.mrf.mxu0
    %v6959 = vadd.f32 %v6930, %v6958
    %6960 = vdwg.mxu0
    %6961 = vmatpush.bf16.msra.mxu0 %v5805
    %6962 = vmatpush.bf16.msra.mxu0 %v5801
    %6963 = vmatpush.bf16.msra.mxu0 %v5797
    %6964 = vmatpush.bf16.msra.mxu0 %v5793
    %6965 = vmatpush.bf16.msra.mxu0 %v5789
    %6966 = vmatpush.bf16.msra.mxu0 %v5785
    %6967 = vmatpush.bf16.msra.mxu0 %v5781
    %6968 = vmatpush.bf16.msra.mxu0 %v5777
    %6969 = vmatmul.bf16.gmra.mxu0 %v4725
    %v6970 = vpop.f32.mrf.mxu0
    %v6971 = vadd.f32 %v6942, %v6970
    %v6972 = vpop.f32.mrf.mxu0
    %v6973 = vadd.f32 %v6944, %v6972
    %6974 = vmatmul.bf16.gmra.mxu0 %v4733
    %v6975 = vpop.f32.mrf.mxu0
    %v6976 = vadd.f32 %v6947, %v6975
    %v6977 = vpop.f32.mrf.mxu0
    %v6978 = vadd.f32 %v6949, %v6977
    %6979 = vmatmul.bf16.gmra.mxu0 %v4741
    %v6980 = vpop.f32.mrf.mxu0
    %v6981 = vadd.f32 %v6952, %v6980
    %v6982 = vpop.f32.mrf.mxu0
    %v6983 = vadd.f32 %v6954, %v6982
    %6984 = vmatmul.bf16.gmra.mxu0 %v4749
    %v6985 = vpop.f32.mrf.mxu0
    %v6986 = vadd.f32 %v6957, %v6985
    %v6987 = vpop.f32.mrf.mxu0
    %v6988 = vadd.f32 %v6959, %v6987
    %6989 = vdwg.mxu0
    %s6990 = scalar_lea.vmem [#allocation6], 4096
    %v6991 = vld [vmem:[%s6990] sm:$0xff]
    %v6992 = vld [vmem:[%s6990 + $0x8] sm:$0xff]
    %v6993 = vld [vmem:[%s6990 + $0x10] sm:$0xff]
    %v6994 = vld [vmem:[%s6990 + $0x18] sm:$0xff]
    %v6995 = vld [vmem:[%s6990 + $0x20] sm:$0xff]
    %v6996 = vld [vmem:[%s6990 + $0x28] sm:$0xff]
    %v6997 = vld [vmem:[%s6990 + $0x30] sm:$0xff]
    %v6998 = vld [vmem:[%s6990 + $0x38] sm:$0xff]
    %v6999 = vld [vmem:[%s6990 + $0x40] sm:$0xff]
    %v7000 = vld [vmem:[%s6990 + $0x48] sm:$0xff]
    %v7001 = vld [vmem:[%s6990 + $0x50] sm:$0xff]
    %v7002 = vld [vmem:[%s6990 + $0x58] sm:$0xff]
    %v7003 = vld [vmem:[%s6990 + $0x60] sm:$0xff]
    %v7004 = vld [vmem:[%s6990 + $0x68] sm:$0xff]
    %v7005 = vld [vmem:[%s6990 + $0x70] sm:$0xff]
    %v7006 = vld [vmem:[%s6990 + $0x78] sm:$0xff]
    %v7007 = vld [vmem:[%s6990 + $0x80] sm:$0xff]
    %v7008 = vld [vmem:[%s6990 + $0x88] sm:$0xff]
    %v7009 = vld [vmem:[%s6990 + $0x90] sm:$0xff]
    %v7010 = vld [vmem:[%s6990 + $0x98] sm:$0xff]
    %v7011 = vld [vmem:[%s6990 + $0xa0] sm:$0xff]
    %v7012 = vld [vmem:[%s6990 + $0xa8] sm:$0xff]
    %v7013 = vld [vmem:[%s6990 + $0xb0] sm:$0xff]
    %v7014 = vld [vmem:[%s6990 + $0xb8] sm:$0xff]
    %v7015 = vld [vmem:[%s6990 + $0xc0] sm:$0xff]
    %v7016 = vld [vmem:[%s6990 + $0xc8] sm:$0xff]
    %v7017 = vld [vmem:[%s6990 + $0xd0] sm:$0xff]
    %v7018 = vld [vmem:[%s6990 + $0xd8] sm:$0xff]
    %v7019 = vld [vmem:[%s6990 + $0xe0] sm:$0xff]
    %v7020 = vld [vmem:[%s6990 + $0xe8] sm:$0xff]
    %v7021 = vld [vmem:[%s6990 + $0xf0] sm:$0xff]
    %v7022 = vld [vmem:[%s6990 + $0xf8] sm:$0xff]
    %v7023 = vld [vmem:[%s6990 + $0x100] sm:$0xff]
    %v7024 = vld [vmem:[%s6990 + $0x108] sm:$0xff]
    %v7025 = vld [vmem:[%s6990 + $0x110] sm:$0xff]
    %v7026 = vld [vmem:[%s6990 + $0x118] sm:$0xff]
    %v7027 = vld [vmem:[%s6990 + $0x120] sm:$0xff]
    %v7028 = vld [vmem:[%s6990 + $0x128] sm:$0xff]
    %v7029 = vld [vmem:[%s6990 + $0x130] sm:$0xff]
    %v7030 = vld [vmem:[%s6990 + $0x138] sm:$0xff]
    %v7031 = vld [vmem:[%s6990 + $0x140] sm:$0xff]
    %v7032 = vld [vmem:[%s6990 + $0x148] sm:$0xff]
    %v7033 = vld [vmem:[%s6990 + $0x150] sm:$0xff]
    %v7034 = vld [vmem:[%s6990 + $0x158] sm:$0xff]
    %v7035 = vld [vmem:[%s6990 + $0x160] sm:$0xff]
    %v7036 = vld [vmem:[%s6990 + $0x168] sm:$0xff]
    %v7037 = vld [vmem:[%s6990 + $0x170] sm:$0xff]
    %v7038 = vld [vmem:[%s6990 + $0x178] sm:$0xff]
    %v7039 = vld [vmem:[%s6990 + $0x180] sm:$0xff]
    %v7040 = vld [vmem:[%s6990 + $0x188] sm:$0xff]
    %v7041 = vld [vmem:[%s6990 + $0x190] sm:$0xff]
    %v7042 = vld [vmem:[%s6990 + $0x198] sm:$0xff]
    %v7043 = vld [vmem:[%s6990 + $0x1a0] sm:$0xff]
    %v7044 = vld [vmem:[%s6990 + $0x1a8] sm:$0xff]
    %v7045 = vld [vmem:[%s6990 + $0x1b0] sm:$0xff]
    %v7046 = vld [vmem:[%s6990 + $0x1b8] sm:$0xff]
    %v7047 = vld [vmem:[%s6990 + $0x1c0] sm:$0xff]
    %v7048 = vld [vmem:[%s6990 + $0x1c8] sm:$0xff]
    %v7049 = vld [vmem:[%s6990 + $0x1d0] sm:$0xff]
    %v7050 = vld [vmem:[%s6990 + $0x1d8] sm:$0xff]
    %v7051 = vld [vmem:[%s6990 + $0x1e0] sm:$0xff]
    %v7052 = vld [vmem:[%s6990 + $0x1e8] sm:$0xff]
    %v7053 = vld [vmem:[%s6990 + $0x1f0] sm:$0xff]
    %v7054 = vld [vmem:[%s6990 + $0x1f8] sm:$0xff]
    %v7055 = vld [vmem:[%s6990 + $0x200] sm:$0xff]
    %v7056 = vld [vmem:[%s6990 + $0x208] sm:$0xff]
    %v7057 = vld [vmem:[%s6990 + $0x210] sm:$0xff]
    %v7058 = vld [vmem:[%s6990 + $0x218] sm:$0xff]
    %v7059 = vld [vmem:[%s6990 + $0x220] sm:$0xff]
    %v7060 = vld [vmem:[%s6990 + $0x228] sm:$0xff]
    %v7061 = vld [vmem:[%s6990 + $0x230] sm:$0xff]
    %v7062 = vld [vmem:[%s6990 + $0x238] sm:$0xff]
    %v7063 = vld [vmem:[%s6990 + $0x240] sm:$0xff]
    %v7064 = vld [vmem:[%s6990 + $0x248] sm:$0xff]
    %v7065 = vld [vmem:[%s6990 + $0x250] sm:$0xff]
    %v7066 = vld [vmem:[%s6990 + $0x258] sm:$0xff]
    %v7067 = vld [vmem:[%s6990 + $0x260] sm:$0xff]
    %v7068 = vld [vmem:[%s6990 + $0x268] sm:$0xff]
    %v7069 = vld [vmem:[%s6990 + $0x270] sm:$0xff]
    %v7070 = vld [vmem:[%s6990 + $0x278] sm:$0xff]
    %v7071 = vld [vmem:[%s6990 + $0x280] sm:$0xff]
    %v7072 = vld [vmem:[%s6990 + $0x288] sm:$0xff]
    %v7073 = vld [vmem:[%s6990 + $0x290] sm:$0xff]
    %v7074 = vld [vmem:[%s6990 + $0x298] sm:$0xff]
    %v7075 = vld [vmem:[%s6990 + $0x2a0] sm:$0xff]
    %v7076 = vld [vmem:[%s6990 + $0x2a8] sm:$0xff]
    %v7077 = vld [vmem:[%s6990 + $0x2b0] sm:$0xff]
    %v7078 = vld [vmem:[%s6990 + $0x2b8] sm:$0xff]
    %v7079 = vld [vmem:[%s6990 + $0x2c0] sm:$0xff]
    %v7080 = vld [vmem:[%s6990 + $0x2c8] sm:$0xff]
    %v7081 = vld [vmem:[%s6990 + $0x2d0] sm:$0xff]
    %v7082 = vld [vmem:[%s6990 + $0x2d8] sm:$0xff]
    %v7083 = vld [vmem:[%s6990 + $0x2e0] sm:$0xff]
    %v7084 = vld [vmem:[%s6990 + $0x2e8] sm:$0xff]
    %v7085 = vld [vmem:[%s6990 + $0x2f0] sm:$0xff]
    %v7086 = vld [vmem:[%s6990 + $0x2f8] sm:$0xff]
    %v7087 = vld [vmem:[%s6990 + $0x300] sm:$0xff]
    %v7088 = vld [vmem:[%s6990 + $0x308] sm:$0xff]
    %v7089 = vld [vmem:[%s6990 + $0x310] sm:$0xff]
    %v7090 = vld [vmem:[%s6990 + $0x318] sm:$0xff]
    %v7091 = vld [vmem:[%s6990 + $0x320] sm:$0xff]
    %v7092 = vld [vmem:[%s6990 + $0x328] sm:$0xff]
    %v7093 = vld [vmem:[%s6990 + $0x330] sm:$0xff]
    %v7094 = vld [vmem:[%s6990 + $0x338] sm:$0xff]
    %v7095 = vld [vmem:[%s6990 + $0x340] sm:$0xff]
    %v7096 = vld [vmem:[%s6990 + $0x348] sm:$0xff]
    %v7097 = vld [vmem:[%s6990 + $0x350] sm:$0xff]
    %v7098 = vld [vmem:[%s6990 + $0x358] sm:$0xff]
    %v7099 = vld [vmem:[%s6990 + $0x360] sm:$0xff]
    %v7100 = vld [vmem:[%s6990 + $0x368] sm:$0xff]
    %v7101 = vld [vmem:[%s6990 + $0x370] sm:$0xff]
    %v7102 = vld [vmem:[%s6990 + $0x378] sm:$0xff]
    %v7103 = vld [vmem:[%s6990 + $0x380] sm:$0xff]
    %v7104 = vld [vmem:[%s6990 + $0x388] sm:$0xff]
    %v7105 = vld [vmem:[%s6990 + $0x390] sm:$0xff]
    %v7106 = vld [vmem:[%s6990 + $0x398] sm:$0xff]
    %v7107 = vld [vmem:[%s6990 + $0x3a0] sm:$0xff]
    %v7108 = vld [vmem:[%s6990 + $0x3a8] sm:$0xff]
    %v7109 = vld [vmem:[%s6990 + $0x3b0] sm:$0xff]
    %v7110 = vld [vmem:[%s6990 + $0x3b8] sm:$0xff]
    %v7111 = vld [vmem:[%s6990 + $0x3c0] sm:$0xff]
    %v7112 = vld [vmem:[%s6990 + $0x3c8] sm:$0xff]
    %v7113 = vld [vmem:[%s6990 + $0x3d0] sm:$0xff]
    %v7114 = vld [vmem:[%s6990 + $0x3d8] sm:$0xff]
    %v7115 = vld [vmem:[%s6990 + $0x3e0] sm:$0xff]
    %v7116 = vld [vmem:[%s6990 + $0x3e8] sm:$0xff]
    %v7117 = vld [vmem:[%s6990 + $0x3f0] sm:$0xff]
    %v7118 = vld [vmem:[%s6990 + $0x3f8] sm:$0xff]
    %v7119 = vld [vmem:[%s6990 + $0x400] sm:$0xff]
    %v7120 = vld [vmem:[%s6990 + $0x408] sm:$0xff]
    %v7121 = vld [vmem:[%s6990 + $0x410] sm:$0xff]
    %v7122 = vld [vmem:[%s6990 + $0x418] sm:$0xff]
    %v7123 = vld [vmem:[%s6990 + $0x420] sm:$0xff]
    %v7124 = vld [vmem:[%s6990 + $0x428] sm:$0xff]
    %v7125 = vld [vmem:[%s6990 + $0x430] sm:$0xff]
    %v7126 = vld [vmem:[%s6990 + $0x438] sm:$0xff]
    %v7127 = vld [vmem:[%s6990 + $0x440] sm:$0xff]
    %v7128 = vld [vmem:[%s6990 + $0x448] sm:$0xff]
    %v7129 = vld [vmem:[%s6990 + $0x450] sm:$0xff]
    %v7130 = vld [vmem:[%s6990 + $0x458] sm:$0xff]
    %v7131 = vld [vmem:[%s6990 + $0x460] sm:$0xff]
    %v7132 = vld [vmem:[%s6990 + $0x468] sm:$0xff]
    %v7133 = vld [vmem:[%s6990 + $0x470] sm:$0xff]
    %v7134 = vld [vmem:[%s6990 + $0x478] sm:$0xff]
    %v7135 = vld [vmem:[%s6990 + $0x480] sm:$0xff]
    %v7136 = vld [vmem:[%s6990 + $0x488] sm:$0xff]
    %v7137 = vld [vmem:[%s6990 + $0x490] sm:$0xff]
    %v7138 = vld [vmem:[%s6990 + $0x498] sm:$0xff]
    %v7139 = vld [vmem:[%s6990 + $0x4a0] sm:$0xff]
    %v7140 = vld [vmem:[%s6990 + $0x4a8] sm:$0xff]
    %v7141 = vld [vmem:[%s6990 + $0x4b0] sm:$0xff]
    %v7142 = vld [vmem:[%s6990 + $0x4b8] sm:$0xff]
    %v7143 = vld [vmem:[%s6990 + $0x4c0] sm:$0xff]
    %v7144 = vld [vmem:[%s6990 + $0x4c8] sm:$0xff]
    %v7145 = vld [vmem:[%s6990 + $0x4d0] sm:$0xff]
    %v7146 = vld [vmem:[%s6990 + $0x4d8] sm:$0xff]
    %v7147 = vld [vmem:[%s6990 + $0x4e0] sm:$0xff]
    %v7148 = vld [vmem:[%s6990 + $0x4e8] sm:$0xff]
    %v7149 = vld [vmem:[%s6990 + $0x4f0] sm:$0xff]
    %v7150 = vld [vmem:[%s6990 + $0x4f8] sm:$0xff]
    %v7151 = vld [vmem:[%s6990 + $0x500] sm:$0xff]
    %v7152 = vld [vmem:[%s6990 + $0x508] sm:$0xff]
    %v7153 = vld [vmem:[%s6990 + $0x510] sm:$0xff]
    %v7154 = vld [vmem:[%s6990 + $0x518] sm:$0xff]
    %v7155 = vld [vmem:[%s6990 + $0x520] sm:$0xff]
    %v7156 = vld [vmem:[%s6990 + $0x528] sm:$0xff]
    %v7157 = vld [vmem:[%s6990 + $0x530] sm:$0xff]
    %v7158 = vld [vmem:[%s6990 + $0x538] sm:$0xff]
    %v7159 = vld [vmem:[%s6990 + $0x540] sm:$0xff]
    %v7160 = vld [vmem:[%s6990 + $0x548] sm:$0xff]
    %v7161 = vld [vmem:[%s6990 + $0x550] sm:$0xff]
    %v7162 = vld [vmem:[%s6990 + $0x558] sm:$0xff]
    %v7163 = vld [vmem:[%s6990 + $0x560] sm:$0xff]
    %v7164 = vld [vmem:[%s6990 + $0x568] sm:$0xff]
    %v7165 = vld [vmem:[%s6990 + $0x570] sm:$0xff]
    %v7166 = vld [vmem:[%s6990 + $0x578] sm:$0xff]
    %v7167 = vld [vmem:[%s6990 + $0x580] sm:$0xff]
    %v7168 = vld [vmem:[%s6990 + $0x588] sm:$0xff]
    %v7169 = vld [vmem:[%s6990 + $0x590] sm:$0xff]
    %v7170 = vld [vmem:[%s6990 + $0x598] sm:$0xff]
    %v7171 = vld [vmem:[%s6990 + $0x5a0] sm:$0xff]
    %v7172 = vld [vmem:[%s6990 + $0x5a8] sm:$0xff]
    %v7173 = vld [vmem:[%s6990 + $0x5b0] sm:$0xff]
    %v7174 = vld [vmem:[%s6990 + $0x5b8] sm:$0xff]
    %v7175 = vld [vmem:[%s6990 + $0x5c0] sm:$0xff]
    %v7176 = vld [vmem:[%s6990 + $0x5c8] sm:$0xff]
    %v7177 = vld [vmem:[%s6990 + $0x5d0] sm:$0xff]
    %v7178 = vld [vmem:[%s6990 + $0x5d8] sm:$0xff]
    %v7179 = vld [vmem:[%s6990 + $0x5e0] sm:$0xff]
    %v7180 = vld [vmem:[%s6990 + $0x5e8] sm:$0xff]
    %v7181 = vld [vmem:[%s6990 + $0x5f0] sm:$0xff]
    %v7182 = vld [vmem:[%s6990 + $0x5f8] sm:$0xff]
    %v7183 = vld [vmem:[%s6990 + $0x600] sm:$0xff]
    %v7184 = vld [vmem:[%s6990 + $0x608] sm:$0xff]
    %v7185 = vld [vmem:[%s6990 + $0x610] sm:$0xff]
    %v7186 = vld [vmem:[%s6990 + $0x618] sm:$0xff]
    %v7187 = vld [vmem:[%s6990 + $0x620] sm:$0xff]
    %v7188 = vld [vmem:[%s6990 + $0x628] sm:$0xff]
    %v7189 = vld [vmem:[%s6990 + $0x630] sm:$0xff]
    %v7190 = vld [vmem:[%s6990 + $0x638] sm:$0xff]
    %v7191 = vld [vmem:[%s6990 + $0x640] sm:$0xff]
    %v7192 = vld [vmem:[%s6990 + $0x648] sm:$0xff]
    %v7193 = vld [vmem:[%s6990 + $0x650] sm:$0xff]
    %v7194 = vld [vmem:[%s6990 + $0x658] sm:$0xff]
    %v7195 = vld [vmem:[%s6990 + $0x660] sm:$0xff]
    %v7196 = vld [vmem:[%s6990 + $0x668] sm:$0xff]
    %v7197 = vld [vmem:[%s6990 + $0x670] sm:$0xff]
    %v7198 = vld [vmem:[%s6990 + $0x678] sm:$0xff]
    %v7199 = vld [vmem:[%s6990 + $0x680] sm:$0xff]
    %v7200 = vld [vmem:[%s6990 + $0x688] sm:$0xff]
    %v7201 = vld [vmem:[%s6990 + $0x690] sm:$0xff]
    %v7202 = vld [vmem:[%s6990 + $0x698] sm:$0xff]
    %v7203 = vld [vmem:[%s6990 + $0x6a0] sm:$0xff]
    %v7204 = vld [vmem:[%s6990 + $0x6a8] sm:$0xff]
    %v7205 = vld [vmem:[%s6990 + $0x6b0] sm:$0xff]
    %v7206 = vld [vmem:[%s6990 + $0x6b8] sm:$0xff]
    %v7207 = vld [vmem:[%s6990 + $0x6c0] sm:$0xff]
    %v7208 = vld [vmem:[%s6990 + $0x6c8] sm:$0xff]
    %v7209 = vld [vmem:[%s6990 + $0x6d0] sm:$0xff]
    %v7210 = vld [vmem:[%s6990 + $0x6d8] sm:$0xff]
    %v7211 = vld [vmem:[%s6990 + $0x6e0] sm:$0xff]
    %v7212 = vld [vmem:[%s6990 + $0x6e8] sm:$0xff]
    %v7213 = vld [vmem:[%s6990 + $0x6f0] sm:$0xff]
    %v7214 = vld [vmem:[%s6990 + $0x6f8] sm:$0xff]
    %v7215 = vld [vmem:[%s6990 + $0x700] sm:$0xff]
    %v7216 = vld [vmem:[%s6990 + $0x708] sm:$0xff]
    %v7217 = vld [vmem:[%s6990 + $0x710] sm:$0xff]
    %v7218 = vld [vmem:[%s6990 + $0x718] sm:$0xff]
    %v7219 = vld [vmem:[%s6990 + $0x720] sm:$0xff]
    %v7220 = vld [vmem:[%s6990 + $0x728] sm:$0xff]
    %v7221 = vld [vmem:[%s6990 + $0x730] sm:$0xff]
    %v7222 = vld [vmem:[%s6990 + $0x738] sm:$0xff]
    %v7223 = vld [vmem:[%s6990 + $0x740] sm:$0xff]
    %v7224 = vld [vmem:[%s6990 + $0x748] sm:$0xff]
    %v7225 = vld [vmem:[%s6990 + $0x750] sm:$0xff]
    %v7226 = vld [vmem:[%s6990 + $0x758] sm:$0xff]
    %v7227 = vld [vmem:[%s6990 + $0x760] sm:$0xff]
    %v7228 = vld [vmem:[%s6990 + $0x768] sm:$0xff]
    %v7229 = vld [vmem:[%s6990 + $0x770] sm:$0xff]
    %v7230 = vld [vmem:[%s6990 + $0x778] sm:$0xff]
    %v7231 = vld [vmem:[%s6990 + $0x780] sm:$0xff]
    %v7232 = vld [vmem:[%s6990 + $0x788] sm:$0xff]
    %v7233 = vld [vmem:[%s6990 + $0x790] sm:$0xff]
    %v7234 = vld [vmem:[%s6990 + $0x798] sm:$0xff]
    %v7235 = vld [vmem:[%s6990 + $0x7a0] sm:$0xff]
    %v7236 = vld [vmem:[%s6990 + $0x7a8] sm:$0xff]
    %v7237 = vld [vmem:[%s6990 + $0x7b0] sm:$0xff]
    %v7238 = vld [vmem:[%s6990 + $0x7b8] sm:$0xff]
    %v7239 = vld [vmem:[%s6990 + $0x7c0] sm:$0xff]
    %v7240 = vld [vmem:[%s6990 + $0x7c8] sm:$0xff]
    %v7241 = vld [vmem:[%s6990 + $0x7d0] sm:$0xff]
    %v7242 = vld [vmem:[%s6990 + $0x7d8] sm:$0xff]
    %v7243 = vld [vmem:[%s6990 + $0x7e0] sm:$0xff]
    %v7244 = vld [vmem:[%s6990 + $0x7e8] sm:$0xff]
    %v7245 = vld [vmem:[%s6990 + $0x7f0] sm:$0xff]
    %v7246 = vld [vmem:[%s6990 + $0x7f8] sm:$0xff]
    %v7251 = vunpack.c.l.b16 %v1747
    %v7252 = vunpack.c.h.b16 %v1747
    %v7253 = vunpack.c.l.b16 %v1748
    %v7254 = vunpack.c.h.b16 %v1748
    %v7255 = vunpack.c.l.b16 %v1749
    %v7256 = vunpack.c.h.b16 %v1749
    %v7257 = vunpack.c.l.b16 %v1750
    %v7258 = vunpack.c.h.b16 %v1750
    %v7259 = vpack.c.b16 %v1787, %v1779
    %v7260 = vpack.c.b16 %v1788, %v1780
    %v7261 = vpack.c.b16 %v1789, %v1781
    %v7262 = vpack.c.b16 %v1790, %v1782
    %v7263 = vpack.c.b16 %v1791, %v1783
    %v7264 = vpack.c.b16 %v1792, %v1784
    %v7265 = vpack.c.b16 %v1793, %v1785
    %v7266 = vpack.c.b16 %v1794, %v1786
    %v7267 = vpack.c.b16 %v1803, %v1795
    %v7268 = vpack.c.b16 %v1804, %v1796
    %v7269 = vpack.c.b16 %v1805, %v1797
    %v7270 = vpack.c.b16 %v1806, %v1798
    %v7271 = vpack.c.b16 %v1807, %v1799
    %v7272 = vpack.c.b16 %v1808, %v1800
    %v7273 = vpack.c.b16 %v1809, %v1801
    %v7274 = vpack.c.b16 %v1810, %v1802
    %v7275 = vpack.c.b16 %v1819, %v1811
    %v7276 = vpack.c.b16 %v1820, %v1812
    %v7277 = vpack.c.b16 %v1821, %v1813
    %v7278 = vpack.c.b16 %v1822, %v1814
    %v7279 = vpack.c.b16 %v1823, %v1815
    %v7280 = vpack.c.b16 %v1824, %v1816
    %v7281 = vpack.c.b16 %v1825, %v1817
    %v7282 = vpack.c.b16 %v1826, %v1818
    %v7283 = vpack.c.b16 %v7251, %v1827
    %v7284 = vpack.c.b16 %v7252, %v1828
    %v7285 = vpack.c.b16 %v7253, %v1829
    %v7286 = vpack.c.b16 %v7254, %v1830
    %v7287 = vpack.c.b16 %v7255, %v1831
    %v7288 = vpack.c.b16 %v7256, %v1832
    %v7289 = vpack.c.b16 %v7257, %v1833
    %v7290 = vpack.c.b16 %v7258, %v1834
    %v7579 = vunpack.c.l.b16 %v6991
    %v7580 = vunpack.c.h.b16 %v6991
    %v7581 = vunpack.c.l.b16 %v6992
    %v7582 = vunpack.c.h.b16 %v6992
    %v7583 = vunpack.c.l.b16 %v6993
    %v7584 = vunpack.c.h.b16 %v6993
    %v7585 = vunpack.c.l.b16 %v6994
    %v7586 = vunpack.c.h.b16 %v6994
    %v7587 = vunpack.c.l.b16 %v6995
    %v7588 = vunpack.c.h.b16 %v6995
    %v7589 = vunpack.c.l.b16 %v6996
    %v7590 = vunpack.c.h.b16 %v6996
    %v7591 = vunpack.c.l.b16 %v6997
    %v7592 = vunpack.c.h.b16 %v6997
    %v7593 = vunpack.c.l.b16 %v6998
    %v7594 = vunpack.c.h.b16 %v6998
    %v7595 = vunpack.c.l.b16 %v6999
    %v7596 = vunpack.c.h.b16 %v6999
    %v7597 = vunpack.c.l.b16 %v7000
    %v7598 = vunpack.c.h.b16 %v7000
    %v7599 = vunpack.c.l.b16 %v7001
    %v7600 = vunpack.c.h.b16 %v7001
    %v7601 = vunpack.c.l.b16 %v7002
    %v7602 = vunpack.c.h.b16 %v7002
    %v7603 = vunpack.c.l.b16 %v7003
    %v7604 = vunpack.c.h.b16 %v7003
    %v7605 = vunpack.c.l.b16 %v7004
    %v7606 = vunpack.c.h.b16 %v7004
    %v7607 = vunpack.c.l.b16 %v7005
    %v7608 = vunpack.c.h.b16 %v7005
    %v7609 = vunpack.c.l.b16 %v7006
    %v7610 = vunpack.c.h.b16 %v7006
    %v7611 = vunpack.c.l.b16 %v7007
    %v7612 = vunpack.c.h.b16 %v7007
    %v7613 = vunpack.c.l.b16 %v7008
    %v7614 = vunpack.c.h.b16 %v7008
    %v7615 = vunpack.c.l.b16 %v7009
    %v7616 = vunpack.c.h.b16 %v7009
    %v7617 = vunpack.c.l.b16 %v7010
    %v7618 = vunpack.c.h.b16 %v7010
    %v7619 = vunpack.c.l.b16 %v7011
    %v7620 = vunpack.c.h.b16 %v7011
    %v7621 = vunpack.c.l.b16 %v7012
    %v7622 = vunpack.c.h.b16 %v7012
    %v7623 = vunpack.c.l.b16 %v7013
    %v7624 = vunpack.c.h.b16 %v7013
    %v7625 = vunpack.c.l.b16 %v7014
    %v7626 = vunpack.c.h.b16 %v7014
    %v7627 = vunpack.c.l.b16 %v7015
    %v7628 = vunpack.c.h.b16 %v7015
    %v7629 = vunpack.c.l.b16 %v7016
    %v7630 = vunpack.c.h.b16 %v7016
    %v7631 = vunpack.c.l.b16 %v7017
    %v7632 = vunpack.c.h.b16 %v7017
    %v7633 = vunpack.c.l.b16 %v7018
    %v7634 = vunpack.c.h.b16 %v7018
    %v7635 = vunpack.c.l.b16 %v7019
    %v7636 = vunpack.c.h.b16 %v7019
    %v7637 = vunpack.c.l.b16 %v7020
    %v7638 = vunpack.c.h.b16 %v7020
    %v7639 = vunpack.c.l.b16 %v7021
    %v7640 = vunpack.c.h.b16 %v7021
    %v7641 = vunpack.c.l.b16 %v7022
    %v7642 = vunpack.c.h.b16 %v7022
    %v7643 = vunpack.c.l.b16 %v7023
    %v7644 = vunpack.c.h.b16 %v7023
    %v7645 = vunpack.c.l.b16 %v7024
    %v7646 = vunpack.c.h.b16 %v7024
    %v7647 = vunpack.c.l.b16 %v7025
    %v7648 = vunpack.c.h.b16 %v7025
    %v7649 = vunpack.c.l.b16 %v7026
    %v7650 = vunpack.c.h.b16 %v7026
    %v7651 = vunpack.c.l.b16 %v7027
    %v7652 = vunpack.c.h.b16 %v7027
    %v7653 = vunpack.c.l.b16 %v7028
    %v7654 = vunpack.c.h.b16 %v7028
    %v7655 = vunpack.c.l.b16 %v7029
    %v7656 = vunpack.c.h.b16 %v7029
    %v7657 = vunpack.c.l.b16 %v7030
    %v7658 = vunpack.c.h.b16 %v7030
    %v7659 = vunpack.c.l.b16 %v7031
    %v7660 = vunpack.c.h.b16 %v7031
    %v7661 = vunpack.c.l.b16 %v7032
    %v7662 = vunpack.c.h.b16 %v7032
    %v7663 = vunpack.c.l.b16 %v7033
    %v7664 = vunpack.c.h.b16 %v7033
    %v7665 = vunpack.c.l.b16 %v7034
    %v7666 = vunpack.c.h.b16 %v7034
    %v7667 = vunpack.c.l.b16 %v7035
    %v7668 = vunpack.c.h.b16 %v7035
    %v7669 = vunpack.c.l.b16 %v7036
    %v7670 = vunpack.c.h.b16 %v7036
    %v7671 = vunpack.c.l.b16 %v7037
    %v7672 = vunpack.c.h.b16 %v7037
    %v7673 = vunpack.c.l.b16 %v7038
    %v7674 = vunpack.c.h.b16 %v7038
    %v7675 = vunpack.c.l.b16 %v7039
    %v7676 = vunpack.c.h.b16 %v7039
    %v7677 = vunpack.c.l.b16 %v7040
    %v7678 = vunpack.c.h.b16 %v7040
    %v7679 = vunpack.c.l.b16 %v7041
    %v7680 = vunpack.c.h.b16 %v7041
    %v7681 = vunpack.c.l.b16 %v7042
    %v7682 = vunpack.c.h.b16 %v7042
    %v7683 = vunpack.c.l.b16 %v7043
    %v7684 = vunpack.c.h.b16 %v7043
    %v7685 = vunpack.c.l.b16 %v7044
    %v7686 = vunpack.c.h.b16 %v7044
    %v7687 = vunpack.c.l.b16 %v7045
    %v7688 = vunpack.c.h.b16 %v7045
    %v7689 = vunpack.c.l.b16 %v7046
    %v7690 = vunpack.c.h.b16 %v7046
    %v7691 = vunpack.c.l.b16 %v7047
    %v7692 = vunpack.c.h.b16 %v7047
    %v7693 = vunpack.c.l.b16 %v7048
    %v7694 = vunpack.c.h.b16 %v7048
    %v7695 = vunpack.c.l.b16 %v7049
    %v7696 = vunpack.c.h.b16 %v7049
    %v7697 = vunpack.c.l.b16 %v7050
    %v7698 = vunpack.c.h.b16 %v7050
    %v7699 = vunpack.c.l.b16 %v7051
    %v7700 = vunpack.c.h.b16 %v7051
    %v7701 = vunpack.c.l.b16 %v7052
    %v7702 = vunpack.c.h.b16 %v7052
    %v7703 = vunpack.c.l.b16 %v7053
    %v7704 = vunpack.c.h.b16 %v7053
    %v7705 = vunpack.c.l.b16 %v7054
    %v7706 = vunpack.c.h.b16 %v7054
    %v7707 = vunpack.c.l.b16 %v7055
    %v7708 = vunpack.c.h.b16 %v7055
    %v7709 = vunpack.c.l.b16 %v7056
    %v7710 = vunpack.c.h.b16 %v7056
    %v7711 = vunpack.c.l.b16 %v7057
    %v7712 = vunpack.c.h.b16 %v7057
    %v7713 = vunpack.c.l.b16 %v7058
    %v7714 = vunpack.c.h.b16 %v7058
    %v7715 = vunpack.c.l.b16 %v7059
    %v7716 = vunpack.c.h.b16 %v7059
    %v7717 = vunpack.c.l.b16 %v7060
    %v7718 = vunpack.c.h.b16 %v7060
    %v7719 = vunpack.c.l.b16 %v7061
    %v7720 = vunpack.c.h.b16 %v7061
    %v7721 = vunpack.c.l.b16 %v7062
    %v7722 = vunpack.c.h.b16 %v7062
    %v7723 = vunpack.c.l.b16 %v7063
    %v7724 = vunpack.c.h.b16 %v7063
    %v7725 = vunpack.c.l.b16 %v7064
    %v7726 = vunpack.c.h.b16 %v7064
    %v7727 = vunpack.c.l.b16 %v7065
    %v7728 = vunpack.c.h.b16 %v7065
    %v7729 = vunpack.c.l.b16 %v7066
    %v7730 = vunpack.c.h.b16 %v7066
    %v7731 = vunpack.c.l.b16 %v7067
    %v7732 = vunpack.c.h.b16 %v7067
    %v7733 = vunpack.c.l.b16 %v7068
    %v7734 = vunpack.c.h.b16 %v7068
    %v7735 = vunpack.c.l.b16 %v7069
    %v7736 = vunpack.c.h.b16 %v7069
    %v7737 = vunpack.c.l.b16 %v7070
    %v7738 = vunpack.c.h.b16 %v7070
    %v7739 = vunpack.c.l.b16 %v7071
    %v7740 = vunpack.c.h.b16 %v7071
    %v7741 = vunpack.c.l.b16 %v7072
    %v7742 = vunpack.c.h.b16 %v7072
    %v7743 = vunpack.c.l.b16 %v7073
    %v7744 = vunpack.c.h.b16 %v7073
    %v7745 = vunpack.c.l.b16 %v7074
    %v7746 = vunpack.c.h.b16 %v7074
    %v7747 = vunpack.c.l.b16 %v7075
    %v7748 = vunpack.c.h.b16 %v7075
    %v7749 = vunpack.c.l.b16 %v7076
    %v7750 = vunpack.c.h.b16 %v7076
    %v7751 = vunpack.c.l.b16 %v7077
    %v7752 = vunpack.c.h.b16 %v7077
    %v7753 = vunpack.c.l.b16 %v7078
    %v7754 = vunpack.c.h.b16 %v7078
    %v7755 = vunpack.c.l.b16 %v7079
    %v7756 = vunpack.c.h.b16 %v7079
    %v7757 = vunpack.c.l.b16 %v7080
    %v7758 = vunpack.c.h.b16 %v7080
    %v7759 = vunpack.c.l.b16 %v7081
    %v7760 = vunpack.c.h.b16 %v7081
    %v7761 = vunpack.c.l.b16 %v7082
    %v7762 = vunpack.c.h.b16 %v7082
    %v7763 = vunpack.c.l.b16 %v7083
    %v7764 = vunpack.c.h.b16 %v7083
    %v7765 = vunpack.c.l.b16 %v7084
    %v7766 = vunpack.c.h.b16 %v7084
    %v7767 = vunpack.c.l.b16 %v7085
    %v7768 = vunpack.c.h.b16 %v7085
    %v7769 = vunpack.c.l.b16 %v7086
    %v7770 = vunpack.c.h.b16 %v7086
    %v7771 = vunpack.c.l.b16 %v7087
    %v7772 = vunpack.c.h.b16 %v7087
    %v7773 = vunpack.c.l.b16 %v7088
    %v7774 = vunpack.c.h.b16 %v7088
    %v7775 = vunpack.c.l.b16 %v7089
    %v7776 = vunpack.c.h.b16 %v7089
    %v7777 = vunpack.c.l.b16 %v7090
    %v7778 = vunpack.c.h.b16 %v7090
    %v7779 = vunpack.c.l.b16 %v7091
    %v7780 = vunpack.c.h.b16 %v7091
    %v7781 = vunpack.c.l.b16 %v7092
    %v7782 = vunpack.c.h.b16 %v7092
    %v7783 = vunpack.c.l.b16 %v7093
    %v7784 = vunpack.c.h.b16 %v7093
    %v7785 = vunpack.c.l.b16 %v7094
    %v7786 = vunpack.c.h.b16 %v7094
    %v7787 = vunpack.c.l.b16 %v7095
    %v7788 = vunpack.c.h.b16 %v7095
    %v7789 = vunpack.c.l.b16 %v7096
    %v7790 = vunpack.c.h.b16 %v7096
    %v7791 = vunpack.c.l.b16 %v7097
    %v7792 = vunpack.c.h.b16 %v7097
    %v7793 = vunpack.c.l.b16 %v7098
    %v7794 = vunpack.c.h.b16 %v7098
    %v7795 = vunpack.c.l.b16 %v7099
    %v7796 = vunpack.c.h.b16 %v7099
    %v7797 = vunpack.c.l.b16 %v7100
    %v7798 = vunpack.c.h.b16 %v7100
    %v7799 = vunpack.c.l.b16 %v7101
    %v7800 = vunpack.c.h.b16 %v7101
    %v7801 = vunpack.c.l.b16 %v7102
    %v7802 = vunpack.c.h.b16 %v7102
    %v7803 = vunpack.c.l.b16 %v7103
    %v7804 = vunpack.c.h.b16 %v7103
    %v7805 = vunpack.c.l.b16 %v7104
    %v7806 = vunpack.c.h.b16 %v7104
    %v7807 = vunpack.c.l.b16 %v7105
    %v7808 = vunpack.c.h.b16 %v7105
    %v7809 = vunpack.c.l.b16 %v7106
    %v7810 = vunpack.c.h.b16 %v7106
    %v7811 = vunpack.c.l.b16 %v7107
    %v7812 = vunpack.c.h.b16 %v7107
    %v7813 = vunpack.c.l.b16 %v7108
    %v7814 = vunpack.c.h.b16 %v7108
    %v7815 = vunpack.c.l.b16 %v7109
    %v7816 = vunpack.c.h.b16 %v7109
    %v7817 = vunpack.c.l.b16 %v7110
    %v7818 = vunpack.c.h.b16 %v7110
    %v7819 = vunpack.c.l.b16 %v7111
    %v7820 = vunpack.c.h.b16 %v7111
    %v7821 = vunpack.c.l.b16 %v7112
    %v7822 = vunpack.c.h.b16 %v7112
    %v7823 = vunpack.c.l.b16 %v7113
    %v7824 = vunpack.c.h.b16 %v7113
    %v7825 = vunpack.c.l.b16 %v7114
    %v7826 = vunpack.c.h.b16 %v7114
    %v7827 = vunpack.c.l.b16 %v7115
    %v7828 = vunpack.c.h.b16 %v7115
    %v7829 = vunpack.c.l.b16 %v7116
    %v7830 = vunpack.c.h.b16 %v7116
    %v7831 = vunpack.c.l.b16 %v7117
    %v7832 = vunpack.c.h.b16 %v7117
    %v7833 = vunpack.c.l.b16 %v7118
    %v7834 = vunpack.c.h.b16 %v7118
    %v7835 = vunpack.c.l.b16 %v7119
    %v7836 = vunpack.c.h.b16 %v7119
    %v7837 = vunpack.c.l.b16 %v7120
    %v7838 = vunpack.c.h.b16 %v7120
    %v7839 = vunpack.c.l.b16 %v7121
    %v7840 = vunpack.c.h.b16 %v7121
    %v7841 = vunpack.c.l.b16 %v7122
    %v7842 = vunpack.c.h.b16 %v7122
    %v7843 = vunpack.c.l.b16 %v7123
    %v7844 = vunpack.c.h.b16 %v7123
    %v7845 = vunpack.c.l.b16 %v7124
    %v7846 = vunpack.c.h.b16 %v7124
    %v7847 = vunpack.c.l.b16 %v7125
    %v7848 = vunpack.c.h.b16 %v7125
    %v7849 = vunpack.c.l.b16 %v7126
    %v7850 = vunpack.c.h.b16 %v7126
    %v7851 = vunpack.c.l.b16 %v7127
    %v7852 = vunpack.c.h.b16 %v7127
    %v7853 = vunpack.c.l.b16 %v7128
    %v7854 = vunpack.c.h.b16 %v7128
    %v7855 = vunpack.c.l.b16 %v7129
    %v7856 = vunpack.c.h.b16 %v7129
    %v7857 = vunpack.c.l.b16 %v7130
    %v7858 = vunpack.c.h.b16 %v7130
    %v7859 = vunpack.c.l.b16 %v7131
    %v7860 = vunpack.c.h.b16 %v7131
    %v7861 = vunpack.c.l.b16 %v7132
    %v7862 = vunpack.c.h.b16 %v7132
    %v7863 = vunpack.c.l.b16 %v7133
    %v7864 = vunpack.c.h.b16 %v7133
    %v7865 = vunpack.c.l.b16 %v7134
    %v7866 = vunpack.c.h.b16 %v7134
    %v7867 = vunpack.c.l.b16 %v7135
    %v7868 = vunpack.c.h.b16 %v7135
    %v7869 = vunpack.c.l.b16 %v7136
    %v7870 = vunpack.c.h.b16 %v7136
    %v7871 = vunpack.c.l.b16 %v7137
    %v7872 = vunpack.c.h.b16 %v7137
    %v7873 = vunpack.c.l.b16 %v7138
    %v7874 = vunpack.c.h.b16 %v7138
    %v7875 = vunpack.c.l.b16 %v7139
    %v7876 = vunpack.c.h.b16 %v7139
    %v7877 = vunpack.c.l.b16 %v7140
    %v7878 = vunpack.c.h.b16 %v7140
    %v7879 = vunpack.c.l.b16 %v7141
    %v7880 = vunpack.c.h.b16 %v7141
    %v7881 = vunpack.c.l.b16 %v7142
    %v7882 = vunpack.c.h.b16 %v7142
    %v7883 = vunpack.c.l.b16 %v7143
    %v7884 = vunpack.c.h.b16 %v7143
    %v7885 = vunpack.c.l.b16 %v7144
    %v7886 = vunpack.c.h.b16 %v7144
    %v7887 = vunpack.c.l.b16 %v7145
    %v7888 = vunpack.c.h.b16 %v7145
    %v7889 = vunpack.c.l.b16 %v7146
    %v7890 = vunpack.c.h.b16 %v7146
    %v7891 = vunpack.c.l.b16 %v7147
    %v7892 = vunpack.c.h.b16 %v7147
    %v7893 = vunpack.c.l.b16 %v7148
    %v7894 = vunpack.c.h.b16 %v7148
    %v7895 = vunpack.c.l.b16 %v7149
    %v7896 = vunpack.c.h.b16 %v7149
    %v7897 = vunpack.c.l.b16 %v7150
    %v7898 = vunpack.c.h.b16 %v7150
    %v7899 = vunpack.c.l.b16 %v7151
    %v7900 = vunpack.c.h.b16 %v7151
    %v7901 = vunpack.c.l.b16 %v7152
    %v7902 = vunpack.c.h.b16 %v7152
    %v7903 = vunpack.c.l.b16 %v7153
    %v7904 = vunpack.c.h.b16 %v7153
    %v7905 = vunpack.c.l.b16 %v7154
    %v7906 = vunpack.c.h.b16 %v7154
    %v7907 = vunpack.c.l.b16 %v7155
    %v7908 = vunpack.c.h.b16 %v7155
    %v7909 = vunpack.c.l.b16 %v7156
    %v7910 = vunpack.c.h.b16 %v7156
    %v7911 = vunpack.c.l.b16 %v7157
    %v7912 = vunpack.c.h.b16 %v7157
    %v7913 = vunpack.c.l.b16 %v7158
    %v7914 = vunpack.c.h.b16 %v7158
    %v7915 = vunpack.c.l.b16 %v7159
    %v7916 = vunpack.c.h.b16 %v7159
    %v7917 = vunpack.c.l.b16 %v7160
    %v7918 = vunpack.c.h.b16 %v7160
    %v7919 = vunpack.c.l.b16 %v7161
    %v7920 = vunpack.c.h.b16 %v7161
    %v7921 = vunpack.c.l.b16 %v7162
    %v7922 = vunpack.c.h.b16 %v7162
    %v7923 = vunpack.c.l.b16 %v7163
    %v7924 = vunpack.c.h.b16 %v7163
    %v7925 = vunpack.c.l.b16 %v7164
    %v7926 = vunpack.c.h.b16 %v7164
    %v7927 = vunpack.c.l.b16 %v7165
    %v7928 = vunpack.c.h.b16 %v7165
    %v7929 = vunpack.c.l.b16 %v7166
    %v7930 = vunpack.c.h.b16 %v7166
    %v7931 = vunpack.c.l.b16 %v7167
    %v7932 = vunpack.c.h.b16 %v7167
    %v7933 = vunpack.c.l.b16 %v7168
    %v7934 = vunpack.c.h.b16 %v7168
    %v7935 = vunpack.c.l.b16 %v7169
    %v7936 = vunpack.c.h.b16 %v7169
    %v7937 = vunpack.c.l.b16 %v7170
    %v7938 = vunpack.c.h.b16 %v7170
    %v7939 = vunpack.c.l.b16 %v7171
    %v7940 = vunpack.c.h.b16 %v7171
    %v7941 = vunpack.c.l.b16 %v7172
    %v7942 = vunpack.c.h.b16 %v7172
    %v7943 = vunpack.c.l.b16 %v7173
    %v7944 = vunpack.c.h.b16 %v7173
    %v7945 = vunpack.c.l.b16 %v7174
    %v7946 = vunpack.c.h.b16 %v7174
    %v7947 = vunpack.c.l.b16 %v7175
    %v7948 = vunpack.c.h.b16 %v7175
    %v7949 = vunpack.c.l.b16 %v7176
    %v7950 = vunpack.c.h.b16 %v7176
    %v7951 = vunpack.c.l.b16 %v7177
    %v7952 = vunpack.c.h.b16 %v7177
    %v7953 = vunpack.c.l.b16 %v7178
    %v7954 = vunpack.c.h.b16 %v7178
    %v7955 = vunpack.c.l.b16 %v7179
    %v7956 = vunpack.c.h.b16 %v7179
    %v7957 = vunpack.c.l.b16 %v7180
    %v7958 = vunpack.c.h.b16 %v7180
    %v7959 = vunpack.c.l.b16 %v7181
    %v7960 = vunpack.c.h.b16 %v7181
    %v7961 = vunpack.c.l.b16 %v7182
    %v7962 = vunpack.c.h.b16 %v7182
    %v7963 = vunpack.c.l.b16 %v7183
    %v7964 = vunpack.c.h.b16 %v7183
    %v7965 = vunpack.c.l.b16 %v7184
    %v7966 = vunpack.c.h.b16 %v7184
    %v7967 = vunpack.c.l.b16 %v7185
    %v7968 = vunpack.c.h.b16 %v7185
    %v7969 = vunpack.c.l.b16 %v7186
    %v7970 = vunpack.c.h.b16 %v7186
    %v7971 = vunpack.c.l.b16 %v7187
    %v7972 = vunpack.c.h.b16 %v7187
    %v7973 = vunpack.c.l.b16 %v7188
    %v7974 = vunpack.c.h.b16 %v7188
    %v7975 = vunpack.c.l.b16 %v7189
    %v7976 = vunpack.c.h.b16 %v7189
    %v7977 = vunpack.c.l.b16 %v7190
    %v7978 = vunpack.c.h.b16 %v7190
    %v7979 = vunpack.c.l.b16 %v7191
    %v7980 = vunpack.c.h.b16 %v7191
    %v7981 = vunpack.c.l.b16 %v7192
    %v7982 = vunpack.c.h.b16 %v7192
    %v7983 = vunpack.c.l.b16 %v7193
    %v7984 = vunpack.c.h.b16 %v7193
    %v7985 = vunpack.c.l.b16 %v7194
    %v7986 = vunpack.c.h.b16 %v7194
    %v7987 = vunpack.c.l.b16 %v7195
    %v7988 = vunpack.c.h.b16 %v7195
    %v7989 = vunpack.c.l.b16 %v7196
    %v7990 = vunpack.c.h.b16 %v7196
    %v7991 = vunpack.c.l.b16 %v7197
    %v7992 = vunpack.c.h.b16 %v7197
    %v7993 = vunpack.c.l.b16 %v7198
    %v7994 = vunpack.c.h.b16 %v7198
    %v7995 = vunpack.c.l.b16 %v7199
    %v7996 = vunpack.c.h.b16 %v7199
    %v7997 = vunpack.c.l.b16 %v7200
    %v7998 = vunpack.c.h.b16 %v7200
    %v7999 = vunpack.c.l.b16 %v7201
    %v8000 = vunpack.c.h.b16 %v7201
    %v8001 = vunpack.c.l.b16 %v7202
    %v8002 = vunpack.c.h.b16 %v7202
    %v8003 = vunpack.c.l.b16 %v7203
    %v8004 = vunpack.c.h.b16 %v7203
    %v8005 = vunpack.c.l.b16 %v7204
    %v8006 = vunpack.c.h.b16 %v7204
    %v8007 = vunpack.c.l.b16 %v7205
    %v8008 = vunpack.c.h.b16 %v7205
    %v8009 = vunpack.c.l.b16 %v7206
    %v8010 = vunpack.c.h.b16 %v7206
    %v8011 = vunpack.c.l.b16 %v7207
    %v8012 = vunpack.c.h.b16 %v7207
    %v8013 = vunpack.c.l.b16 %v7208
    %v8014 = vunpack.c.h.b16 %v7208
    %v8015 = vunpack.c.l.b16 %v7209
    %v8016 = vunpack.c.h.b16 %v7209
    %v8017 = vunpack.c.l.b16 %v7210
    %v8018 = vunpack.c.h.b16 %v7210
    %v8019 = vunpack.c.l.b16 %v7211
    %v8020 = vunpack.c.h.b16 %v7211
    %v8021 = vunpack.c.l.b16 %v7212
    %v8022 = vunpack.c.h.b16 %v7212
    %v8023 = vunpack.c.l.b16 %v7213
    %v8024 = vunpack.c.h.b16 %v7213
    %v8025 = vunpack.c.l.b16 %v7214
    %v8026 = vunpack.c.h.b16 %v7214
    %v8027 = vunpack.c.l.b16 %v7215
    %v8028 = vunpack.c.h.b16 %v7215
    %v8029 = vunpack.c.l.b16 %v7216
    %v8030 = vunpack.c.h.b16 %v7216
    %v8031 = vunpack.c.l.b16 %v7217
    %v8032 = vunpack.c.h.b16 %v7217
    %v8033 = vunpack.c.l.b16 %v7218
    %v8034 = vunpack.c.h.b16 %v7218
    %v8035 = vunpack.c.l.b16 %v7219
    %v8036 = vunpack.c.h.b16 %v7219
    %v8037 = vunpack.c.l.b16 %v7220
    %v8038 = vunpack.c.h.b16 %v7220
    %v8039 = vunpack.c.l.b16 %v7221
    %v8040 = vunpack.c.h.b16 %v7221
    %v8041 = vunpack.c.l.b16 %v7222
    %v8042 = vunpack.c.h.b16 %v7222
    %v8043 = vunpack.c.l.b16 %v7223
    %v8044 = vunpack.c.h.b16 %v7223
    %v8045 = vunpack.c.l.b16 %v7224
    %v8046 = vunpack.c.h.b16 %v7224
    %v8047 = vunpack.c.l.b16 %v7225
    %v8048 = vunpack.c.h.b16 %v7225
    %v8049 = vunpack.c.l.b16 %v7226
    %v8050 = vunpack.c.h.b16 %v7226
    %v8051 = vunpack.c.l.b16 %v7227
    %v8052 = vunpack.c.h.b16 %v7227
    %v8053 = vunpack.c.l.b16 %v7228
    %v8054 = vunpack.c.h.b16 %v7228
    %v8055 = vunpack.c.l.b16 %v7229
    %v8056 = vunpack.c.h.b16 %v7229
    %v8057 = vunpack.c.l.b16 %v7230
    %v8058 = vunpack.c.h.b16 %v7230
    %v8059 = vunpack.c.l.b16 %v7231
    %v8060 = vunpack.c.h.b16 %v7231
    %v8061 = vunpack.c.l.b16 %v7232
    %v8062 = vunpack.c.h.b16 %v7232
    %v8063 = vunpack.c.l.b16 %v7233
    %v8064 = vunpack.c.h.b16 %v7233
    %v8065 = vunpack.c.l.b16 %v7234
    %v8066 = vunpack.c.h.b16 %v7234
    %v8067 = vunpack.c.l.b16 %v7235
    %v8068 = vunpack.c.h.b16 %v7235
    %v8069 = vunpack.c.l.b16 %v7236
    %v8070 = vunpack.c.h.b16 %v7236
    %v8071 = vunpack.c.l.b16 %v7237
    %v8072 = vunpack.c.h.b16 %v7237
    %v8073 = vunpack.c.l.b16 %v7238
    %v8074 = vunpack.c.h.b16 %v7238
    %v8075 = vunpack.c.l.b16 %v7239
    %v8076 = vunpack.c.h.b16 %v7239
    %v8077 = vunpack.c.l.b16 %v7240
    %v8078 = vunpack.c.h.b16 %v7240
    %v8079 = vunpack.c.l.b16 %v7241
    %v8080 = vunpack.c.h.b16 %v7241
    %v8081 = vunpack.c.l.b16 %v7242
    %v8082 = vunpack.c.h.b16 %v7242
    %v8083 = vunpack.c.l.b16 %v7243
    %v8084 = vunpack.c.h.b16 %v7243
    %v8085 = vunpack.c.l.b16 %v7244
    %v8086 = vunpack.c.h.b16 %v7244
    %v8087 = vunpack.c.l.b16 %v7245
    %v8088 = vunpack.c.h.b16 %v7245
    %v8089 = vunpack.c.l.b16 %v7246
    %v8090 = vunpack.c.h.b16 %v7246
    %v8091 = vpack.c.b16 %v7583, %v7579
    %v8092 = vpack.c.b16 %v7584, %v7580
    %v8093 = vpack.c.b16 %v7585, %v7581
    %v8094 = vpack.c.b16 %v7586, %v7582
    %v8095 = vpack.c.b16 %v7591, %v7587
    %v8096 = vpack.c.b16 %v7592, %v7588
    %v8097 = vpack.c.b16 %v7593, %v7589
    %v8098 = vpack.c.b16 %v7594, %v7590
    %v8099 = vpack.c.b16 %v7599, %v7595
    %v8100 = vpack.c.b16 %v7600, %v7596
    %v8101 = vpack.c.b16 %v7601, %v7597
    %v8102 = vpack.c.b16 %v7602, %v7598
    %v8103 = vpack.c.b16 %v7607, %v7603
    %v8104 = vpack.c.b16 %v7608, %v7604
    %v8105 = vpack.c.b16 %v7609, %v7605
    %v8106 = vpack.c.b16 %v7610, %v7606
    %v8107 = vpack.c.b16 %v7615, %v7611
    %v8108 = vpack.c.b16 %v7616, %v7612
    %v8109 = vpack.c.b16 %v7617, %v7613
    %v8110 = vpack.c.b16 %v7618, %v7614
    %v8111 = vpack.c.b16 %v7623, %v7619
    %v8112 = vpack.c.b16 %v7624, %v7620
    %v8113 = vpack.c.b16 %v7625, %v7621
    %v8114 = vpack.c.b16 %v7626, %v7622
    %v8115 = vpack.c.b16 %v7631, %v7627
    %v8116 = vpack.c.b16 %v7632, %v7628
    %v8117 = vpack.c.b16 %v7633, %v7629
    %v8118 = vpack.c.b16 %v7634, %v7630
    %v8119 = vpack.c.b16 %v7639, %v7635
    %v8120 = vpack.c.b16 %v7640, %v7636
    %v8121 = vpack.c.b16 %v7641, %v7637
    %v8122 = vpack.c.b16 %v7642, %v7638
    %v8123 = vpack.c.b16 %v7647, %v7643
    %v8124 = vpack.c.b16 %v7648, %v7644
    %v8125 = vpack.c.b16 %v7649, %v7645
    %v8126 = vpack.c.b16 %v7650, %v7646
    %v8127 = vpack.c.b16 %v7655, %v7651
    %v8128 = vpack.c.b16 %v7656, %v7652
    %v8129 = vpack.c.b16 %v7657, %v7653
    %v8130 = vpack.c.b16 %v7658, %v7654
    %v8131 = vpack.c.b16 %v7663, %v7659
    %v8132 = vpack.c.b16 %v7664, %v7660
    %v8133 = vpack.c.b16 %v7665, %v7661
    %v8134 = vpack.c.b16 %v7666, %v7662
    %v8135 = vpack.c.b16 %v7671, %v7667
    %v8136 = vpack.c.b16 %v7672, %v7668
    %v8137 = vpack.c.b16 %v7673, %v7669
    %v8138 = vpack.c.b16 %v7674, %v7670
    %v8139 = vpack.c.b16 %v7679, %v7675
    %v8140 = vpack.c.b16 %v7680, %v7676
    %v8141 = vpack.c.b16 %v7681, %v7677
    %v8142 = vpack.c.b16 %v7682, %v7678
    %v8143 = vpack.c.b16 %v7687, %v7683
    %v8144 = vpack.c.b16 %v7688, %v7684
    %v8145 = vpack.c.b16 %v7689, %v7685
    %v8146 = vpack.c.b16 %v7690, %v7686
    %v8147 = vpack.c.b16 %v7695, %v7691
    %v8148 = vpack.c.b16 %v7696, %v7692
    %v8149 = vpack.c.b16 %v7697, %v7693
    %v8150 = vpack.c.b16 %v7698, %v7694
    %v8151 = vpack.c.b16 %v7703, %v7699
    %v8152 = vpack.c.b16 %v7704, %v7700
    %v8153 = vpack.c.b16 %v7705, %v7701
    %v8154 = vpack.c.b16 %v7706, %v7702
    %v8155 = vpack.c.b16 %v7711, %v7707
    %v8156 = vpack.c.b16 %v7712, %v7708
    %v8157 = vpack.c.b16 %v7713, %v7709
    %v8158 = vpack.c.b16 %v7714, %v7710
    %v8159 = vpack.c.b16 %v7719, %v7715
    %v8160 = vpack.c.b16 %v7720, %v7716
    %v8161 = vpack.c.b16 %v7721, %v7717
    %v8162 = vpack.c.b16 %v7722, %v7718
    %v8163 = vpack.c.b16 %v7727, %v7723
    %v8164 = vpack.c.b16 %v7728, %v7724
    %v8165 = vpack.c.b16 %v7729, %v7725
    %v8166 = vpack.c.b16 %v7730, %v7726
    %v8167 = vpack.c.b16 %v7735, %v7731
    %v8168 = vpack.c.b16 %v7736, %v7732
    %v8169 = vpack.c.b16 %v7737, %v7733
    %v8170 = vpack.c.b16 %v7738, %v7734
    %v8171 = vpack.c.b16 %v7743, %v7739
    %v8172 = vpack.c.b16 %v7744, %v7740
    %v8173 = vpack.c.b16 %v7745, %v7741
    %v8174 = vpack.c.b16 %v7746, %v7742
    %v8175 = vpack.c.b16 %v7751, %v7747
    %v8176 = vpack.c.b16 %v7752, %v7748
    %v8177 = vpack.c.b16 %v7753, %v7749
    %v8178 = vpack.c.b16 %v7754, %v7750
    %v8179 = vpack.c.b16 %v7759, %v7755
    %v8180 = vpack.c.b16 %v7760, %v7756
    %v8181 = vpack.c.b16 %v7761, %v7757
    %v8182 = vpack.c.b16 %v7762, %v7758
    %v8183 = vpack.c.b16 %v7767, %v7763
    %v8184 = vpack.c.b16 %v7768, %v7764
    %v8185 = vpack.c.b16 %v7769, %v7765
    %v8186 = vpack.c.b16 %v7770, %v7766
    %v8187 = vpack.c.b16 %v7775, %v7771
    %v8188 = vpack.c.b16 %v7776, %v7772
    %v8189 = vpack.c.b16 %v7777, %v7773
    %v8190 = vpack.c.b16 %v7778, %v7774
    %v8191 = vpack.c.b16 %v7783, %v7779
    %v8192 = vpack.c.b16 %v7784, %v7780
    %v8193 = vpack.c.b16 %v7785, %v7781
    %v8194 = vpack.c.b16 %v7786, %v7782
    %v8195 = vpack.c.b16 %v7791, %v7787
    %v8196 = vpack.c.b16 %v7792, %v7788
    %v8197 = vpack.c.b16 %v7793, %v7789
    %v8198 = vpack.c.b16 %v7794, %v7790
    %v8199 = vpack.c.b16 %v7799, %v7795
    %v8200 = vpack.c.b16 %v7800, %v7796
    %v8201 = vpack.c.b16 %v7801, %v7797
    %v8202 = vpack.c.b16 %v7802, %v7798
    %v8203 = vpack.c.b16 %v7807, %v7803
    %v8204 = vpack.c.b16 %v7808, %v7804
    %v8205 = vpack.c.b16 %v7809, %v7805
    %v8206 = vpack.c.b16 %v7810, %v7806
    %v8207 = vpack.c.b16 %v7815, %v7811
    %v8208 = vpack.c.b16 %v7816, %v7812
    %v8209 = vpack.c.b16 %v7817, %v7813
    %v8210 = vpack.c.b16 %v7818, %v7814
    %v8211 = vpack.c.b16 %v7823, %v7819
    %v8212 = vpack.c.b16 %v7824, %v7820
    %v8213 = vpack.c.b16 %v7825, %v7821
    %v8214 = vpack.c.b16 %v7826, %v7822
    %v8215 = vpack.c.b16 %v7831, %v7827
    %v8216 = vpack.c.b16 %v7832, %v7828
    %v8217 = vpack.c.b16 %v7833, %v7829
    %v8218 = vpack.c.b16 %v7834, %v7830
    %v8219 = vpack.c.b16 %v7839, %v7835
    %v8220 = vpack.c.b16 %v7840, %v7836
    %v8221 = vpack.c.b16 %v7841, %v7837
    %v8222 = vpack.c.b16 %v7842, %v7838
    %v8223 = vpack.c.b16 %v7847, %v7843
    %v8224 = vpack.c.b16 %v7848, %v7844
    %v8225 = vpack.c.b16 %v7849, %v7845
    %v8226 = vpack.c.b16 %v7850, %v7846
    %v8227 = vpack.c.b16 %v7855, %v7851
    %v8228 = vpack.c.b16 %v7856, %v7852
    %v8229 = vpack.c.b16 %v7857, %v7853
    %v8230 = vpack.c.b16 %v7858, %v7854
    %v8231 = vpack.c.b16 %v7863, %v7859
    %v8232 = vpack.c.b16 %v7864, %v7860
    %v8233 = vpack.c.b16 %v7865, %v7861
    %v8234 = vpack.c.b16 %v7866, %v7862
    %v8235 = vpack.c.b16 %v7871, %v7867
    %v8236 = vpack.c.b16 %v7872, %v7868
    %v8237 = vpack.c.b16 %v7873, %v7869
    %v8238 = vpack.c.b16 %v7874, %v7870
    %v8239 = vpack.c.b16 %v7879, %v7875
    %v8240 = vpack.c.b16 %v7880, %v7876
    %v8241 = vpack.c.b16 %v7881, %v7877
    %v8242 = vpack.c.b16 %v7882, %v7878
    %v8243 = vpack.c.b16 %v7887, %v7883
    %v8244 = vpack.c.b16 %v7888, %v7884
    %v8245 = vpack.c.b16 %v7889, %v7885
    %v8246 = vpack.c.b16 %v7890, %v7886
    %v8247 = vpack.c.b16 %v7895, %v7891
    %v8248 = vpack.c.b16 %v7896, %v7892
    %v8249 = vpack.c.b16 %v7897, %v7893
    %v8250 = vpack.c.b16 %v7898, %v7894
    %v8251 = vpack.c.b16 %v7903, %v7899
    %v8252 = vpack.c.b16 %v7904, %v7900
    %v8253 = vpack.c.b16 %v7905, %v7901
    %v8254 = vpack.c.b16 %v7906, %v7902
    %v8255 = vpack.c.b16 %v7911, %v7907
    %v8256 = vpack.c.b16 %v7912, %v7908
    %v8257 = vpack.c.b16 %v7913, %v7909
    %v8258 = vpack.c.b16 %v7914, %v7910
    %v8259 = vpack.c.b16 %v7919, %v7915
    %v8260 = vpack.c.b16 %v7920, %v7916
    %v8261 = vpack.c.b16 %v7921, %v7917
    %v8262 = vpack.c.b16 %v7922, %v7918
    %v8263 = vpack.c.b16 %v7927, %v7923
    %v8264 = vpack.c.b16 %v7928, %v7924
    %v8265 = vpack.c.b16 %v7929, %v7925
    %v8266 = vpack.c.b16 %v7930, %v7926
    %v8267 = vpack.c.b16 %v7935, %v7931
    %v8268 = vpack.c.b16 %v7936, %v7932
    %v8269 = vpack.c.b16 %v7937, %v7933
    %v8270 = vpack.c.b16 %v7938, %v7934
    %v8271 = vpack.c.b16 %v7943, %v7939
    %v8272 = vpack.c.b16 %v7944, %v7940
    %v8273 = vpack.c.b16 %v7945, %v7941
    %v8274 = vpack.c.b16 %v7946, %v7942
    %v8275 = vpack.c.b16 %v7951, %v7947
    %v8276 = vpack.c.b16 %v7952, %v7948
    %v8277 = vpack.c.b16 %v7953, %v7949
    %v8278 = vpack.c.b16 %v7954, %v7950
    %v8279 = vpack.c.b16 %v7959, %v7955
    %v8280 = vpack.c.b16 %v7960, %v7956
    %v8281 = vpack.c.b16 %v7961, %v7957
    %v8282 = vpack.c.b16 %v7962, %v7958
    %v8283 = vpack.c.b16 %v7967, %v7963
    %v8284 = vpack.c.b16 %v7968, %v7964
    %v8285 = vpack.c.b16 %v7969, %v7965
    %v8286 = vpack.c.b16 %v7970, %v7966
    %v8287 = vpack.c.b16 %v7975, %v7971
    %v8288 = vpack.c.b16 %v7976, %v7972
    %v8289 = vpack.c.b16 %v7977, %v7973
    %v8290 = vpack.c.b16 %v7978, %v7974
    %v8291 = vpack.c.b16 %v7983, %v7979
    %v8292 = vpack.c.b16 %v7984, %v7980
    %v8293 = vpack.c.b16 %v7985, %v7981
    %v8294 = vpack.c.b16 %v7986, %v7982
    %v8295 = vpack.c.b16 %v7991, %v7987
    %v8296 = vpack.c.b16 %v7992, %v7988
    %v8297 = vpack.c.b16 %v7993, %v7989
    %v8298 = vpack.c.b16 %v7994, %v7990
    %v8299 = vpack.c.b16 %v7999, %v7995
    %v8300 = vpack.c.b16 %v8000, %v7996
    %v8301 = vpack.c.b16 %v8001, %v7997
    %v8302 = vpack.c.b16 %v8002, %v7998
    %v8303 = vpack.c.b16 %v8007, %v8003
    %v8304 = vpack.c.b16 %v8008, %v8004
    %v8305 = vpack.c.b16 %v8009, %v8005
    %v8306 = vpack.c.b16 %v8010, %v8006
    %v8307 = vpack.c.b16 %v8015, %v8011
    %v8308 = vpack.c.b16 %v8016, %v8012
    %v8309 = vpack.c.b16 %v8017, %v8013
    %v8310 = vpack.c.b16 %v8018, %v8014
    %v8311 = vpack.c.b16 %v8023, %v8019
    %v8312 = vpack.c.b16 %v8024, %v8020
    %v8313 = vpack.c.b16 %v8025, %v8021
    %v8314 = vpack.c.b16 %v8026, %v8022
    %v8315 = vpack.c.b16 %v8031, %v8027
    %v8316 = vpack.c.b16 %v8032, %v8028
    %v8317 = vpack.c.b16 %v8033, %v8029
    %v8318 = vpack.c.b16 %v8034, %v8030
    %v8319 = vpack.c.b16 %v8039, %v8035
    %v8320 = vpack.c.b16 %v8040, %v8036
    %v8321 = vpack.c.b16 %v8041, %v8037
    %v8322 = vpack.c.b16 %v8042, %v8038
    %v8323 = vpack.c.b16 %v8047, %v8043
    %v8324 = vpack.c.b16 %v8048, %v8044
    %v8325 = vpack.c.b16 %v8049, %v8045
    %v8326 = vpack.c.b16 %v8050, %v8046
    %v8327 = vpack.c.b16 %v8055, %v8051
    %v8328 = vpack.c.b16 %v8056, %v8052
    %v8329 = vpack.c.b16 %v8057, %v8053
    %v8330 = vpack.c.b16 %v8058, %v8054
    %v8331 = vpack.c.b16 %v8063, %v8059
    %v8332 = vpack.c.b16 %v8064, %v8060
    %v8333 = vpack.c.b16 %v8065, %v8061
    %v8334 = vpack.c.b16 %v8066, %v8062
    %v8335 = vpack.c.b16 %v8071, %v8067
    %v8336 = vpack.c.b16 %v8072, %v8068
    %v8337 = vpack.c.b16 %v8073, %v8069
    %v8338 = vpack.c.b16 %v8074, %v8070
    %v8339 = vpack.c.b16 %v8079, %v8075
    %v8340 = vpack.c.b16 %v8080, %v8076
    %v8341 = vpack.c.b16 %v8081, %v8077
    %v8342 = vpack.c.b16 %v8082, %v8078
    %v8343 = vpack.c.b16 %v8087, %v8083
    %v8344 = vpack.c.b16 %v8088, %v8084
    %v8345 = vpack.c.b16 %v8089, %v8085
    %v8346 = vpack.c.b16 %v8090, %v8086
    %8603 = vmatpush.bf16.msra.mxu0 %v8119
    %8604 = vmatpush.bf16.msra.mxu0 %v8115
    %8605 = vmatpush.bf16.msra.mxu0 %v8111
    %8606 = vmatpush.bf16.msra.mxu0 %v8107
    %8607 = vmatpush.bf16.msra.mxu0 %v8103
    %8608 = vmatpush.bf16.msra.mxu0 %v8099
    %8609 = vmatpush.bf16.msra.mxu0 %v8095
    %8610 = vmatpush.bf16.msra.mxu0 %v8091
    %8611 = vmatmul.bf16.gmra.mxu0 %v7259
    %v8612 = vpop.f32.mrf.mxu0
    %v8613 = vadd.f32 0.0, %v8612
    %v8614 = vpop.f32.mrf.mxu0
    %v8615 = vadd.f32 0.0, %v8614
    %8616 = vmatmul.bf16.gmra.mxu0 %v7267
    %v8617 = vpop.f32.mrf.mxu0
    %v8618 = vadd.f32 0.0, %v8617
    %v8619 = vpop.f32.mrf.mxu0
    %v8620 = vadd.f32 0.0, %v8619
    %8621 = vmatmul.bf16.gmra.mxu0 %v7275
    %v8622 = vpop.f32.mrf.mxu0
    %v8623 = vadd.f32 0.0, %v8622
    %v8624 = vpop.f32.mrf.mxu0
    %v8625 = vadd.f32 0.0, %v8624
    %8626 = vmatmul.bf16.gmra.mxu0 %v7283
    %v8627 = vpop.f32.mrf.mxu0
    %v8628 = vadd.f32 0.0, %v8627
    %v8629 = vpop.f32.mrf.mxu0
    %v8630 = vadd.f32 0.0, %v8629
    %8631 = vdwg.mxu0
    %8632 = vmatpush.bf16.msra.mxu0 %v8151
    %8633 = vmatpush.bf16.msra.mxu0 %v8147
    %8634 = vmatpush.bf16.msra.mxu0 %v8143
    %8635 = vmatpush.bf16.msra.mxu0 %v8139
    %8636 = vmatpush.bf16.msra.mxu0 %v8135
    %8637 = vmatpush.bf16.msra.mxu0 %v8131
    %8638 = vmatpush.bf16.msra.mxu0 %v8127
    %8639 = vmatpush.bf16.msra.mxu0 %v8123
    %8640 = vmatmul.bf16.gmra.mxu0 %v7260
    %v8641 = vpop.f32.mrf.mxu0
    %v8642 = vadd.f32 %v8613, %v8641
    %v8643 = vpop.f32.mrf.mxu0
    %v8644 = vadd.f32 %v8615, %v8643
    %8645 = vmatmul.bf16.gmra.mxu0 %v7268
    %v8646 = vpop.f32.mrf.mxu0
    %v8647 = vadd.f32 %v8618, %v8646
    %v8648 = vpop.f32.mrf.mxu0
    %v8649 = vadd.f32 %v8620, %v8648
    %8650 = vmatmul.bf16.gmra.mxu0 %v7276
    %v8651 = vpop.f32.mrf.mxu0
    %v8652 = vadd.f32 %v8623, %v8651
    %v8653 = vpop.f32.mrf.mxu0
    %v8654 = vadd.f32 %v8625, %v8653
    %8655 = vmatmul.bf16.gmra.mxu0 %v7284
    %v8656 = vpop.f32.mrf.mxu0
    %v8657 = vadd.f32 %v8628, %v8656
    %v8658 = vpop.f32.mrf.mxu0
    %v8659 = vadd.f32 %v8630, %v8658
    %8660 = vdwg.mxu0
    %8661 = vmatpush.bf16.msra.mxu0 %v8183
    %8662 = vmatpush.bf16.msra.mxu0 %v8179
    %8663 = vmatpush.bf16.msra.mxu0 %v8175
    %8664 = vmatpush.bf16.msra.mxu0 %v8171
    %8665 = vmatpush.bf16.msra.mxu0 %v8167
    %8666 = vmatpush.bf16.msra.mxu0 %v8163
    %8667 = vmatpush.bf16.msra.mxu0 %v8159
    %8668 = vmatpush.bf16.msra.mxu0 %v8155
    %8669 = vmatmul.bf16.gmra.mxu0 %v7261
    %v8670 = vpop.f32.mrf.mxu0
    %v8671 = vadd.f32 %v8642, %v8670
    %v8672 = vpop.f32.mrf.mxu0
    %v8673 = vadd.f32 %v8644, %v8672
    %8674 = vmatmul.bf16.gmra.mxu0 %v7269
    %v8675 = vpop.f32.mrf.mxu0
    %v8676 = vadd.f32 %v8647, %v8675
    %v8677 = vpop.f32.mrf.mxu0
    %v8678 = vadd.f32 %v8649, %v8677
    %8679 = vmatmul.bf16.gmra.mxu0 %v7277
    %v8680 = vpop.f32.mrf.mxu0
    %v8681 = vadd.f32 %v8652, %v8680
    %v8682 = vpop.f32.mrf.mxu0
    %v8683 = vadd.f32 %v8654, %v8682
    %8684 = vmatmul.bf16.gmra.mxu0 %v7285
    %v8685 = vpop.f32.mrf.mxu0
    %v8686 = vadd.f32 %v8657, %v8685
    %v8687 = vpop.f32.mrf.mxu0
    %v8688 = vadd.f32 %v8659, %v8687
    %8689 = vdwg.mxu0
    %8690 = vmatpush.bf16.msra.mxu0 %v8215
    %8691 = vmatpush.bf16.msra.mxu0 %v8211
    %8692 = vmatpush.bf16.msra.mxu0 %v8207
    %8693 = vmatpush.bf16.msra.mxu0 %v8203
    %8694 = vmatpush.bf16.msra.mxu0 %v8199
    %8695 = vmatpush.bf16.msra.mxu0 %v8195
    %8696 = vmatpush.bf16.msra.mxu0 %v8191
    %8697 = vmatpush.bf16.msra.mxu0 %v8187
    %8698 = vmatmul.bf16.gmra.mxu0 %v7262
    %v8699 = vpop.f32.mrf.mxu0
    %v8700 = vadd.f32 %v8671, %v8699
    %v8701 = vpop.f32.mrf.mxu0
    %v8702 = vadd.f32 %v8673, %v8701
    %8703 = vmatmul.bf16.gmra.mxu0 %v7270
    %v8704 = vpop.f32.mrf.mxu0
    %v8705 = vadd.f32 %v8676, %v8704
    %v8706 = vpop.f32.mrf.mxu0
    %v8707 = vadd.f32 %v8678, %v8706
    %8708 = vmatmul.bf16.gmra.mxu0 %v7278
    %v8709 = vpop.f32.mrf.mxu0
    %v8710 = vadd.f32 %v8681, %v8709
    %v8711 = vpop.f32.mrf.mxu0
    %v8712 = vadd.f32 %v8683, %v8711
    %8713 = vmatmul.bf16.gmra.mxu0 %v7286
    %v8714 = vpop.f32.mrf.mxu0
    %v8715 = vadd.f32 %v8686, %v8714
    %v8716 = vpop.f32.mrf.mxu0
    %v8717 = vadd.f32 %v8688, %v8716
    %8718 = vdwg.mxu0
    %8719 = vmatpush.bf16.msra.mxu0 %v8247
    %8720 = vmatpush.bf16.msra.mxu0 %v8243
    %8721 = vmatpush.bf16.msra.mxu0 %v8239
    %8722 = vmatpush.bf16.msra.mxu0 %v8235
    %8723 = vmatpush.bf16.msra.mxu0 %v8231
    %8724 = vmatpush.bf16.msra.mxu0 %v8227
    %8725 = vmatpush.bf16.msra.mxu0 %v8223
    %8726 = vmatpush.bf16.msra.mxu0 %v8219
    %8727 = vmatmul.bf16.gmra.mxu0 %v7263
    %v8728 = vpop.f32.mrf.mxu0
    %v8729 = vadd.f32 %v8700, %v8728
    %v8730 = vpop.f32.mrf.mxu0
    %v8731 = vadd.f32 %v8702, %v8730
    %8732 = vmatmul.bf16.gmra.mxu0 %v7271
    %v8733 = vpop.f32.mrf.mxu0
    %v8734 = vadd.f32 %v8705, %v8733
    %v8735 = vpop.f32.mrf.mxu0
    %v8736 = vadd.f32 %v8707, %v8735
    %8737 = vmatmul.bf16.gmra.mxu0 %v7279
    %v8738 = vpop.f32.mrf.mxu0
    %v8739 = vadd.f32 %v8710, %v8738
    %v8740 = vpop.f32.mrf.mxu0
    %v8741 = vadd.f32 %v8712, %v8740
    %8742 = vmatmul.bf16.gmra.mxu0 %v7287
    %v8743 = vpop.f32.mrf.mxu0
    %v8744 = vadd.f32 %v8715, %v8743
    %v8745 = vpop.f32.mrf.mxu0
    %v8746 = vadd.f32 %v8717, %v8745
    %8747 = vdwg.mxu0
    %8748 = vmatpush.bf16.msra.mxu0 %v8279
    %8749 = vmatpush.bf16.msra.mxu0 %v8275
    %8750 = vmatpush.bf16.msra.mxu0 %v8271
    %8751 = vmatpush.bf16.msra.mxu0 %v8267
    %8752 = vmatpush.bf16.msra.mxu0 %v8263
    %8753 = vmatpush.bf16.msra.mxu0 %v8259
    %8754 = vmatpush.bf16.msra.mxu0 %v8255
    %8755 = vmatpush.bf16.msra.mxu0 %v8251
    %8756 = vmatmul.bf16.gmra.mxu0 %v7264
    %v8757 = vpop.f32.mrf.mxu0
    %v8758 = vadd.f32 %v8729, %v8757
    %v8759 = vpop.f32.mrf.mxu0
    %v8760 = vadd.f32 %v8731, %v8759
    %8761 = vmatmul.bf16.gmra.mxu0 %v7272
    %v8762 = vpop.f32.mrf.mxu0
    %v8763 = vadd.f32 %v8734, %v8762
    %v8764 = vpop.f32.mrf.mxu0
    %v8765 = vadd.f32 %v8736, %v8764
    %8766 = vmatmul.bf16.gmra.mxu0 %v7280
    %v8767 = vpop.f32.mrf.mxu0
    %v8768 = vadd.f32 %v8739, %v8767
    %v8769 = vpop.f32.mrf.mxu0
    %v8770 = vadd.f32 %v8741, %v8769
    %8771 = vmatmul.bf16.gmra.mxu0 %v7288
    %v8772 = vpop.f32.mrf.mxu0
    %v8773 = vadd.f32 %v8744, %v8772
    %v8774 = vpop.f32.mrf.mxu0
    %v8775 = vadd.f32 %v8746, %v8774
    %8776 = vdwg.mxu0
    %8777 = vmatpush.bf16.msra.mxu0 %v8311
    %8778 = vmatpush.bf16.msra.mxu0 %v8307
    %8779 = vmatpush.bf16.msra.mxu0 %v8303
    %8780 = vmatpush.bf16.msra.mxu0 %v8299
    %8781 = vmatpush.bf16.msra.mxu0 %v8295
    %8782 = vmatpush.bf16.msra.mxu0 %v8291
    %8783 = vmatpush.bf16.msra.mxu0 %v8287
    %8784 = vmatpush.bf16.msra.mxu0 %v8283
    %8785 = vmatmul.bf16.gmra.mxu0 %v7265
    %v8786 = vpop.f32.mrf.mxu0
    %v8787 = vadd.f32 %v8758, %v8786
    %v8788 = vpop.f32.mrf.mxu0
    %v8789 = vadd.f32 %v8760, %v8788
    %8790 = vmatmul.bf16.gmra.mxu0 %v7273
    %v8791 = vpop.f32.mrf.mxu0
    %v8792 = vadd.f32 %v8763, %v8791
    %v8793 = vpop.f32.mrf.mxu0
    %v8794 = vadd.f32 %v8765, %v8793
    %8795 = vmatmul.bf16.gmra.mxu0 %v7281
    %v8796 = vpop.f32.mrf.mxu0
    %v8797 = vadd.f32 %v8768, %v8796
    %v8798 = vpop.f32.mrf.mxu0
    %v8799 = vadd.f32 %v8770, %v8798
    %8800 = vmatmul.bf16.gmra.mxu0 %v7289
    %v8801 = vpop.f32.mrf.mxu0
    %v8802 = vadd.f32 %v8773, %v8801
    %v8803 = vpop.f32.mrf.mxu0
    %v8804 = vadd.f32 %v8775, %v8803
    %8805 = vdwg.mxu0
    %8806 = vmatpush.bf16.msra.mxu0 %v8343
    %8807 = vmatpush.bf16.msra.mxu0 %v8339
    %8808 = vmatpush.bf16.msra.mxu0 %v8335
    %8809 = vmatpush.bf16.msra.mxu0 %v8331
    %8810 = vmatpush.bf16.msra.mxu0 %v8327
    %8811 = vmatpush.bf16.msra.mxu0 %v8323
    %8812 = vmatpush.bf16.msra.mxu0 %v8319
    %8813 = vmatpush.bf16.msra.mxu0 %v8315
    %8814 = vmatmul.bf16.gmra.mxu0 %v7266
    %v8815 = vpop.f32.mrf.mxu0
    %v8816 = vadd.f32 %v8787, %v8815
    %v8817 = vpop.f32.mrf.mxu0
    %v8818 = vadd.f32 %v8789, %v8817
    %8819 = vmatmul.bf16.gmra.mxu0 %v7274
    %v8820 = vpop.f32.mrf.mxu0
    %v8821 = vadd.f32 %v8792, %v8820
    %v8822 = vpop.f32.mrf.mxu0
    %v8823 = vadd.f32 %v8794, %v8822
    %8824 = vmatmul.bf16.gmra.mxu0 %v7282
    %v8825 = vpop.f32.mrf.mxu0
    %v8826 = vadd.f32 %v8797, %v8825
    %v8827 = vpop.f32.mrf.mxu0
    %v8828 = vadd.f32 %v8799, %v8827
    %8829 = vmatmul.bf16.gmra.mxu0 %v7290
    %v8830 = vpop.f32.mrf.mxu0
    %v8831 = vadd.f32 %v8802, %v8830
    %v8832 = vpop.f32.mrf.mxu0
    %v8833 = vadd.f32 %v8804, %v8832
    %8834 = vdwg.mxu0
    %8835 = vmatpush.bf16.msra.mxu0 %v8120
    %8836 = vmatpush.bf16.msra.mxu0 %v8116
    %8837 = vmatpush.bf16.msra.mxu0 %v8112
    %8838 = vmatpush.bf16.msra.mxu0 %v8108
    %8839 = vmatpush.bf16.msra.mxu0 %v8104
    %8840 = vmatpush.bf16.msra.mxu0 %v8100
    %8841 = vmatpush.bf16.msra.mxu0 %v8096
    %8842 = vmatpush.bf16.msra.mxu0 %v8092
    %8843 = vmatmul.bf16.gmra.mxu0 %v7259
    %v8844 = vpop.f32.mrf.mxu0
    %v8845 = vadd.f32 0.0, %v8844
    %v8846 = vpop.f32.mrf.mxu0
    %v8847 = vadd.f32 0.0, %v8846
    %8848 = vmatmul.bf16.gmra.mxu0 %v7267
    %v8849 = vpop.f32.mrf.mxu0
    %v8850 = vadd.f32 0.0, %v8849
    %v8851 = vpop.f32.mrf.mxu0
    %v8852 = vadd.f32 0.0, %v8851
    %8853 = vmatmul.bf16.gmra.mxu0 %v7275
    %v8854 = vpop.f32.mrf.mxu0
    %v8855 = vadd.f32 0.0, %v8854
    %v8856 = vpop.f32.mrf.mxu0
    %v8857 = vadd.f32 0.0, %v8856
    %8858 = vmatmul.bf16.gmra.mxu0 %v7283
    %v8859 = vpop.f32.mrf.mxu0
    %v8860 = vadd.f32 0.0, %v8859
    %v8861 = vpop.f32.mrf.mxu0
    %v8862 = vadd.f32 0.0, %v8861
    %8863 = vdwg.mxu0
    %8864 = vmatpush.bf16.msra.mxu0 %v8152
    %8865 = vmatpush.bf16.msra.mxu0 %v8148
    %8866 = vmatpush.bf16.msra.mxu0 %v8144
    %8867 = vmatpush.bf16.msra.mxu0 %v8140
    %8868 = vmatpush.bf16.msra.mxu0 %v8136
    %8869 = vmatpush.bf16.msra.mxu0 %v8132
    %8870 = vmatpush.bf16.msra.mxu0 %v8128
    %8871 = vmatpush.bf16.msra.mxu0 %v8124
    %8872 = vmatmul.bf16.gmra.mxu0 %v7260
    %v8873 = vpop.f32.mrf.mxu0
    %v8874 = vadd.f32 %v8845, %v8873
    %v8875 = vpop.f32.mrf.mxu0
    %v8876 = vadd.f32 %v8847, %v8875
    %8877 = vmatmul.bf16.gmra.mxu0 %v7268
    %v8878 = vpop.f32.mrf.mxu0
    %v8879 = vadd.f32 %v8850, %v8878
    %v8880 = vpop.f32.mrf.mxu0
    %v8881 = vadd.f32 %v8852, %v8880
    %8882 = vmatmul.bf16.gmra.mxu0 %v7276
    %v8883 = vpop.f32.mrf.mxu0
    %v8884 = vadd.f32 %v8855, %v8883
    %v8885 = vpop.f32.mrf.mxu0
    %v8886 = vadd.f32 %v8857, %v8885
    %8887 = vmatmul.bf16.gmra.mxu0 %v7284
    %v8888 = vpop.f32.mrf.mxu0
    %v8889 = vadd.f32 %v8860, %v8888
    %v8890 = vpop.f32.mrf.mxu0
    %v8891 = vadd.f32 %v8862, %v8890
    %8892 = vdwg.mxu0
    %8893 = vmatpush.bf16.msra.mxu0 %v8184
    %8894 = vmatpush.bf16.msra.mxu0 %v8180
    %8895 = vmatpush.bf16.msra.mxu0 %v8176
    %8896 = vmatpush.bf16.msra.mxu0 %v8172
    %8897 = vmatpush.bf16.msra.mxu0 %v8168
    %8898 = vmatpush.bf16.msra.mxu0 %v8164
    %8899 = vmatpush.bf16.msra.mxu0 %v8160
    %8900 = vmatpush.bf16.msra.mxu0 %v8156
    %8901 = vmatmul.bf16.gmra.mxu0 %v7261
    %v8902 = vpop.f32.mrf.mxu0
    %v8903 = vadd.f32 %v8874, %v8902
    %v8904 = vpop.f32.mrf.mxu0
    %v8905 = vadd.f32 %v8876, %v8904
    %8906 = vmatmul.bf16.gmra.mxu0 %v7269
    %v8907 = vpop.f32.mrf.mxu0
    %v8908 = vadd.f32 %v8879, %v8907
    %v8909 = vpop.f32.mrf.mxu0
    %v8910 = vadd.f32 %v8881, %v8909
    %8911 = vmatmul.bf16.gmra.mxu0 %v7277
    %v8912 = vpop.f32.mrf.mxu0
    %v8913 = vadd.f32 %v8884, %v8912
    %v8914 = vpop.f32.mrf.mxu0
    %v8915 = vadd.f32 %v8886, %v8914
    %8916 = vmatmul.bf16.gmra.mxu0 %v7285
    %v8917 = vpop.f32.mrf.mxu0
    %v8918 = vadd.f32 %v8889, %v8917
    %v8919 = vpop.f32.mrf.mxu0
    %v8920 = vadd.f32 %v8891, %v8919
    %8921 = vdwg.mxu0
    %8922 = vmatpush.bf16.msra.mxu0 %v8216
    %8923 = vmatpush.bf16.msra.mxu0 %v8212
    %8924 = vmatpush.bf16.msra.mxu0 %v8208
    %8925 = vmatpush.bf16.msra.mxu0 %v8204
    %8926 = vmatpush.bf16.msra.mxu0 %v8200
    %8927 = vmatpush.bf16.msra.mxu0 %v8196
    %8928 = vmatpush.bf16.msra.mxu0 %v8192
    %8929 = vmatpush.bf16.msra.mxu0 %v8188
    %8930 = vmatmul.bf16.gmra.mxu0 %v7262
    %v8931 = vpop.f32.mrf.mxu0
    %v8932 = vadd.f32 %v8903, %v8931
    %v8933 = vpop.f32.mrf.mxu0
    %v8934 = vadd.f32 %v8905, %v8933
    %8935 = vmatmul.bf16.gmra.mxu0 %v7270
    %v8936 = vpop.f32.mrf.mxu0
    %v8937 = vadd.f32 %v8908, %v8936
    %v8938 = vpop.f32.mrf.mxu0
    %v8939 = vadd.f32 %v8910, %v8938
    %8940 = vmatmul.bf16.gmra.mxu0 %v7278
    %v8941 = vpop.f32.mrf.mxu0
    %v8942 = vadd.f32 %v8913, %v8941
    %v8943 = vpop.f32.mrf.mxu0
    %v8944 = vadd.f32 %v8915, %v8943
    %8945 = vmatmul.bf16.gmra.mxu0 %v7286
    %v8946 = vpop.f32.mrf.mxu0
    %v8947 = vadd.f32 %v8918, %v8946
    %v8948 = vpop.f32.mrf.mxu0
    %v8949 = vadd.f32 %v8920, %v8948
    %8950 = vdwg.mxu0
    %8951 = vmatpush.bf16.msra.mxu0 %v8248
    %8952 = vmatpush.bf16.msra.mxu0 %v8244
    %8953 = vmatpush.bf16.msra.mxu0 %v8240
    %8954 = vmatpush.bf16.msra.mxu0 %v8236
    %8955 = vmatpush.bf16.msra.mxu0 %v8232
    %8956 = vmatpush.bf16.msra.mxu0 %v8228
    %8957 = vmatpush.bf16.msra.mxu0 %v8224
    %8958 = vmatpush.bf16.msra.mxu0 %v8220
    %8959 = vmatmul.bf16.gmra.mxu0 %v7263
    %v8960 = vpop.f32.mrf.mxu0
    %v8961 = vadd.f32 %v8932, %v8960
    %v8962 = vpop.f32.mrf.mxu0
    %v8963 = vadd.f32 %v8934, %v8962
    %8964 = vmatmul.bf16.gmra.mxu0 %v7271
    %v8965 = vpop.f32.mrf.mxu0
    %v8966 = vadd.f32 %v8937, %v8965
    %v8967 = vpop.f32.mrf.mxu0
    %v8968 = vadd.f32 %v8939, %v8967
    %8969 = vmatmul.bf16.gmra.mxu0 %v7279
    %v8970 = vpop.f32.mrf.mxu0
    %v8971 = vadd.f32 %v8942, %v8970
    %v8972 = vpop.f32.mrf.mxu0
    %v8973 = vadd.f32 %v8944, %v8972
    %8974 = vmatmul.bf16.gmra.mxu0 %v7287
    %v8975 = vpop.f32.mrf.mxu0
    %v8976 = vadd.f32 %v8947, %v8975
    %v8977 = vpop.f32.mrf.mxu0
    %v8978 = vadd.f32 %v8949, %v8977
    %8979 = vdwg.mxu0
    %8980 = vmatpush.bf16.msra.mxu0 %v8280
    %8981 = vmatpush.bf16.msra.mxu0 %v8276
    %8982 = vmatpush.bf16.msra.mxu0 %v8272
    %8983 = vmatpush.bf16.msra.mxu0 %v8268
    %8984 = vmatpush.bf16.msra.mxu0 %v8264
    %8985 = vmatpush.bf16.msra.mxu0 %v8260
    %8986 = vmatpush.bf16.msra.mxu0 %v8256
    %8987 = vmatpush.bf16.msra.mxu0 %v8252
    %8988 = vmatmul.bf16.gmra.mxu0 %v7264
    %v8989 = vpop.f32.mrf.mxu0
    %v8990 = vadd.f32 %v8961, %v8989
    %v8991 = vpop.f32.mrf.mxu0
    %v8992 = vadd.f32 %v8963, %v8991
    %8993 = vmatmul.bf16.gmra.mxu0 %v7272
    %v8994 = vpop.f32.mrf.mxu0
    %v8995 = vadd.f32 %v8966, %v8994
    %v8996 = vpop.f32.mrf.mxu0
    %v8997 = vadd.f32 %v8968, %v8996
    %8998 = vmatmul.bf16.gmra.mxu0 %v7280
    %v8999 = vpop.f32.mrf.mxu0
    %v9000 = vadd.f32 %v8971, %v8999
    %v9001 = vpop.f32.mrf.mxu0
    %v9002 = vadd.f32 %v8973, %v9001
    %9003 = vmatmul.bf16.gmra.mxu0 %v7288
    %v9004 = vpop.f32.mrf.mxu0
    %v9005 = vadd.f32 %v8976, %v9004
    %v9006 = vpop.f32.mrf.mxu0
    %v9007 = vadd.f32 %v8978, %v9006
    %9008 = vdwg.mxu0
    %9009 = vmatpush.bf16.msra.mxu0 %v8312
    %9010 = vmatpush.bf16.msra.mxu0 %v8308
    %9011 = vmatpush.bf16.msra.mxu0 %v8304
    %9012 = vmatpush.bf16.msra.mxu0 %v8300
    %9013 = vmatpush.bf16.msra.mxu0 %v8296
    %9014 = vmatpush.bf16.msra.mxu0 %v8292
    %9015 = vmatpush.bf16.msra.mxu0 %v8288
    %9016 = vmatpush.bf16.msra.mxu0 %v8284
    %9017 = vmatmul.bf16.gmra.mxu0 %v7265
    %v9018 = vpop.f32.mrf.mxu0
    %v9019 = vadd.f32 %v8990, %v9018
    %v9020 = vpop.f32.mrf.mxu0
    %v9021 = vadd.f32 %v8992, %v9020
    %9022 = vmatmul.bf16.gmra.mxu0 %v7273
    %v9023 = vpop.f32.mrf.mxu0
    %v9024 = vadd.f32 %v8995, %v9023
    %v9025 = vpop.f32.mrf.mxu0
    %v9026 = vadd.f32 %v8997, %v9025
    %9027 = vmatmul.bf16.gmra.mxu0 %v7281
    %v9028 = vpop.f32.mrf.mxu0
    %v9029 = vadd.f32 %v9000, %v9028
    %v9030 = vpop.f32.mrf.mxu0
    %v9031 = vadd.f32 %v9002, %v9030
    %9032 = vmatmul.bf16.gmra.mxu0 %v7289
    %v9033 = vpop.f32.mrf.mxu0
    %v9034 = vadd.f32 %v9005, %v9033
    %v9035 = vpop.f32.mrf.mxu0
    %v9036 = vadd.f32 %v9007, %v9035
    %9037 = vdwg.mxu0
    %9038 = vmatpush.bf16.msra.mxu0 %v8344
    %9039 = vmatpush.bf16.msra.mxu0 %v8340
    %9040 = vmatpush.bf16.msra.mxu0 %v8336
    %9041 = vmatpush.bf16.msra.mxu0 %v8332
    %9042 = vmatpush.bf16.msra.mxu0 %v8328
    %9043 = vmatpush.bf16.msra.mxu0 %v8324
    %9044 = vmatpush.bf16.msra.mxu0 %v8320
    %9045 = vmatpush.bf16.msra.mxu0 %v8316
    %9046 = vmatmul.bf16.gmra.mxu0 %v7266
    %v9047 = vpop.f32.mrf.mxu0
    %v9048 = vadd.f32 %v9019, %v9047
    %v9049 = vpop.f32.mrf.mxu0
    %v9050 = vadd.f32 %v9021, %v9049
    %9051 = vmatmul.bf16.gmra.mxu0 %v7274
    %v9052 = vpop.f32.mrf.mxu0
    %v9053 = vadd.f32 %v9024, %v9052
    %v9054 = vpop.f32.mrf.mxu0
    %v9055 = vadd.f32 %v9026, %v9054
    %9056 = vmatmul.bf16.gmra.mxu0 %v7282
    %v9057 = vpop.f32.mrf.mxu0
    %v9058 = vadd.f32 %v9029, %v9057
    %v9059 = vpop.f32.mrf.mxu0
    %v9060 = vadd.f32 %v9031, %v9059
    %9061 = vmatmul.bf16.gmra.mxu0 %v7290
    %v9062 = vpop.f32.mrf.mxu0
    %v9063 = vadd.f32 %v9034, %v9062
    %v9064 = vpop.f32.mrf.mxu0
    %v9065 = vadd.f32 %v9036, %v9064
    %9066 = vdwg.mxu0
    %9067 = vmatpush.bf16.msra.mxu0 %v8121
    %9068 = vmatpush.bf16.msra.mxu0 %v8117
    %9069 = vmatpush.bf16.msra.mxu0 %v8113
    %9070 = vmatpush.bf16.msra.mxu0 %v8109
    %9071 = vmatpush.bf16.msra.mxu0 %v8105
    %9072 = vmatpush.bf16.msra.mxu0 %v8101
    %9073 = vmatpush.bf16.msra.mxu0 %v8097
    %9074 = vmatpush.bf16.msra.mxu0 %v8093
    %9075 = vmatmul.bf16.gmra.mxu0 %v7259
    %v9076 = vpop.f32.mrf.mxu0
    %v9077 = vadd.f32 0.0, %v9076
    %v9078 = vpop.f32.mrf.mxu0
    %v9079 = vadd.f32 0.0, %v9078
    %9080 = vmatmul.bf16.gmra.mxu0 %v7267
    %v9081 = vpop.f32.mrf.mxu0
    %v9082 = vadd.f32 0.0, %v9081
    %v9083 = vpop.f32.mrf.mxu0
    %v9084 = vadd.f32 0.0, %v9083
    %9085 = vmatmul.bf16.gmra.mxu0 %v7275
    %v9086 = vpop.f32.mrf.mxu0
    %v9087 = vadd.f32 0.0, %v9086
    %v9088 = vpop.f32.mrf.mxu0
    %v9089 = vadd.f32 0.0, %v9088
    %9090 = vmatmul.bf16.gmra.mxu0 %v7283
    %v9091 = vpop.f32.mrf.mxu0
    %v9092 = vadd.f32 0.0, %v9091
    %v9093 = vpop.f32.mrf.mxu0
    %v9094 = vadd.f32 0.0, %v9093
    %9095 = vdwg.mxu0
    %9096 = vmatpush.bf16.msra.mxu0 %v8153
    %9097 = vmatpush.bf16.msra.mxu0 %v8149
    %9098 = vmatpush.bf16.msra.mxu0 %v8145
    %9099 = vmatpush.bf16.msra.mxu0 %v8141
    %9100 = vmatpush.bf16.msra.mxu0 %v8137
    %9101 = vmatpush.bf16.msra.mxu0 %v8133
    %9102 = vmatpush.bf16.msra.mxu0 %v8129
    %9103 = vmatpush.bf16.msra.mxu0 %v8125
    %9104 = vmatmul.bf16.gmra.mxu0 %v7260
    %v9105 = vpop.f32.mrf.mxu0
    %v9106 = vadd.f32 %v9077, %v9105
    %v9107 = vpop.f32.mrf.mxu0
    %v9108 = vadd.f32 %v9079, %v9107
    %9109 = vmatmul.bf16.gmra.mxu0 %v7268
    %v9110 = vpop.f32.mrf.mxu0
    %v9111 = vadd.f32 %v9082, %v9110
    %v9112 = vpop.f32.mrf.mxu0
    %v9113 = vadd.f32 %v9084, %v9112
    %9114 = vmatmul.bf16.gmra.mxu0 %v7276
    %v9115 = vpop.f32.mrf.mxu0
    %v9116 = vadd.f32 %v9087, %v9115
    %v9117 = vpop.f32.mrf.mxu0
    %v9118 = vadd.f32 %v9089, %v9117
    %9119 = vmatmul.bf16.gmra.mxu0 %v7284
    %v9120 = vpop.f32.mrf.mxu0
    %v9121 = vadd.f32 %v9092, %v9120
    %v9122 = vpop.f32.mrf.mxu0
    %v9123 = vadd.f32 %v9094, %v9122
    %9124 = vdwg.mxu0
    %9125 = vmatpush.bf16.msra.mxu0 %v8185
    %9126 = vmatpush.bf16.msra.mxu0 %v8181
    %9127 = vmatpush.bf16.msra.mxu0 %v8177
    %9128 = vmatpush.bf16.msra.mxu0 %v8173
    %9129 = vmatpush.bf16.msra.mxu0 %v8169
    %9130 = vmatpush.bf16.msra.mxu0 %v8165
    %9131 = vmatpush.bf16.msra.mxu0 %v8161
    %9132 = vmatpush.bf16.msra.mxu0 %v8157
    %9133 = vmatmul.bf16.gmra.mxu0 %v7261
    %v9134 = vpop.f32.mrf.mxu0
    %v9135 = vadd.f32 %v9106, %v9134
    %v9136 = vpop.f32.mrf.mxu0
    %v9137 = vadd.f32 %v9108, %v9136
    %9138 = vmatmul.bf16.gmra.mxu0 %v7269
    %v9139 = vpop.f32.mrf.mxu0
    %v9140 = vadd.f32 %v9111, %v9139
    %v9141 = vpop.f32.mrf.mxu0
    %v9142 = vadd.f32 %v9113, %v9141
    %9143 = vmatmul.bf16.gmra.mxu0 %v7277
    %v9144 = vpop.f32.mrf.mxu0
    %v9145 = vadd.f32 %v9116, %v9144
    %v9146 = vpop.f32.mrf.mxu0
    %v9147 = vadd.f32 %v9118, %v9146
    %9148 = vmatmul.bf16.gmra.mxu0 %v7285
    %v9149 = vpop.f32.mrf.mxu0
    %v9150 = vadd.f32 %v9121, %v9149
    %v9151 = vpop.f32.mrf.mxu0
    %v9152 = vadd.f32 %v9123, %v9151
    %9153 = vdwg.mxu0
    %9154 = vmatpush.bf16.msra.mxu0 %v8217
    %9155 = vmatpush.bf16.msra.mxu0 %v8213
    %9156 = vmatpush.bf16.msra.mxu0 %v8209
    %9157 = vmatpush.bf16.msra.mxu0 %v8205
    %9158 = vmatpush.bf16.msra.mxu0 %v8201
    %9159 = vmatpush.bf16.msra.mxu0 %v8197
    %9160 = vmatpush.bf16.msra.mxu0 %v8193
    %9161 = vmatpush.bf16.msra.mxu0 %v8189
    %9162 = vmatmul.bf16.gmra.mxu0 %v7262
    %v9163 = vpop.f32.mrf.mxu0
    %v9164 = vadd.f32 %v9135, %v9163
    %v9165 = vpop.f32.mrf.mxu0
    %v9166 = vadd.f32 %v9137, %v9165
    %9167 = vmatmul.bf16.gmra.mxu0 %v7270
    %v9168 = vpop.f32.mrf.mxu0
    %v9169 = vadd.f32 %v9140, %v9168
    %v9170 = vpop.f32.mrf.mxu0
    %v9171 = vadd.f32 %v9142, %v9170
    %9172 = vmatmul.bf16.gmra.mxu0 %v7278
    %v9173 = vpop.f32.mrf.mxu0
    %v9174 = vadd.f32 %v9145, %v9173
    %v9175 = vpop.f32.mrf.mxu0
    %v9176 = vadd.f32 %v9147, %v9175
    %9177 = vmatmul.bf16.gmra.mxu0 %v7286
    %v9178 = vpop.f32.mrf.mxu0
    %v9179 = vadd.f32 %v9150, %v9178
    %v9180 = vpop.f32.mrf.mxu0
    %v9181 = vadd.f32 %v9152, %v9180
    %9182 = vdwg.mxu0
    %9183 = vmatpush.bf16.msra.mxu0 %v8249
    %9184 = vmatpush.bf16.msra.mxu0 %v8245
    %9185 = vmatpush.bf16.msra.mxu0 %v8241
    %9186 = vmatpush.bf16.msra.mxu0 %v8237
    %9187 = vmatpush.bf16.msra.mxu0 %v8233
    %9188 = vmatpush.bf16.msra.mxu0 %v8229
    %9189 = vmatpush.bf16.msra.mxu0 %v8225
    %9190 = vmatpush.bf16.msra.mxu0 %v8221
    %9191 = vmatmul.bf16.gmra.mxu0 %v7263
    %v9192 = vpop.f32.mrf.mxu0
    %v9193 = vadd.f32 %v9164, %v9192
    %v9194 = vpop.f32.mrf.mxu0
    %v9195 = vadd.f32 %v9166, %v9194
    %9196 = vmatmul.bf16.gmra.mxu0 %v7271
    %v9197 = vpop.f32.mrf.mxu0
    %v9198 = vadd.f32 %v9169, %v9197
    %v9199 = vpop.f32.mrf.mxu0
    %v9200 = vadd.f32 %v9171, %v9199
    %9201 = vmatmul.bf16.gmra.mxu0 %v7279
    %v9202 = vpop.f32.mrf.mxu0
    %v9203 = vadd.f32 %v9174, %v9202
    %v9204 = vpop.f32.mrf.mxu0
    %v9205 = vadd.f32 %v9176, %v9204
    %9206 = vmatmul.bf16.gmra.mxu0 %v7287
    %v9207 = vpop.f32.mrf.mxu0
    %v9208 = vadd.f32 %v9179, %v9207
    %v9209 = vpop.f32.mrf.mxu0
    %v9210 = vadd.f32 %v9181, %v9209
    %9211 = vdwg.mxu0
    %9212 = vmatpush.bf16.msra.mxu0 %v8281
    %9213 = vmatpush.bf16.msra.mxu0 %v8277
    %9214 = vmatpush.bf16.msra.mxu0 %v8273
    %9215 = vmatpush.bf16.msra.mxu0 %v8269
    %9216 = vmatpush.bf16.msra.mxu0 %v8265
    %9217 = vmatpush.bf16.msra.mxu0 %v8261
    %9218 = vmatpush.bf16.msra.mxu0 %v8257
    %9219 = vmatpush.bf16.msra.mxu0 %v8253
    %9220 = vmatmul.bf16.gmra.mxu0 %v7264
    %v9221 = vpop.f32.mrf.mxu0
    %v9222 = vadd.f32 %v9193, %v9221
    %v9223 = vpop.f32.mrf.mxu0
    %v9224 = vadd.f32 %v9195, %v9223
    %9225 = vmatmul.bf16.gmra.mxu0 %v7272
    %v9226 = vpop.f32.mrf.mxu0
    %v9227 = vadd.f32 %v9198, %v9226
    %v9228 = vpop.f32.mrf.mxu0
    %v9229 = vadd.f32 %v9200, %v9228
    %9230 = vmatmul.bf16.gmra.mxu0 %v7280
    %v9231 = vpop.f32.mrf.mxu0
    %v9232 = vadd.f32 %v9203, %v9231
    %v9233 = vpop.f32.mrf.mxu0
    %v9234 = vadd.f32 %v9205, %v9233
    %9235 = vmatmul.bf16.gmra.mxu0 %v7288
    %v9236 = vpop.f32.mrf.mxu0
    %v9237 = vadd.f32 %v9208, %v9236
    %v9238 = vpop.f32.mrf.mxu0
    %v9239 = vadd.f32 %v9210, %v9238
    %9240 = vdwg.mxu0
    %9241 = vmatpush.bf16.msra.mxu0 %v8313
    %9242 = vmatpush.bf16.msra.mxu0 %v8309
    %9243 = vmatpush.bf16.msra.mxu0 %v8305
    %9244 = vmatpush.bf16.msra.mxu0 %v8301
    %9245 = vmatpush.bf16.msra.mxu0 %v8297
    %9246 = vmatpush.bf16.msra.mxu0 %v8293
    %9247 = vmatpush.bf16.msra.mxu0 %v8289
    %9248 = vmatpush.bf16.msra.mxu0 %v8285
    %9249 = vmatmul.bf16.gmra.mxu0 %v7265
    %v9250 = vpop.f32.mrf.mxu0
    %v9251 = vadd.f32 %v9222, %v9250
    %v9252 = vpop.f32.mrf.mxu0
    %v9253 = vadd.f32 %v9224, %v9252
    %9254 = vmatmul.bf16.gmra.mxu0 %v7273
    %v9255 = vpop.f32.mrf.mxu0
    %v9256 = vadd.f32 %v9227, %v9255
    %v9257 = vpop.f32.mrf.mxu0
    %v9258 = vadd.f32 %v9229, %v9257
    %9259 = vmatmul.bf16.gmra.mxu0 %v7281
    %v9260 = vpop.f32.mrf.mxu0
    %v9261 = vadd.f32 %v9232, %v9260
    %v9262 = vpop.f32.mrf.mxu0
    %v9263 = vadd.f32 %v9234, %v9262
    %9264 = vmatmul.bf16.gmra.mxu0 %v7289
    %v9265 = vpop.f32.mrf.mxu0
    %v9266 = vadd.f32 %v9237, %v9265
    %v9267 = vpop.f32.mrf.mxu0
    %v9268 = vadd.f32 %v9239, %v9267
    %9269 = vdwg.mxu0
    %9270 = vmatpush.bf16.msra.mxu0 %v8345
    %9271 = vmatpush.bf16.msra.mxu0 %v8341
    %9272 = vmatpush.bf16.msra.mxu0 %v8337
    %9273 = vmatpush.bf16.msra.mxu0 %v8333
    %9274 = vmatpush.bf16.msra.mxu0 %v8329
    %9275 = vmatpush.bf16.msra.mxu0 %v8325
    %9276 = vmatpush.bf16.msra.mxu0 %v8321
    %9277 = vmatpush.bf16.msra.mxu0 %v8317
    %9278 = vmatmul.bf16.gmra.mxu0 %v7266
    %v9279 = vpop.f32.mrf.mxu0
    %v9280 = vadd.f32 %v9251, %v9279
    %v9281 = vpop.f32.mrf.mxu0
    %v9282 = vadd.f32 %v9253, %v9281
    %9283 = vmatmul.bf16.gmra.mxu0 %v7274
    %v9284 = vpop.f32.mrf.mxu0
    %v9285 = vadd.f32 %v9256, %v9284
    %v9286 = vpop.f32.mrf.mxu0
    %v9287 = vadd.f32 %v9258, %v9286
    %9288 = vmatmul.bf16.gmra.mxu0 %v7282
    %v9289 = vpop.f32.mrf.mxu0
    %v9290 = vadd.f32 %v9261, %v9289
    %v9291 = vpop.f32.mrf.mxu0
    %v9292 = vadd.f32 %v9263, %v9291
    %9293 = vmatmul.bf16.gmra.mxu0 %v7290
    %v9294 = vpop.f32.mrf.mxu0
    %v9295 = vadd.f32 %v9266, %v9294
    %v9296 = vpop.f32.mrf.mxu0
    %v9297 = vadd.f32 %v9268, %v9296
    %9298 = vdwg.mxu0
    %9299 = vmatpush.bf16.msra.mxu0 %v8122
    %9300 = vmatpush.bf16.msra.mxu0 %v8118
    %9301 = vmatpush.bf16.msra.mxu0 %v8114
    %9302 = vmatpush.bf16.msra.mxu0 %v8110
    %9303 = vmatpush.bf16.msra.mxu0 %v8106
    %9304 = vmatpush.bf16.msra.mxu0 %v8102
    %9305 = vmatpush.bf16.msra.mxu0 %v8098
    %9306 = vmatpush.bf16.msra.mxu0 %v8094
    %9307 = vmatmul.bf16.gmra.mxu0 %v7259
    %v9308 = vpop.f32.mrf.mxu0
    %v9309 = vadd.f32 0.0, %v9308
    %v9310 = vpop.f32.mrf.mxu0
    %v9311 = vadd.f32 0.0, %v9310
    %9312 = vmatmul.bf16.gmra.mxu0 %v7267
    %v9313 = vpop.f32.mrf.mxu0
    %v9314 = vadd.f32 0.0, %v9313
    %v9315 = vpop.f32.mrf.mxu0
    %v9316 = vadd.f32 0.0, %v9315
    %9317 = vmatmul.bf16.gmra.mxu0 %v7275
    %v9318 = vpop.f32.mrf.mxu0
    %v9319 = vadd.f32 0.0, %v9318
    %v9320 = vpop.f32.mrf.mxu0
    %v9321 = vadd.f32 0.0, %v9320
    %9322 = vmatmul.bf16.gmra.mxu0 %v7283
    %v9323 = vpop.f32.mrf.mxu0
    %v9324 = vadd.f32 0.0, %v9323
    %v9325 = vpop.f32.mrf.mxu0
    %v9326 = vadd.f32 0.0, %v9325
    %9327 = vdwg.mxu0
    %9328 = vmatpush.bf16.msra.mxu0 %v8154
    %9329 = vmatpush.bf16.msra.mxu0 %v8150
    %9330 = vmatpush.bf16.msra.mxu0 %v8146
    %9331 = vmatpush.bf16.msra.mxu0 %v8142
    %9332 = vmatpush.bf16.msra.mxu0 %v8138
    %9333 = vmatpush.bf16.msra.mxu0 %v8134
    %9334 = vmatpush.bf16.msra.mxu0 %v8130
    %9335 = vmatpush.bf16.msra.mxu0 %v8126
    %9336 = vmatmul.bf16.gmra.mxu0 %v7260
    %v9337 = vpop.f32.mrf.mxu0
    %v9338 = vadd.f32 %v9309, %v9337
    %v9339 = vpop.f32.mrf.mxu0
    %v9340 = vadd.f32 %v9311, %v9339
    %9341 = vmatmul.bf16.gmra.mxu0 %v7268
    %v9342 = vpop.f32.mrf.mxu0
    %v9343 = vadd.f32 %v9314, %v9342
    %v9344 = vpop.f32.mrf.mxu0
    %v9345 = vadd.f32 %v9316, %v9344
    %9346 = vmatmul.bf16.gmra.mxu0 %v7276
    %v9347 = vpop.f32.mrf.mxu0
    %v9348 = vadd.f32 %v9319, %v9347
    %v9349 = vpop.f32.mrf.mxu0
    %v9350 = vadd.f32 %v9321, %v9349
    %9351 = vmatmul.bf16.gmra.mxu0 %v7284
    %v9352 = vpop.f32.mrf.mxu0
    %v9353 = vadd.f32 %v9324, %v9352
    %v9354 = vpop.f32.mrf.mxu0
    %v9355 = vadd.f32 %v9326, %v9354
    %9356 = vdwg.mxu0
    %9357 = vmatpush.bf16.msra.mxu0 %v8186
    %9358 = vmatpush.bf16.msra.mxu0 %v8182
    %9359 = vmatpush.bf16.msra.mxu0 %v8178
    %9360 = vmatpush.bf16.msra.mxu0 %v8174
    %9361 = vmatpush.bf16.msra.mxu0 %v8170
    %9362 = vmatpush.bf16.msra.mxu0 %v8166
    %9363 = vmatpush.bf16.msra.mxu0 %v8162
    %9364 = vmatpush.bf16.msra.mxu0 %v8158
    %9365 = vmatmul.bf16.gmra.mxu0 %v7261
    %v9366 = vpop.f32.mrf.mxu0
    %v9367 = vadd.f32 %v9338, %v9366
    %v9368 = vpop.f32.mrf.mxu0
    %v9369 = vadd.f32 %v9340, %v9368
    %9370 = vmatmul.bf16.gmra.mxu0 %v7269
    %v9371 = vpop.f32.mrf.mxu0
    %v9372 = vadd.f32 %v9343, %v9371
    %v9373 = vpop.f32.mrf.mxu0
    %v9374 = vadd.f32 %v9345, %v9373
    %9375 = vmatmul.bf16.gmra.mxu0 %v7277
    %v9376 = vpop.f32.mrf.mxu0
    %v9377 = vadd.f32 %v9348, %v9376
    %v9378 = vpop.f32.mrf.mxu0
    %v9379 = vadd.f32 %v9350, %v9378
    %9380 = vmatmul.bf16.gmra.mxu0 %v7285
    %v9381 = vpop.f32.mrf.mxu0
    %v9382 = vadd.f32 %v9353, %v9381
    %v9383 = vpop.f32.mrf.mxu0
    %v9384 = vadd.f32 %v9355, %v9383
    %9385 = vdwg.mxu0
    %9386 = vmatpush.bf16.msra.mxu0 %v8218
    %9387 = vmatpush.bf16.msra.mxu0 %v8214
    %9388 = vmatpush.bf16.msra.mxu0 %v8210
    %9389 = vmatpush.bf16.msra.mxu0 %v8206
    %9390 = vmatpush.bf16.msra.mxu0 %v8202
    %9391 = vmatpush.bf16.msra.mxu0 %v8198
    %9392 = vmatpush.bf16.msra.mxu0 %v8194
    %9393 = vmatpush.bf16.msra.mxu0 %v8190
    %9394 = vmatmul.bf16.gmra.mxu0 %v7262
    %v9395 = vpop.f32.mrf.mxu0
    %v9396 = vadd.f32 %v9367, %v9395
    %v9397 = vpop.f32.mrf.mxu0
    %v9398 = vadd.f32 %v9369, %v9397
    %9399 = vmatmul.bf16.gmra.mxu0 %v7270
    %v9400 = vpop.f32.mrf.mxu0
    %v9401 = vadd.f32 %v9372, %v9400
    %v9402 = vpop.f32.mrf.mxu0
    %v9403 = vadd.f32 %v9374, %v9402
    %9404 = vmatmul.bf16.gmra.mxu0 %v7278
    %v9405 = vpop.f32.mrf.mxu0
    %v9406 = vadd.f32 %v9377, %v9405
    %v9407 = vpop.f32.mrf.mxu0
    %v9408 = vadd.f32 %v9379, %v9407
    %9409 = vmatmul.bf16.gmra.mxu0 %v7286
    %v9410 = vpop.f32.mrf.mxu0
    %v9411 = vadd.f32 %v9382, %v9410
    %v9412 = vpop.f32.mrf.mxu0
    %v9413 = vadd.f32 %v9384, %v9412
    %9414 = vdwg.mxu0
    %9415 = vmatpush.bf16.msra.mxu0 %v8250
    %9416 = vmatpush.bf16.msra.mxu0 %v8246
    %9417 = vmatpush.bf16.msra.mxu0 %v8242
    %9418 = vmatpush.bf16.msra.mxu0 %v8238
    %9419 = vmatpush.bf16.msra.mxu0 %v8234
    %9420 = vmatpush.bf16.msra.mxu0 %v8230
    %9421 = vmatpush.bf16.msra.mxu0 %v8226
    %9422 = vmatpush.bf16.msra.mxu0 %v8222
    %9423 = vmatmul.bf16.gmra.mxu0 %v7263
    %v9424 = vpop.f32.mrf.mxu0
    %v9425 = vadd.f32 %v9396, %v9424
    %v9426 = vpop.f32.mrf.mxu0
    %v9427 = vadd.f32 %v9398, %v9426
    %9428 = vmatmul.bf16.gmra.mxu0 %v7271
    %v9429 = vpop.f32.mrf.mxu0
    %v9430 = vadd.f32 %v9401, %v9429
    %v9431 = vpop.f32.mrf.mxu0
    %v9432 = vadd.f32 %v9403, %v9431
    %9433 = vmatmul.bf16.gmra.mxu0 %v7279
    %v9434 = vpop.f32.mrf.mxu0
    %v9435 = vadd.f32 %v9406, %v9434
    %v9436 = vpop.f32.mrf.mxu0
    %v9437 = vadd.f32 %v9408, %v9436
    %9438 = vmatmul.bf16.gmra.mxu0 %v7287
    %v9439 = vpop.f32.mrf.mxu0
    %v9440 = vadd.f32 %v9411, %v9439
    %v9441 = vpop.f32.mrf.mxu0
    %v9442 = vadd.f32 %v9413, %v9441
    %9443 = vdwg.mxu0
    %9444 = vmatpush.bf16.msra.mxu0 %v8282
    %9445 = vmatpush.bf16.msra.mxu0 %v8278
    %9446 = vmatpush.bf16.msra.mxu0 %v8274
    %9447 = vmatpush.bf16.msra.mxu0 %v8270
    %9448 = vmatpush.bf16.msra.mxu0 %v8266
    %9449 = vmatpush.bf16.msra.mxu0 %v8262
    %9450 = vmatpush.bf16.msra.mxu0 %v8258
    %9451 = vmatpush.bf16.msra.mxu0 %v8254
    %9452 = vmatmul.bf16.gmra.mxu0 %v7264
    %v9453 = vpop.f32.mrf.mxu0
    %v9454 = vadd.f32 %v9425, %v9453
    %v9455 = vpop.f32.mrf.mxu0
    %v9456 = vadd.f32 %v9427, %v9455
    %9457 = vmatmul.bf16.gmra.mxu0 %v7272
    %v9458 = vpop.f32.mrf.mxu0
    %v9459 = vadd.f32 %v9430, %v9458
    %v9460 = vpop.f32.mrf.mxu0
    %v9461 = vadd.f32 %v9432, %v9460
    %9462 = vmatmul.bf16.gmra.mxu0 %v7280
    %v9463 = vpop.f32.mrf.mxu0
    %v9464 = vadd.f32 %v9435, %v9463
    %v9465 = vpop.f32.mrf.mxu0
    %v9466 = vadd.f32 %v9437, %v9465
    %9467 = vmatmul.bf16.gmra.mxu0 %v7288
    %v9468 = vpop.f32.mrf.mxu0
    %v9469 = vadd.f32 %v9440, %v9468
    %v9470 = vpop.f32.mrf.mxu0
    %v9471 = vadd.f32 %v9442, %v9470
    %9472 = vdwg.mxu0
    %9473 = vmatpush.bf16.msra.mxu0 %v8314
    %9474 = vmatpush.bf16.msra.mxu0 %v8310
    %9475 = vmatpush.bf16.msra.mxu0 %v8306
    %9476 = vmatpush.bf16.msra.mxu0 %v8302
    %9477 = vmatpush.bf16.msra.mxu0 %v8298
    %9478 = vmatpush.bf16.msra.mxu0 %v8294
    %9479 = vmatpush.bf16.msra.mxu0 %v8290
    %9480 = vmatpush.bf16.msra.mxu0 %v8286
    %9481 = vmatmul.bf16.gmra.mxu0 %v7265
    %v9482 = vpop.f32.mrf.mxu0
    %v9483 = vadd.f32 %v9454, %v9482
    %v9484 = vpop.f32.mrf.mxu0
    %v9485 = vadd.f32 %v9456, %v9484
    %9486 = vmatmul.bf16.gmra.mxu0 %v7273
    %v9487 = vpop.f32.mrf.mxu0
    %v9488 = vadd.f32 %v9459, %v9487
    %v9489 = vpop.f32.mrf.mxu0
    %v9490 = vadd.f32 %v9461, %v9489
    %9491 = vmatmul.bf16.gmra.mxu0 %v7281
    %v9492 = vpop.f32.mrf.mxu0
    %v9493 = vadd.f32 %v9464, %v9492
    %v9494 = vpop.f32.mrf.mxu0
    %v9495 = vadd.f32 %v9466, %v9494
    %9496 = vmatmul.bf16.gmra.mxu0 %v7289
    %v9497 = vpop.f32.mrf.mxu0
    %v9498 = vadd.f32 %v9469, %v9497
    %v9499 = vpop.f32.mrf.mxu0
    %v9500 = vadd.f32 %v9471, %v9499
    %9501 = vdwg.mxu0
    %9502 = vmatpush.bf16.msra.mxu0 %v8346
    %9503 = vmatpush.bf16.msra.mxu0 %v8342
    %9504 = vmatpush.bf16.msra.mxu0 %v8338
    %9505 = vmatpush.bf16.msra.mxu0 %v8334
    %9506 = vmatpush.bf16.msra.mxu0 %v8330
    %9507 = vmatpush.bf16.msra.mxu0 %v8326
    %9508 = vmatpush.bf16.msra.mxu0 %v8322
    %9509 = vmatpush.bf16.msra.mxu0 %v8318
    %9510 = vmatmul.bf16.gmra.mxu0 %v7266
    %v9511 = vpop.f32.mrf.mxu0
    %v9512 = vadd.f32 %v9483, %v9511
    %v9513 = vpop.f32.mrf.mxu0
    %v9514 = vadd.f32 %v9485, %v9513
    %9515 = vmatmul.bf16.gmra.mxu0 %v7274
    %v9516 = vpop.f32.mrf.mxu0
    %v9517 = vadd.f32 %v9488, %v9516
    %v9518 = vpop.f32.mrf.mxu0
    %v9519 = vadd.f32 %v9490, %v9518
    %9520 = vmatmul.bf16.gmra.mxu0 %v7282
    %v9521 = vpop.f32.mrf.mxu0
    %v9522 = vadd.f32 %v9493, %v9521
    %v9523 = vpop.f32.mrf.mxu0
    %v9524 = vadd.f32 %v9495, %v9523
    %9525 = vmatmul.bf16.gmra.mxu0 %v7290
    %v9526 = vpop.f32.mrf.mxu0
    %v9527 = vadd.f32 %v9498, %v9526
    %v9528 = vpop.f32.mrf.mxu0
    %v9529 = vadd.f32 %v9500, %v9528
    %9530 = vdwg.mxu0
    %v9531 = vadd.f32 %v6275, %v8816
    %v9532 = vadd.f32 %v6507, %v9048
    %v9533 = vadd.f32 %v6739, %v9280
    %v9534 = vadd.f32 %v6971, %v9512
    %v9535 = vadd.f32 %v6277, %v8818
    %v9536 = vadd.f32 %v6509, %v9050
    %v9537 = vadd.f32 %v6741, %v9282
    %v9538 = vadd.f32 %v6973, %v9514
    %v9539 = vadd.f32 %v6280, %v8821
    %v9540 = vadd.f32 %v6512, %v9053
    %v9541 = vadd.f32 %v6744, %v9285
    %v9542 = vadd.f32 %v6976, %v9517
    %v9543 = vadd.f32 %v6282, %v8823
    %v9544 = vadd.f32 %v6514, %v9055
    %v9545 = vadd.f32 %v6746, %v9287
    %v9546 = vadd.f32 %v6978, %v9519
    %v9547 = vadd.f32 %v6285, %v8826
    %v9548 = vadd.f32 %v6517, %v9058
    %v9549 = vadd.f32 %v6749, %v9290
    %v9550 = vadd.f32 %v6981, %v9522
    %v9551 = vadd.f32 %v6287, %v8828
    %v9552 = vadd.f32 %v6519, %v9060
    %v9553 = vadd.f32 %v6751, %v9292
    %v9554 = vadd.f32 %v6983, %v9524
    %v9555 = vadd.f32 %v6290, %v8831
    %v9556 = vadd.f32 %v6522, %v9063
    %v9557 = vadd.f32 %v6754, %v9295
    %v9558 = vadd.f32 %v6986, %v9527
    %v9559 = vadd.f32 %v6292, %v8833
    %v9560 = vadd.f32 %v6524, %v9065
    %v9561 = vadd.f32 %v6756, %v9297
    %v9562 = vadd.f32 %v6988, %v9529
    %v9563 = vld [vmem:[#allocation7] sm:$0xf]
    %v9565 = vperm.slane %v9563, 0
    %v9566 = vperm.slane %v9563, 1
    %v9567 = vperm.slane %v9563, 2
    %v9568 = vperm.slane %v9563, 3
    %v9573 = vadd.f32 %v9531, %v9565
    %v9574 = vadd.f32 %v9532, %v9566
    %v9575 = vadd.f32 %v9533, %v9567
    %v9576 = vadd.f32 %v9534, %v9568
    %v9577 = vadd.f32 %v9535, %v9565
    %v9578 = vadd.f32 %v9536, %v9566
    %v9579 = vadd.f32 %v9537, %v9567
    %v9580 = vadd.f32 %v9538, %v9568
    %v9581 = vadd.f32 %v9539, %v9565
    %v9582 = vadd.f32 %v9540, %v9566
    %v9583 = vadd.f32 %v9541, %v9567
    %v9584 = vadd.f32 %v9542, %v9568
    %v9585 = vadd.f32 %v9543, %v9565
    %v9586 = vadd.f32 %v9544, %v9566
    %v9587 = vadd.f32 %v9545, %v9567
    %v9588 = vadd.f32 %v9546, %v9568
    %v9589 = vadd.f32 %v9547, %v9565
    %v9590 = vadd.f32 %v9548, %v9566
    %v9591 = vadd.f32 %v9549, %v9567
    %v9592 = vadd.f32 %v9550, %v9568
    %v9593 = vadd.f32 %v9551, %v9565
    %v9594 = vadd.f32 %v9552, %v9566
    %v9595 = vadd.f32 %v9553, %v9567
    %v9596 = vadd.f32 %v9554, %v9568
    %v9597 = vadd.f32 %v9555, %v9565
    %v9598 = vadd.f32 %v9556, %v9566
    %v9599 = vadd.f32 %v9557, %v9567
    %v9600 = vadd.f32 %v9558, %v9568
    %v9601 = vadd.f32 %v9559, %v9565
    %v9602 = vadd.f32 %v9560, %v9566
    %v9603 = vadd.f32 %v9561, %v9567
    %v9604 = vadd.f32 %v9562, %v9568
    %v9605 = vmax.f32 %v9573, 0.0
    %v9606 = vmax.f32 %v9574, 0.0
    %v9607 = vmax.f32 %v9575, 0.0
    %v9608 = vmax.f32 %v9576, 0.0
    %v9609 = vmax.f32 %v9577, 0.0
    %v9610 = vmax.f32 %v9578, 0.0
    %v9611 = vmax.f32 %v9579, 0.0
    %v9612 = vmax.f32 %v9580, 0.0
    %v9613 = vmax.f32 %v9581, 0.0
    %v9614 = vmax.f32 %v9582, 0.0
    %v9615 = vmax.f32 %v9583, 0.0
    %v9616 = vmax.f32 %v9584, 0.0
    %v9617 = vmax.f32 %v9585, 0.0
    %v9618 = vmax.f32 %v9586, 0.0
    %v9619 = vmax.f32 %v9587, 0.0
    %v9620 = vmax.f32 %v9588, 0.0
    %v9621 = vmax.f32 %v9589, 0.0
    %v9622 = vmax.f32 %v9590, 0.0
    %v9623 = vmax.f32 %v9591, 0.0
    %v9624 = vmax.f32 %v9592, 0.0
    %v9625 = vmax.f32 %v9593, 0.0
    %v9626 = vmax.f32 %v9594, 0.0
    %v9627 = vmax.f32 %v9595, 0.0
    %v9628 = vmax.f32 %v9596, 0.0
    %v9629 = vmax.f32 %v9597, 0.0
    %v9630 = vmax.f32 %v9598, 0.0
    %v9631 = vmax.f32 %v9599, 0.0
    %v9632 = vmax.f32 %v9600, 0.0
    %v9633 = vmax.f32 %v9601, 0.0
    %v9634 = vmax.f32 %v9602, 0.0
    %v9635 = vmax.f32 %v9603, 0.0
    %v9636 = vmax.f32 %v9604, 0.0
    %v9637 = vpack.c.bf16 %v9606, %v9605
    %v9638 = vpack.c.bf16 %v9608, %v9607
    %v9639 = vpack.c.bf16 %v9610, %v9609
    %v9640 = vpack.c.bf16 %v9612, %v9611
    %v9641 = vpack.c.bf16 %v9614, %v9613
    %v9642 = vpack.c.bf16 %v9616, %v9615
    %v9643 = vpack.c.bf16 %v9618, %v9617
    %v9644 = vpack.c.bf16 %v9620, %v9619
    %v9645 = vpack.c.bf16 %v9622, %v9621
    %v9646 = vpack.c.bf16 %v9624, %v9623
    %v9647 = vpack.c.bf16 %v9626, %v9625
    %v9648 = vpack.c.bf16 %v9628, %v9627
    %v9649 = vpack.c.bf16 %v9630, %v9629
    %v9650 = vpack.c.bf16 %v9632, %v9631
    %v9651 = vpack.c.bf16 %v9634, %v9633
    %v9652 = vpack.c.bf16 %v9636, %v9635
    %v9659 = vunpack.c.l.b16 %v9639
    %v9660 = vunpack.c.h.b16 %v9639
    %v9661 = vunpack.c.l.b16 %v9640
    %v9662 = vunpack.c.h.b16 %v9640
    %v9663 = vunpack.c.l.b16 %v9643
    %v9664 = vunpack.c.h.b16 %v9643
    %v9665 = vunpack.c.l.b16 %v9644
    %v9666 = vunpack.c.h.b16 %v9644
    %v9667 = vunpack.c.l.b16 %v9647
    %v9668 = vunpack.c.h.b16 %v9647
    %v9669 = vunpack.c.l.b16 %v9648
    %v9670 = vunpack.c.h.b16 %v9648
    %v9671 = vld [vmem:[#allocation9] sm:$0xff]
    %v9672 = vld [vmem:[#allocation9 + $0x8] sm:$0xff]
    %v9673 = vld [vmem:[#allocation9 + $0x10] sm:$0xff]
    %v9674 = vld [vmem:[#allocation9 + $0x18] sm:$0xff]
    %v9675 = vld [vmem:[#allocation9 + $0x20] sm:$0xff]
    %v9676 = vld [vmem:[#allocation9 + $0x28] sm:$0xff]
    %v9677 = vld [vmem:[#allocation9 + $0x30] sm:$0xff]
    %v9678 = vld [vmem:[#allocation9 + $0x38] sm:$0xff]
    %v9679 = vld [vmem:[#allocation9 + $0x40] sm:$0xff]
    %v9680 = vld [vmem:[#allocation9 + $0x48] sm:$0xff]
    %v9681 = vld [vmem:[#allocation9 + $0x50] sm:$0xff]
    %v9682 = vld [vmem:[#allocation9 + $0x58] sm:$0xff]
    %v9683 = vld [vmem:[#allocation9 + $0x60] sm:$0xff]
    %v9684 = vld [vmem:[#allocation9 + $0x68] sm:$0xff]
    %v9685 = vld [vmem:[#allocation9 + $0x70] sm:$0xff]
    %v9686 = vld [vmem:[#allocation9 + $0x78] sm:$0xff]
    %v9687 = vld [vmem:[#allocation9 + $0x80] sm:$0xff]
    %v9688 = vld [vmem:[#allocation9 + $0x88] sm:$0xff]
    %v9689 = vld [vmem:[#allocation9 + $0x90] sm:$0xff]
    %v9690 = vld [vmem:[#allocation9 + $0x98] sm:$0xff]
    %v9691 = vld [vmem:[#allocation9 + $0xa0] sm:$0xff]
    %v9692 = vld [vmem:[#allocation9 + $0xa8] sm:$0xff]
    %v9693 = vld [vmem:[#allocation9 + $0xb0] sm:$0xff]
    %v9694 = vld [vmem:[#allocation9 + $0xb8] sm:$0xff]
    %v9695 = vld [vmem:[#allocation9 + $0xc0] sm:$0xff]
    %v9696 = vld [vmem:[#allocation9 + $0xc8] sm:$0xff]
    %v9697 = vld [vmem:[#allocation9 + $0xd0] sm:$0xff]
    %v9698 = vld [vmem:[#allocation9 + $0xd8] sm:$0xff]
    %v9699 = vld [vmem:[#allocation9 + $0xe0] sm:$0xff]
    %v9700 = vld [vmem:[#allocation9 + $0xe8] sm:$0xff]
    %v9701 = vld [vmem:[#allocation9 + $0xf0] sm:$0xff]
    %v9702 = vld [vmem:[#allocation9 + $0xf8] sm:$0xff]
    %v9703 = vld [vmem:[#allocation9 + $0x100] sm:$0xff]
    %v9704 = vld [vmem:[#allocation9 + $0x108] sm:$0xff]
    %v9705 = vld [vmem:[#allocation9 + $0x110] sm:$0xff]
    %v9706 = vld [vmem:[#allocation9 + $0x118] sm:$0xff]
    %v9707 = vld [vmem:[#allocation9 + $0x120] sm:$0xff]
    %v9708 = vld [vmem:[#allocation9 + $0x128] sm:$0xff]
    %v9709 = vld [vmem:[#allocation9 + $0x130] sm:$0xff]
    %v9710 = vld [vmem:[#allocation9 + $0x138] sm:$0xff]
    %v9711 = vld [vmem:[#allocation9 + $0x140] sm:$0xff]
    %v9712 = vld [vmem:[#allocation9 + $0x148] sm:$0xff]
    %v9713 = vld [vmem:[#allocation9 + $0x150] sm:$0xff]
    %v9714 = vld [vmem:[#allocation9 + $0x158] sm:$0xff]
    %v9715 = vld [vmem:[#allocation9 + $0x160] sm:$0xff]
    %v9716 = vld [vmem:[#allocation9 + $0x168] sm:$0xff]
    %v9717 = vld [vmem:[#allocation9 + $0x170] sm:$0xff]
    %v9718 = vld [vmem:[#allocation9 + $0x178] sm:$0xff]
    %v9719 = vld [vmem:[#allocation9 + $0x180] sm:$0xff]
    %v9720 = vld [vmem:[#allocation9 + $0x188] sm:$0xff]
    %v9721 = vld [vmem:[#allocation9 + $0x190] sm:$0xff]
    %v9722 = vld [vmem:[#allocation9 + $0x198] sm:$0xff]
    %v9723 = vld [vmem:[#allocation9 + $0x1a0] sm:$0xff]
    %v9724 = vld [vmem:[#allocation9 + $0x1a8] sm:$0xff]
    %v9725 = vld [vmem:[#allocation9 + $0x1b0] sm:$0xff]
    %v9726 = vld [vmem:[#allocation9 + $0x1b8] sm:$0xff]
    %v9727 = vld [vmem:[#allocation9 + $0x1c0] sm:$0xff]
    %v9728 = vld [vmem:[#allocation9 + $0x1c8] sm:$0xff]
    %v9729 = vld [vmem:[#allocation9 + $0x1d0] sm:$0xff]
    %v9730 = vld [vmem:[#allocation9 + $0x1d8] sm:$0xff]
    %v9731 = vld [vmem:[#allocation9 + $0x1e0] sm:$0xff]
    %v9732 = vld [vmem:[#allocation9 + $0x1e8] sm:$0xff]
    %v9733 = vld [vmem:[#allocation9 + $0x1f0] sm:$0xff]
    %v9734 = vld [vmem:[#allocation9 + $0x1f8] sm:$0xff]
    %s9735 = scalar_lea.vmem [#allocation9], 512
    %v9736 = vld [vmem:[%s9735] sm:$0xff]
    %v9737 = vld [vmem:[%s9735 + $0x8] sm:$0xff]
    %v9738 = vld [vmem:[%s9735 + $0x10] sm:$0xff]
    %v9739 = vld [vmem:[%s9735 + $0x18] sm:$0xff]
    %v9740 = vld [vmem:[%s9735 + $0x20] sm:$0xff]
    %v9741 = vld [vmem:[%s9735 + $0x28] sm:$0xff]
    %v9742 = vld [vmem:[%s9735 + $0x30] sm:$0xff]
    %v9743 = vld [vmem:[%s9735 + $0x38] sm:$0xff]
    %v9744 = vld [vmem:[%s9735 + $0x40] sm:$0xff]
    %v9745 = vld [vmem:[%s9735 + $0x48] sm:$0xff]
    %v9746 = vld [vmem:[%s9735 + $0x50] sm:$0xff]
    %v9747 = vld [vmem:[%s9735 + $0x58] sm:$0xff]
    %v9748 = vld [vmem:[%s9735 + $0x60] sm:$0xff]
    %v9749 = vld [vmem:[%s9735 + $0x68] sm:$0xff]
    %v9750 = vld [vmem:[%s9735 + $0x70] sm:$0xff]
    %v9751 = vld [vmem:[%s9735 + $0x78] sm:$0xff]
    %v9752 = vld [vmem:[%s9735 + $0x80] sm:$0xff]
    %v9753 = vld [vmem:[%s9735 + $0x88] sm:$0xff]
    %v9754 = vld [vmem:[%s9735 + $0x90] sm:$0xff]
    %v9755 = vld [vmem:[%s9735 + $0x98] sm:$0xff]
    %v9756 = vld [vmem:[%s9735 + $0xa0] sm:$0xff]
    %v9757 = vld [vmem:[%s9735 + $0xa8] sm:$0xff]
    %v9758 = vld [vmem:[%s9735 + $0xb0] sm:$0xff]
    %v9759 = vld [vmem:[%s9735 + $0xb8] sm:$0xff]
    %v9760 = vld [vmem:[%s9735 + $0xc0] sm:$0xff]
    %v9761 = vld [vmem:[%s9735 + $0xc8] sm:$0xff]
    %v9762 = vld [vmem:[%s9735 + $0xd0] sm:$0xff]
    %v9763 = vld [vmem:[%s9735 + $0xd8] sm:$0xff]
    %v9764 = vld [vmem:[%s9735 + $0xe0] sm:$0xff]
    %v9765 = vld [vmem:[%s9735 + $0xe8] sm:$0xff]
    %v9766 = vld [vmem:[%s9735 + $0xf0] sm:$0xff]
    %v9767 = vld [vmem:[%s9735 + $0xf8] sm:$0xff]
    %v9768 = vld [vmem:[%s9735 + $0x100] sm:$0xff]
    %v9769 = vld [vmem:[%s9735 + $0x108] sm:$0xff]
    %v9770 = vld [vmem:[%s9735 + $0x110] sm:$0xff]
    %v9771 = vld [vmem:[%s9735 + $0x118] sm:$0xff]
    %v9772 = vld [vmem:[%s9735 + $0x120] sm:$0xff]
    %v9773 = vld [vmem:[%s9735 + $0x128] sm:$0xff]
    %v9774 = vld [vmem:[%s9735 + $0x130] sm:$0xff]
    %v9775 = vld [vmem:[%s9735 + $0x138] sm:$0xff]
    %v9776 = vld [vmem:[%s9735 + $0x140] sm:$0xff]
    %v9777 = vld [vmem:[%s9735 + $0x148] sm:$0xff]
    %v9778 = vld [vmem:[%s9735 + $0x150] sm:$0xff]
    %v9779 = vld [vmem:[%s9735 + $0x158] sm:$0xff]
    %v9780 = vld [vmem:[%s9735 + $0x160] sm:$0xff]
    %v9781 = vld [vmem:[%s9735 + $0x168] sm:$0xff]
    %v9782 = vld [vmem:[%s9735 + $0x170] sm:$0xff]
    %v9783 = vld [vmem:[%s9735 + $0x178] sm:$0xff]
    %v9784 = vld [vmem:[%s9735 + $0x180] sm:$0xff]
    %v9785 = vld [vmem:[%s9735 + $0x188] sm:$0xff]
    %v9786 = vld [vmem:[%s9735 + $0x190] sm:$0xff]
    %v9787 = vld [vmem:[%s9735 + $0x198] sm:$0xff]
    %v9788 = vld [vmem:[%s9735 + $0x1a0] sm:$0xff]
    %v9789 = vld [vmem:[%s9735 + $0x1a8] sm:$0xff]
    %v9790 = vld [vmem:[%s9735 + $0x1b0] sm:$0xff]
    %v9791 = vld [vmem:[%s9735 + $0x1b8] sm:$0xff]
    %v9792 = vld [vmem:[%s9735 + $0x1c0] sm:$0xff]
    %v9793 = vld [vmem:[%s9735 + $0x1c8] sm:$0xff]
    %v9794 = vld [vmem:[%s9735 + $0x1d0] sm:$0xff]
    %v9795 = vld [vmem:[%s9735 + $0x1d8] sm:$0xff]
    %v9796 = vld [vmem:[%s9735 + $0x1e0] sm:$0xff]
    %v9797 = vld [vmem:[%s9735 + $0x1e8] sm:$0xff]
    %v9798 = vld [vmem:[%s9735 + $0x1f0] sm:$0xff]
    %v9799 = vld [vmem:[%s9735 + $0x1f8] sm:$0xff]
    %v9808 = vunpack.c.l.b16 %v9637
    %v9809 = vunpack.c.h.b16 %v9637
    %v9810 = vunpack.c.l.b16 %v9638
    %v9811 = vunpack.c.h.b16 %v9638
    %v9812 = vunpack.c.l.b16 %v9641
    %v9813 = vunpack.c.h.b16 %v9641
    %v9814 = vunpack.c.l.b16 %v9642
    %v9815 = vunpack.c.h.b16 %v9642
    %v9816 = vunpack.c.l.b16 %v9645
    %v9817 = vunpack.c.h.b16 %v9645
    %v9818 = vunpack.c.l.b16 %v9646
    %v9819 = vunpack.c.h.b16 %v9646
    %v9820 = vunpack.c.l.b16 %v9649
    %v9821 = vunpack.c.h.b16 %v9649
    %v9822 = vunpack.c.l.b16 %v9650
    %v9823 = vunpack.c.h.b16 %v9650
    %v9824 = vpack.c.b16 %v9812, %v9808
    %v9825 = vpack.c.b16 %v9813, %v9809
    %v9826 = vpack.c.b16 %v9814, %v9810
    %v9827 = vpack.c.b16 %v9815, %v9811
    %v9828 = vpack.c.b16 %v9820, %v9816
    %v9829 = vpack.c.b16 %v9821, %v9817
    %v9830 = vpack.c.b16 %v9822, %v9818
    %v9831 = vpack.c.b16 %v9823, %v9819
    %v9904 = vunpack.c.l.b16 %v9736
    %v9905 = vunpack.c.h.b16 %v9736
    %v9906 = vunpack.c.l.b16 %v9737
    %v9907 = vunpack.c.h.b16 %v9737
    %v9908 = vunpack.c.l.b16 %v9738
    %v9909 = vunpack.c.h.b16 %v9738
    %v9910 = vunpack.c.l.b16 %v9739
    %v9911 = vunpack.c.h.b16 %v9739
    %v9912 = vunpack.c.l.b16 %v9740
    %v9913 = vunpack.c.h.b16 %v9740
    %v9914 = vunpack.c.l.b16 %v9741
    %v9915 = vunpack.c.h.b16 %v9741
    %v9916 = vunpack.c.l.b16 %v9742
    %v9917 = vunpack.c.h.b16 %v9742
    %v9918 = vunpack.c.l.b16 %v9743
    %v9919 = vunpack.c.h.b16 %v9743
    %v9920 = vunpack.c.l.b16 %v9744
    %v9921 = vunpack.c.h.b16 %v9744
    %v9922 = vunpack.c.l.b16 %v9745
    %v9923 = vunpack.c.h.b16 %v9745
    %v9924 = vunpack.c.l.b16 %v9746
    %v9925 = vunpack.c.h.b16 %v9746
    %v9926 = vunpack.c.l.b16 %v9747
    %v9927 = vunpack.c.h.b16 %v9747
    %v9928 = vunpack.c.l.b16 %v9748
    %v9929 = vunpack.c.h.b16 %v9748
    %v9930 = vunpack.c.l.b16 %v9749
    %v9931 = vunpack.c.h.b16 %v9749
    %v9932 = vunpack.c.l.b16 %v9750
    %v9933 = vunpack.c.h.b16 %v9750
    %v9934 = vunpack.c.l.b16 %v9751
    %v9935 = vunpack.c.h.b16 %v9751
    %v9936 = vunpack.c.l.b16 %v9752
    %v9937 = vunpack.c.h.b16 %v9752
    %v9938 = vunpack.c.l.b16 %v9753
    %v9939 = vunpack.c.h.b16 %v9753
    %v9940 = vunpack.c.l.b16 %v9754
    %v9941 = vunpack.c.h.b16 %v9754
    %v9942 = vunpack.c.l.b16 %v9755
    %v9943 = vunpack.c.h.b16 %v9755
    %v9944 = vunpack.c.l.b16 %v9756
    %v9945 = vunpack.c.h.b16 %v9756
    %v9946 = vunpack.c.l.b16 %v9757
    %v9947 = vunpack.c.h.b16 %v9757
    %v9948 = vunpack.c.l.b16 %v9758
    %v9949 = vunpack.c.h.b16 %v9758
    %v9950 = vunpack.c.l.b16 %v9759
    %v9951 = vunpack.c.h.b16 %v9759
    %v9952 = vunpack.c.l.b16 %v9760
    %v9953 = vunpack.c.h.b16 %v9760
    %v9954 = vunpack.c.l.b16 %v9761
    %v9955 = vunpack.c.h.b16 %v9761
    %v9956 = vunpack.c.l.b16 %v9762
    %v9957 = vunpack.c.h.b16 %v9762
    %v9958 = vunpack.c.l.b16 %v9763
    %v9959 = vunpack.c.h.b16 %v9763
    %v9960 = vunpack.c.l.b16 %v9764
    %v9961 = vunpack.c.h.b16 %v9764
    %v9962 = vunpack.c.l.b16 %v9765
    %v9963 = vunpack.c.h.b16 %v9765
    %v9964 = vunpack.c.l.b16 %v9766
    %v9965 = vunpack.c.h.b16 %v9766
    %v9966 = vunpack.c.l.b16 %v9767
    %v9967 = vunpack.c.h.b16 %v9767
    %v9968 = vunpack.c.l.b16 %v9768
    %v9969 = vunpack.c.h.b16 %v9768
    %v9970 = vunpack.c.l.b16 %v9769
    %v9971 = vunpack.c.h.b16 %v9769
    %v9972 = vunpack.c.l.b16 %v9770
    %v9973 = vunpack.c.h.b16 %v9770
    %v9974 = vunpack.c.l.b16 %v9771
    %v9975 = vunpack.c.h.b16 %v9771
    %v9976 = vunpack.c.l.b16 %v9772
    %v9977 = vunpack.c.h.b16 %v9772
    %v9978 = vunpack.c.l.b16 %v9773
    %v9979 = vunpack.c.h.b16 %v9773
    %v9980 = vunpack.c.l.b16 %v9774
    %v9981 = vunpack.c.h.b16 %v9774
    %v9982 = vunpack.c.l.b16 %v9775
    %v9983 = vunpack.c.h.b16 %v9775
    %v9984 = vunpack.c.l.b16 %v9776
    %v9985 = vunpack.c.h.b16 %v9776
    %v9986 = vunpack.c.l.b16 %v9777
    %v9987 = vunpack.c.h.b16 %v9777
    %v9988 = vunpack.c.l.b16 %v9778
    %v9989 = vunpack.c.h.b16 %v9778
    %v9990 = vunpack.c.l.b16 %v9779
    %v9991 = vunpack.c.h.b16 %v9779
    %v9992 = vunpack.c.l.b16 %v9780
    %v9993 = vunpack.c.h.b16 %v9780
    %v9994 = vunpack.c.l.b16 %v9781
    %v9995 = vunpack.c.h.b16 %v9781
    %v9996 = vunpack.c.l.b16 %v9782
    %v9997 = vunpack.c.h.b16 %v9782
    %v9998 = vunpack.c.l.b16 %v9783
    %v9999 = vunpack.c.h.b16 %v9783
    %v10000 = vunpack.c.l.b16 %v9784
    %v10001 = vunpack.c.h.b16 %v9784
    %v10002 = vunpack.c.l.b16 %v9785
    %v10003 = vunpack.c.h.b16 %v9785
    %v10004 = vunpack.c.l.b16 %v9786
    %v10005 = vunpack.c.h.b16 %v9786
    %v10006 = vunpack.c.l.b16 %v9787
    %v10007 = vunpack.c.h.b16 %v9787
    %v10008 = vunpack.c.l.b16 %v9788
    %v10009 = vunpack.c.h.b16 %v9788
    %v10010 = vunpack.c.l.b16 %v9789
    %v10011 = vunpack.c.h.b16 %v9789
    %v10012 = vunpack.c.l.b16 %v9790
    %v10013 = vunpack.c.h.b16 %v9790
    %v10014 = vunpack.c.l.b16 %v9791
    %v10015 = vunpack.c.h.b16 %v9791
    %v10016 = vunpack.c.l.b16 %v9792
    %v10017 = vunpack.c.h.b16 %v9792
    %v10018 = vunpack.c.l.b16 %v9793
    %v10019 = vunpack.c.h.b16 %v9793
    %v10020 = vunpack.c.l.b16 %v9794
    %v10021 = vunpack.c.h.b16 %v9794
    %v10022 = vunpack.c.l.b16 %v9795
    %v10023 = vunpack.c.h.b16 %v9795
    %v10024 = vunpack.c.l.b16 %v9796
    %v10025 = vunpack.c.h.b16 %v9796
    %v10026 = vunpack.c.l.b16 %v9797
    %v10027 = vunpack.c.h.b16 %v9797
    %v10028 = vunpack.c.l.b16 %v9798
    %v10029 = vunpack.c.h.b16 %v9798
    %v10030 = vunpack.c.l.b16 %v9799
    %v10031 = vunpack.c.h.b16 %v9799
    %v10032 = vpack.c.b16 %v9906, %v9904
    %v10033 = vpack.c.b16 %v9907, %v9905
    %v10034 = vpack.c.b16 %v9910, %v9908
    %v10035 = vpack.c.b16 %v9911, %v9909
    %v10036 = vpack.c.b16 %v9914, %v9912
    %v10037 = vpack.c.b16 %v9915, %v9913
    %v10038 = vpack.c.b16 %v9918, %v9916
    %v10039 = vpack.c.b16 %v9919, %v9917
    %v10040 = vpack.c.b16 %v9922, %v9920
    %v10041 = vpack.c.b16 %v9923, %v9921
    %v10042 = vpack.c.b16 %v9926, %v9924
    %v10043 = vpack.c.b16 %v9927, %v9925
    %v10044 = vpack.c.b16 %v9930, %v9928
    %v10045 = vpack.c.b16 %v9931, %v9929
    %v10046 = vpack.c.b16 %v9934, %v9932
    %v10047 = vpack.c.b16 %v9935, %v9933
    %v10048 = vpack.c.b16 %v9938, %v9936
    %v10049 = vpack.c.b16 %v9939, %v9937
    %v10050 = vpack.c.b16 %v9942, %v9940
    %v10051 = vpack.c.b16 %v9943, %v9941
    %v10052 = vpack.c.b16 %v9946, %v9944
    %v10053 = vpack.c.b16 %v9947, %v9945
    %v10054 = vpack.c.b16 %v9950, %v9948
    %v10055 = vpack.c.b16 %v9951, %v9949
    %v10056 = vpack.c.b16 %v9954, %v9952
    %v10057 = vpack.c.b16 %v9955, %v9953
    %v10058 = vpack.c.b16 %v9958, %v9956
    %v10059 = vpack.c.b16 %v9959, %v9957
    %v10060 = vpack.c.b16 %v9962, %v9960
    %v10061 = vpack.c.b16 %v9963, %v9961
    %v10062 = vpack.c.b16 %v9966, %v9964
    %v10063 = vpack.c.b16 %v9967, %v9965
    %v10064 = vpack.c.b16 %v9970, %v9968
    %v10065 = vpack.c.b16 %v9971, %v9969
    %v10066 = vpack.c.b16 %v9974, %v9972
    %v10067 = vpack.c.b16 %v9975, %v9973
    %v10068 = vpack.c.b16 %v9978, %v9976
    %v10069 = vpack.c.b16 %v9979, %v9977
    %v10070 = vpack.c.b16 %v9982, %v9980
    %v10071 = vpack.c.b16 %v9983, %v9981
    %v10072 = vpack.c.b16 %v9986, %v9984
    %v10073 = vpack.c.b16 %v9987, %v9985
    %v10074 = vpack.c.b16 %v9990, %v9988
    %v10075 = vpack.c.b16 %v9991, %v9989
    %v10076 = vpack.c.b16 %v9994, %v9992
    %v10077 = vpack.c.b16 %v9995, %v9993
    %v10078 = vpack.c.b16 %v9998, %v9996
    %v10079 = vpack.c.b16 %v9999, %v9997
    %v10080 = vpack.c.b16 %v10002, %v10000
    %v10081 = vpack.c.b16 %v10003, %v10001
    %v10082 = vpack.c.b16 %v10006, %v10004
    %v10083 = vpack.c.b16 %v10007, %v10005
    %v10084 = vpack.c.b16 %v10010, %v10008
    %v10085 = vpack.c.b16 %v10011, %v10009
    %v10086 = vpack.c.b16 %v10014, %v10012
    %v10087 = vpack.c.b16 %v10015, %v10013
    %v10088 = vpack.c.b16 %v10018, %v10016
    %v10089 = vpack.c.b16 %v10019, %v10017
    %v10090 = vpack.c.b16 %v10022, %v10020
    %v10091 = vpack.c.b16 %v10023, %v10021
    %v10092 = vpack.c.b16 %v10026, %v10024
    %v10093 = vpack.c.b16 %v10027, %v10025
    %v10094 = vpack.c.b16 %v10030, %v10028
    %v10095 = vpack.c.b16 %v10031, %v10029
    %10160 = vmatpush.bf16.msra.mxu0 %v10046
    %10161 = vmatpush.bf16.msra.mxu0 %v10044
    %10162 = vmatpush.bf16.msra.mxu0 %v10042
    %10163 = vmatpush.bf16.msra.mxu0 %v10040
    %10164 = vmatpush.bf16.msra.mxu0 %v10038
    %10165 = vmatpush.bf16.msra.mxu0 %v10036
    %10166 = vmatpush.bf16.msra.mxu0 %v10034
    %10167 = vmatpush.bf16.msra.mxu0 %v10032
    %10168 = vmatmul.bf16.gmra.mxu0 %v9824
    %v10169 = vpop.f32.mrf.mxu0
    %v10170 = vadd.f32 0.0, %v10169
    %v10171 = vpop.f32.mrf.mxu0
    %v10172 = vadd.f32 0.0, %v10171
    %10173 = vmatmul.bf16.gmra.mxu0 %v9828
    %v10174 = vpop.f32.mrf.mxu0
    %v10175 = vadd.f32 0.0, %v10174
    %v10176 = vpop.f32.mrf.mxu0
    %v10177 = vadd.f32 0.0, %v10176
    %10178 = vdwg.mxu0
    %10179 = vmatpush.bf16.msra.mxu0 %v10062
    %10180 = vmatpush.bf16.msra.mxu0 %v10060
    %10181 = vmatpush.bf16.msra.mxu0 %v10058
    %10182 = vmatpush.bf16.msra.mxu0 %v10056
    %10183 = vmatpush.bf16.msra.mxu0 %v10054
    %10184 = vmatpush.bf16.msra.mxu0 %v10052
    %10185 = vmatpush.bf16.msra.mxu0 %v10050
    %10186 = vmatpush.bf16.msra.mxu0 %v10048
    %10187 = vmatmul.bf16.gmra.mxu0 %v9825
    %v10188 = vpop.f32.mrf.mxu0
    %v10189 = vadd.f32 %v10170, %v10188
    %v10190 = vpop.f32.mrf.mxu0
    %v10191 = vadd.f32 %v10172, %v10190
    %10192 = vmatmul.bf16.gmra.mxu0 %v9829
    %v10193 = vpop.f32.mrf.mxu0
    %v10194 = vadd.f32 %v10175, %v10193
    %v10195 = vpop.f32.mrf.mxu0
    %v10196 = vadd.f32 %v10177, %v10195
    %10197 = vdwg.mxu0
    %10198 = vmatpush.bf16.msra.mxu0 %v10078
    %10199 = vmatpush.bf16.msra.mxu0 %v10076
    %10200 = vmatpush.bf16.msra.mxu0 %v10074
    %10201 = vmatpush.bf16.msra.mxu0 %v10072
    %10202 = vmatpush.bf16.msra.mxu0 %v10070
    %10203 = vmatpush.bf16.msra.mxu0 %v10068
    %10204 = vmatpush.bf16.msra.mxu0 %v10066
    %10205 = vmatpush.bf16.msra.mxu0 %v10064
    %10206 = vmatmul.bf16.gmra.mxu0 %v9826
    %v10207 = vpop.f32.mrf.mxu0
    %v10208 = vadd.f32 %v10189, %v10207
    %v10209 = vpop.f32.mrf.mxu0
    %v10210 = vadd.f32 %v10191, %v10209
    %10211 = vmatmul.bf16.gmra.mxu0 %v9830
    %v10212 = vpop.f32.mrf.mxu0
    %v10213 = vadd.f32 %v10194, %v10212
    %v10214 = vpop.f32.mrf.mxu0
    %v10215 = vadd.f32 %v10196, %v10214
    %10216 = vdwg.mxu0
    %10217 = vmatpush.bf16.msra.mxu0 %v10094
    %10218 = vmatpush.bf16.msra.mxu0 %v10092
    %10219 = vmatpush.bf16.msra.mxu0 %v10090
    %10220 = vmatpush.bf16.msra.mxu0 %v10088
    %10221 = vmatpush.bf16.msra.mxu0 %v10086
    %10222 = vmatpush.bf16.msra.mxu0 %v10084
    %10223 = vmatpush.bf16.msra.mxu0 %v10082
    %10224 = vmatpush.bf16.msra.mxu0 %v10080
    %10225 = vmatmul.bf16.gmra.mxu0 %v9827
    %v10226 = vpop.f32.mrf.mxu0
    %v10227 = vadd.f32 %v10208, %v10226
    %v10228 = vpop.f32.mrf.mxu0
    %v10229 = vadd.f32 %v10210, %v10228
    %10230 = vmatmul.bf16.gmra.mxu0 %v9831
    %v10231 = vpop.f32.mrf.mxu0
    %v10232 = vadd.f32 %v10213, %v10231
    %v10233 = vpop.f32.mrf.mxu0
    %v10234 = vadd.f32 %v10215, %v10233
    %10235 = vdwg.mxu0
    %10236 = vmatpush.bf16.msra.mxu0 %v10047
    %10237 = vmatpush.bf16.msra.mxu0 %v10045
    %10238 = vmatpush.bf16.msra.mxu0 %v10043
    %10239 = vmatpush.bf16.msra.mxu0 %v10041
    %10240 = vmatpush.bf16.msra.mxu0 %v10039
    %10241 = vmatpush.bf16.msra.mxu0 %v10037
    %10242 = vmatpush.bf16.msra.mxu0 %v10035
    %10243 = vmatpush.bf16.msra.mxu0 %v10033
    %10244 = vmatmul.bf16.gmra.mxu0 %v9824
    %v10245 = vpop.f32.mrf.mxu0
    %v10246 = vadd.f32 0.0, %v10245
    %v10247 = vpop.f32.mrf.mxu0
    %v10248 = vadd.f32 0.0, %v10247
    %10249 = vmatmul.bf16.gmra.mxu0 %v9828
    %v10250 = vpop.f32.mrf.mxu0
    %v10251 = vadd.f32 0.0, %v10250
    %v10252 = vpop.f32.mrf.mxu0
    %v10253 = vadd.f32 0.0, %v10252
    %10254 = vdwg.mxu0
    %10255 = vmatpush.bf16.msra.mxu0 %v10063
    %10256 = vmatpush.bf16.msra.mxu0 %v10061
    %10257 = vmatpush.bf16.msra.mxu0 %v10059
    %10258 = vmatpush.bf16.msra.mxu0 %v10057
    %10259 = vmatpush.bf16.msra.mxu0 %v10055
    %10260 = vmatpush.bf16.msra.mxu0 %v10053
    %10261 = vmatpush.bf16.msra.mxu0 %v10051
    %10262 = vmatpush.bf16.msra.mxu0 %v10049
    %10263 = vmatmul.bf16.gmra.mxu0 %v9825
    %v10264 = vpop.f32.mrf.mxu0
    %v10265 = vadd.f32 %v10246, %v10264
    %v10266 = vpop.f32.mrf.mxu0
    %v10267 = vadd.f32 %v10248, %v10266
    %10268 = vmatmul.bf16.gmra.mxu0 %v9829
    %v10269 = vpop.f32.mrf.mxu0
    %v10270 = vadd.f32 %v10251, %v10269
    %v10271 = vpop.f32.mrf.mxu0
    %v10272 = vadd.f32 %v10253, %v10271
    %10273 = vdwg.mxu0
    %10274 = vmatpush.bf16.msra.mxu0 %v10079
    %10275 = vmatpush.bf16.msra.mxu0 %v10077
    %10276 = vmatpush.bf16.msra.mxu0 %v10075
    %10277 = vmatpush.bf16.msra.mxu0 %v10073
    %10278 = vmatpush.bf16.msra.mxu0 %v10071
    %10279 = vmatpush.bf16.msra.mxu0 %v10069
    %10280 = vmatpush.bf16.msra.mxu0 %v10067
    %10281 = vmatpush.bf16.msra.mxu0 %v10065
    %10282 = vmatmul.bf16.gmra.mxu0 %v9826
    %v10283 = vpop.f32.mrf.mxu0
    %v10284 = vadd.f32 %v10265, %v10283
    %v10285 = vpop.f32.mrf.mxu0
    %v10286 = vadd.f32 %v10267, %v10285
    %10287 = vmatmul.bf16.gmra.mxu0 %v9830
    %v10288 = vpop.f32.mrf.mxu0
    %v10289 = vadd.f32 %v10270, %v10288
    %v10290 = vpop.f32.mrf.mxu0
    %v10291 = vadd.f32 %v10272, %v10290
    %10292 = vdwg.mxu0
    %10293 = vmatpush.bf16.msra.mxu0 %v10095
    %10294 = vmatpush.bf16.msra.mxu0 %v10093
    %10295 = vmatpush.bf16.msra.mxu0 %v10091
    %10296 = vmatpush.bf16.msra.mxu0 %v10089
    %10297 = vmatpush.bf16.msra.mxu0 %v10087
    %10298 = vmatpush.bf16.msra.mxu0 %v10085
    %10299 = vmatpush.bf16.msra.mxu0 %v10083
    %10300 = vmatpush.bf16.msra.mxu0 %v10081
    %10301 = vmatmul.bf16.gmra.mxu0 %v9827
    %v10302 = vpop.f32.mrf.mxu0
    %v10303 = vadd.f32 %v10284, %v10302
    %v10304 = vpop.f32.mrf.mxu0
    %v10305 = vadd.f32 %v10286, %v10304
    %10306 = vmatmul.bf16.gmra.mxu0 %v9831
    %v10307 = vpop.f32.mrf.mxu0
    %v10308 = vadd.f32 %v10289, %v10307
    %v10309 = vpop.f32.mrf.mxu0
    %v10310 = vadd.f32 %v10291, %v10309
    %10311 = vdwg.mxu0
    %v10312 = vpack.c.b16 %v9659, %v1836
    %v10313 = vpack.c.b16 %v9660, %v1836
    %v10314 = vpack.c.b16 %v9661, %v1836
    %v10315 = vpack.c.b16 %v9662, %v1836
    %v10316 = vpack.c.b16 %v9667, %v9663
    %v10317 = vpack.c.b16 %v9668, %v9664
    %v10318 = vpack.c.b16 %v9669, %v9665
    %v10319 = vpack.c.b16 %v9670, %v9666
    %v10392 = vunpack.c.l.b16 %v9671
    %v10393 = vunpack.c.h.b16 %v9671
    %v10394 = vunpack.c.l.b16 %v9672
    %v10395 = vunpack.c.h.b16 %v9672
    %v10396 = vunpack.c.l.b16 %v9673
    %v10397 = vunpack.c.h.b16 %v9673
    %v10398 = vunpack.c.l.b16 %v9674
    %v10399 = vunpack.c.h.b16 %v9674
    %v10400 = vunpack.c.l.b16 %v9675
    %v10401 = vunpack.c.h.b16 %v9675
    %v10402 = vunpack.c.l.b16 %v9676
    %v10403 = vunpack.c.h.b16 %v9676
    %v10404 = vunpack.c.l.b16 %v9677
    %v10405 = vunpack.c.h.b16 %v9677
    %v10406 = vunpack.c.l.b16 %v9678
    %v10407 = vunpack.c.h.b16 %v9678
    %v10408 = vunpack.c.l.b16 %v9679
    %v10409 = vunpack.c.h.b16 %v9679
    %v10410 = vunpack.c.l.b16 %v9680
    %v10411 = vunpack.c.h.b16 %v9680
    %v10412 = vunpack.c.l.b16 %v9681
    %v10413 = vunpack.c.h.b16 %v9681
    %v10414 = vunpack.c.l.b16 %v9682
    %v10415 = vunpack.c.h.b16 %v9682
    %v10416 = vunpack.c.l.b16 %v9683
    %v10417 = vunpack.c.h.b16 %v9683
    %v10418 = vunpack.c.l.b16 %v9684
    %v10419 = vunpack.c.h.b16 %v9684
    %v10420 = vunpack.c.l.b16 %v9685
    %v10421 = vunpack.c.h.b16 %v9685
    %v10422 = vunpack.c.l.b16 %v9686
    %v10423 = vunpack.c.h.b16 %v9686
    %v10424 = vunpack.c.l.b16 %v9687
    %v10425 = vunpack.c.h.b16 %v9687
    %v10426 = vunpack.c.l.b16 %v9688
    %v10427 = vunpack.c.h.b16 %v9688
    %v10428 = vunpack.c.l.b16 %v9689
    %v10429 = vunpack.c.h.b16 %v9689
    %v10430 = vunpack.c.l.b16 %v9690
    %v10431 = vunpack.c.h.b16 %v9690
    %v10432 = vunpack.c.l.b16 %v9691
    %v10433 = vunpack.c.h.b16 %v9691
    %v10434 = vunpack.c.l.b16 %v9692
    %v10435 = vunpack.c.h.b16 %v9692
    %v10436 = vunpack.c.l.b16 %v9693
    %v10437 = vunpack.c.h.b16 %v9693
    %v10438 = vunpack.c.l.b16 %v9694
    %v10439 = vunpack.c.h.b16 %v9694
    %v10440 = vunpack.c.l.b16 %v9695
    %v10441 = vunpack.c.h.b16 %v9695
    %v10442 = vunpack.c.l.b16 %v9696
    %v10443 = vunpack.c.h.b16 %v9696
    %v10444 = vunpack.c.l.b16 %v9697
    %v10445 = vunpack.c.h.b16 %v9697
    %v10446 = vunpack.c.l.b16 %v9698
    %v10447 = vunpack.c.h.b16 %v9698
    %v10448 = vunpack.c.l.b16 %v9699
    %v10449 = vunpack.c.h.b16 %v9699
    %v10450 = vunpack.c.l.b16 %v9700
    %v10451 = vunpack.c.h.b16 %v9700
    %v10452 = vunpack.c.l.b16 %v9701
    %v10453 = vunpack.c.h.b16 %v9701
    %v10454 = vunpack.c.l.b16 %v9702
    %v10455 = vunpack.c.h.b16 %v9702
    %v10456 = vunpack.c.l.b16 %v9703
    %v10457 = vunpack.c.h.b16 %v9703
    %v10458 = vunpack.c.l.b16 %v9704
    %v10459 = vunpack.c.h.b16 %v9704
    %v10460 = vunpack.c.l.b16 %v9705
    %v10461 = vunpack.c.h.b16 %v9705
    %v10462 = vunpack.c.l.b16 %v9706
    %v10463 = vunpack.c.h.b16 %v9706
    %v10464 = vunpack.c.l.b16 %v9707
    %v10465 = vunpack.c.h.b16 %v9707
    %v10466 = vunpack.c.l.b16 %v9708
    %v10467 = vunpack.c.h.b16 %v9708
    %v10468 = vunpack.c.l.b16 %v9709
    %v10469 = vunpack.c.h.b16 %v9709
    %v10470 = vunpack.c.l.b16 %v9710
    %v10471 = vunpack.c.h.b16 %v9710
    %v10472 = vunpack.c.l.b16 %v9711
    %v10473 = vunpack.c.h.b16 %v9711
    %v10474 = vunpack.c.l.b16 %v9712
    %v10475 = vunpack.c.h.b16 %v9712
    %v10476 = vunpack.c.l.b16 %v9713
    %v10477 = vunpack.c.h.b16 %v9713
    %v10478 = vunpack.c.l.b16 %v9714
    %v10479 = vunpack.c.h.b16 %v9714
    %v10480 = vunpack.c.l.b16 %v9715
    %v10481 = vunpack.c.h.b16 %v9715
    %v10482 = vunpack.c.l.b16 %v9716
    %v10483 = vunpack.c.h.b16 %v9716
    %v10484 = vunpack.c.l.b16 %v9717
    %v10485 = vunpack.c.h.b16 %v9717
    %v10486 = vunpack.c.l.b16 %v9718
    %v10487 = vunpack.c.h.b16 %v9718
    %v10488 = vunpack.c.l.b16 %v9719
    %v10489 = vunpack.c.h.b16 %v9719
    %v10490 = vunpack.c.l.b16 %v9720
    %v10491 = vunpack.c.h.b16 %v9720
    %v10492 = vunpack.c.l.b16 %v9721
    %v10493 = vunpack.c.h.b16 %v9721
    %v10494 = vunpack.c.l.b16 %v9722
    %v10495 = vunpack.c.h.b16 %v9722
    %v10496 = vunpack.c.l.b16 %v9723
    %v10497 = vunpack.c.h.b16 %v9723
    %v10498 = vunpack.c.l.b16 %v9724
    %v10499 = vunpack.c.h.b16 %v9724
    %v10500 = vunpack.c.l.b16 %v9725
    %v10501 = vunpack.c.h.b16 %v9725
    %v10502 = vunpack.c.l.b16 %v9726
    %v10503 = vunpack.c.h.b16 %v9726
    %v10504 = vunpack.c.l.b16 %v9727
    %v10505 = vunpack.c.h.b16 %v9727
    %v10506 = vunpack.c.l.b16 %v9728
    %v10507 = vunpack.c.h.b16 %v9728
    %v10508 = vunpack.c.l.b16 %v9729
    %v10509 = vunpack.c.h.b16 %v9729
    %v10510 = vunpack.c.l.b16 %v9730
    %v10511 = vunpack.c.h.b16 %v9730
    %v10512 = vunpack.c.l.b16 %v9731
    %v10513 = vunpack.c.h.b16 %v9731
    %v10514 = vunpack.c.l.b16 %v9732
    %v10515 = vunpack.c.h.b16 %v9732
    %v10516 = vunpack.c.l.b16 %v9733
    %v10517 = vunpack.c.h.b16 %v9733
    %v10518 = vunpack.c.l.b16 %v9734
    %v10519 = vunpack.c.h.b16 %v9734
    %v10520 = vpack.c.b16 %v10394, %v10392
    %v10521 = vpack.c.b16 %v10395, %v10393
    %v10522 = vpack.c.b16 %v10398, %v10396
    %v10523 = vpack.c.b16 %v10399, %v10397
    %v10524 = vpack.c.b16 %v10402, %v10400
    %v10525 = vpack.c.b16 %v10403, %v10401
    %v10526 = vpack.c.b16 %v10406, %v10404
    %v10527 = vpack.c.b16 %v10407, %v10405
    %v10528 = vpack.c.b16 %v10410, %v10408
    %v10529 = vpack.c.b16 %v10411, %v10409
    %v10530 = vpack.c.b16 %v10414, %v10412
    %v10531 = vpack.c.b16 %v10415, %v10413
    %v10532 = vpack.c.b16 %v10418, %v10416
    %v10533 = vpack.c.b16 %v10419, %v10417
    %v10534 = vpack.c.b16 %v10422, %v10420
    %v10535 = vpack.c.b16 %v10423, %v10421
    %v10536 = vpack.c.b16 %v10426, %v10424
    %v10537 = vpack.c.b16 %v10427, %v10425
    %v10538 = vpack.c.b16 %v10430, %v10428
    %v10539 = vpack.c.b16 %v10431, %v10429
    %v10540 = vpack.c.b16 %v10434, %v10432
    %v10541 = vpack.c.b16 %v10435, %v10433
    %v10542 = vpack.c.b16 %v10438, %v10436
    %v10543 = vpack.c.b16 %v10439, %v10437
    %v10544 = vpack.c.b16 %v10442, %v10440
    %v10545 = vpack.c.b16 %v10443, %v10441
    %v10546 = vpack.c.b16 %v10446, %v10444
    %v10547 = vpack.c.b16 %v10447, %v10445
    %v10548 = vpack.c.b16 %v10450, %v10448
    %v10549 = vpack.c.b16 %v10451, %v10449
    %v10550 = vpack.c.b16 %v10454, %v10452
    %v10551 = vpack.c.b16 %v10455, %v10453
    %v10552 = vpack.c.b16 %v10458, %v10456
    %v10553 = vpack.c.b16 %v10459, %v10457
    %v10554 = vpack.c.b16 %v10462, %v10460
    %v10555 = vpack.c.b16 %v10463, %v10461
    %v10556 = vpack.c.b16 %v10466, %v10464
    %v10557 = vpack.c.b16 %v10467, %v10465
    %v10558 = vpack.c.b16 %v10470, %v10468
    %v10559 = vpack.c.b16 %v10471, %v10469
    %v10560 = vpack.c.b16 %v10474, %v10472
    %v10561 = vpack.c.b16 %v10475, %v10473
    %v10562 = vpack.c.b16 %v10478, %v10476
    %v10563 = vpack.c.b16 %v10479, %v10477
    %v10564 = vpack.c.b16 %v10482, %v10480
    %v10565 = vpack.c.b16 %v10483, %v10481
    %v10566 = vpack.c.b16 %v10486, %v10484
    %v10567 = vpack.c.b16 %v10487, %v10485
    %v10568 = vpack.c.b16 %v10490, %v10488
    %v10569 = vpack.c.b16 %v10491, %v10489
    %v10570 = vpack.c.b16 %v10494, %v10492
    %v10571 = vpack.c.b16 %v10495, %v10493
    %v10572 = vpack.c.b16 %v10498, %v10496
    %v10573 = vpack.c.b16 %v10499, %v10497
    %v10574 = vpack.c.b16 %v10502, %v10500
    %v10575 = vpack.c.b16 %v10503, %v10501
    %v10576 = vpack.c.b16 %v10506, %v10504
    %v10577 = vpack.c.b16 %v10507, %v10505
    %v10578 = vpack.c.b16 %v10510, %v10508
    %v10579 = vpack.c.b16 %v10511, %v10509
    %v10580 = vpack.c.b16 %v10514, %v10512
    %v10581 = vpack.c.b16 %v10515, %v10513
    %v10582 = vpack.c.b16 %v10518, %v10516
    %v10583 = vpack.c.b16 %v10519, %v10517
    %10648 = vmatpush.bf16.msra.mxu0 %v10534
    %10649 = vmatpush.bf16.msra.mxu0 %v10532
    %10650 = vmatpush.bf16.msra.mxu0 %v10530
    %10651 = vmatpush.bf16.msra.mxu0 %v10528
    %10652 = vmatpush.bf16.msra.mxu0 %v10526
    %10653 = vmatpush.bf16.msra.mxu0 %v10524
    %10654 = vmatpush.bf16.msra.mxu0 %v10522
    %10655 = vmatpush.bf16.msra.mxu0 %v10520
    %10656 = vmatmul.bf16.gmra.mxu0 %v10312
    %v10657 = vpop.f32.mrf.mxu0
    %v10658 = vadd.f32 %v10227, %v10657
    %v10659 = vpop.f32.mrf.mxu0
    %v10660 = vadd.f32 %v10229, %v10659
    %10661 = vmatmul.bf16.gmra.mxu0 %v10316
    %v10662 = vpop.f32.mrf.mxu0
    %v10663 = vadd.f32 %v10232, %v10662
    %v10664 = vpop.f32.mrf.mxu0
    %v10665 = vadd.f32 %v10234, %v10664
    %10666 = vdwg.mxu0
    %10667 = vmatpush.bf16.msra.mxu0 %v10550
    %10668 = vmatpush.bf16.msra.mxu0 %v10548
    %10669 = vmatpush.bf16.msra.mxu0 %v10546
    %10670 = vmatpush.bf16.msra.mxu0 %v10544
    %10671 = vmatpush.bf16.msra.mxu0 %v10542
    %10672 = vmatpush.bf16.msra.mxu0 %v10540
    %10673 = vmatpush.bf16.msra.mxu0 %v10538
    %10674 = vmatpush.bf16.msra.mxu0 %v10536
    %10675 = vmatmul.bf16.gmra.mxu0 %v10313
    %v10676 = vpop.f32.mrf.mxu0
    %v10677 = vadd.f32 %v10658, %v10676
    %v10678 = vpop.f32.mrf.mxu0
    %v10679 = vadd.f32 %v10660, %v10678
    %10680 = vmatmul.bf16.gmra.mxu0 %v10317
    %v10681 = vpop.f32.mrf.mxu0
    %v10682 = vadd.f32 %v10663, %v10681
    %v10683 = vpop.f32.mrf.mxu0
    %v10684 = vadd.f32 %v10665, %v10683
    %10685 = vdwg.mxu0
    %10686 = vmatpush.bf16.msra.mxu0 %v10566
    %10687 = vmatpush.bf16.msra.mxu0 %v10564
    %10688 = vmatpush.bf16.msra.mxu0 %v10562
    %10689 = vmatpush.bf16.msra.mxu0 %v10560
    %10690 = vmatpush.bf16.msra.mxu0 %v10558
    %10691 = vmatpush.bf16.msra.mxu0 %v10556
    %10692 = vmatpush.bf16.msra.mxu0 %v10554
    %10693 = vmatpush.bf16.msra.mxu0 %v10552
    %10694 = vmatmul.bf16.gmra.mxu0 %v10314
    %v10695 = vpop.f32.mrf.mxu0
    %v10696 = vadd.f32 %v10677, %v10695
    %v10697 = vpop.f32.mrf.mxu0
    %v10698 = vadd.f32 %v10679, %v10697
    %10699 = vmatmul.bf16.gmra.mxu0 %v10318
    %v10700 = vpop.f32.mrf.mxu0
    %v10701 = vadd.f32 %v10682, %v10700
    %v10702 = vpop.f32.mrf.mxu0
    %v10703 = vadd.f32 %v10684, %v10702
    %10704 = vdwg.mxu0
    %10705 = vmatpush.bf16.msra.mxu0 %v10582
    %10706 = vmatpush.bf16.msra.mxu0 %v10580
    %10707 = vmatpush.bf16.msra.mxu0 %v10578
    %10708 = vmatpush.bf16.msra.mxu0 %v10576
    %10709 = vmatpush.bf16.msra.mxu0 %v10574
    %10710 = vmatpush.bf16.msra.mxu0 %v10572
    %10711 = vmatpush.bf16.msra.mxu0 %v10570
    %10712 = vmatpush.bf16.msra.mxu0 %v10568
    %10713 = vmatmul.bf16.gmra.mxu0 %v10315
    %v10714 = vpop.f32.mrf.mxu0
    %v10715 = vadd.f32 %v10696, %v10714
    %v10716 = vpop.f32.mrf.mxu0
    %v10717 = vadd.f32 %v10698, %v10716
    %10718 = vmatmul.bf16.gmra.mxu0 %v10319
    %v10719 = vpop.f32.mrf.mxu0
    %v10720 = vadd.f32 %v10701, %v10719
    %v10721 = vpop.f32.mrf.mxu0
    %v10722 = vadd.f32 %v10703, %v10721
    %10723 = vdwg.mxu0
    %10724 = vmatpush.bf16.msra.mxu0 %v10535
    %10725 = vmatpush.bf16.msra.mxu0 %v10533
    %10726 = vmatpush.bf16.msra.mxu0 %v10531
    %10727 = vmatpush.bf16.msra.mxu0 %v10529
    %10728 = vmatpush.bf16.msra.mxu0 %v10527
    %10729 = vmatpush.bf16.msra.mxu0 %v10525
    %10730 = vmatpush.bf16.msra.mxu0 %v10523
    %10731 = vmatpush.bf16.msra.mxu0 %v10521
    %10732 = vmatmul.bf16.gmra.mxu0 %v10312
    %v10733 = vpop.f32.mrf.mxu0
    %v10734 = vadd.f32 %v10303, %v10733
    %v10735 = vpop.f32.mrf.mxu0
    %v10736 = vadd.f32 %v10305, %v10735
    %10737 = vmatmul.bf16.gmra.mxu0 %v10316
    %v10738 = vpop.f32.mrf.mxu0
    %v10739 = vadd.f32 %v10308, %v10738
    %v10740 = vpop.f32.mrf.mxu0
    %v10741 = vadd.f32 %v10310, %v10740
    %10742 = vdwg.mxu0
    %10743 = vmatpush.bf16.msra.mxu0 %v10551
    %10744 = vmatpush.bf16.msra.mxu0 %v10549
    %10745 = vmatpush.bf16.msra.mxu0 %v10547
    %10746 = vmatpush.bf16.msra.mxu0 %v10545
    %10747 = vmatpush.bf16.msra.mxu0 %v10543
    %10748 = vmatpush.bf16.msra.mxu0 %v10541
    %10749 = vmatpush.bf16.msra.mxu0 %v10539
    %10750 = vmatpush.bf16.msra.mxu0 %v10537
    %10751 = vmatmul.bf16.gmra.mxu0 %v10313
    %v10752 = vpop.f32.mrf.mxu0
    %v10753 = vadd.f32 %v10734, %v10752
    %v10754 = vpop.f32.mrf.mxu0
    %v10755 = vadd.f32 %v10736, %v10754
    %10756 = vmatmul.bf16.gmra.mxu0 %v10317
    %v10757 = vpop.f32.mrf.mxu0
    %v10758 = vadd.f32 %v10739, %v10757
    %v10759 = vpop.f32.mrf.mxu0
    %v10760 = vadd.f32 %v10741, %v10759
    %10761 = vdwg.mxu0
    %10762 = vmatpush.bf16.msra.mxu0 %v10567
    %10763 = vmatpush.bf16.msra.mxu0 %v10565
    %10764 = vmatpush.bf16.msra.mxu0 %v10563
    %10765 = vmatpush.bf16.msra.mxu0 %v10561
    %10766 = vmatpush.bf16.msra.mxu0 %v10559
    %10767 = vmatpush.bf16.msra.mxu0 %v10557
    %10768 = vmatpush.bf16.msra.mxu0 %v10555
    %10769 = vmatpush.bf16.msra.mxu0 %v10553
    %10770 = vmatmul.bf16.gmra.mxu0 %v10314
    %v10771 = vpop.f32.mrf.mxu0
    %v10772 = vadd.f32 %v10753, %v10771
    %v10773 = vpop.f32.mrf.mxu0
    %v10774 = vadd.f32 %v10755, %v10773
    %10775 = vmatmul.bf16.gmra.mxu0 %v10318
    %v10776 = vpop.f32.mrf.mxu0
    %v10777 = vadd.f32 %v10758, %v10776
    %v10778 = vpop.f32.mrf.mxu0
    %v10779 = vadd.f32 %v10760, %v10778
    %10780 = vdwg.mxu0
    %10781 = vmatpush.bf16.msra.mxu0 %v10583
    %10782 = vmatpush.bf16.msra.mxu0 %v10581
    %10783 = vmatpush.bf16.msra.mxu0 %v10579
    %10784 = vmatpush.bf16.msra.mxu0 %v10577
    %10785 = vmatpush.bf16.msra.mxu0 %v10575
    %10786 = vmatpush.bf16.msra.mxu0 %v10573
    %10787 = vmatpush.bf16.msra.mxu0 %v10571
    %10788 = vmatpush.bf16.msra.mxu0 %v10569
    %10789 = vmatmul.bf16.gmra.mxu0 %v10315
    %v10790 = vpop.f32.mrf.mxu0
    %v10791 = vadd.f32 %v10772, %v10790
    %v10792 = vpop.f32.mrf.mxu0
    %v10793 = vadd.f32 %v10774, %v10792
    %10794 = vmatmul.bf16.gmra.mxu0 %v10319
    %v10795 = vpop.f32.mrf.mxu0
    %v10796 = vadd.f32 %v10777, %v10795
    %v10797 = vpop.f32.mrf.mxu0
    %v10798 = vadd.f32 %v10779, %v10797
    %10799 = vdwg.mxu0
    %s10800 = scalar_lea.vmem [#allocation9], 1024
    %v10801 = vld [vmem:[%s10800] sm:$0xff]
    %v10802 = vld [vmem:[%s10800 + $0x8] sm:$0xff]
    %v10803 = vld [vmem:[%s10800 + $0x10] sm:$0xff]
    %v10804 = vld [vmem:[%s10800 + $0x18] sm:$0xff]
    %v10805 = vld [vmem:[%s10800 + $0x20] sm:$0xff]
    %v10806 = vld [vmem:[%s10800 + $0x28] sm:$0xff]
    %v10807 = vld [vmem:[%s10800 + $0x30] sm:$0xff]
    %v10808 = vld [vmem:[%s10800 + $0x38] sm:$0xff]
    %v10809 = vld [vmem:[%s10800 + $0x40] sm:$0xff]
    %v10810 = vld [vmem:[%s10800 + $0x48] sm:$0xff]
    %v10811 = vld [vmem:[%s10800 + $0x50] sm:$0xff]
    %v10812 = vld [vmem:[%s10800 + $0x58] sm:$0xff]
    %v10813 = vld [vmem:[%s10800 + $0x60] sm:$0xff]
    %v10814 = vld [vmem:[%s10800 + $0x68] sm:$0xff]
    %v10815 = vld [vmem:[%s10800 + $0x70] sm:$0xff]
    %v10816 = vld [vmem:[%s10800 + $0x78] sm:$0xff]
    %v10817 = vld [vmem:[%s10800 + $0x80] sm:$0xff]
    %v10818 = vld [vmem:[%s10800 + $0x88] sm:$0xff]
    %v10819 = vld [vmem:[%s10800 + $0x90] sm:$0xff]
    %v10820 = vld [vmem:[%s10800 + $0x98] sm:$0xff]
    %v10821 = vld [vmem:[%s10800 + $0xa0] sm:$0xff]
    %v10822 = vld [vmem:[%s10800 + $0xa8] sm:$0xff]
    %v10823 = vld [vmem:[%s10800 + $0xb0] sm:$0xff]
    %v10824 = vld [vmem:[%s10800 + $0xb8] sm:$0xff]
    %v10825 = vld [vmem:[%s10800 + $0xc0] sm:$0xff]
    %v10826 = vld [vmem:[%s10800 + $0xc8] sm:$0xff]
    %v10827 = vld [vmem:[%s10800 + $0xd0] sm:$0xff]
    %v10828 = vld [vmem:[%s10800 + $0xd8] sm:$0xff]
    %v10829 = vld [vmem:[%s10800 + $0xe0] sm:$0xff]
    %v10830 = vld [vmem:[%s10800 + $0xe8] sm:$0xff]
    %v10831 = vld [vmem:[%s10800 + $0xf0] sm:$0xff]
    %v10832 = vld [vmem:[%s10800 + $0xf8] sm:$0xff]
    %v10833 = vld [vmem:[%s10800 + $0x100] sm:$0xff]
    %v10834 = vld [vmem:[%s10800 + $0x108] sm:$0xff]
    %v10835 = vld [vmem:[%s10800 + $0x110] sm:$0xff]
    %v10836 = vld [vmem:[%s10800 + $0x118] sm:$0xff]
    %v10837 = vld [vmem:[%s10800 + $0x120] sm:$0xff]
    %v10838 = vld [vmem:[%s10800 + $0x128] sm:$0xff]
    %v10839 = vld [vmem:[%s10800 + $0x130] sm:$0xff]
    %v10840 = vld [vmem:[%s10800 + $0x138] sm:$0xff]
    %v10841 = vld [vmem:[%s10800 + $0x140] sm:$0xff]
    %v10842 = vld [vmem:[%s10800 + $0x148] sm:$0xff]
    %v10843 = vld [vmem:[%s10800 + $0x150] sm:$0xff]
    %v10844 = vld [vmem:[%s10800 + $0x158] sm:$0xff]
    %v10845 = vld [vmem:[%s10800 + $0x160] sm:$0xff]
    %v10846 = vld [vmem:[%s10800 + $0x168] sm:$0xff]
    %v10847 = vld [vmem:[%s10800 + $0x170] sm:$0xff]
    %v10848 = vld [vmem:[%s10800 + $0x178] sm:$0xff]
    %v10849 = vld [vmem:[%s10800 + $0x180] sm:$0xff]
    %v10850 = vld [vmem:[%s10800 + $0x188] sm:$0xff]
    %v10851 = vld [vmem:[%s10800 + $0x190] sm:$0xff]
    %v10852 = vld [vmem:[%s10800 + $0x198] sm:$0xff]
    %v10853 = vld [vmem:[%s10800 + $0x1a0] sm:$0xff]
    %v10854 = vld [vmem:[%s10800 + $0x1a8] sm:$0xff]
    %v10855 = vld [vmem:[%s10800 + $0x1b0] sm:$0xff]
    %v10856 = vld [vmem:[%s10800 + $0x1b8] sm:$0xff]
    %v10857 = vld [vmem:[%s10800 + $0x1c0] sm:$0xff]
    %v10858 = vld [vmem:[%s10800 + $0x1c8] sm:$0xff]
    %v10859 = vld [vmem:[%s10800 + $0x1d0] sm:$0xff]
    %v10860 = vld [vmem:[%s10800 + $0x1d8] sm:$0xff]
    %v10861 = vld [vmem:[%s10800 + $0x1e0] sm:$0xff]
    %v10862 = vld [vmem:[%s10800 + $0x1e8] sm:$0xff]
    %v10863 = vld [vmem:[%s10800 + $0x1f0] sm:$0xff]
    %v10864 = vld [vmem:[%s10800 + $0x1f8] sm:$0xff]
    %v10867 = vunpack.c.l.b16 %v9651
    %v10868 = vunpack.c.h.b16 %v9651
    %v10869 = vunpack.c.l.b16 %v9652
    %v10870 = vunpack.c.h.b16 %v9652
    %v10871 = vpack.c.b16 %v9663, %v9659
    %v10872 = vpack.c.b16 %v9664, %v9660
    %v10873 = vpack.c.b16 %v9665, %v9661
    %v10874 = vpack.c.b16 %v9666, %v9662
    %v10875 = vpack.c.b16 %v10867, %v9667
    %v10876 = vpack.c.b16 %v10868, %v9668
    %v10877 = vpack.c.b16 %v10869, %v9669
    %v10878 = vpack.c.b16 %v10870, %v9670
    %v10951 = vunpack.c.l.b16 %v10801
    %v10952 = vunpack.c.h.b16 %v10801
    %v10953 = vunpack.c.l.b16 %v10802
    %v10954 = vunpack.c.h.b16 %v10802
    %v10955 = vunpack.c.l.b16 %v10803
    %v10956 = vunpack.c.h.b16 %v10803
    %v10957 = vunpack.c.l.b16 %v10804
    %v10958 = vunpack.c.h.b16 %v10804
    %v10959 = vunpack.c.l.b16 %v10805
    %v10960 = vunpack.c.h.b16 %v10805
    %v10961 = vunpack.c.l.b16 %v10806
    %v10962 = vunpack.c.h.b16 %v10806
    %v10963 = vunpack.c.l.b16 %v10807
    %v10964 = vunpack.c.h.b16 %v10807
    %v10965 = vunpack.c.l.b16 %v10808
    %v10966 = vunpack.c.h.b16 %v10808
    %v10967 = vunpack.c.l.b16 %v10809
    %v10968 = vunpack.c.h.b16 %v10809
    %v10969 = vunpack.c.l.b16 %v10810
    %v10970 = vunpack.c.h.b16 %v10810
    %v10971 = vunpack.c.l.b16 %v10811
    %v10972 = vunpack.c.h.b16 %v10811
    %v10973 = vunpack.c.l.b16 %v10812
    %v10974 = vunpack.c.h.b16 %v10812
    %v10975 = vunpack.c.l.b16 %v10813
    %v10976 = vunpack.c.h.b16 %v10813
    %v10977 = vunpack.c.l.b16 %v10814
    %v10978 = vunpack.c.h.b16 %v10814
    %v10979 = vunpack.c.l.b16 %v10815
    %v10980 = vunpack.c.h.b16 %v10815
    %v10981 = vunpack.c.l.b16 %v10816
    %v10982 = vunpack.c.h.b16 %v10816
    %v10983 = vunpack.c.l.b16 %v10817
    %v10984 = vunpack.c.h.b16 %v10817
    %v10985 = vunpack.c.l.b16 %v10818
    %v10986 = vunpack.c.h.b16 %v10818
    %v10987 = vunpack.c.l.b16 %v10819
    %v10988 = vunpack.c.h.b16 %v10819
    %v10989 = vunpack.c.l.b16 %v10820
    %v10990 = vunpack.c.h.b16 %v10820
    %v10991 = vunpack.c.l.b16 %v10821
    %v10992 = vunpack.c.h.b16 %v10821
    %v10993 = vunpack.c.l.b16 %v10822
    %v10994 = vunpack.c.h.b16 %v10822
    %v10995 = vunpack.c.l.b16 %v10823
    %v10996 = vunpack.c.h.b16 %v10823
    %v10997 = vunpack.c.l.b16 %v10824
    %v10998 = vunpack.c.h.b16 %v10824
    %v10999 = vunpack.c.l.b16 %v10825
    %v11000 = vunpack.c.h.b16 %v10825
    %v11001 = vunpack.c.l.b16 %v10826
    %v11002 = vunpack.c.h.b16 %v10826
    %v11003 = vunpack.c.l.b16 %v10827
    %v11004 = vunpack.c.h.b16 %v10827
    %v11005 = vunpack.c.l.b16 %v10828
    %v11006 = vunpack.c.h.b16 %v10828
    %v11007 = vunpack.c.l.b16 %v10829
    %v11008 = vunpack.c.h.b16 %v10829
    %v11009 = vunpack.c.l.b16 %v10830
    %v11010 = vunpack.c.h.b16 %v10830
    %v11011 = vunpack.c.l.b16 %v10831
    %v11012 = vunpack.c.h.b16 %v10831
    %v11013 = vunpack.c.l.b16 %v10832
    %v11014 = vunpack.c.h.b16 %v10832
    %v11015 = vunpack.c.l.b16 %v10833
    %v11016 = vunpack.c.h.b16 %v10833
    %v11017 = vunpack.c.l.b16 %v10834
    %v11018 = vunpack.c.h.b16 %v10834
    %v11019 = vunpack.c.l.b16 %v10835
    %v11020 = vunpack.c.h.b16 %v10835
    %v11021 = vunpack.c.l.b16 %v10836
    %v11022 = vunpack.c.h.b16 %v10836
    %v11023 = vunpack.c.l.b16 %v10837
    %v11024 = vunpack.c.h.b16 %v10837
    %v11025 = vunpack.c.l.b16 %v10838
    %v11026 = vunpack.c.h.b16 %v10838
    %v11027 = vunpack.c.l.b16 %v10839
    %v11028 = vunpack.c.h.b16 %v10839
    %v11029 = vunpack.c.l.b16 %v10840
    %v11030 = vunpack.c.h.b16 %v10840
    %v11031 = vunpack.c.l.b16 %v10841
    %v11032 = vunpack.c.h.b16 %v10841
    %v11033 = vunpack.c.l.b16 %v10842
    %v11034 = vunpack.c.h.b16 %v10842
    %v11035 = vunpack.c.l.b16 %v10843
    %v11036 = vunpack.c.h.b16 %v10843
    %v11037 = vunpack.c.l.b16 %v10844
    %v11038 = vunpack.c.h.b16 %v10844
    %v11039 = vunpack.c.l.b16 %v10845
    %v11040 = vunpack.c.h.b16 %v10845
    %v11041 = vunpack.c.l.b16 %v10846
    %v11042 = vunpack.c.h.b16 %v10846
    %v11043 = vunpack.c.l.b16 %v10847
    %v11044 = vunpack.c.h.b16 %v10847
    %v11045 = vunpack.c.l.b16 %v10848
    %v11046 = vunpack.c.h.b16 %v10848
    %v11047 = vunpack.c.l.b16 %v10849
    %v11048 = vunpack.c.h.b16 %v10849
    %v11049 = vunpack.c.l.b16 %v10850
    %v11050 = vunpack.c.h.b16 %v10850
    %v11051 = vunpack.c.l.b16 %v10851
    %v11052 = vunpack.c.h.b16 %v10851
    %v11053 = vunpack.c.l.b16 %v10852
    %v11054 = vunpack.c.h.b16 %v10852
    %v11055 = vunpack.c.l.b16 %v10853
    %v11056 = vunpack.c.h.b16 %v10853
    %v11057 = vunpack.c.l.b16 %v10854
    %v11058 = vunpack.c.h.b16 %v10854
    %v11059 = vunpack.c.l.b16 %v10855
    %v11060 = vunpack.c.h.b16 %v10855
    %v11061 = vunpack.c.l.b16 %v10856
    %v11062 = vunpack.c.h.b16 %v10856
    %v11063 = vunpack.c.l.b16 %v10857
    %v11064 = vunpack.c.h.b16 %v10857
    %v11065 = vunpack.c.l.b16 %v10858
    %v11066 = vunpack.c.h.b16 %v10858
    %v11067 = vunpack.c.l.b16 %v10859
    %v11068 = vunpack.c.h.b16 %v10859
    %v11069 = vunpack.c.l.b16 %v10860
    %v11070 = vunpack.c.h.b16 %v10860
    %v11071 = vunpack.c.l.b16 %v10861
    %v11072 = vunpack.c.h.b16 %v10861
    %v11073 = vunpack.c.l.b16 %v10862
    %v11074 = vunpack.c.h.b16 %v10862
    %v11075 = vunpack.c.l.b16 %v10863
    %v11076 = vunpack.c.h.b16 %v10863
    %v11077 = vunpack.c.l.b16 %v10864
    %v11078 = vunpack.c.h.b16 %v10864
    %v11079 = vpack.c.b16 %v10953, %v10951
    %v11080 = vpack.c.b16 %v10954, %v10952
    %v11081 = vpack.c.b16 %v10957, %v10955
    %v11082 = vpack.c.b16 %v10958, %v10956
    %v11083 = vpack.c.b16 %v10961, %v10959
    %v11084 = vpack.c.b16 %v10962, %v10960
    %v11085 = vpack.c.b16 %v10965, %v10963
    %v11086 = vpack.c.b16 %v10966, %v10964
    %v11087 = vpack.c.b16 %v10969, %v10967
    %v11088 = vpack.c.b16 %v10970, %v10968
    %v11089 = vpack.c.b16 %v10973, %v10971
    %v11090 = vpack.c.b16 %v10974, %v10972
    %v11091 = vpack.c.b16 %v10977, %v10975
    %v11092 = vpack.c.b16 %v10978, %v10976
    %v11093 = vpack.c.b16 %v10981, %v10979
    %v11094 = vpack.c.b16 %v10982, %v10980
    %v11095 = vpack.c.b16 %v10985, %v10983
    %v11096 = vpack.c.b16 %v10986, %v10984
    %v11097 = vpack.c.b16 %v10989, %v10987
    %v11098 = vpack.c.b16 %v10990, %v10988
    %v11099 = vpack.c.b16 %v10993, %v10991
    %v11100 = vpack.c.b16 %v10994, %v10992
    %v11101 = vpack.c.b16 %v10997, %v10995
    %v11102 = vpack.c.b16 %v10998, %v10996
    %v11103 = vpack.c.b16 %v11001, %v10999
    %v11104 = vpack.c.b16 %v11002, %v11000
    %v11105 = vpack.c.b16 %v11005, %v11003
    %v11106 = vpack.c.b16 %v11006, %v11004
    %v11107 = vpack.c.b16 %v11009, %v11007
    %v11108 = vpack.c.b16 %v11010, %v11008
    %v11109 = vpack.c.b16 %v11013, %v11011
    %v11110 = vpack.c.b16 %v11014, %v11012
    %v11111 = vpack.c.b16 %v11017, %v11015
    %v11112 = vpack.c.b16 %v11018, %v11016
    %v11113 = vpack.c.b16 %v11021, %v11019
    %v11114 = vpack.c.b16 %v11022, %v11020
    %v11115 = vpack.c.b16 %v11025, %v11023
    %v11116 = vpack.c.b16 %v11026, %v11024
    %v11117 = vpack.c.b16 %v11029, %v11027
    %v11118 = vpack.c.b16 %v11030, %v11028
    %v11119 = vpack.c.b16 %v11033, %v11031
    %v11120 = vpack.c.b16 %v11034, %v11032
    %v11121 = vpack.c.b16 %v11037, %v11035
    %v11122 = vpack.c.b16 %v11038, %v11036
    %v11123 = vpack.c.b16 %v11041, %v11039
    %v11124 = vpack.c.b16 %v11042, %v11040
    %v11125 = vpack.c.b16 %v11045, %v11043
    %v11126 = vpack.c.b16 %v11046, %v11044
    %v11127 = vpack.c.b16 %v11049, %v11047
    %v11128 = vpack.c.b16 %v11050, %v11048
    %v11129 = vpack.c.b16 %v11053, %v11051
    %v11130 = vpack.c.b16 %v11054, %v11052
    %v11131 = vpack.c.b16 %v11057, %v11055
    %v11132 = vpack.c.b16 %v11058, %v11056
    %v11133 = vpack.c.b16 %v11061, %v11059
    %v11134 = vpack.c.b16 %v11062, %v11060
    %v11135 = vpack.c.b16 %v11065, %v11063
    %v11136 = vpack.c.b16 %v11066, %v11064
    %v11137 = vpack.c.b16 %v11069, %v11067
    %v11138 = vpack.c.b16 %v11070, %v11068
    %v11139 = vpack.c.b16 %v11073, %v11071
    %v11140 = vpack.c.b16 %v11074, %v11072
    %v11141 = vpack.c.b16 %v11077, %v11075
    %v11142 = vpack.c.b16 %v11078, %v11076
    %11207 = vmatpush.bf16.msra.mxu0 %v11093
    %11208 = vmatpush.bf16.msra.mxu0 %v11091
    %11209 = vmatpush.bf16.msra.mxu0 %v11089
    %11210 = vmatpush.bf16.msra.mxu0 %v11087
    %11211 = vmatpush.bf16.msra.mxu0 %v11085
    %11212 = vmatpush.bf16.msra.mxu0 %v11083
    %11213 = vmatpush.bf16.msra.mxu0 %v11081
    %11214 = vmatpush.bf16.msra.mxu0 %v11079
    %11215 = vmatmul.bf16.gmra.mxu0 %v10871
    %v11216 = vpop.f32.mrf.mxu0
    %v11217 = vadd.f32 0.0, %v11216
    %v11218 = vpop.f32.mrf.mxu0
    %v11219 = vadd.f32 0.0, %v11218
    %11220 = vmatmul.bf16.gmra.mxu0 %v10875
    %v11221 = vpop.f32.mrf.mxu0
    %v11222 = vadd.f32 0.0, %v11221
    %v11223 = vpop.f32.mrf.mxu0
    %v11224 = vadd.f32 0.0, %v11223
    %11225 = vdwg.mxu0
    %11226 = vmatpush.bf16.msra.mxu0 %v11109
    %11227 = vmatpush.bf16.msra.mxu0 %v11107
    %11228 = vmatpush.bf16.msra.mxu0 %v11105
    %11229 = vmatpush.bf16.msra.mxu0 %v11103
    %11230 = vmatpush.bf16.msra.mxu0 %v11101
    %11231 = vmatpush.bf16.msra.mxu0 %v11099
    %11232 = vmatpush.bf16.msra.mxu0 %v11097
    %11233 = vmatpush.bf16.msra.mxu0 %v11095
    %11234 = vmatmul.bf16.gmra.mxu0 %v10872
    %v11235 = vpop.f32.mrf.mxu0
    %v11236 = vadd.f32 %v11217, %v11235
    %v11237 = vpop.f32.mrf.mxu0
    %v11238 = vadd.f32 %v11219, %v11237
    %11239 = vmatmul.bf16.gmra.mxu0 %v10876
    %v11240 = vpop.f32.mrf.mxu0
    %v11241 = vadd.f32 %v11222, %v11240
    %v11242 = vpop.f32.mrf.mxu0
    %v11243 = vadd.f32 %v11224, %v11242
    %11244 = vdwg.mxu0
    %11245 = vmatpush.bf16.msra.mxu0 %v11125
    %11246 = vmatpush.bf16.msra.mxu0 %v11123
    %11247 = vmatpush.bf16.msra.mxu0 %v11121
    %11248 = vmatpush.bf16.msra.mxu0 %v11119
    %11249 = vmatpush.bf16.msra.mxu0 %v11117
    %11250 = vmatpush.bf16.msra.mxu0 %v11115
    %11251 = vmatpush.bf16.msra.mxu0 %v11113
    %11252 = vmatpush.bf16.msra.mxu0 %v11111
    %11253 = vmatmul.bf16.gmra.mxu0 %v10873
    %v11254 = vpop.f32.mrf.mxu0
    %v11255 = vadd.f32 %v11236, %v11254
    %v11256 = vpop.f32.mrf.mxu0
    %v11257 = vadd.f32 %v11238, %v11256
    %11258 = vmatmul.bf16.gmra.mxu0 %v10877
    %v11259 = vpop.f32.mrf.mxu0
    %v11260 = vadd.f32 %v11241, %v11259
    %v11261 = vpop.f32.mrf.mxu0
    %v11262 = vadd.f32 %v11243, %v11261
    %11263 = vdwg.mxu0
    %11264 = vmatpush.bf16.msra.mxu0 %v11141
    %11265 = vmatpush.bf16.msra.mxu0 %v11139
    %11266 = vmatpush.bf16.msra.mxu0 %v11137
    %11267 = vmatpush.bf16.msra.mxu0 %v11135
    %11268 = vmatpush.bf16.msra.mxu0 %v11133
    %11269 = vmatpush.bf16.msra.mxu0 %v11131
    %11270 = vmatpush.bf16.msra.mxu0 %v11129
    %11271 = vmatpush.bf16.msra.mxu0 %v11127
    %11272 = vmatmul.bf16.gmra.mxu0 %v10874
    %v11273 = vpop.f32.mrf.mxu0
    %v11274 = vadd.f32 %v11255, %v11273
    %v11275 = vpop.f32.mrf.mxu0
    %v11276 = vadd.f32 %v11257, %v11275
    %11277 = vmatmul.bf16.gmra.mxu0 %v10878
    %v11278 = vpop.f32.mrf.mxu0
    %v11279 = vadd.f32 %v11260, %v11278
    %v11280 = vpop.f32.mrf.mxu0
    %v11281 = vadd.f32 %v11262, %v11280
    %11282 = vdwg.mxu0
    %11283 = vmatpush.bf16.msra.mxu0 %v11094
    %11284 = vmatpush.bf16.msra.mxu0 %v11092
    %11285 = vmatpush.bf16.msra.mxu0 %v11090
    %11286 = vmatpush.bf16.msra.mxu0 %v11088
    %11287 = vmatpush.bf16.msra.mxu0 %v11086
    %11288 = vmatpush.bf16.msra.mxu0 %v11084
    %11289 = vmatpush.bf16.msra.mxu0 %v11082
    %11290 = vmatpush.bf16.msra.mxu0 %v11080
    %11291 = vmatmul.bf16.gmra.mxu0 %v10871
    %v11292 = vpop.f32.mrf.mxu0
    %v11293 = vadd.f32 0.0, %v11292
    %v11294 = vpop.f32.mrf.mxu0
    %v11295 = vadd.f32 0.0, %v11294
    %11296 = vmatmul.bf16.gmra.mxu0 %v10875
    %v11297 = vpop.f32.mrf.mxu0
    %v11298 = vadd.f32 0.0, %v11297
    %v11299 = vpop.f32.mrf.mxu0
    %v11300 = vadd.f32 0.0, %v11299
    %11301 = vdwg.mxu0
    %11302 = vmatpush.bf16.msra.mxu0 %v11110
    %11303 = vmatpush.bf16.msra.mxu0 %v11108
    %11304 = vmatpush.bf16.msra.mxu0 %v11106
    %11305 = vmatpush.bf16.msra.mxu0 %v11104
    %11306 = vmatpush.bf16.msra.mxu0 %v11102
    %11307 = vmatpush.bf16.msra.mxu0 %v11100
    %11308 = vmatpush.bf16.msra.mxu0 %v11098
    %11309 = vmatpush.bf16.msra.mxu0 %v11096
    %11310 = vmatmul.bf16.gmra.mxu0 %v10872
    %v11311 = vpop.f32.mrf.mxu0
    %v11312 = vadd.f32 %v11293, %v11311
    %v11313 = vpop.f32.mrf.mxu0
    %v11314 = vadd.f32 %v11295, %v11313
    %11315 = vmatmul.bf16.gmra.mxu0 %v10876
    %v11316 = vpop.f32.mrf.mxu0
    %v11317 = vadd.f32 %v11298, %v11316
    %v11318 = vpop.f32.mrf.mxu0
    %v11319 = vadd.f32 %v11300, %v11318
    %11320 = vdwg.mxu0
    %11321 = vmatpush.bf16.msra.mxu0 %v11126
    %11322 = vmatpush.bf16.msra.mxu0 %v11124
    %11323 = vmatpush.bf16.msra.mxu0 %v11122
    %11324 = vmatpush.bf16.msra.mxu0 %v11120
    %11325 = vmatpush.bf16.msra.mxu0 %v11118
    %11326 = vmatpush.bf16.msra.mxu0 %v11116
    %11327 = vmatpush.bf16.msra.mxu0 %v11114
    %11328 = vmatpush.bf16.msra.mxu0 %v11112
    %11329 = vmatmul.bf16.gmra.mxu0 %v10873
    %v11330 = vpop.f32.mrf.mxu0
    %v11331 = vadd.f32 %v11312, %v11330
    %v11332 = vpop.f32.mrf.mxu0
    %v11333 = vadd.f32 %v11314, %v11332
    %11334 = vmatmul.bf16.gmra.mxu0 %v10877
    %v11335 = vpop.f32.mrf.mxu0
    %v11336 = vadd.f32 %v11317, %v11335
    %v11337 = vpop.f32.mrf.mxu0
    %v11338 = vadd.f32 %v11319, %v11337
    %11339 = vdwg.mxu0
    %11340 = vmatpush.bf16.msra.mxu0 %v11142
    %11341 = vmatpush.bf16.msra.mxu0 %v11140
    %11342 = vmatpush.bf16.msra.mxu0 %v11138
    %11343 = vmatpush.bf16.msra.mxu0 %v11136
    %11344 = vmatpush.bf16.msra.mxu0 %v11134
    %11345 = vmatpush.bf16.msra.mxu0 %v11132
    %11346 = vmatpush.bf16.msra.mxu0 %v11130
    %11347 = vmatpush.bf16.msra.mxu0 %v11128
    %11348 = vmatmul.bf16.gmra.mxu0 %v10874
    %v11349 = vpop.f32.mrf.mxu0
    %v11350 = vadd.f32 %v11331, %v11349
    %v11351 = vpop.f32.mrf.mxu0
    %v11352 = vadd.f32 %v11333, %v11351
    %11353 = vmatmul.bf16.gmra.mxu0 %v10878
    %v11354 = vpop.f32.mrf.mxu0
    %v11355 = vadd.f32 %v11336, %v11354
    %v11356 = vpop.f32.mrf.mxu0
    %v11357 = vadd.f32 %v11338, %v11356
    %11358 = vdwg.mxu0
    %v11359 = vadd.f32 %v10715, %v11274
    %v11360 = vadd.f32 %v10791, %v11350
    %v11361 = vadd.f32 %v10717, %v11276
    %v11362 = vadd.f32 %v10793, %v11352
    %v11363 = vadd.f32 %v10720, %v11279
    %v11364 = vadd.f32 %v10796, %v11355
    %v11365 = vadd.f32 %v10722, %v11281
    %v11366 = vadd.f32 %v10798, %v11357
    %v11367 = vld [vmem:[#allocation10] sm:$0x3]
    %v11369 = vperm.slane %v11367, 0
    %v11370 = vperm.slane %v11367, 1
    %v11373 = vadd.f32 %v11359, %v11369
    %v11374 = vadd.f32 %v11360, %v11370
    %v11375 = vadd.f32 %v11361, %v11369
    %v11376 = vadd.f32 %v11362, %v11370
    %v11377 = vadd.f32 %v11363, %v11369
    %v11378 = vadd.f32 %v11364, %v11370
    %v11379 = vadd.f32 %v11365, %v11369
    %v11380 = vadd.f32 %v11366, %v11370
    %v11381 = vmax.f32 %v11373, 0.0
    %v11382 = vmax.f32 %v11374, 0.0
    %v11383 = vmax.f32 %v11375, 0.0
    %v11384 = vmax.f32 %v11376, 0.0
    %v11385 = vmax.f32 %v11377, 0.0
    %v11386 = vmax.f32 %v11378, 0.0
    %v11387 = vmax.f32 %v11379, 0.0
    %v11388 = vmax.f32 %v11380, 0.0
    %v11389 = vpack.c.bf16 %v11382, %v11381
    %v11390 = vpack.c.bf16 %v11384, %v11383
    %v11391 = vpack.c.bf16 %v11386, %v11385
    %v11392 = vpack.c.bf16 %v11388, %v11387
    %v11393 = vld [vmem:[#allocation12] sm:$0xff]
    %v11394 = vld [vmem:[#allocation12 + $0x8] sm:$0xff]
    %v11395 = vld [vmem:[#allocation12 + $0x10] sm:$0xff]
    %v11396 = vld [vmem:[#allocation12 + $0x18] sm:$0xff]
    %v11397 = vld [vmem:[#allocation12 + $0x20] sm:$0xff]
    %v11398 = vld [vmem:[#allocation12 + $0x28] sm:$0xff]
    %v11399 = vld [vmem:[#allocation12 + $0x30] sm:$0xff]
    %v11400 = vld [vmem:[#allocation12 + $0x38] sm:$0xff]
    %v11401 = vld [vmem:[#allocation12 + $0x40] sm:$0xff]
    %v11402 = vld [vmem:[#allocation12 + $0x48] sm:$0xff]
    %v11403 = vld [vmem:[#allocation12 + $0x50] sm:$0xff]
    %v11404 = vld [vmem:[#allocation12 + $0x58] sm:$0xff]
    %v11405 = vld [vmem:[#allocation12 + $0x60] sm:$0xff]
    %v11406 = vld [vmem:[#allocation12 + $0x68] sm:$0xff]
    %v11407 = vld [vmem:[#allocation12 + $0x70] sm:$0xff]
    %v11408 = vld [vmem:[#allocation12 + $0x78] sm:$0xff]
    %v11409 = vld [vmem:[#allocation12 + $0x80] sm:$0xff]
    %v11410 = vld [vmem:[#allocation12 + $0x88] sm:$0xff]
    %v11411 = vld [vmem:[#allocation12 + $0x90] sm:$0xff]
    %v11412 = vld [vmem:[#allocation12 + $0x98] sm:$0xff]
    %v11413 = vld [vmem:[#allocation12 + $0xa0] sm:$0xff]
    %v11414 = vld [vmem:[#allocation12 + $0xa8] sm:$0xff]
    %v11415 = vld [vmem:[#allocation12 + $0xb0] sm:$0xff]
    %v11416 = vld [vmem:[#allocation12 + $0xb8] sm:$0xff]
    %v11417 = vld [vmem:[#allocation12 + $0xc0] sm:$0xff]
    %v11418 = vld [vmem:[#allocation12 + $0xc8] sm:$0xff]
    %v11419 = vld [vmem:[#allocation12 + $0xd0] sm:$0xff]
    %v11420 = vld [vmem:[#allocation12 + $0xd8] sm:$0xff]
    %v11421 = vld [vmem:[#allocation12 + $0xe0] sm:$0xff]
    %v11422 = vld [vmem:[#allocation12 + $0xe8] sm:$0xff]
    %v11423 = vld [vmem:[#allocation12 + $0xf0] sm:$0xff]
    %v11424 = vld [vmem:[#allocation12 + $0xf8] sm:$0xff]
    %s11425 = scalar_lea.vmem [#allocation12], 256
    %v11426 = vld [vmem:[%s11425] sm:$0xff]
    %v11427 = vld [vmem:[%s11425 + $0x8] sm:$0xff]
    %v11428 = vld [vmem:[%s11425 + $0x10] sm:$0xff]
    %v11429 = vld [vmem:[%s11425 + $0x18] sm:$0xff]
    %v11430 = vld [vmem:[%s11425 + $0x20] sm:$0xff]
    %v11431 = vld [vmem:[%s11425 + $0x28] sm:$0xff]
    %v11432 = vld [vmem:[%s11425 + $0x30] sm:$0xff]
    %v11433 = vld [vmem:[%s11425 + $0x38] sm:$0xff]
    %v11434 = vld [vmem:[%s11425 + $0x40] sm:$0xff]
    %v11435 = vld [vmem:[%s11425 + $0x48] sm:$0xff]
    %v11436 = vld [vmem:[%s11425 + $0x50] sm:$0xff]
    %v11437 = vld [vmem:[%s11425 + $0x58] sm:$0xff]
    %v11438 = vld [vmem:[%s11425 + $0x60] sm:$0xff]
    %v11439 = vld [vmem:[%s11425 + $0x68] sm:$0xff]
    %v11440 = vld [vmem:[%s11425 + $0x70] sm:$0xff]
    %v11441 = vld [vmem:[%s11425 + $0x78] sm:$0xff]
    %v11442 = vld [vmem:[%s11425 + $0x80] sm:$0xff]
    %v11443 = vld [vmem:[%s11425 + $0x88] sm:$0xff]
    %v11444 = vld [vmem:[%s11425 + $0x90] sm:$0xff]
    %v11445 = vld [vmem:[%s11425 + $0x98] sm:$0xff]
    %v11446 = vld [vmem:[%s11425 + $0xa0] sm:$0xff]
    %v11447 = vld [vmem:[%s11425 + $0xa8] sm:$0xff]
    %v11448 = vld [vmem:[%s11425 + $0xb0] sm:$0xff]
    %v11449 = vld [vmem:[%s11425 + $0xb8] sm:$0xff]
    %v11450 = vld [vmem:[%s11425 + $0xc0] sm:$0xff]
    %v11451 = vld [vmem:[%s11425 + $0xc8] sm:$0xff]
    %v11452 = vld [vmem:[%s11425 + $0xd0] sm:$0xff]
    %v11453 = vld [vmem:[%s11425 + $0xd8] sm:$0xff]
    %v11454 = vld [vmem:[%s11425 + $0xe0] sm:$0xff]
    %v11455 = vld [vmem:[%s11425 + $0xe8] sm:$0xff]
    %v11456 = vld [vmem:[%s11425 + $0xf0] sm:$0xff]
    %v11457 = vld [vmem:[%s11425 + $0xf8] sm:$0xff]
    %v11459 = vunpack.c.l.b16 %v11390
    %v11460 = vunpack.c.h.b16 %v11390
    %v11461 = vpack.c.b16 %v11459, %v11459
    %v11462 = vpack.c.b16 %v11460, %v11460
    %v11497 = vunpack.c.l.b16 %v11426
    %v11498 = vunpack.c.h.b16 %v11426
    %v11499 = vunpack.c.l.b16 %v11427
    %v11500 = vunpack.c.h.b16 %v11427
    %v11501 = vunpack.c.l.b16 %v11428
    %v11502 = vunpack.c.h.b16 %v11428
    %v11503 = vunpack.c.l.b16 %v11429
    %v11504 = vunpack.c.h.b16 %v11429
    %v11505 = vunpack.c.l.b16 %v11430
    %v11506 = vunpack.c.h.b16 %v11430
    %v11507 = vunpack.c.l.b16 %v11431
    %v11508 = vunpack.c.h.b16 %v11431
    %v11509 = vunpack.c.l.b16 %v11432
    %v11510 = vunpack.c.h.b16 %v11432
    %v11511 = vunpack.c.l.b16 %v11433
    %v11512 = vunpack.c.h.b16 %v11433
    %v11513 = vunpack.c.l.b16 %v11434
    %v11514 = vunpack.c.h.b16 %v11434
    %v11515 = vunpack.c.l.b16 %v11435
    %v11516 = vunpack.c.h.b16 %v11435
    %v11517 = vunpack.c.l.b16 %v11436
    %v11518 = vunpack.c.h.b16 %v11436
    %v11519 = vunpack.c.l.b16 %v11437
    %v11520 = vunpack.c.h.b16 %v11437
    %v11521 = vunpack.c.l.b16 %v11438
    %v11522 = vunpack.c.h.b16 %v11438
    %v11523 = vunpack.c.l.b16 %v11439
    %v11524 = vunpack.c.h.b16 %v11439
    %v11525 = vunpack.c.l.b16 %v11440
    %v11526 = vunpack.c.h.b16 %v11440
    %v11527 = vunpack.c.l.b16 %v11441
    %v11528 = vunpack.c.h.b16 %v11441
    %v11529 = vunpack.c.l.b16 %v11442
    %v11530 = vunpack.c.h.b16 %v11442
    %v11531 = vunpack.c.l.b16 %v11443
    %v11532 = vunpack.c.h.b16 %v11443
    %v11533 = vunpack.c.l.b16 %v11444
    %v11534 = vunpack.c.h.b16 %v11444
    %v11535 = vunpack.c.l.b16 %v11445
    %v11536 = vunpack.c.h.b16 %v11445
    %v11537 = vunpack.c.l.b16 %v11446
    %v11538 = vunpack.c.h.b16 %v11446
    %v11539 = vunpack.c.l.b16 %v11447
    %v11540 = vunpack.c.h.b16 %v11447
    %v11541 = vunpack.c.l.b16 %v11448
    %v11542 = vunpack.c.h.b16 %v11448
    %v11543 = vunpack.c.l.b16 %v11449
    %v11544 = vunpack.c.h.b16 %v11449
    %v11545 = vunpack.c.l.b16 %v11450
    %v11546 = vunpack.c.h.b16 %v11450
    %v11547 = vunpack.c.l.b16 %v11451
    %v11548 = vunpack.c.h.b16 %v11451
    %v11549 = vunpack.c.l.b16 %v11452
    %v11550 = vunpack.c.h.b16 %v11452
    %v11551 = vunpack.c.l.b16 %v11453
    %v11552 = vunpack.c.h.b16 %v11453
    %v11553 = vunpack.c.l.b16 %v11454
    %v11554 = vunpack.c.h.b16 %v11454
    %v11555 = vunpack.c.l.b16 %v11455
    %v11556 = vunpack.c.h.b16 %v11455
    %v11557 = vunpack.c.l.b16 %v11456
    %v11558 = vunpack.c.h.b16 %v11456
    %v11559 = vunpack.c.l.b16 %v11457
    %v11560 = vunpack.c.h.b16 %v11457
    %v11561 = vpack.c.b16 %v11499, %v11497
    %v11562 = vpack.c.b16 %v11500, %v11498
    %v11563 = vpack.c.b16 %v11503, %v11501
    %v11564 = vpack.c.b16 %v11504, %v11502
    %v11565 = vpack.c.b16 %v11507, %v11505
    %v11566 = vpack.c.b16 %v11508, %v11506
    %v11567 = vpack.c.b16 %v11511, %v11509
    %v11568 = vpack.c.b16 %v11512, %v11510
    %v11569 = vpack.c.b16 %v11515, %v11513
    %v11570 = vpack.c.b16 %v11516, %v11514
    %v11571 = vpack.c.b16 %v11519, %v11517
    %v11572 = vpack.c.b16 %v11520, %v11518
    %v11573 = vpack.c.b16 %v11523, %v11521
    %v11574 = vpack.c.b16 %v11524, %v11522
    %v11575 = vpack.c.b16 %v11527, %v11525
    %v11576 = vpack.c.b16 %v11528, %v11526
    %v11577 = vpack.c.b16 %v11531, %v11529
    %v11578 = vpack.c.b16 %v11532, %v11530
    %v11579 = vpack.c.b16 %v11535, %v11533
    %v11580 = vpack.c.b16 %v11536, %v11534
    %v11581 = vpack.c.b16 %v11539, %v11537
    %v11582 = vpack.c.b16 %v11540, %v11538
    %v11583 = vpack.c.b16 %v11543, %v11541
    %v11584 = vpack.c.b16 %v11544, %v11542
    %v11585 = vpack.c.b16 %v11547, %v11545
    %v11586 = vpack.c.b16 %v11548, %v11546
    %v11587 = vpack.c.b16 %v11551, %v11549
    %v11588 = vpack.c.b16 %v11552, %v11550
    %v11589 = vpack.c.b16 %v11555, %v11553
    %v11590 = vpack.c.b16 %v11556, %v11554
    %v11591 = vpack.c.b16 %v11559, %v11557
    %v11592 = vpack.c.b16 %v11560, %v11558
    %11625 = vmatpush.bf16.msra.mxu0 %v11575
    %11626 = vmatpush.bf16.msra.mxu0 %v11573
    %11627 = vmatpush.bf16.msra.mxu0 %v11571
    %11628 = vmatpush.bf16.msra.mxu0 %v11569
    %11629 = vmatpush.bf16.msra.mxu0 %v11567
    %11630 = vmatpush.bf16.msra.mxu0 %v11565
    %11631 = vmatpush.bf16.msra.mxu0 %v11563
    %11632 = vmatpush.bf16.msra.mxu0 %v11561
    %11633 = vmatmul.bf16.gmra.mxu0 %v11461
    %v11634 = vpop.f32.mrf.mxu0
    %v11635 = vadd.f32 0.0, %v11634
    %v11636 = vpop.f32.mrf.mxu0
    %11637 = vdwg.mxu0
    %11638 = vmatpush.bf16.msra.mxu0 %v11591
    %11639 = vmatpush.bf16.msra.mxu0 %v11589
    %11640 = vmatpush.bf16.msra.mxu0 %v11587
    %11641 = vmatpush.bf16.msra.mxu0 %v11585
    %11642 = vmatpush.bf16.msra.mxu0 %v11583
    %11643 = vmatpush.bf16.msra.mxu0 %v11581
    %11644 = vmatpush.bf16.msra.mxu0 %v11579
    %11645 = vmatpush.bf16.msra.mxu0 %v11577
    %11646 = vmatmul.bf16.gmra.mxu0 %v11462
    %v11647 = vpop.f32.mrf.mxu0
    %v11648 = vadd.f32 %v11635, %v11647
    %v11649 = vpop.f32.mrf.mxu0
    %11650 = vdwg.mxu0
    %11651 = vmatpush.bf16.msra.mxu0 %v11576
    %11652 = vmatpush.bf16.msra.mxu0 %v11574
    %11653 = vmatpush.bf16.msra.mxu0 %v11572
    %11654 = vmatpush.bf16.msra.mxu0 %v11570
    %11655 = vmatpush.bf16.msra.mxu0 %v11568
    %11656 = vmatpush.bf16.msra.mxu0 %v11566
    %11657 = vmatpush.bf16.msra.mxu0 %v11564
    %11658 = vmatpush.bf16.msra.mxu0 %v11562
    %11659 = vmatmul.bf16.gmra.mxu0 %v11461
    %v11660 = vpop.f32.mrf.mxu0
    %v11661 = vadd.f32 0.0, %v11660
    %v11662 = vpop.f32.mrf.mxu0
    %11663 = vdwg.mxu0
    %11664 = vmatpush.bf16.msra.mxu0 %v11592
    %11665 = vmatpush.bf16.msra.mxu0 %v11590
    %11666 = vmatpush.bf16.msra.mxu0 %v11588
    %11667 = vmatpush.bf16.msra.mxu0 %v11586
    %11668 = vmatpush.bf16.msra.mxu0 %v11584
    %11669 = vmatpush.bf16.msra.mxu0 %v11582
    %11670 = vmatpush.bf16.msra.mxu0 %v11580
    %11671 = vmatpush.bf16.msra.mxu0 %v11578
    %11672 = vmatmul.bf16.gmra.mxu0 %v11462
    %v11673 = vpop.f32.mrf.mxu0
    %v11674 = vadd.f32 %v11661, %v11673
    %v11675 = vpop.f32.mrf.mxu0
    %11676 = vdwg.mxu0
    %v11678 = vunpack.c.l.b16 %v11389
    %v11679 = vunpack.c.h.b16 %v11389
    %v11680 = vpack.c.b16 %v11678, %v11678
    %v11681 = vpack.c.b16 %v11679, %v11679
    %v11716 = vunpack.c.l.b16 %v11393
    %v11717 = vunpack.c.h.b16 %v11393
    %v11718 = vunpack.c.l.b16 %v11394
    %v11719 = vunpack.c.h.b16 %v11394
    %v11720 = vunpack.c.l.b16 %v11395
    %v11721 = vunpack.c.h.b16 %v11395
    %v11722 = vunpack.c.l.b16 %v11396
    %v11723 = vunpack.c.h.b16 %v11396
    %v11724 = vunpack.c.l.b16 %v11397
    %v11725 = vunpack.c.h.b16 %v11397
    %v11726 = vunpack.c.l.b16 %v11398
    %v11727 = vunpack.c.h.b16 %v11398
    %v11728 = vunpack.c.l.b16 %v11399
    %v11729 = vunpack.c.h.b16 %v11399
    %v11730 = vunpack.c.l.b16 %v11400
    %v11731 = vunpack.c.h.b16 %v11400
    %v11732 = vunpack.c.l.b16 %v11401
    %v11733 = vunpack.c.h.b16 %v11401
    %v11734 = vunpack.c.l.b16 %v11402
    %v11735 = vunpack.c.h.b16 %v11402
    %v11736 = vunpack.c.l.b16 %v11403
    %v11737 = vunpack.c.h.b16 %v11403
    %v11738 = vunpack.c.l.b16 %v11404
    %v11739 = vunpack.c.h.b16 %v11404
    %v11740 = vunpack.c.l.b16 %v11405
    %v11741 = vunpack.c.h.b16 %v11405
    %v11742 = vunpack.c.l.b16 %v11406
    %v11743 = vunpack.c.h.b16 %v11406
    %v11744 = vunpack.c.l.b16 %v11407
    %v11745 = vunpack.c.h.b16 %v11407
    %v11746 = vunpack.c.l.b16 %v11408
    %v11747 = vunpack.c.h.b16 %v11408
    %v11748 = vunpack.c.l.b16 %v11409
    %v11749 = vunpack.c.h.b16 %v11409
    %v11750 = vunpack.c.l.b16 %v11410
    %v11751 = vunpack.c.h.b16 %v11410
    %v11752 = vunpack.c.l.b16 %v11411
    %v11753 = vunpack.c.h.b16 %v11411
    %v11754 = vunpack.c.l.b16 %v11412
    %v11755 = vunpack.c.h.b16 %v11412
    %v11756 = vunpack.c.l.b16 %v11413
    %v11757 = vunpack.c.h.b16 %v11413
    %v11758 = vunpack.c.l.b16 %v11414
    %v11759 = vunpack.c.h.b16 %v11414
    %v11760 = vunpack.c.l.b16 %v11415
    %v11761 = vunpack.c.h.b16 %v11415
    %v11762 = vunpack.c.l.b16 %v11416
    %v11763 = vunpack.c.h.b16 %v11416
    %v11764 = vunpack.c.l.b16 %v11417
    %v11765 = vunpack.c.h.b16 %v11417
    %v11766 = vunpack.c.l.b16 %v11418
    %v11767 = vunpack.c.h.b16 %v11418
    %v11768 = vunpack.c.l.b16 %v11419
    %v11769 = vunpack.c.h.b16 %v11419
    %v11770 = vunpack.c.l.b16 %v11420
    %v11771 = vunpack.c.h.b16 %v11420
    %v11772 = vunpack.c.l.b16 %v11421
    %v11773 = vunpack.c.h.b16 %v11421
    %v11774 = vunpack.c.l.b16 %v11422
    %v11775 = vunpack.c.h.b16 %v11422
    %v11776 = vunpack.c.l.b16 %v11423
    %v11777 = vunpack.c.h.b16 %v11423
    %v11778 = vunpack.c.l.b16 %v11424
    %v11779 = vunpack.c.h.b16 %v11424
    %v11780 = vpack.c.b16 %v11718, %v11716
    %v11781 = vpack.c.b16 %v11719, %v11717
    %v11782 = vpack.c.b16 %v11722, %v11720
    %v11783 = vpack.c.b16 %v11723, %v11721
    %v11784 = vpack.c.b16 %v11726, %v11724
    %v11785 = vpack.c.b16 %v11727, %v11725
    %v11786 = vpack.c.b16 %v11730, %v11728
    %v11787 = vpack.c.b16 %v11731, %v11729
    %v11788 = vpack.c.b16 %v11734, %v11732
    %v11789 = vpack.c.b16 %v11735, %v11733
    %v11790 = vpack.c.b16 %v11738, %v11736
    %v11791 = vpack.c.b16 %v11739, %v11737
    %v11792 = vpack.c.b16 %v11742, %v11740
    %v11793 = vpack.c.b16 %v11743, %v11741
    %v11794 = vpack.c.b16 %v11746, %v11744
    %v11795 = vpack.c.b16 %v11747, %v11745
    %v11796 = vpack.c.b16 %v11750, %v11748
    %v11797 = vpack.c.b16 %v11751, %v11749
    %v11798 = vpack.c.b16 %v11754, %v11752
    %v11799 = vpack.c.b16 %v11755, %v11753
    %v11800 = vpack.c.b16 %v11758, %v11756
    %v11801 = vpack.c.b16 %v11759, %v11757
    %v11802 = vpack.c.b16 %v11762, %v11760
    %v11803 = vpack.c.b16 %v11763, %v11761
    %v11804 = vpack.c.b16 %v11766, %v11764
    %v11805 = vpack.c.b16 %v11767, %v11765
    %v11806 = vpack.c.b16 %v11770, %v11768
    %v11807 = vpack.c.b16 %v11771, %v11769
    %v11808 = vpack.c.b16 %v11774, %v11772
    %v11809 = vpack.c.b16 %v11775, %v11773
    %v11810 = vpack.c.b16 %v11778, %v11776
    %v11811 = vpack.c.b16 %v11779, %v11777
    %11844 = vmatpush.bf16.msra.mxu0 %v11794
    %11845 = vmatpush.bf16.msra.mxu0 %v11792
    %11846 = vmatpush.bf16.msra.mxu0 %v11790
    %11847 = vmatpush.bf16.msra.mxu0 %v11788
    %11848 = vmatpush.bf16.msra.mxu0 %v11786
    %11849 = vmatpush.bf16.msra.mxu0 %v11784
    %11850 = vmatpush.bf16.msra.mxu0 %v11782
    %11851 = vmatpush.bf16.msra.mxu0 %v11780
    %11852 = vmatmul.bf16.gmra.mxu0 %v11680
    %v11853 = vpop.f32.mrf.mxu0
    %v11854 = vadd.f32 %v11648, %v11853
    %v11855 = vpop.f32.mrf.mxu0
    %11856 = vdwg.mxu0
    %11857 = vmatpush.bf16.msra.mxu0 %v11810
    %11858 = vmatpush.bf16.msra.mxu0 %v11808
    %11859 = vmatpush.bf16.msra.mxu0 %v11806
    %11860 = vmatpush.bf16.msra.mxu0 %v11804
    %11861 = vmatpush.bf16.msra.mxu0 %v11802
    %11862 = vmatpush.bf16.msra.mxu0 %v11800
    %11863 = vmatpush.bf16.msra.mxu0 %v11798
    %11864 = vmatpush.bf16.msra.mxu0 %v11796
    %11865 = vmatmul.bf16.gmra.mxu0 %v11681
    %v11866 = vpop.f32.mrf.mxu0
    %v11867 = vadd.f32 %v11854, %v11866
    %v11868 = vpop.f32.mrf.mxu0
    %11869 = vdwg.mxu0
    %11870 = vmatpush.bf16.msra.mxu0 %v11795
    %11871 = vmatpush.bf16.msra.mxu0 %v11793
    %11872 = vmatpush.bf16.msra.mxu0 %v11791
    %11873 = vmatpush.bf16.msra.mxu0 %v11789
    %11874 = vmatpush.bf16.msra.mxu0 %v11787
    %11875 = vmatpush.bf16.msra.mxu0 %v11785
    %11876 = vmatpush.bf16.msra.mxu0 %v11783
    %11877 = vmatpush.bf16.msra.mxu0 %v11781
    %11878 = vmatmul.bf16.gmra.mxu0 %v11680
    %v11879 = vpop.f32.mrf.mxu0
    %v11880 = vadd.f32 %v11674, %v11879
    %v11881 = vpop.f32.mrf.mxu0
    %11882 = vdwg.mxu0
    %11883 = vmatpush.bf16.msra.mxu0 %v11811
    %11884 = vmatpush.bf16.msra.mxu0 %v11809
    %11885 = vmatpush.bf16.msra.mxu0 %v11807
    %11886 = vmatpush.bf16.msra.mxu0 %v11805
    %11887 = vmatpush.bf16.msra.mxu0 %v11803
    %11888 = vmatpush.bf16.msra.mxu0 %v11801
    %11889 = vmatpush.bf16.msra.mxu0 %v11799
    %11890 = vmatpush.bf16.msra.mxu0 %v11797
    %11891 = vmatmul.bf16.gmra.mxu0 %v11681
    %v11892 = vpop.f32.mrf.mxu0
    %v11893 = vadd.f32 %v11880, %v11892
    %v11894 = vpop.f32.mrf.mxu0
    %11895 = vdwg.mxu0
    %s11896 = scalar_lea.vmem [#allocation12], 512
    %v11897 = vld [vmem:[%s11896] sm:$0xff]
    %v11898 = vld [vmem:[%s11896 + $0x8] sm:$0xff]
    %v11899 = vld [vmem:[%s11896 + $0x10] sm:$0xff]
    %v11900 = vld [vmem:[%s11896 + $0x18] sm:$0xff]
    %v11901 = vld [vmem:[%s11896 + $0x20] sm:$0xff]
    %v11902 = vld [vmem:[%s11896 + $0x28] sm:$0xff]
    %v11903 = vld [vmem:[%s11896 + $0x30] sm:$0xff]
    %v11904 = vld [vmem:[%s11896 + $0x38] sm:$0xff]
    %v11905 = vld [vmem:[%s11896 + $0x40] sm:$0xff]
    %v11906 = vld [vmem:[%s11896 + $0x48] sm:$0xff]
    %v11907 = vld [vmem:[%s11896 + $0x50] sm:$0xff]
    %v11908 = vld [vmem:[%s11896 + $0x58] sm:$0xff]
    %v11909 = vld [vmem:[%s11896 + $0x60] sm:$0xff]
    %v11910 = vld [vmem:[%s11896 + $0x68] sm:$0xff]
    %v11911 = vld [vmem:[%s11896 + $0x70] sm:$0xff]
    %v11912 = vld [vmem:[%s11896 + $0x78] sm:$0xff]
    %v11913 = vld [vmem:[%s11896 + $0x80] sm:$0xff]
    %v11914 = vld [vmem:[%s11896 + $0x88] sm:$0xff]
    %v11915 = vld [vmem:[%s11896 + $0x90] sm:$0xff]
    %v11916 = vld [vmem:[%s11896 + $0x98] sm:$0xff]
    %v11917 = vld [vmem:[%s11896 + $0xa0] sm:$0xff]
    %v11918 = vld [vmem:[%s11896 + $0xa8] sm:$0xff]
    %v11919 = vld [vmem:[%s11896 + $0xb0] sm:$0xff]
    %v11920 = vld [vmem:[%s11896 + $0xb8] sm:$0xff]
    %v11921 = vld [vmem:[%s11896 + $0xc0] sm:$0xff]
    %v11922 = vld [vmem:[%s11896 + $0xc8] sm:$0xff]
    %v11923 = vld [vmem:[%s11896 + $0xd0] sm:$0xff]
    %v11924 = vld [vmem:[%s11896 + $0xd8] sm:$0xff]
    %v11925 = vld [vmem:[%s11896 + $0xe0] sm:$0xff]
    %v11926 = vld [vmem:[%s11896 + $0xe8] sm:$0xff]
    %v11927 = vld [vmem:[%s11896 + $0xf0] sm:$0xff]
    %v11928 = vld [vmem:[%s11896 + $0xf8] sm:$0xff]
    %v11930 = vunpack.c.l.b16 %v11391
    %v11931 = vunpack.c.h.b16 %v11391
    %v11932 = vpack.c.b16 %v11930, %v11930
    %v11933 = vpack.c.b16 %v11931, %v11931
    %v11968 = vunpack.c.l.b16 %v11897
    %v11969 = vunpack.c.h.b16 %v11897
    %v11970 = vunpack.c.l.b16 %v11898
    %v11971 = vunpack.c.h.b16 %v11898
    %v11972 = vunpack.c.l.b16 %v11899
    %v11973 = vunpack.c.h.b16 %v11899
    %v11974 = vunpack.c.l.b16 %v11900
    %v11975 = vunpack.c.h.b16 %v11900
    %v11976 = vunpack.c.l.b16 %v11901
    %v11977 = vunpack.c.h.b16 %v11901
    %v11978 = vunpack.c.l.b16 %v11902
    %v11979 = vunpack.c.h.b16 %v11902
    %v11980 = vunpack.c.l.b16 %v11903
    %v11981 = vunpack.c.h.b16 %v11903
    %v11982 = vunpack.c.l.b16 %v11904
    %v11983 = vunpack.c.h.b16 %v11904
    %v11984 = vunpack.c.l.b16 %v11905
    %v11985 = vunpack.c.h.b16 %v11905
    %v11986 = vunpack.c.l.b16 %v11906
    %v11987 = vunpack.c.h.b16 %v11906
    %v11988 = vunpack.c.l.b16 %v11907
    %v11989 = vunpack.c.h.b16 %v11907
    %v11990 = vunpack.c.l.b16 %v11908
    %v11991 = vunpack.c.h.b16 %v11908
    %v11992 = vunpack.c.l.b16 %v11909
    %v11993 = vunpack.c.h.b16 %v11909
    %v11994 = vunpack.c.l.b16 %v11910
    %v11995 = vunpack.c.h.b16 %v11910
    %v11996 = vunpack.c.l.b16 %v11911
    %v11997 = vunpack.c.h.b16 %v11911
    %v11998 = vunpack.c.l.b16 %v11912
    %v11999 = vunpack.c.h.b16 %v11912
    %v12000 = vunpack.c.l.b16 %v11913
    %v12001 = vunpack.c.h.b16 %v11913
    %v12002 = vunpack.c.l.b16 %v11914
    %v12003 = vunpack.c.h.b16 %v11914
    %v12004 = vunpack.c.l.b16 %v11915
    %v12005 = vunpack.c.h.b16 %v11915
    %v12006 = vunpack.c.l.b16 %v11916
    %v12007 = vunpack.c.h.b16 %v11916
    %v12008 = vunpack.c.l.b16 %v11917
    %v12009 = vunpack.c.h.b16 %v11917
    %v12010 = vunpack.c.l.b16 %v11918
    %v12011 = vunpack.c.h.b16 %v11918
    %v12012 = vunpack.c.l.b16 %v11919
    %v12013 = vunpack.c.h.b16 %v11919
    %v12014 = vunpack.c.l.b16 %v11920
    %v12015 = vunpack.c.h.b16 %v11920
    %v12016 = vunpack.c.l.b16 %v11921
    %v12017 = vunpack.c.h.b16 %v11921
    %v12018 = vunpack.c.l.b16 %v11922
    %v12019 = vunpack.c.h.b16 %v11922
    %v12020 = vunpack.c.l.b16 %v11923
    %v12021 = vunpack.c.h.b16 %v11923
    %v12022 = vunpack.c.l.b16 %v11924
    %v12023 = vunpack.c.h.b16 %v11924
    %v12024 = vunpack.c.l.b16 %v11925
    %v12025 = vunpack.c.h.b16 %v11925
    %v12026 = vunpack.c.l.b16 %v11926
    %v12027 = vunpack.c.h.b16 %v11926
    %v12028 = vunpack.c.l.b16 %v11927
    %v12029 = vunpack.c.h.b16 %v11927
    %v12030 = vunpack.c.l.b16 %v11928
    %v12031 = vunpack.c.h.b16 %v11928
    %v12032 = vpack.c.b16 %v11970, %v11968
    %v12033 = vpack.c.b16 %v11971, %v11969
    %v12034 = vpack.c.b16 %v11974, %v11972
    %v12035 = vpack.c.b16 %v11975, %v11973
    %v12036 = vpack.c.b16 %v11978, %v11976
    %v12037 = vpack.c.b16 %v11979, %v11977
    %v12038 = vpack.c.b16 %v11982, %v11980
    %v12039 = vpack.c.b16 %v11983, %v11981
    %v12040 = vpack.c.b16 %v11986, %v11984
    %v12041 = vpack.c.b16 %v11987, %v11985
    %v12042 = vpack.c.b16 %v11990, %v11988
    %v12043 = vpack.c.b16 %v11991, %v11989
    %v12044 = vpack.c.b16 %v11994, %v11992
    %v12045 = vpack.c.b16 %v11995, %v11993
    %v12046 = vpack.c.b16 %v11998, %v11996
    %v12047 = vpack.c.b16 %v11999, %v11997
    %v12048 = vpack.c.b16 %v12002, %v12000
    %v12049 = vpack.c.b16 %v12003, %v12001
    %v12050 = vpack.c.b16 %v12006, %v12004
    %v12051 = vpack.c.b16 %v12007, %v12005
    %v12052 = vpack.c.b16 %v12010, %v12008
    %v12053 = vpack.c.b16 %v12011, %v12009
    %v12054 = vpack.c.b16 %v12014, %v12012
    %v12055 = vpack.c.b16 %v12015, %v12013
    %v12056 = vpack.c.b16 %v12018, %v12016
    %v12057 = vpack.c.b16 %v12019, %v12017
    %v12058 = vpack.c.b16 %v12022, %v12020
    %v12059 = vpack.c.b16 %v12023, %v12021
    %v12060 = vpack.c.b16 %v12026, %v12024
    %v12061 = vpack.c.b16 %v12027, %v12025
    %v12062 = vpack.c.b16 %v12030, %v12028
    %v12063 = vpack.c.b16 %v12031, %v12029
    %12096 = vmatpush.bf16.msra.mxu0 %v12046
    %12097 = vmatpush.bf16.msra.mxu0 %v12044
    %12098 = vmatpush.bf16.msra.mxu0 %v12042
    %12099 = vmatpush.bf16.msra.mxu0 %v12040
    %12100 = vmatpush.bf16.msra.mxu0 %v12038
    %12101 = vmatpush.bf16.msra.mxu0 %v12036
    %12102 = vmatpush.bf16.msra.mxu0 %v12034
    %12103 = vmatpush.bf16.msra.mxu0 %v12032
    %12104 = vmatmul.bf16.gmra.mxu0 %v11932
    %v12105 = vpop.f32.mrf.mxu0
    %v12106 = vadd.f32 0.0, %v12105
    %v12107 = vpop.f32.mrf.mxu0
    %12108 = vdwg.mxu0
    %12109 = vmatpush.bf16.msra.mxu0 %v12062
    %12110 = vmatpush.bf16.msra.mxu0 %v12060
    %12111 = vmatpush.bf16.msra.mxu0 %v12058
    %12112 = vmatpush.bf16.msra.mxu0 %v12056
    %12113 = vmatpush.bf16.msra.mxu0 %v12054
    %12114 = vmatpush.bf16.msra.mxu0 %v12052
    %12115 = vmatpush.bf16.msra.mxu0 %v12050
    %12116 = vmatpush.bf16.msra.mxu0 %v12048
    %12117 = vmatmul.bf16.gmra.mxu0 %v11933
    %v12118 = vpop.f32.mrf.mxu0
    %v12119 = vadd.f32 %v12106, %v12118
    %v12120 = vpop.f32.mrf.mxu0
    %12121 = vdwg.mxu0
    %12122 = vmatpush.bf16.msra.mxu0 %v12047
    %12123 = vmatpush.bf16.msra.mxu0 %v12045
    %12124 = vmatpush.bf16.msra.mxu0 %v12043
    %12125 = vmatpush.bf16.msra.mxu0 %v12041
    %12126 = vmatpush.bf16.msra.mxu0 %v12039
    %12127 = vmatpush.bf16.msra.mxu0 %v12037
    %12128 = vmatpush.bf16.msra.mxu0 %v12035
    %12129 = vmatpush.bf16.msra.mxu0 %v12033
    %12130 = vmatmul.bf16.gmra.mxu0 %v11932
    %v12131 = vpop.f32.mrf.mxu0
    %v12132 = vadd.f32 0.0, %v12131
    %v12133 = vpop.f32.mrf.mxu0
    %12134 = vdwg.mxu0
    %12135 = vmatpush.bf16.msra.mxu0 %v12063
    %12136 = vmatpush.bf16.msra.mxu0 %v12061
    %12137 = vmatpush.bf16.msra.mxu0 %v12059
    %12138 = vmatpush.bf16.msra.mxu0 %v12057
    %12139 = vmatpush.bf16.msra.mxu0 %v12055
    %12140 = vmatpush.bf16.msra.mxu0 %v12053
    %12141 = vmatpush.bf16.msra.mxu0 %v12051
    %12142 = vmatpush.bf16.msra.mxu0 %v12049
    %12143 = vmatmul.bf16.gmra.mxu0 %v11933
    %v12144 = vpop.f32.mrf.mxu0
    %v12145 = vadd.f32 %v12132, %v12144
    %v12146 = vpop.f32.mrf.mxu0
    %12147 = vdwg.mxu0
    %v12148 = vadd.f32 %v11867, %v12119
    %v12149 = vadd.f32 %v11893, %v12145
    %s12150 = scalar_lea.vmem [#allocation12], 768
    %v12151 = vld [vmem:[%s12150] sm:$0xff]
    %v12152 = vld [vmem:[%s12150 + $0x8] sm:$0xff]
    %v12153 = vld [vmem:[%s12150 + $0x10] sm:$0xff]
    %v12154 = vld [vmem:[%s12150 + $0x18] sm:$0xff]
    %v12155 = vld [vmem:[%s12150 + $0x20] sm:$0xff]
    %v12156 = vld [vmem:[%s12150 + $0x28] sm:$0xff]
    %v12157 = vld [vmem:[%s12150 + $0x30] sm:$0xff]
    %v12158 = vld [vmem:[%s12150 + $0x38] sm:$0xff]
    %v12159 = vld [vmem:[%s12150 + $0x40] sm:$0xff]
    %v12160 = vld [vmem:[%s12150 + $0x48] sm:$0xff]
    %v12161 = vld [vmem:[%s12150 + $0x50] sm:$0xff]
    %v12162 = vld [vmem:[%s12150 + $0x58] sm:$0xff]
    %v12163 = vld [vmem:[%s12150 + $0x60] sm:$0xff]
    %v12164 = vld [vmem:[%s12150 + $0x68] sm:$0xff]
    %v12165 = vld [vmem:[%s12150 + $0x70] sm:$0xff]
    %v12166 = vld [vmem:[%s12150 + $0x78] sm:$0xff]
    %v12167 = vld [vmem:[%s12150 + $0x80] sm:$0xff]
    %v12168 = vld [vmem:[%s12150 + $0x88] sm:$0xff]
    %v12169 = vld [vmem:[%s12150 + $0x90] sm:$0xff]
    %v12170 = vld [vmem:[%s12150 + $0x98] sm:$0xff]
    %v12171 = vld [vmem:[%s12150 + $0xa0] sm:$0xff]
    %v12172 = vld [vmem:[%s12150 + $0xa8] sm:$0xff]
    %v12173 = vld [vmem:[%s12150 + $0xb0] sm:$0xff]
    %v12174 = vld [vmem:[%s12150 + $0xb8] sm:$0xff]
    %v12175 = vld [vmem:[%s12150 + $0xc0] sm:$0xff]
    %v12176 = vld [vmem:[%s12150 + $0xc8] sm:$0xff]
    %v12177 = vld [vmem:[%s12150 + $0xd0] sm:$0xff]
    %v12178 = vld [vmem:[%s12150 + $0xd8] sm:$0xff]
    %v12179 = vld [vmem:[%s12150 + $0xe0] sm:$0xff]
    %v12180 = vld [vmem:[%s12150 + $0xe8] sm:$0xff]
    %v12181 = vld [vmem:[%s12150 + $0xf0] sm:$0xff]
    %v12182 = vld [vmem:[%s12150 + $0xf8] sm:$0xff]
    %v12184 = vunpack.c.l.b16 %v11392
    %v12185 = vunpack.c.h.b16 %v11392
    %v12186 = vpack.c.b16 %v12184, %v12184
    %v12187 = vpack.c.b16 %v12185, %v12185
    %v12222 = vunpack.c.l.b16 %v12151
    %v12223 = vunpack.c.h.b16 %v12151
    %v12224 = vunpack.c.l.b16 %v12152
    %v12225 = vunpack.c.h.b16 %v12152
    %v12226 = vunpack.c.l.b16 %v12153
    %v12227 = vunpack.c.h.b16 %v12153
    %v12228 = vunpack.c.l.b16 %v12154
    %v12229 = vunpack.c.h.b16 %v12154
    %v12230 = vunpack.c.l.b16 %v12155
    %v12231 = vunpack.c.h.b16 %v12155
    %v12232 = vunpack.c.l.b16 %v12156
    %v12233 = vunpack.c.h.b16 %v12156
    %v12234 = vunpack.c.l.b16 %v12157
    %v12235 = vunpack.c.h.b16 %v12157
    %v12236 = vunpack.c.l.b16 %v12158
    %v12237 = vunpack.c.h.b16 %v12158
    %v12238 = vunpack.c.l.b16 %v12159
    %v12239 = vunpack.c.h.b16 %v12159
    %v12240 = vunpack.c.l.b16 %v12160
    %v12241 = vunpack.c.h.b16 %v12160
    %v12242 = vunpack.c.l.b16 %v12161
    %v12243 = vunpack.c.h.b16 %v12161
    %v12244 = vunpack.c.l.b16 %v12162
    %v12245 = vunpack.c.h.b16 %v12162
    %v12246 = vunpack.c.l.b16 %v12163
    %v12247 = vunpack.c.h.b16 %v12163
    %v12248 = vunpack.c.l.b16 %v12164
    %v12249 = vunpack.c.h.b16 %v12164
    %v12250 = vunpack.c.l.b16 %v12165
    %v12251 = vunpack.c.h.b16 %v12165
    %v12252 = vunpack.c.l.b16 %v12166
    %v12253 = vunpack.c.h.b16 %v12166
    %v12254 = vunpack.c.l.b16 %v12167
    %v12255 = vunpack.c.h.b16 %v12167
    %v12256 = vunpack.c.l.b16 %v12168
    %v12257 = vunpack.c.h.b16 %v12168
    %v12258 = vunpack.c.l.b16 %v12169
    %v12259 = vunpack.c.h.b16 %v12169
    %v12260 = vunpack.c.l.b16 %v12170
    %v12261 = vunpack.c.h.b16 %v12170
    %v12262 = vunpack.c.l.b16 %v12171
    %v12263 = vunpack.c.h.b16 %v12171
    %v12264 = vunpack.c.l.b16 %v12172
    %v12265 = vunpack.c.h.b16 %v12172
    %v12266 = vunpack.c.l.b16 %v12173
    %v12267 = vunpack.c.h.b16 %v12173
    %v12268 = vunpack.c.l.b16 %v12174
    %v12269 = vunpack.c.h.b16 %v12174
    %v12270 = vunpack.c.l.b16 %v12175
    %v12271 = vunpack.c.h.b16 %v12175
    %v12272 = vunpack.c.l.b16 %v12176
    %v12273 = vunpack.c.h.b16 %v12176
    %v12274 = vunpack.c.l.b16 %v12177
    %v12275 = vunpack.c.h.b16 %v12177
    %v12276 = vunpack.c.l.b16 %v12178
    %v12277 = vunpack.c.h.b16 %v12178
    %v12278 = vunpack.c.l.b16 %v12179
    %v12279 = vunpack.c.h.b16 %v12179
    %v12280 = vunpack.c.l.b16 %v12180
    %v12281 = vunpack.c.h.b16 %v12180
    %v12282 = vunpack.c.l.b16 %v12181
    %v12283 = vunpack.c.h.b16 %v12181
    %v12284 = vunpack.c.l.b16 %v12182
    %v12285 = vunpack.c.h.b16 %v12182
    %v12286 = vpack.c.b16 %v12224, %v12222
    %v12287 = vpack.c.b16 %v12225, %v12223
    %v12288 = vpack.c.b16 %v12228, %v12226
    %v12289 = vpack.c.b16 %v12229, %v12227
    %v12290 = vpack.c.b16 %v12232, %v12230
    %v12291 = vpack.c.b16 %v12233, %v12231
    %v12292 = vpack.c.b16 %v12236, %v12234
    %v12293 = vpack.c.b16 %v12237, %v12235
    %v12294 = vpack.c.b16 %v12240, %v12238
    %v12295 = vpack.c.b16 %v12241, %v12239
    %v12296 = vpack.c.b16 %v12244, %v12242
    %v12297 = vpack.c.b16 %v12245, %v12243
    %v12298 = vpack.c.b16 %v12248, %v12246
    %v12299 = vpack.c.b16 %v12249, %v12247
    %v12300 = vpack.c.b16 %v12252, %v12250
    %v12301 = vpack.c.b16 %v12253, %v12251
    %v12302 = vpack.c.b16 %v12256, %v12254
    %v12303 = vpack.c.b16 %v12257, %v12255
    %v12304 = vpack.c.b16 %v12260, %v12258
    %v12305 = vpack.c.b16 %v12261, %v12259
    %v12306 = vpack.c.b16 %v12264, %v12262
    %v12307 = vpack.c.b16 %v12265, %v12263
    %v12308 = vpack.c.b16 %v12268, %v12266
    %v12309 = vpack.c.b16 %v12269, %v12267
    %v12310 = vpack.c.b16 %v12272, %v12270
    %v12311 = vpack.c.b16 %v12273, %v12271
    %v12312 = vpack.c.b16 %v12276, %v12274
    %v12313 = vpack.c.b16 %v12277, %v12275
    %v12314 = vpack.c.b16 %v12280, %v12278
    %v12315 = vpack.c.b16 %v12281, %v12279
    %v12316 = vpack.c.b16 %v12284, %v12282
    %v12317 = vpack.c.b16 %v12285, %v12283
    %12350 = vmatpush.bf16.msra.mxu0 %v12300
    %12351 = vmatpush.bf16.msra.mxu0 %v12298
    %12352 = vmatpush.bf16.msra.mxu0 %v12296
    %12353 = vmatpush.bf16.msra.mxu0 %v12294
    %12354 = vmatpush.bf16.msra.mxu0 %v12292
    %12355 = vmatpush.bf16.msra.mxu0 %v12290
    %12356 = vmatpush.bf16.msra.mxu0 %v12288
    %12357 = vmatpush.bf16.msra.mxu0 %v12286
    %12358 = vmatmul.bf16.gmra.mxu0 %v12186
    %v12359 = vpop.f32.mrf.mxu0
    %v12360 = vadd.f32 0.0, %v12359
    %v12361 = vpop.f32.mrf.mxu0
    %12362 = vdwg.mxu0
    %12363 = vmatpush.bf16.msra.mxu0 %v12316
    %12364 = vmatpush.bf16.msra.mxu0 %v12314
    %12365 = vmatpush.bf16.msra.mxu0 %v12312
    %12366 = vmatpush.bf16.msra.mxu0 %v12310
    %12367 = vmatpush.bf16.msra.mxu0 %v12308
    %12368 = vmatpush.bf16.msra.mxu0 %v12306
    %12369 = vmatpush.bf16.msra.mxu0 %v12304
    %12370 = vmatpush.bf16.msra.mxu0 %v12302
    %12371 = vmatmul.bf16.gmra.mxu0 %v12187
    %v12372 = vpop.f32.mrf.mxu0
    %v12373 = vadd.f32 %v12360, %v12372
    %v12374 = vpop.f32.mrf.mxu0
    %12375 = vdwg.mxu0
    %12376 = vmatpush.bf16.msra.mxu0 %v12301
    %12377 = vmatpush.bf16.msra.mxu0 %v12299
    %12378 = vmatpush.bf16.msra.mxu0 %v12297
    %12379 = vmatpush.bf16.msra.mxu0 %v12295
    %12380 = vmatpush.bf16.msra.mxu0 %v12293
    %12381 = vmatpush.bf16.msra.mxu0 %v12291
    %12382 = vmatpush.bf16.msra.mxu0 %v12289
    %12383 = vmatpush.bf16.msra.mxu0 %v12287
    %12384 = vmatmul.bf16.gmra.mxu0 %v12186
    %v12385 = vpop.f32.mrf.mxu0
    %v12386 = vadd.f32 0.0, %v12385
    %v12387 = vpop.f32.mrf.mxu0
    %12388 = vdwg.mxu0
    %12389 = vmatpush.bf16.msra.mxu0 %v12317
    %12390 = vmatpush.bf16.msra.mxu0 %v12315
    %12391 = vmatpush.bf16.msra.mxu0 %v12313
    %12392 = vmatpush.bf16.msra.mxu0 %v12311
    %12393 = vmatpush.bf16.msra.mxu0 %v12309
    %12394 = vmatpush.bf16.msra.mxu0 %v12307
    %12395 = vmatpush.bf16.msra.mxu0 %v12305
    %12396 = vmatpush.bf16.msra.mxu0 %v12303
    %12397 = vmatmul.bf16.gmra.mxu0 %v12187
    %v12398 = vpop.f32.mrf.mxu0
    %v12399 = vadd.f32 %v12386, %v12398
    %v12400 = vpop.f32.mrf.mxu0
    %12401 = vdwg.mxu0
    %v12402 = vadd.f32 %v12148, %v12373
    %v12403 = vadd.f32 %v12149, %v12399
    %v12404 = vld [vmem:[#allocation13] sm:$0x3]
    %v12406 = vperm.slane %v12404, 0
    %v12407 = vperm.slane %v12404, 1
    %v12410 = vadd.f32 %v12402, %v12406
    %v12411 = vadd.f32 %v12403, %v12407
    %v12412 = vmax.f32 %v12410, 0.0
    %v12413 = vmax.f32 %v12411, 0.0
    %v12414 = vpack.c.bf16 %v12412, %v12412
    %v12415 = vpack.c.bf16 %v12413, %v12413
    %v12416 = vld [vmem:[#allocation15] sm:$0xf]
    %v12417 = vld [vmem:[#allocation15 + $0x4] sm:$0xf]
    %v12418 = vld [vmem:[#allocation15 + $0x8] sm:$0xf]
    %v12419 = vld [vmem:[#allocation15 + $0xc] sm:$0xf]
    %v12420 = vld [vmem:[#allocation15 + $0x10] sm:$0xf]
    %v12421 = vld [vmem:[#allocation15 + $0x14] sm:$0xf]
    %v12422 = vld [vmem:[#allocation15 + $0x18] sm:$0xf]
    %v12423 = vld [vmem:[#allocation15 + $0x1c] sm:$0xf]
    %v12424 = vld [vmem:[#allocation15 + $0x20] sm:$0xf]
    %v12425 = vld [vmem:[#allocation15 + $0x24] sm:$0xf]
    %v12426 = vld [vmem:[#allocation15 + $0x28] sm:$0xf]
    %v12427 = vld [vmem:[#allocation15 + $0x2c] sm:$0xf]
    %v12428 = vld [vmem:[#allocation15 + $0x30] sm:$0xf]
    %v12429 = vld [vmem:[#allocation15 + $0x34] sm:$0xf]
    %v12430 = vld [vmem:[#allocation15 + $0x38] sm:$0xf]
    %v12431 = vld [vmem:[#allocation15 + $0x3c] sm:$0xf]
    %v12432 = vld [vmem:[#allocation15 + $0x40] sm:$0xf]
    %v12433 = vld [vmem:[#allocation15 + $0x44] sm:$0xf]
    %v12434 = vld [vmem:[#allocation15 + $0x48] sm:$0xf]
    %v12435 = vld [vmem:[#allocation15 + $0x4c] sm:$0xf]
    %v12436 = vld [vmem:[#allocation15 + $0x50] sm:$0xf]
    %v12437 = vld [vmem:[#allocation15 + $0x54] sm:$0xf]
    %v12438 = vld [vmem:[#allocation15 + $0x58] sm:$0xf]
    %v12439 = vld [vmem:[#allocation15 + $0x5c] sm:$0xf]
    %v12440 = vld [vmem:[#allocation15 + $0x60] sm:$0xf]
    %v12441 = vld [vmem:[#allocation15 + $0x64] sm:$0xf]
    %v12442 = vld [vmem:[#allocation15 + $0x68] sm:$0xf]
    %v12443 = vld [vmem:[#allocation15 + $0x6c] sm:$0xf]
    %v12444 = vld [vmem:[#allocation15 + $0x70] sm:$0xf]
    %v12445 = vld [vmem:[#allocation15 + $0x74] sm:$0xf]
    %v12446 = vld [vmem:[#allocation15 + $0x78] sm:$0xf]
    %v12447 = vld [vmem:[#allocation15 + $0x7c] sm:$0xf]
    %v12448 = vld [vmem:[#allocation16] sm:$0x1]
    %v12450 = vperm.slane %v12448, 0
    %v12484 = vunpack.c.l.b16 %v12416
    %v12485 = vunpack.c.l.b16 %v12417
    %v12486 = vunpack.c.l.b16 %v12418
    %v12487 = vunpack.c.l.b16 %v12419
    %v12488 = vunpack.c.l.b16 %v12420
    %v12489 = vunpack.c.l.b16 %v12421
    %v12490 = vunpack.c.l.b16 %v12422
    %v12491 = vunpack.c.l.b16 %v12423
    %v12492 = vunpack.c.l.b16 %v12424
    %v12493 = vunpack.c.l.b16 %v12425
    %v12494 = vunpack.c.l.b16 %v12426
    %v12495 = vunpack.c.l.b16 %v12427
    %v12496 = vunpack.c.l.b16 %v12428
    %v12497 = vunpack.c.l.b16 %v12429
    %v12498 = vunpack.c.l.b16 %v12430
    %v12499 = vunpack.c.l.b16 %v12431
    %v12500 = vunpack.c.l.b16 %v12432
    %v12501 = vunpack.c.l.b16 %v12433
    %v12502 = vunpack.c.l.b16 %v12434
    %v12503 = vunpack.c.l.b16 %v12435
    %v12504 = vunpack.c.l.b16 %v12436
    %v12505 = vunpack.c.l.b16 %v12437
    %v12506 = vunpack.c.l.b16 %v12438
    %v12507 = vunpack.c.l.b16 %v12439
    %v12508 = vunpack.c.l.b16 %v12440
    %v12509 = vunpack.c.l.b16 %v12441
    %v12510 = vunpack.c.l.b16 %v12442
    %v12511 = vunpack.c.l.b16 %v12443
    %v12512 = vunpack.c.l.b16 %v12444
    %v12513 = vunpack.c.l.b16 %v12445
    %v12514 = vunpack.c.l.b16 %v12446
    %v12515 = vunpack.c.l.b16 %v12447
    %v12516 = vpack.c.b16 %v12485, %v12484
    %v12517 = vpack.c.b16 %v12487, %v12486
    %v12518 = vpack.c.b16 %v12489, %v12488
    %v12519 = vpack.c.b16 %v12491, %v12490
    %v12520 = vpack.c.b16 %v12493, %v12492
    %v12521 = vpack.c.b16 %v12495, %v12494
    %v12522 = vpack.c.b16 %v12497, %v12496
    %v12523 = vpack.c.b16 %v12499, %v12498
    %v12524 = vpack.c.b16 %v12501, %v12500
    %v12525 = vpack.c.b16 %v12503, %v12502
    %v12526 = vpack.c.b16 %v12505, %v12504
    %v12527 = vpack.c.b16 %v12507, %v12506
    %v12528 = vpack.c.b16 %v12509, %v12508
    %v12529 = vpack.c.b16 %v12511, %v12510
    %v12530 = vpack.c.b16 %v12513, %v12512
    %v12531 = vpack.c.b16 %v12515, %v12514
    %12548 = vmatpush.bf16.msra.mxu0 %v12523
    %12549 = vmatpush.bf16.msra.mxu0 %v12522
    %12550 = vmatpush.bf16.msra.mxu0 %v12521
    %12551 = vmatpush.bf16.msra.mxu0 %v12520
    %12552 = vmatpush.bf16.msra.mxu0 %v12519
    %12553 = vmatpush.bf16.msra.mxu0 %v12518
    %12554 = vmatpush.bf16.msra.mxu0 %v12517
    %12555 = vmatpush.bf16.msra.mxu0 %v12516
    %12556 = vmatmul.bf16.gmra.mxu0 %v12414
    %v12557 = vpop.f32.mrf.mxu0
    %v12558 = vadd.f32 %v12450, %v12557
    %v12559 = vpop.f32.mrf.mxu0
    %12560 = vdwg.mxu0
    %12561 = vmatpush.bf16.msra.mxu0 %v12531
    %12562 = vmatpush.bf16.msra.mxu0 %v12530
    %12563 = vmatpush.bf16.msra.mxu0 %v12529
    %12564 = vmatpush.bf16.msra.mxu0 %v12528
    %12565 = vmatpush.bf16.msra.mxu0 %v12527
    %12566 = vmatpush.bf16.msra.mxu0 %v12526
    %12567 = vmatpush.bf16.msra.mxu0 %v12525
    %12568 = vmatpush.bf16.msra.mxu0 %v12524
    %12569 = vmatmul.bf16.gmra.mxu0 %v12415
    %v12570 = vpop.f32.mrf.mxu0
    %v12571 = vadd.f32 %v12558, %v12570
    %v12572 = vpop.f32.mrf.mxu0
    %12573 = vdwg.mxu0
    %12574 = vmax.xlane.f32.xlu0 %v12571
    %v12575 = vpop.xlane.xlu0 %12574
    %v12576 = vsub.f32 %v12571, %v12575
    %v12577 = vmul.f32 %v12576, 1.442695
    %v12578 = vpow.pop %v12577
    %12579 = vadd.xlane.f32.xlu0 %v12578
    %v12580 = vpop.xlane.xlu0 %12579
    %v12581 = vlog2.pop %v12580
    %v12582 = vmul.f32 %v12581, 0.6931472
    %v12583 = vsub.f32 %v12576, %v12582
    %12584 = vst [vmem:[%s11] sm:$0xff] %v12583
    // Predicated region
    $region86: #{net72_forward.1} parent=1 // pred_check
      _
    $region87: #{net72_forward.1} parent=1 // pred_check_branch
      %12586 = sbr.rel (0) target = $region89
    $region88: #{net72_forward.1} parent=1 // pred_region
      _
    $region89: #{net72_forward.1} parent=1 // pred_fallthru
      _
    // Predicated region
    $region90: #{net72_forward.1} parent=1 // pred_check
      _
    $region91: #{net72_forward.1} parent=1 // pred_check_branch
      %12588 = sbr.rel (0) target = $region93
    $region92: #{net72_forward.1} parent=1 // pred_region
      _
    $region93: #{net72_forward.1} parent=1 // pred_fallthru
      _
    %12589 = vsyncpa [#allocation3], 1
    %12590 = vsyncpa [#allocation5], 1
    %12591 = vsyncpa [#allocation8], 1
    %12592 = vsyncpa [#allocation11], 1
    %12593 = vsyncpa [#allocation14], 1
    %12594 = vsyncpa [#allocation17], 1

</llo_original>
